<compile_context>
chip_gen: v7x
topology: tpu7x:2x2x1
jax: 0.10.0
libtpu: 0.0.40
codegen_flags: <defaults>
</compile_context>

<pallas_src>
import jax
import jax.numpy as jnp
from jax.experimental import pallas as pl
from jax.experimental.pallas import tpu as pltpu


def _round_up(x, m):
    return (x + m - 1) // m * m


# -----------------------------------------------------------------------------
# In-kernel building block: Conv2d(VALID, s=1) + bias + ReLU + 2x2 max-pool
# -----------------------------------------------------------------------------
def _tap_matmul_pool(pieces, W, OH, OW, w, b):
    """pieces: list of (BT, OH*W, c_k) bf16 slices whose channel concatenation
    is the im2col slab (K ordered to match w's rows).  One MXU contraction,
    then 2x2 max-pool + bias + ReLU in registers.  Columns OW..W-1 of every
    conv row are garbage (they are the only consumers of the zero-padded input
    tail) and are dropped by the column slice before pooling.

    Returns (BT, (OH//2)*(OW//2), Cout) f32."""
    BT, M, _ = pieces[0].shape
    cout = w.shape[-1]
    slab = pieces[0] if len(pieces) == 1 else jnp.concatenate(pieces, axis=-1)
    K = slab.shape[-1]

    z = jnp.dot(slab.reshape(BT * M, K), w,
                preferred_element_type=jnp.float32)              # (BT*M, cout) f32

    oh2, ow2 = OH // 2, OW // 2
    z = z.reshape(BT, oh2, 2, W, cout)
    z = jnp.maximum(z[:, :, 0, :, :], z[:, :, 1, :, :])          # row pairs
    z = z[:, :, :OW, :].reshape(BT, oh2, ow2, 2, cout)
    z = jnp.maximum(z[:, :, :, 0, :], z[:, :, :, 1, :])          # column pairs
    z = jnp.maximum(z + b, 0.0)                                  # bias + ReLU
    return z.reshape(BT, oh2 * ow2, cout)


# -----------------------------------------------------------------------------
# The fused whole-network kernel (one batch tile per grid step)
# -----------------------------------------------------------------------------
def _fused_cnn_kernel(x_ref, w1_ref, b1_ref, w2_ref, b2_ref, w3_ref, b3_ref,
                      fw1_ref, fb1_ref, fw2_ref, fb2_ref, fw3_ref, fb3_ref,
                      o_ref):
    bf16 = jnp.bfloat16
    x0 = x_ref[...]                                  # (BT, 1024, 15) bf16, kw*Cin pre-folded
    BT = x0.shape[0]

    # conv1 (5x5, 3->20): kernel-row fold only (kw*Cin folded in wrapper) -> K=75.
    p1 = [x0[:, i * 32:i * 32 + 28 * 32, :] for i in range(5)]
    a1 = _tap_matmul_pool(p1, 32, 28, 28, w1_ref[...], b1_ref[...])     # (BT,196,20) f32
    a1 = jnp.concatenate([a1.astype(bf16), jnp.zeros((BT, 2, 20), bf16)], axis=1)

    # conv2 (3x3, 20->128): all 9 taps folded -> K=180.
    p2 = [a1[:, i * 14 + j:i * 14 + j + 12 * 14, :]
          for i in range(3) for j in range(3)]
    a2 = _tap_matmul_pool(p2, 14, 12, 12, w2_ref[...], b2_ref[...])     # (BT,36,128) f32
    a2 = jnp.concatenate([a2.astype(bf16), jnp.zeros((BT, 2, 128), bf16)], axis=1)

    # conv3 (3x3, 128->512): all 9 taps folded -> K=1152 (lane-aligned concat).
    p3 = [a2[:, i * 6 + j:i * 6 + j + 4 * 6, :]
          for i in range(3) for j in range(3)]
    a3 = _tap_matmul_pool(p3, 6, 4, 4, w3_ref[...], b3_ref[...])        # (BT,4,512) f32
    a3 = a3.astype(bf16)

    # dropout1 / dropout2: identity (eval mode).
    # fc1 as 4 accumulated K=512 matmuls (fw1 is (pos, cin, cout), pos = h*2+w).
    h = jnp.zeros((BT, fw1_ref.shape[-1]), jnp.float32)
    for p in range(4):
        h = h + jnp.dot(a3[:, p, :], fw1_ref[p],
                        preferred_element_type=jnp.float32)
    h = jnp.maximum(h + fb1_ref[...], 0.0)                              # (BT,128)
    h = jnp.dot(h.astype(bf16), fw2_ref[...],
                preferred_element_type=jnp.float32)
    h = jnp.maximum(h + fb2_ref[...], 0.0)                              # (BT,64)
    z = jnp.dot(h.astype(bf16), fw3_ref[...],
                preferred_element_type=jnp.float32) + fb3_ref[...]      # (BT,10)

    m = jnp.max(z, axis=-1, keepdims=True)
    s = z - m
    lse = jnp.log(jnp.sum(jnp.exp(s), axis=-1, keepdims=True))
    o_ref[:, 0, :] = (s - lse).astype(o_ref.dtype)


# -----------------------------------------------------------------------------
# Wrapper: layout prep + pallas_call
# -----------------------------------------------------------------------------
def cnn_forward(params, x_nchw, *, bt=None):
    """x_nchw: (B, 3, 32, 32) f32 -> (B, 10) log-probabilities."""
    B = x_nchw.shape[0]
    assert x_nchw.shape[1:] == (3, 32, 32), x_nchw.shape
    if bt is None:
        # >= 2 grid steps whenever B >= 2 (keeps both v7x TensorCores busy),
        # capped at 8 images/step (comfortably inside scoped VMEM everywhere).
        bt = min(8, max(1, B // 2))
    Bp = _round_up(B, bt)

    f32, bf16 = jnp.float32, jnp.bfloat16

    # NCHW -> NHWC -> flat-spatial (row-major), pad batch to a multiple of bt and
    # the flat axis by kw-1=4 (feeds only garbage conv columns), cast bf16 once.
    x = jnp.transpose(x_nchw, (0, 2, 3, 1)).astype(f32).reshape(B, 1024, 3)
    x = jnp.pad(x, ((0, Bp - B), (0, 4), (0, 0))).astype(bf16)           # (Bp,1028,3)
    # Pre-fold kw (=5) taps x Cin (=3) into the channel axis (tiny HBM cost) so
    # the in-kernel conv1 concat is only 5 pieces: xc[b,p,j*3+c] = x[b,p+j,c].
    xc = jnp.concatenate([x[:, j:j + 1024, :] for j in range(5)], axis=-1)  # (Bp,1024,15)

    out = pl.pallas_call(
        _fused_cnn_kernel,
        out_shape=jax.ShapeDtypeStruct((Bp, 1, 10), f32),
        grid=(Bp // bt,),
        in_specs=[
            pl.BlockSpec((bt, 1024, 15), lambda i: (i, 0, 0)),
            pl.BlockSpec((75, 20), lambda i: (0, 0)),
            pl.BlockSpec((1, 20), lambda i: (0, 0)),
            pl.BlockSpec((180, 128), lambda i: (0, 0)),
            pl.BlockSpec((1, 128), lambda i: (0, 0)),
            pl.BlockSpec((1152, 512), lambda i: (0, 0)),
            pl.BlockSpec((1, 512), lambda i: (0, 0)),
            pl.BlockSpec((4, 512, 128), lambda i: (0, 0, 0)),
            pl.BlockSpec((1, 128), lambda i: (0, 0)),
            pl.BlockSpec((128, 64), lambda i: (0, 0)),
            pl.BlockSpec((1, 64), lambda i: (0, 0)),
            pl.BlockSpec((64, 10), lambda i: (0, 0)),
            pl.BlockSpec((1, 10), lambda i: (0, 0)),
        ],
        out_specs=pl.BlockSpec((bt, 1, 10), lambda i: (i, 0, 0)),
        compiler_params=pltpu.CompilerParams(
            dimension_semantics=("parallel",),
            vmem_limit_bytes=48 * 1024 * 1024),
    )(xc,
      params["w1"].astype(bf16), params["b1"].reshape(1, 20).astype(f32),
      params["w2"].astype(bf16), params["b2"].reshape(1, 128).astype(f32),
      params["w3"].astype(bf16), params["b3"].reshape(1, 512).astype(f32),
      params["fw1"].astype(bf16), params["fb1"].reshape(1, 128).astype(f32),
      params["fw2"].astype(bf16), params["fb2"].reshape(1, 64).astype(f32),
      params["fw3"].astype(bf16), params["fb3"].reshape(1, 10).astype(f32))
    return out[:B, 0, :]


# -----------------------------------------------------------------------------
# Parameters (deterministic init, PyTorch-default-style uniform(+-1/sqrt(fan_in)))
# -----------------------------------------------------------------------------
def init_params(key):
    def u(k, shape, fan_in):
        bound = 1.0 / float(fan_in) ** 0.5
        return jax.random.uniform(k, shape, jnp.float32, -bound, bound)

    ks = jax.random.split(key, 12)
    p = {}
    p["w1"], p["b1"] = u(ks[0], (75, 20), 75), u(ks[1], (20,), 75)
    p["w2"], p["b2"] = u(ks[2], (180, 128), 180), u(ks[3], (128,), 180)
    p["w3"], p["b3"] = u(ks[4], (1152, 512), 1152), u(ks[5], (512,), 1152)
    p["fw1"], p["fb1"] = u(ks[6], (4, 512, 128), 2048), u(ks[7], (128,), 2048)
    p["fw2"], p["fb2"] = u(ks[8], (128, 64), 128), u(ks[9], (64,), 128)
    p["fw3"], p["fb3"] = u(ks[10], (64, 10), 64), u(ks[11], (10,), 64)
    return p


# -----------------------------------------------------------------------------
# Pure-XLA reference (same bf16 rounding points) for validation
# -----------------------------------------------------------------------------
def _reference_forward(params, x_nchw):
    def bf(v):
        return v.astype(jnp.bfloat16).astype(jnp.float32)

    x = jnp.transpose(x_nchw, (0, 2, 3, 1)).astype(jnp.float32)
    for wk, bk, k, cin, cout in (("w1", "b1", 5, 3, 20),
                                 ("w2", "b2", 3, 20, 128),
                                 ("w3", "b3", 3, 128, 512)):
        w4 = bf(params[wk]).reshape(k, k, cin, cout)
        y = jax.lax.conv_general_dilated(
            bf(x), w4, window_strides=(1, 1), padding="VALID",
            dimension_numbers=("NHWC", "HWIO", "NHWC"))
        y = jax.nn.relu(y + params[bk])
        x = jax.lax.reduce_window(y, -jnp.inf, jax.lax.max,
                                  (1, 2, 2, 1), (1, 2, 2, 1), "VALID")
    B = x.shape[0]
    h = bf(x.reshape(B, -1))                       # NHWC flatten: (h*2+w)*512 + c
    fw1 = bf(params["fw1"]).reshape(2048, 128)
    h = jax.nn.relu(h @ fw1 + params["fb1"])
    h = jax.nn.relu(bf(h) @ bf(params["fw2"]) + params["fb2"])
    z = bf(h) @ bf(params["fw3"]) + params["fb3"]
    return jax.nn.log_softmax(z, axis=-1)


if __name__ == "__main__":
    key = jax.random.PRNGKey(0)
    k_param, k_x = jax.random.split(key)
    params = init_params(k_param)

    # CIFAR-10 sized input (32x32 is required by fc1 = 512*2*2), small batch.
    x = jax.random.normal(k_x, (2, 3, 32, 32), dtype=jnp.float32)

    fwd = jax.jit(cnn_forward)
    out = jax.block_until_ready(fwd(params, x))

    # sanity: shape, finiteness, valid log-probabilities, and agreement with an
    # XLA reference that applies the same bf16 roundings.
    assert out.shape == (2, 10), out.shape
    assert bool(jnp.all(jnp.isfinite(out)))
    row_sums = jnp.sum(jnp.exp(out), axis=-1)
    assert bool(jnp.all(jnp.abs(row_sums - 1.0) < 1e-3)), row_sums

    ref = jax.block_until_ready(jax.jit(_reference_forward)(params, x))
    assert bool(jnp.allclose(out, ref, atol=2e-2, rtol=0.0)), (out, ref)

    print("KERNEL_OK")
</pallas_src>

<mosaic_0001>
module attributes {stable_mosaic.version = 11 : i64} {
  func.func @_fused_cnn_kernel(%arg0: i32, %arg1: memref<1x1024x15xbf16, #tpu.memory_space<vmem>>, %arg2: memref<75x20xbf16, #tpu.memory_space<vmem>>, %arg3: memref<1x20xf32, #tpu.memory_space<vmem>>, %arg4: memref<180x128xbf16, #tpu.memory_space<vmem>>, %arg5: memref<1x128xf32, #tpu.memory_space<vmem>>, %arg6: memref<1152x512xbf16, #tpu.memory_space<vmem>>, %arg7: memref<1x512xf32, #tpu.memory_space<vmem>>, %arg8: memref<4x512x128xbf16, #tpu.memory_space<vmem>>, %arg9: memref<1x128xf32, #tpu.memory_space<vmem>>, %arg10: memref<128x64xbf16, #tpu.memory_space<vmem>>, %arg11: memref<1x64xf32, #tpu.memory_space<vmem>>, %arg12: memref<64x10xbf16, #tpu.memory_space<vmem>>, %arg13: memref<1x10xf32, #tpu.memory_space<vmem>>, %arg14: memref<1x1x10xf32, #tpu.memory_space<vmem>>) attributes {dimension_semantics = [#tpu.dimension_semantics<parallel>], iteration_bounds = array<i64: 2>, scalar_prefetch = 0 : i64, scratch_operands = 0 : i64, tpu.core_type = #tpu.core_type<tc>, window_params = [{transform_indices = @transform_0, window_bounds = array<i64: 1, 1024, 15>}, {pipeline_mode = #tpu.pipeline_mode<synchronous>, transform_indices = @transform_1, window_bounds = array<i64: 75, 20>}, {pipeline_mode = #tpu.pipeline_mode<synchronous>, transform_indices = @transform_2, window_bounds = array<i64: 1, 20>}, {pipeline_mode = #tpu.pipeline_mode<synchronous>, transform_indices = @transform_3, window_bounds = array<i64: 180, 128>}, {pipeline_mode = #tpu.pipeline_mode<synchronous>, transform_indices = @transform_4, window_bounds = array<i64: 1, 128>}, {pipeline_mode = #tpu.pipeline_mode<synchronous>, transform_indices = @transform_5, window_bounds = array<i64: 1152, 512>}, {pipeline_mode = #tpu.pipeline_mode<synchronous>, transform_indices = @transform_6, window_bounds = array<i64: 1, 512>}, {pipeline_mode = #tpu.pipeline_mode<synchronous>, transform_indices = @transform_7, window_bounds = array<i64: 4, 512, 128>}, {pipeline_mode = #tpu.pipeline_mode<synchronous>, transform_indices = @transform_8, window_bounds = array<i64: 1, 128>}, {pipeline_mode = #tpu.pipeline_mode<synchronous>, transform_indices = @transform_9, window_bounds = array<i64: 128, 64>}, {pipeline_mode = #tpu.pipeline_mode<synchronous>, transform_indices = @transform_10, window_bounds = array<i64: 1, 64>}, {pipeline_mode = #tpu.pipeline_mode<synchronous>, transform_indices = @transform_11, window_bounds = array<i64: 64, 10>}, {pipeline_mode = #tpu.pipeline_mode<synchronous>, transform_indices = @transform_12, window_bounds = array<i64: 1, 10>}, {transform_indices = @transform_13, window_bounds = array<i64: 1, 1, 10>}]} {
    %c0 = arith.constant 0 : index
    %c0_0 = arith.constant 0 : index
    %c0_1 = arith.constant 0 : index
    %0 = vector.load %arg1[%c0, %c0_0, %c0_1] : memref<1x1024x15xbf16, #tpu.memory_space<vmem>>, vector<1x1024x15xbf16>
    %1 = vector.extract_strided_slice %0 {offsets = [0, 0, 0], sizes = [1, 896, 15], strides = [1, 1, 1]} : vector<1x1024x15xbf16> to vector<1x896x15xbf16>
    %2 = vector.extract_strided_slice %0 {offsets = [0, 32, 0], sizes = [1, 896, 15], strides = [1, 1, 1]} : vector<1x1024x15xbf16> to vector<1x896x15xbf16>
    %3 = vector.extract_strided_slice %0 {offsets = [0, 64, 0], sizes = [1, 896, 15], strides = [1, 1, 1]} : vector<1x1024x15xbf16> to vector<1x896x15xbf16>
    %4 = vector.extract_strided_slice %0 {offsets = [0, 96, 0], sizes = [1, 896, 15], strides = [1, 1, 1]} : vector<1x1024x15xbf16> to vector<1x896x15xbf16>
    %5 = vector.extract_strided_slice %0 {offsets = [0, 128, 0], sizes = [1, 896, 15], strides = [1, 1, 1]} : vector<1x1024x15xbf16> to vector<1x896x15xbf16>
    %c0_2 = arith.constant 0 : index
    %c0_3 = arith.constant 0 : index
    %6 = vector.load %arg2[%c0_2, %c0_3] : memref<75x20xbf16, #tpu.memory_space<vmem>>, vector<75x20xbf16>
    %c0_4 = arith.constant 0 : index
    %c0_5 = arith.constant 0 : index
    %7 = vector.load %arg3[%c0_4, %c0_5] : memref<1x20xf32, #tpu.memory_space<vmem>>, vector<1x20xf32>
    %8 = tpu.concatenate %1, %2, %3, %4, %5 in 2 : vector<1x896x15xbf16>, vector<1x896x15xbf16>, vector<1x896x15xbf16>, vector<1x896x15xbf16>, vector<1x896x15xbf16> -> vector<1x896x75xbf16>
    %9 = vector.shape_cast %8 : vector<1x896x75xbf16> to vector<896x75xbf16>
    %cst = arith.constant dense<0.000000e+00> : vector<896x20xf32>
    %10 = tpu.matmul %9, %6, %cst {dimension_numbers = #tpu.dot_dimension_numbers<[1], [0], [0], [1], [0, 0, 1, 1], [], []>} : vector<896x75xbf16>, vector<75x20xbf16>, vector<896x20xf32> -> vector<896x20xf32>
    %11 = vector.shape_cast %10 : vector<896x20xf32> to vector<1x14x2x32x20xf32>
    %12 = vector.extract_strided_slice %11 {offsets = [0, 0, 0, 0, 0], sizes = [1, 14, 1, 32, 20], strides = [1, 1, 1, 1, 1]} : vector<1x14x2x32x20xf32> to vector<1x14x1x32x20xf32>
    %13 = vector.shape_cast %12 : vector<1x14x1x32x20xf32> to vector<1x14x32x20xf32>
    %14 = vector.extract_strided_slice %11 {offsets = [0, 0, 1, 0, 0], sizes = [1, 14, 1, 32, 20], strides = [1, 1, 1, 1, 1]} : vector<1x14x2x32x20xf32> to vector<1x14x1x32x20xf32>
    %15 = vector.shape_cast %14 : vector<1x14x1x32x20xf32> to vector<1x14x32x20xf32>
    %16 = arith.maximumf %13, %15 : vector<1x14x32x20xf32>
    %17 = vector.extract_strided_slice %16 {offsets = [0, 0, 0, 0], sizes = [1, 14, 28, 20], strides = [1, 1, 1, 1]} : vector<1x14x32x20xf32> to vector<1x14x28x20xf32>
    %18 = vector.shape_cast %17 : vector<1x14x28x20xf32> to vector<1x14x14x2x20xf32>
    %19 = vector.extract_strided_slice %18 {offsets = [0, 0, 0, 0, 0], sizes = [1, 14, 14, 1, 20], strides = [1, 1, 1, 1, 1]} : vector<1x14x14x2x20xf32> to vector<1x14x14x1x20xf32>
    %20 = vector.shape_cast %19 : vector<1x14x14x1x20xf32> to vector<1x14x14x20xf32>
    %21 = vector.extract_strided_slice %18 {offsets = [0, 0, 0, 1, 0], sizes = [1, 14, 14, 1, 20], strides = [1, 1, 1, 1, 1]} : vector<1x14x14x2x20xf32> to vector<1x14x14x1x20xf32>
    %22 = vector.shape_cast %21 : vector<1x14x14x1x20xf32> to vector<1x14x14x20xf32>
    %23 = arith.maximumf %20, %22 : vector<1x14x14x20xf32>
    %24 = vector.shape_cast %7 : vector<1x20xf32> to vector<1x1x1x20xf32>
    %25 = vector.broadcast %24 : vector<1x1x1x20xf32> to vector<1x14x14x20xf32>
    %26 = arith.addf %23, %25 : vector<1x14x14x20xf32>
    %cst_6 = arith.constant 0.000000e+00 : f32
    %27 = vector.broadcast %cst_6 : f32 to vector<1x14x14x20xf32>
    %28 = arith.maximumf %26, %27 : vector<1x14x14x20xf32>
    %29 = vector.shape_cast %28 : vector<1x14x14x20xf32> to vector<1x196x20xf32>
    %30 = arith.truncf %29 : vector<1x196x20xf32> to vector<1x196x20xbf16>
    %cst_7 = arith.constant 0.000000e+00 : bf16
    %31 = vector.broadcast %cst_7 : bf16 to vector<1x2x20xbf16>
    %32 = tpu.concatenate %30, %31 in 1 : vector<1x196x20xbf16>, vector<1x2x20xbf16> -> vector<1x198x20xbf16>
    %33 = vector.extract_strided_slice %32 {offsets = [0, 0, 0], sizes = [1, 168, 20], strides = [1, 1, 1]} : vector<1x198x20xbf16> to vector<1x168x20xbf16>
    %34 = vector.extract_strided_slice %32 {offsets = [0, 1, 0], sizes = [1, 168, 20], strides = [1, 1, 1]} : vector<1x198x20xbf16> to vector<1x168x20xbf16>
    %35 = vector.extract_strided_slice %32 {offsets = [0, 2, 0], sizes = [1, 168, 20], strides = [1, 1, 1]} : vector<1x198x20xbf16> to vector<1x168x20xbf16>
    %36 = vector.extract_strided_slice %32 {offsets = [0, 14, 0], sizes = [1, 168, 20], strides = [1, 1, 1]} : vector<1x198x20xbf16> to vector<1x168x20xbf16>
    %37 = vector.extract_strided_slice %32 {offsets = [0, 15, 0], sizes = [1, 168, 20], strides = [1, 1, 1]} : vector<1x198x20xbf16> to vector<1x168x20xbf16>
    %38 = vector.extract_strided_slice %32 {offsets = [0, 16, 0], sizes = [1, 168, 20], strides = [1, 1, 1]} : vector<1x198x20xbf16> to vector<1x168x20xbf16>
    %39 = vector.extract_strided_slice %32 {offsets = [0, 28, 0], sizes = [1, 168, 20], strides = [1, 1, 1]} : vector<1x198x20xbf16> to vector<1x168x20xbf16>
    %40 = vector.extract_strided_slice %32 {offsets = [0, 29, 0], sizes = [1, 168, 20], strides = [1, 1, 1]} : vector<1x198x20xbf16> to vector<1x168x20xbf16>
    %41 = vector.extract_strided_slice %32 {offsets = [0, 30, 0], sizes = [1, 168, 20], strides = [1, 1, 1]} : vector<1x198x20xbf16> to vector<1x168x20xbf16>
    %c0_8 = arith.constant 0 : index
    %c0_9 = arith.constant 0 : index
    %42 = vector.load %arg4[%c0_8, %c0_9] : memref<180x128xbf16, #tpu.memory_space<vmem>>, vector<180x128xbf16>
    %c0_10 = arith.constant 0 : index
    %c0_11 = arith.constant 0 : index
    %43 = vector.load %arg5[%c0_10, %c0_11] : memref<1x128xf32, #tpu.memory_space<vmem>>, vector<1x128xf32>
    %44 = tpu.concatenate %33, %34, %35, %36, %37, %38, %39, %40, %41 in 2 : vector<1x168x20xbf16>, vector<1x168x20xbf16>, vector<1x168x20xbf16>, vector<1x168x20xbf16>, vector<1x168x20xbf16>, vector<1x168x20xbf16>, vector<1x168x20xbf16>, vector<1x168x20xbf16>, vector<1x168x20xbf16> -> vector<1x168x180xbf16>
    %45 = vector.shape_cast %44 : vector<1x168x180xbf16> to vector<168x180xbf16>
    %cst_12 = arith.constant dense<0.000000e+00> : vector<168x128xf32>
    %46 = tpu.matmul %45, %42, %cst_12 {dimension_numbers = #tpu.dot_dimension_numbers<[1], [0], [0], [1], [0, 0, 1, 1], [], []>} : vector<168x180xbf16>, vector<180x128xbf16>, vector<168x128xf32> -> vector<168x128xf32>
    %47 = vector.shape_cast %46 : vector<168x128xf32> to vector<1x6x2x14x128xf32>
    %48 = vector.extract_strided_slice %47 {offsets = [0, 0, 0, 0, 0], sizes = [1, 6, 1, 14, 128], strides = [1, 1, 1, 1, 1]} : vector<1x6x2x14x128xf32> to vector<1x6x1x14x128xf32>
    %49 = vector.shape_cast %48 : vector<1x6x1x14x128xf32> to vector<1x6x14x128xf32>
    %50 = vector.extract_strided_slice %47 {offsets = [0, 0, 1, 0, 0], sizes = [1, 6, 1, 14, 128], strides = [1, 1, 1, 1, 1]} : vector<1x6x2x14x128xf32> to vector<1x6x1x14x128xf32>
    %51 = vector.shape_cast %50 : vector<1x6x1x14x128xf32> to vector<1x6x14x128xf32>
    %52 = arith.maximumf %49, %51 : vector<1x6x14x128xf32>
    %53 = vector.extract_strided_slice %52 {offsets = [0, 0, 0, 0], sizes = [1, 6, 12, 128], strides = [1, 1, 1, 1]} : vector<1x6x14x128xf32> to vector<1x6x12x128xf32>
    %54 = vector.shape_cast %53 : vector<1x6x12x128xf32> to vector<1x6x6x2x128xf32>
    %55 = vector.extract_strided_slice %54 {offsets = [0, 0, 0, 0, 0], sizes = [1, 6, 6, 1, 128], strides = [1, 1, 1, 1, 1]} : vector<1x6x6x2x128xf32> to vector<1x6x6x1x128xf32>
    %56 = vector.shape_cast %55 : vector<1x6x6x1x128xf32> to vector<1x6x6x128xf32>
    %57 = vector.extract_strided_slice %54 {offsets = [0, 0, 0, 1, 0], sizes = [1, 6, 6, 1, 128], strides = [1, 1, 1, 1, 1]} : vector<1x6x6x2x128xf32> to vector<1x6x6x1x128xf32>
    %58 = vector.shape_cast %57 : vector<1x6x6x1x128xf32> to vector<1x6x6x128xf32>
    %59 = arith.maximumf %56, %58 : vector<1x6x6x128xf32>
    %60 = vector.shape_cast %43 : vector<1x128xf32> to vector<1x1x1x128xf32>
    %61 = vector.broadcast %60 : vector<1x1x1x128xf32> to vector<1x6x6x128xf32>
    %62 = arith.addf %59, %61 : vector<1x6x6x128xf32>
    %cst_13 = arith.constant 0.000000e+00 : f32
    %63 = vector.broadcast %cst_13 : f32 to vector<1x6x6x128xf32>
    %64 = arith.maximumf %62, %63 : vector<1x6x6x128xf32>
    %65 = vector.shape_cast %64 : vector<1x6x6x128xf32> to vector<1x36x128xf32>
    %66 = arith.truncf %65 : vector<1x36x128xf32> to vector<1x36x128xbf16>
    %cst_14 = arith.constant 0.000000e+00 : bf16
    %67 = vector.broadcast %cst_14 : bf16 to vector<1x2x128xbf16>
    %68 = tpu.concatenate %66, %67 in 1 : vector<1x36x128xbf16>, vector<1x2x128xbf16> -> vector<1x38x128xbf16>
    %69 = vector.extract_strided_slice %68 {offsets = [0, 0, 0], sizes = [1, 24, 128], strides = [1, 1, 1]} : vector<1x38x128xbf16> to vector<1x24x128xbf16>
    %70 = vector.extract_strided_slice %68 {offsets = [0, 1, 0], sizes = [1, 24, 128], strides = [1, 1, 1]} : vector<1x38x128xbf16> to vector<1x24x128xbf16>
    %71 = vector.extract_strided_slice %68 {offsets = [0, 2, 0], sizes = [1, 24, 128], strides = [1, 1, 1]} : vector<1x38x128xbf16> to vector<1x24x128xbf16>
    %72 = vector.extract_strided_slice %68 {offsets = [0, 6, 0], sizes = [1, 24, 128], strides = [1, 1, 1]} : vector<1x38x128xbf16> to vector<1x24x128xbf16>
    %73 = vector.extract_strided_slice %68 {offsets = [0, 7, 0], sizes = [1, 24, 128], strides = [1, 1, 1]} : vector<1x38x128xbf16> to vector<1x24x128xbf16>
    %74 = vector.extract_strided_slice %68 {offsets = [0, 8, 0], sizes = [1, 24, 128], strides = [1, 1, 1]} : vector<1x38x128xbf16> to vector<1x24x128xbf16>
    %75 = vector.extract_strided_slice %68 {offsets = [0, 12, 0], sizes = [1, 24, 128], strides = [1, 1, 1]} : vector<1x38x128xbf16> to vector<1x24x128xbf16>
    %76 = vector.extract_strided_slice %68 {offsets = [0, 13, 0], sizes = [1, 24, 128], strides = [1, 1, 1]} : vector<1x38x128xbf16> to vector<1x24x128xbf16>
    %77 = vector.extract_strided_slice %68 {offsets = [0, 14, 0], sizes = [1, 24, 128], strides = [1, 1, 1]} : vector<1x38x128xbf16> to vector<1x24x128xbf16>
    %c0_15 = arith.constant 0 : index
    %c0_16 = arith.constant 0 : index
    %78 = vector.load %arg6[%c0_15, %c0_16] : memref<1152x512xbf16, #tpu.memory_space<vmem>>, vector<1152x512xbf16>
    %c0_17 = arith.constant 0 : index
    %c0_18 = arith.constant 0 : index
    %79 = vector.load %arg7[%c0_17, %c0_18] : memref<1x512xf32, #tpu.memory_space<vmem>>, vector<1x512xf32>
    %80 = tpu.concatenate %69, %70, %71, %72, %73, %74, %75, %76, %77 in 2 : vector<1x24x128xbf16>, vector<1x24x128xbf16>, vector<1x24x128xbf16>, vector<1x24x128xbf16>, vector<1x24x128xbf16>, vector<1x24x128xbf16>, vector<1x24x128xbf16>, vector<1x24x128xbf16>, vector<1x24x128xbf16> -> vector<1x24x1152xbf16>
    %81 = vector.shape_cast %80 : vector<1x24x1152xbf16> to vector<24x1152xbf16>
    %cst_19 = arith.constant dense<0.000000e+00> : vector<24x512xf32>
    %82 = tpu.matmul %81, %78, %cst_19 {dimension_numbers = #tpu.dot_dimension_numbers<[1], [0], [0], [1], [0, 0, 1, 1], [], []>} : vector<24x1152xbf16>, vector<1152x512xbf16>, vector<24x512xf32> -> vector<24x512xf32>
    %83 = vector.shape_cast %82 : vector<24x512xf32> to vector<1x2x2x6x512xf32>
    %84 = vector.extract_strided_slice %83 {offsets = [0, 0, 0, 0, 0], sizes = [1, 2, 1, 6, 512], strides = [1, 1, 1, 1, 1]} : vector<1x2x2x6x512xf32> to vector<1x2x1x6x512xf32>
    %85 = vector.shape_cast %84 : vector<1x2x1x6x512xf32> to vector<1x2x6x512xf32>
    %86 = vector.extract_strided_slice %83 {offsets = [0, 0, 1, 0, 0], sizes = [1, 2, 1, 6, 512], strides = [1, 1, 1, 1, 1]} : vector<1x2x2x6x512xf32> to vector<1x2x1x6x512xf32>
    %87 = vector.shape_cast %86 : vector<1x2x1x6x512xf32> to vector<1x2x6x512xf32>
    %88 = arith.maximumf %85, %87 : vector<1x2x6x512xf32>
    %89 = vector.extract_strided_slice %88 {offsets = [0, 0, 0, 0], sizes = [1, 2, 4, 512], strides = [1, 1, 1, 1]} : vector<1x2x6x512xf32> to vector<1x2x4x512xf32>
    %90 = vector.shape_cast %89 : vector<1x2x4x512xf32> to vector<1x2x2x2x512xf32>
    %91 = vector.extract_strided_slice %90 {offsets = [0, 0, 0, 0, 0], sizes = [1, 2, 2, 1, 512], strides = [1, 1, 1, 1, 1]} : vector<1x2x2x2x512xf32> to vector<1x2x2x1x512xf32>
    %92 = vector.shape_cast %91 : vector<1x2x2x1x512xf32> to vector<1x2x2x512xf32>
    %93 = vector.extract_strided_slice %90 {offsets = [0, 0, 0, 1, 0], sizes = [1, 2, 2, 1, 512], strides = [1, 1, 1, 1, 1]} : vector<1x2x2x2x512xf32> to vector<1x2x2x1x512xf32>
    %94 = vector.shape_cast %93 : vector<1x2x2x1x512xf32> to vector<1x2x2x512xf32>
    %95 = arith.maximumf %92, %94 : vector<1x2x2x512xf32>
    %96 = vector.shape_cast %79 : vector<1x512xf32> to vector<1x1x1x512xf32>
    %97 = vector.broadcast %96 : vector<1x1x1x512xf32> to vector<1x2x2x512xf32>
    %98 = arith.addf %95, %97 : vector<1x2x2x512xf32>
    %cst_20 = arith.constant 0.000000e+00 : f32
    %99 = vector.broadcast %cst_20 : f32 to vector<1x2x2x512xf32>
    %100 = arith.maximumf %98, %99 : vector<1x2x2x512xf32>
    %101 = vector.shape_cast %100 : vector<1x2x2x512xf32> to vector<1x4x512xf32>
    %102 = arith.truncf %101 : vector<1x4x512xf32> to vector<1x4x512xbf16>
    %cst_21 = arith.constant 0.000000e+00 : f32
    %103 = vector.broadcast %cst_21 : f32 to vector<1x128xf32>
    %104 = vector.extract_strided_slice %102 {offsets = [0, 0, 0], sizes = [1, 1, 512], strides = [1, 1, 1]} : vector<1x4x512xbf16> to vector<1x1x512xbf16>
    %105 = vector.shape_cast %104 : vector<1x1x512xbf16> to vector<1x512xbf16>
    %c0_22 = arith.constant 0 : index
    %c0_23 = arith.constant 0 : index
    %c0_24 = arith.constant 0 : index
    %106 = vector.load %arg8[%c0_22, %c0_23, %c0_24] : memref<4x512x128xbf16, #tpu.memory_space<vmem>>, vector<1x512x128xbf16>
    %107 = vector.shape_cast %106 : vector<1x512x128xbf16> to vector<512x128xbf16>
    %cst_25 = arith.constant dense<0.000000e+00> : vector<1x128xf32>
    %108 = tpu.matmul %105, %107, %cst_25 {dimension_numbers = #tpu.dot_dimension_numbers<[1], [0], [0], [1], [0, 0, 1, 1], [], []>} : vector<1x512xbf16>, vector<512x128xbf16>, vector<1x128xf32> -> vector<1x128xf32>
    %109 = arith.addf %103, %108 : vector<1x128xf32>
    %110 = vector.extract_strided_slice %102 {offsets = [0, 1, 0], sizes = [1, 1, 512], strides = [1, 1, 1]} : vector<1x4x512xbf16> to vector<1x1x512xbf16>
    %111 = vector.shape_cast %110 : vector<1x1x512xbf16> to vector<1x512xbf16>
    %c1 = arith.constant 1 : index
    %c0_26 = arith.constant 0 : index
    %c0_27 = arith.constant 0 : index
    %112 = vector.load %arg8[%c1, %c0_26, %c0_27] : memref<4x512x128xbf16, #tpu.memory_space<vmem>>, vector<1x512x128xbf16>
    %113 = vector.shape_cast %112 : vector<1x512x128xbf16> to vector<512x128xbf16>
    %cst_28 = arith.constant dense<0.000000e+00> : vector<1x128xf32>
    %114 = tpu.matmul %111, %113, %cst_28 {dimension_numbers = #tpu.dot_dimension_numbers<[1], [0], [0], [1], [0, 0, 1, 1], [], []>} : vector<1x512xbf16>, vector<512x128xbf16>, vector<1x128xf32> -> vector<1x128xf32>
    %115 = arith.addf %109, %114 : vector<1x128xf32>
    %116 = vector.extract_strided_slice %102 {offsets = [0, 2, 0], sizes = [1, 1, 512], strides = [1, 1, 1]} : vector<1x4x512xbf16> to vector<1x1x512xbf16>
    %117 = vector.shape_cast %116 : vector<1x1x512xbf16> to vector<1x512xbf16>
    %c2 = arith.constant 2 : index
    %c0_29 = arith.constant 0 : index
    %c0_30 = arith.constant 0 : index
    %118 = vector.load %arg8[%c2, %c0_29, %c0_30] : memref<4x512x128xbf16, #tpu.memory_space<vmem>>, vector<1x512x128xbf16>
    %119 = vector.shape_cast %118 : vector<1x512x128xbf16> to vector<512x128xbf16>
    %cst_31 = arith.constant dense<0.000000e+00> : vector<1x128xf32>
    %120 = tpu.matmul %117, %119, %cst_31 {dimension_numbers = #tpu.dot_dimension_numbers<[1], [0], [0], [1], [0, 0, 1, 1], [], []>} : vector<1x512xbf16>, vector<512x128xbf16>, vector<1x128xf32> -> vector<1x128xf32>
    %121 = arith.addf %115, %120 : vector<1x128xf32>
    %122 = vector.extract_strided_slice %102 {offsets = [0, 3, 0], sizes = [1, 1, 512], strides = [1, 1, 1]} : vector<1x4x512xbf16> to vector<1x1x512xbf16>
    %123 = vector.shape_cast %122 : vector<1x1x512xbf16> to vector<1x512xbf16>
    %c3 = arith.constant 3 : index
    %c0_32 = arith.constant 0 : index
    %c0_33 = arith.constant 0 : index
    %124 = vector.load %arg8[%c3, %c0_32, %c0_33] : memref<4x512x128xbf16, #tpu.memory_space<vmem>>, vector<1x512x128xbf16>
    %125 = vector.shape_cast %124 : vector<1x512x128xbf16> to vector<512x128xbf16>
    %cst_34 = arith.constant dense<0.000000e+00> : vector<1x128xf32>
    %126 = tpu.matmul %123, %125, %cst_34 {dimension_numbers = #tpu.dot_dimension_numbers<[1], [0], [0], [1], [0, 0, 1, 1], [], []>} : vector<1x512xbf16>, vector<512x128xbf16>, vector<1x128xf32> -> vector<1x128xf32>
    %127 = arith.addf %121, %126 : vector<1x128xf32>
    %c0_35 = arith.constant 0 : index
    %c0_36 = arith.constant 0 : index
    %128 = vector.load %arg9[%c0_35, %c0_36] : memref<1x128xf32, #tpu.memory_space<vmem>>, vector<1x128xf32>
    %129 = arith.addf %127, %128 : vector<1x128xf32>
    %cst_37 = arith.constant 0.000000e+00 : f32
    %130 = vector.broadcast %cst_37 : f32 to vector<1x128xf32>
    %131 = arith.maximumf %129, %130 : vector<1x128xf32>
    %132 = arith.truncf %131 : vector<1x128xf32> to vector<1x128xbf16>
    %c0_38 = arith.constant 0 : index
    %c0_39 = arith.constant 0 : index
    %133 = vector.load %arg10[%c0_38, %c0_39] : memref<128x64xbf16, #tpu.memory_space<vmem>>, vector<128x64xbf16>
    %cst_40 = arith.constant dense<0.000000e+00> : vector<1x64xf32>
    %134 = tpu.matmul %132, %133, %cst_40 {dimension_numbers = #tpu.dot_dimension_numbers<[1], [0], [0], [1], [0, 0, 1, 1], [], []>} : vector<1x128xbf16>, vector<128x64xbf16>, vector<1x64xf32> -> vector<1x64xf32>
    %c0_41 = arith.constant 0 : index
    %c0_42 = arith.constant 0 : index
    %135 = vector.load %arg11[%c0_41, %c0_42] : memref<1x64xf32, #tpu.memory_space<vmem>>, vector<1x64xf32>
    %136 = arith.addf %134, %135 : vector<1x64xf32>
    %cst_43 = arith.constant 0.000000e+00 : f32
    %137 = vector.broadcast %cst_43 : f32 to vector<1x64xf32>
    %138 = arith.maximumf %136, %137 : vector<1x64xf32>
    %139 = arith.truncf %138 : vector<1x64xf32> to vector<1x64xbf16>
    %c0_44 = arith.constant 0 : index
    %c0_45 = arith.constant 0 : index
    %140 = vector.load %arg12[%c0_44, %c0_45] : memref<64x10xbf16, #tpu.memory_space<vmem>>, vector<64x10xbf16>
    %cst_46 = arith.constant dense<0.000000e+00> : vector<1x10xf32>
    %141 = tpu.matmul %139, %140, %cst_46 {dimension_numbers = #tpu.dot_dimension_numbers<[1], [0], [0], [1], [0, 0, 1, 1], [], []>} : vector<1x64xbf16>, vector<64x10xbf16>, vector<1x10xf32> -> vector<1x10xf32>
    %c0_47 = arith.constant 0 : index
    %c0_48 = arith.constant 0 : index
    %142 = vector.load %arg13[%c0_47, %c0_48] : memref<1x10xf32, #tpu.memory_space<vmem>>, vector<1x10xf32>
    %143 = arith.addf %141, %142 : vector<1x10xf32>
    %cst_49 = arith.constant dense<0xFF800000> : vector<1xf32>
    %144 = vector.multi_reduction <maximumf>, %143, %cst_49 [1] : vector<1x10xf32> to vector<1xf32>
    %145 = vector.shape_cast %144 : vector<1xf32> to vector<1x1xf32>
    %146 = vector.broadcast %145 : vector<1x1xf32> to vector<1x10xf32>
    %147 = arith.subf %143, %146 : vector<1x10xf32>
    %148 = math.exp %147 : vector<1x10xf32>
    %cst_50 = arith.constant dense<0.000000e+00> : vector<1xf32>
    %149 = vector.multi_reduction <add>, %148, %cst_50 [1] : vector<1x10xf32> to vector<1xf32>
    %150 = vector.shape_cast %149 : vector<1xf32> to vector<1x1xf32>
    %151 = math.log %150 : vector<1x1xf32>
    %152 = vector.broadcast %151 : vector<1x1xf32> to vector<1x10xf32>
    %153 = arith.subf %147, %152 : vector<1x10xf32>
    %c0_51 = arith.constant 0 : index
    %c0_52 = arith.constant 0 : index
    %c0_53 = arith.constant 0 : index
    %154 = vector.load %arg14[%c0_51, %c0_52, %c0_53] : memref<1x1x10xf32, #tpu.memory_space<vmem>>, vector<1x1x10xf32>
    %155 = vector.shape_cast %154 : vector<1x1x10xf32> to vector<1x10xf32>
    %156 = vector.shape_cast %153 : vector<1x10xf32> to vector<1x1x10xf32>
    tpu.vector_store %arg14[%c0_51, %c0_52, %c0_53], %156 {strides = array<i32>} : memref<1x1x10xf32, #tpu.memory_space<vmem>>, vector<1x1x10xf32>,
    return
  }
  func.func @transform_0(%arg0: i32) -> (i32, i32, i32) {
    %c0_i32 = arith.constant 0 : i32
    %c0_i32_0 = arith.constant 0 : i32
    %c0_i32_1 = arith.constant 0 : i32
    return %arg0, %c0_i32, %c0_i32_0 : i32, i32, i32
  }
  func.func @transform_1(%arg0: i32) -> (i32, i32) {
    %c0_i32 = arith.constant 0 : i32
    %c0_i32_0 = arith.constant 0 : i32
    %c0_i32_1 = arith.constant 0 : i32
    return %c0_i32, %c0_i32_0 : i32, i32
  }
  func.func @transform_2(%arg0: i32) -> (i32, i32) {
    %c0_i32 = arith.constant 0 : i32
    %c0_i32_0 = arith.constant 0 : i32
    %c0_i32_1 = arith.constant 0 : i32
    return %c0_i32, %c0_i32_0 : i32, i32
  }
  func.func @transform_3(%arg0: i32) -> (i32, i32) {
    %c0_i32 = arith.constant 0 : i32
    %c0_i32_0 = arith.constant 0 : i32
    %c0_i32_1 = arith.constant 0 : i32
    return %c0_i32, %c0_i32_0 : i32, i32
  }
  func.func @transform_4(%arg0: i32) -> (i32, i32) {
    %c0_i32 = arith.constant 0 : i32
    %c0_i32_0 = arith.constant 0 : i32
    %c0_i32_1 = arith.constant 0 : i32
    return %c0_i32, %c0_i32_0 : i32, i32
  }
  func.func @transform_5(%arg0: i32) -> (i32, i32) {
    %c0_i32 = arith.constant 0 : i32
    %c0_i32_0 = arith.constant 0 : i32
    %c0_i32_1 = arith.constant 0 : i32
    return %c0_i32, %c0_i32_0 : i32, i32
  }
  func.func @transform_6(%arg0: i32) -> (i32, i32) {
    %c0_i32 = arith.constant 0 : i32
    %c0_i32_0 = arith.constant 0 : i32
    %c0_i32_1 = arith.constant 0 : i32
    return %c0_i32, %c0_i32_0 : i32, i32
  }
  func.func @transform_7(%arg0: i32) -> (i32, i32, i32) {
    %c0_i32 = arith.constant 0 : i32
    %c0_i32_0 = arith.constant 0 : i32
    %c0_i32_1 = arith.constant 0 : i32
    %c0_i32_2 = arith.constant 0 : i32
    return %c0_i32, %c0_i32_0, %c0_i32_1 : i32, i32, i32
  }
  func.func @transform_8(%arg0: i32) -> (i32, i32) {
    %c0_i32 = arith.constant 0 : i32
    %c0_i32_0 = arith.constant 0 : i32
    %c0_i32_1 = arith.constant 0 : i32
    return %c0_i32, %c0_i32_0 : i32, i32
  }
  func.func @transform_9(%arg0: i32) -> (i32, i32) {
    %c0_i32 = arith.constant 0 : i32
    %c0_i32_0 = arith.constant 0 : i32
    %c0_i32_1 = arith.constant 0 : i32
    return %c0_i32, %c0_i32_0 : i32, i32
  }
  func.func @transform_10(%arg0: i32) -> (i32, i32) {
    %c0_i32 = arith.constant 0 : i32
    %c0_i32_0 = arith.constant 0 : i32
    %c0_i32_1 = arith.constant 0 : i32
    return %c0_i32, %c0_i32_0 : i32, i32
  }
  func.func @transform_11(%arg0: i32) -> (i32, i32) {
    %c0_i32 = arith.constant 0 : i32
    %c0_i32_0 = arith.constant 0 : i32
    %c0_i32_1 = arith.constant 0 : i32
    return %c0_i32, %c0_i32_0 : i32, i32
  }
  func.func @transform_12(%arg0: i32) -> (i32, i32) {
    %c0_i32 = arith.constant 0 : i32
    %c0_i32_0 = arith.constant 0 : i32
    %c0_i32_1 = arith.constant 0 : i32
    return %c0_i32, %c0_i32_0 : i32, i32
  }
  func.func @transform_13(%arg0: i32) -> (i32, i32, i32) {
    %c0_i32 = arith.constant 0 : i32
    %c0_i32_0 = arith.constant 0 : i32
    %c0_i32_1 = arith.constant 0 : i32
    return %arg0, %c0_i32, %c0_i32_0 : i32, i32, i32
  }
}

</mosaic_0001>

<llo_original>
// kernel: cnn_forward.1
$region0: #{cnn_forward.1}
  #allocation0 [shape = 'u32[]', space=smem, size = 0x4, offset = 0x4, fixed_abs, tag = 'smem constant byte address 0x4 - core index']
  #allocation1 [shape = 'u32[144,128]{1,0:T(1,128)}', space=vmem, size = 0x12000, scoped, tag = 'internal scratch']
  %s0 = inlined_call_operand.vmem [shape: bf16[2,1024,15], index: 0, kind: input, shape index: {}]
  %s1 = inlined_call_operand.vmem [shape: bf16[75,20], index: 1, kind: input, shape index: {}]
  %s2 = inlined_call_operand.vmem [shape: f32[1,20], index: 2, kind: input, shape index: {}]
  %s3 = inlined_call_operand.vmem [shape: bf16[180,128], index: 3, kind: input, shape index: {}]
  %s4 = inlined_call_operand.vmem [shape: f32[1,128], index: 4, kind: input, shape index: {}]
  %s5 = inlined_call_operand.vmem [shape: bf16[1152,512], index: 5, kind: input, shape index: {}]
  %s6 = inlined_call_operand.vmem [shape: f32[1,512], index: 6, kind: input, shape index: {}]
  %s7 = inlined_call_operand.vmem [shape: bf16[4,512,128], index: 7, kind: input, shape index: {}]
  %s8 = inlined_call_operand.vmem [shape: f32[1,128], index: 8, kind: input, shape index: {}]
  %s9 = inlined_call_operand.vmem [shape: bf16[128,64], index: 9, kind: input, shape index: {}]
  %s10 = inlined_call_operand.vmem [shape: f32[1,64], index: 10, kind: input, shape index: {}]
  %s11 = inlined_call_operand.vmem [shape: bf16[64,10], index: 11, kind: input, shape index: {}]
  %s12 = inlined_call_operand.vmem [shape: f32[1,10], index: 12, kind: input, shape index: {}]
  %s13 = inlined_call_operand.hbm [shape: f32[2,1,10], index: 13, kind: output, shape index: {}]
  %s14 = sld [smem:[#allocation0]]
  $region85: #{cnn_forward.1} parent=0
    _
  %s16 = ssub.s32 1, %s14
  %s17 = scalar_select 0, %s16, %s14
  $region1: #{cnn_forward.1} parent=0
    #allocation2 [shape = 'u8[1024]{0}', space=vmem, size = 0x400, scoped, tag = 'output window, operand 0']
    #allocation3 [shape = 's32[2]{0}', space=sflag, size = 0x8, scoped, tag = 'scoped memory for cnn_forward.1']
    %18 = vsyncpa [#allocation3], 0
    %s19 = scalar_lea.sflag [#allocation3], 1
    %20 = vsyncpa %s19, 0
    loop: start=0, step=1, limit=4
    $region2: #{cnn_forward.1} parent=1 // loop_pre_header
      _
    $region3: #{cnn_forward.1} parent=1 // loop_header
      %s22 = sphi 0, %s26
      %p23 = scmp.ge.s32.totalorder %s22, 4
      %s32 = sphi 0, %s34
      %s35 = sphi 0, %s32
      %s36 = sphi 0, %s35
      %s52 = sphi 0, %s36
      %s56 = sphi 0, %s56
      %s58 = sphi 0, %s56
      %s59 = sphi 0, %s58
      %s73 = sphi 0, %s59
      %s77 = sphi 0, %s77
      %s79 = sphi 0, %s77
      %s80 = sphi 0, %s79
      %s94 = sphi 0, %s80
      %s98 = sphi 0, %s98
      %s100 = sphi 0, %s98
      %s101 = sphi 0, %s100
      %s115 = sphi 0, %s101
      %s119 = sphi 0, %s119
      %s121 = sphi 0, %s119
      %s122 = sphi 0, %s121
      %s136 = sphi 0, %s122
      %s140 = sphi 0, %s140
      %s142 = sphi 0, %s140
      %s143 = sphi 0, %s142
      %s157 = sphi 0, %s143
      %s161 = sphi 0, %s161
      %s163 = sphi 0, %s161
      %s164 = sphi 0, %s163
      %s178 = sphi 0, %s164
      %s182 = sphi 0, %s182
      %s184 = sphi 0, %s182
      %s185 = sphi 0, %s184
      %s199 = sphi 0, %s185
      %s203 = sphi 0, %s203
      %s205 = sphi 0, %s203
      %s206 = sphi 0, %s205
      %s220 = sphi 0, %s206
      %s224 = sphi 0, %s224
      %s226 = sphi 0, %s224
      %s227 = sphi 0, %s226
      %s241 = sphi 0, %s227
      %s245 = sphi 0, %s245
      %s247 = sphi 0, %s245
      %s248 = sphi 0, %s247
      %s262 = sphi 0, %s248
      %s266 = sphi 0, %s266
      %s268 = sphi 0, %s266
      %s269 = sphi 0, %s268
      %s283 = sphi 0, %s269
      %s287 = sphi 0, %s287
      %s289 = sphi 0, %s287
      %s290 = sphi 0, %s289
      %s304 = sphi 0, %s290
      %s310 = sphi 0, %s312
      %s313 = sphi 0, %s310
      %s314 = sphi 0, %s313
      %s330 = sphi 0, %s314
    $region4: #{cnn_forward.1} parent=1 // loop_header_branch
      %25 = sbr.rel (%p23) target = $region8
    $region5: #{cnn_forward.1} parent=1 // loop_body
      %s27 = ssub.s32 %s22, 1
      %s28 = ssub.s32 %s22, 2
      %s29 = sadd.s32 %s22, 1
      %s30 = ssub.s32 %s22, %s29
      %p31 = scmp.eq.s32.totalorder %s30, 0
      %s33 = sadd.s32 %s32, 1
      %s34 = scalar_select %p31, %s32, %s33
      %p37 = pneg %p31
      %p38 = scmp.eq.s32.totalorder %s22, 1
      %p39 = por %p37, %p38
      %p40 = scmp.ne.s32.totalorder %s32, %s35
      %p41 = scmp.eq.s32.totalorder %s22, 0
      %p42 = por %p40, %p41
      %p43 = scmp.ne.s32.totalorder %s32, %s35
      %p44 = scmp.eq.s32.totalorder %s27, 1
      %p45 = por %p43, %p44
      %p46 = scmp.ne.s32.totalorder %s35, %s36
      %p47 = scmp.eq.s32.totalorder %s27, 0
      %p48 = por %p46, %p47
      %p49 = scmp.ne.s32.totalorder %s35, %s36
      %p50 = scmp.eq.s32.totalorder %s28, 1
      %p51 = por %p49, %p50
      %p53 = scmp.ne.s32.totalorder %s36, %s52
      %p54 = scmp.eq.s32.totalorder %s28, 0
      %p55 = por %p53, %p54
      %s57 = sadd.s32 %s56, 1
      %p60 = scmp.eq.s32.totalorder %s22, 1
      %p61 = scmp.ne.s32.totalorder %s56, %s58
      %p62 = scmp.eq.s32.totalorder %s22, 0
      %p63 = por %p61, %p62
      %p64 = scmp.ne.s32.totalorder %s56, %s58
      %p65 = scmp.eq.s32.totalorder %s27, 1
      %p66 = por %p64, %p65
      %p67 = scmp.ne.s32.totalorder %s58, %s59
      %p68 = scmp.eq.s32.totalorder %s27, 0
      %p69 = por %p67, %p68
      %p70 = scmp.ne.s32.totalorder %s58, %s59
      %p71 = scmp.eq.s32.totalorder %s28, 1
      %p72 = por %p70, %p71
      %p74 = scmp.ne.s32.totalorder %s59, %s73
      %p75 = scmp.eq.s32.totalorder %s28, 0
      %p76 = por %p74, %p75
      %s78 = sadd.s32 %s77, 1
      %p81 = scmp.eq.s32.totalorder %s22, 1
      %p82 = scmp.ne.s32.totalorder %s77, %s79
      %p83 = scmp.eq.s32.totalorder %s22, 0
      %p84 = por %p82, %p83
      %p85 = scmp.ne.s32.totalorder %s77, %s79
      %p86 = scmp.eq.s32.totalorder %s27, 1
      %p87 = por %p85, %p86
      %p88 = scmp.ne.s32.totalorder %s79, %s80
      %p89 = scmp.eq.s32.totalorder %s27, 0
      %p90 = por %p88, %p89
      %p91 = scmp.ne.s32.totalorder %s79, %s80
      %p92 = scmp.eq.s32.totalorder %s28, 1
      %p93 = por %p91, %p92
      %p95 = scmp.ne.s32.totalorder %s80, %s94
      %p96 = scmp.eq.s32.totalorder %s28, 0
      %p97 = por %p95, %p96
      %s99 = sadd.s32 %s98, 1
      %p102 = scmp.eq.s32.totalorder %s22, 1
      %p103 = scmp.ne.s32.totalorder %s98, %s100
      %p104 = scmp.eq.s32.totalorder %s22, 0
      %p105 = por %p103, %p104
      %p106 = scmp.ne.s32.totalorder %s98, %s100
      %p107 = scmp.eq.s32.totalorder %s27, 1
      %p108 = por %p106, %p107
      %p109 = scmp.ne.s32.totalorder %s100, %s101
      %p110 = scmp.eq.s32.totalorder %s27, 0
      %p111 = por %p109, %p110
      %p112 = scmp.ne.s32.totalorder %s100, %s101
      %p113 = scmp.eq.s32.totalorder %s28, 1
      %p114 = por %p112, %p113
      %p116 = scmp.ne.s32.totalorder %s101, %s115
      %p117 = scmp.eq.s32.totalorder %s28, 0
      %p118 = por %p116, %p117
      %s120 = sadd.s32 %s119, 1
      %p123 = scmp.eq.s32.totalorder %s22, 1
      %p124 = scmp.ne.s32.totalorder %s119, %s121
      %p125 = scmp.eq.s32.totalorder %s22, 0
      %p126 = por %p124, %p125
      %p127 = scmp.ne.s32.totalorder %s119, %s121
      %p128 = scmp.eq.s32.totalorder %s27, 1
      %p129 = por %p127, %p128
      %p130 = scmp.ne.s32.totalorder %s121, %s122
      %p131 = scmp.eq.s32.totalorder %s27, 0
      %p132 = por %p130, %p131
      %p133 = scmp.ne.s32.totalorder %s121, %s122
      %p134 = scmp.eq.s32.totalorder %s28, 1
      %p135 = por %p133, %p134
      %p137 = scmp.ne.s32.totalorder %s122, %s136
      %p138 = scmp.eq.s32.totalorder %s28, 0
      %p139 = por %p137, %p138
      %s141 = sadd.s32 %s140, 1
      %p144 = scmp.eq.s32.totalorder %s22, 1
      %p145 = scmp.ne.s32.totalorder %s140, %s142
      %p146 = scmp.eq.s32.totalorder %s22, 0
      %p147 = por %p145, %p146
      %p148 = scmp.ne.s32.totalorder %s140, %s142
      %p149 = scmp.eq.s32.totalorder %s27, 1
      %p150 = por %p148, %p149
      %p151 = scmp.ne.s32.totalorder %s142, %s143
      %p152 = scmp.eq.s32.totalorder %s27, 0
      %p153 = por %p151, %p152
      %p154 = scmp.ne.s32.totalorder %s142, %s143
      %p155 = scmp.eq.s32.totalorder %s28, 1
      %p156 = por %p154, %p155
      %p158 = scmp.ne.s32.totalorder %s143, %s157
      %p159 = scmp.eq.s32.totalorder %s28, 0
      %p160 = por %p158, %p159
      %s162 = sadd.s32 %s161, 1
      %p165 = scmp.eq.s32.totalorder %s22, 1
      %p166 = scmp.ne.s32.totalorder %s161, %s163
      %p167 = scmp.eq.s32.totalorder %s22, 0
      %p168 = por %p166, %p167
      %p169 = scmp.ne.s32.totalorder %s161, %s163
      %p170 = scmp.eq.s32.totalorder %s27, 1
      %p171 = por %p169, %p170
      %p172 = scmp.ne.s32.totalorder %s163, %s164
      %p173 = scmp.eq.s32.totalorder %s27, 0
      %p174 = por %p172, %p173
      %p175 = scmp.ne.s32.totalorder %s163, %s164
      %p176 = scmp.eq.s32.totalorder %s28, 1
      %p177 = por %p175, %p176
      %p179 = scmp.ne.s32.totalorder %s164, %s178
      %p180 = scmp.eq.s32.totalorder %s28, 0
      %p181 = por %p179, %p180
      %s183 = sadd.s32 %s182, 1
      %p186 = scmp.eq.s32.totalorder %s22, 1
      %p187 = scmp.ne.s32.totalorder %s182, %s184
      %p188 = scmp.eq.s32.totalorder %s22, 0
      %p189 = por %p187, %p188
      %p190 = scmp.ne.s32.totalorder %s182, %s184
      %p191 = scmp.eq.s32.totalorder %s27, 1
      %p192 = por %p190, %p191
      %p193 = scmp.ne.s32.totalorder %s184, %s185
      %p194 = scmp.eq.s32.totalorder %s27, 0
      %p195 = por %p193, %p194
      %p196 = scmp.ne.s32.totalorder %s184, %s185
      %p197 = scmp.eq.s32.totalorder %s28, 1
      %p198 = por %p196, %p197
      %p200 = scmp.ne.s32.totalorder %s185, %s199
      %p201 = scmp.eq.s32.totalorder %s28, 0
      %p202 = por %p200, %p201
      %s204 = sadd.s32 %s203, 1
      %p207 = scmp.eq.s32.totalorder %s22, 1
      %p208 = scmp.ne.s32.totalorder %s203, %s205
      %p209 = scmp.eq.s32.totalorder %s22, 0
      %p210 = por %p208, %p209
      %p211 = scmp.ne.s32.totalorder %s203, %s205
      %p212 = scmp.eq.s32.totalorder %s27, 1
      %p213 = por %p211, %p212
      %p214 = scmp.ne.s32.totalorder %s205, %s206
      %p215 = scmp.eq.s32.totalorder %s27, 0
      %p216 = por %p214, %p215
      %p217 = scmp.ne.s32.totalorder %s205, %s206
      %p218 = scmp.eq.s32.totalorder %s28, 1
      %p219 = por %p217, %p218
      %p221 = scmp.ne.s32.totalorder %s206, %s220
      %p222 = scmp.eq.s32.totalorder %s28, 0
      %p223 = por %p221, %p222
      %s225 = sadd.s32 %s224, 1
      %p228 = scmp.eq.s32.totalorder %s22, 1
      %p229 = scmp.ne.s32.totalorder %s224, %s226
      %p230 = scmp.eq.s32.totalorder %s22, 0
      %p231 = por %p229, %p230
      %p232 = scmp.ne.s32.totalorder %s224, %s226
      %p233 = scmp.eq.s32.totalorder %s27, 1
      %p234 = por %p232, %p233
      %p235 = scmp.ne.s32.totalorder %s226, %s227
      %p236 = scmp.eq.s32.totalorder %s27, 0
      %p237 = por %p235, %p236
      %p238 = scmp.ne.s32.totalorder %s226, %s227
      %p239 = scmp.eq.s32.totalorder %s28, 1
      %p240 = por %p238, %p239
      %p242 = scmp.ne.s32.totalorder %s227, %s241
      %p243 = scmp.eq.s32.totalorder %s28, 0
      %p244 = por %p242, %p243
      %s246 = sadd.s32 %s245, 1
      %p249 = scmp.eq.s32.totalorder %s22, 1
      %p250 = scmp.ne.s32.totalorder %s245, %s247
      %p251 = scmp.eq.s32.totalorder %s22, 0
      %p252 = por %p250, %p251
      %p253 = scmp.ne.s32.totalorder %s245, %s247
      %p254 = scmp.eq.s32.totalorder %s27, 1
      %p255 = por %p253, %p254
      %p256 = scmp.ne.s32.totalorder %s247, %s248
      %p257 = scmp.eq.s32.totalorder %s27, 0
      %p258 = por %p256, %p257
      %p259 = scmp.ne.s32.totalorder %s247, %s248
      %p260 = scmp.eq.s32.totalorder %s28, 1
      %p261 = por %p259, %p260
      %p263 = scmp.ne.s32.totalorder %s248, %s262
      %p264 = scmp.eq.s32.totalorder %s28, 0
      %p265 = por %p263, %p264
      %s267 = sadd.s32 %s266, 1
      %p270 = scmp.eq.s32.totalorder %s22, 1
      %p271 = scmp.ne.s32.totalorder %s266, %s268
      %p272 = scmp.eq.s32.totalorder %s22, 0
      %p273 = por %p271, %p272
      %p274 = scmp.ne.s32.totalorder %s266, %s268
      %p275 = scmp.eq.s32.totalorder %s27, 1
      %p276 = por %p274, %p275
      %p277 = scmp.ne.s32.totalorder %s268, %s269
      %p278 = scmp.eq.s32.totalorder %s27, 0
      %p279 = por %p277, %p278
      %p280 = scmp.ne.s32.totalorder %s268, %s269
      %p281 = scmp.eq.s32.totalorder %s28, 1
      %p282 = por %p280, %p281
      %p284 = scmp.ne.s32.totalorder %s269, %s283
      %p285 = scmp.eq.s32.totalorder %s28, 0
      %p286 = por %p284, %p285
      %s288 = sadd.s32 %s287, 1
      %p291 = scmp.eq.s32.totalorder %s22, 1
      %p292 = scmp.ne.s32.totalorder %s287, %s289
      %p293 = scmp.eq.s32.totalorder %s22, 0
      %p294 = por %p292, %p293
      %p295 = scmp.ne.s32.totalorder %s287, %s289
      %p296 = scmp.eq.s32.totalorder %s27, 1
      %p297 = por %p295, %p296
      %p298 = scmp.ne.s32.totalorder %s289, %s290
      %p299 = scmp.eq.s32.totalorder %s27, 0
      %p300 = por %p298, %p299
      %p301 = scmp.ne.s32.totalorder %s289, %s290
      %p302 = scmp.eq.s32.totalorder %s28, 1
      %p303 = por %p301, %p302
      %p305 = scmp.ne.s32.totalorder %s290, %s304
      %p306 = scmp.eq.s32.totalorder %s28, 0
      %p307 = por %p305, %p306
      %s308 = ssub.s32 %s22, %s29
      %p309 = scmp.eq.s32.totalorder %s308, 0
      %s311 = sadd.s32 %s310, 1
      %s312 = scalar_select %p309, %s310, %s311
      %p315 = pneg %p309
      %p316 = scmp.eq.s32.totalorder %s22, 1
      %p317 = por %p315, %p316
      %p318 = scmp.ne.s32.totalorder %s310, %s313
      %p319 = scmp.eq.s32.totalorder %s22, 0
      %p320 = por %p318, %p319
      %p321 = scmp.ne.s32.totalorder %s310, %s313
      %p322 = scmp.eq.s32.totalorder %s27, 1
      %p323 = por %p321, %p322
      %p324 = scmp.ne.s32.totalorder %s313, %s314
      %p325 = scmp.eq.s32.totalorder %s27, 0
      %p326 = por %p324, %p325
      %p327 = scmp.ne.s32.totalorder %s313, %s314
      %p328 = scmp.eq.s32.totalorder %s28, 1
      %p329 = por %p327, %p328
      %p331 = scmp.ne.s32.totalorder %s314, %s330
      %p332 = scmp.eq.s32.totalorder %s28, 0
      %p333 = por %p331, %p332
      %p334 = scmp.le.s32.totalorder 1, %s22
      %p335 = scmp.lt.s32.totalorder %s22, 3
      %p336 = pnand %p334, %p335
      %p337 = pneg %p336
      // Predicated region
      $region9: #{cnn_forward.1} parent=5 // pred_check
        _
      $region10: #{cnn_forward.1} parent=5 // pred_check_branch
        %339 = sbr.rel (%p336) target = $region12
      $region11: #{cnn_forward.1} parent=5 // pred_region
        %s340 = ssub.s32 %s22, 1
        // Predicated region
        $region13: #{cnn_forward.1} parent=11 // pred_check
          %p341 = pneg %p69
        $region14: #{cnn_forward.1} parent=11 // pred_check_branch
          %343 = sbr.rel (%p341) target = $region16
        $region15: #{cnn_forward.1} parent=11 // pred_region
          _
        $region16: #{cnn_forward.1} parent=11 // pred_fallthru
          _
        // Predicated region
        $region17: #{cnn_forward.1} parent=11 // pred_check
          %p344 = pneg %p90
        $region18: #{cnn_forward.1} parent=11 // pred_check_branch
          %346 = sbr.rel (%p344) target = $region20
        $region19: #{cnn_forward.1} parent=11 // pred_region
          _
        $region20: #{cnn_forward.1} parent=11 // pred_fallthru
          _
        // Predicated region
        $region21: #{cnn_forward.1} parent=11 // pred_check
          %p347 = pneg %p111
        $region22: #{cnn_forward.1} parent=11 // pred_check_branch
          %349 = sbr.rel (%p347) target = $region24
        $region23: #{cnn_forward.1} parent=11 // pred_region
          _
        $region24: #{cnn_forward.1} parent=11 // pred_fallthru
          _
        // Predicated region
        $region25: #{cnn_forward.1} parent=11 // pred_check
          %p350 = pneg %p132
        $region26: #{cnn_forward.1} parent=11 // pred_check_branch
          %352 = sbr.rel (%p350) target = $region28
        $region27: #{cnn_forward.1} parent=11 // pred_region
          _
        $region28: #{cnn_forward.1} parent=11 // pred_fallthru
          _
        // Predicated region
        $region29: #{cnn_forward.1} parent=11 // pred_check
          %p353 = pneg %p153
        $region30: #{cnn_forward.1} parent=11 // pred_check_branch
          %355 = sbr.rel (%p353) target = $region32
        $region31: #{cnn_forward.1} parent=11 // pred_region
          _
        $region32: #{cnn_forward.1} parent=11 // pred_fallthru
          _
        // Predicated region
        $region33: #{cnn_forward.1} parent=11 // pred_check
          %p356 = pneg %p174
        $region34: #{cnn_forward.1} parent=11 // pred_check_branch
          %358 = sbr.rel (%p356) target = $region36
        $region35: #{cnn_forward.1} parent=11 // pred_region
          _
        $region36: #{cnn_forward.1} parent=11 // pred_fallthru
          _
        // Predicated region
        $region37: #{cnn_forward.1} parent=11 // pred_check
          %p359 = pneg %p195
        $region38: #{cnn_forward.1} parent=11 // pred_check_branch
          %361 = sbr.rel (%p359) target = $region40
        $region39: #{cnn_forward.1} parent=11 // pred_region
          _
        $region40: #{cnn_forward.1} parent=11 // pred_fallthru
          _
        // Predicated region
        $region41: #{cnn_forward.1} parent=11 // pred_check
          %p362 = pneg %p216
        $region42: #{cnn_forward.1} parent=11 // pred_check_branch
          %364 = sbr.rel (%p362) target = $region44
        $region43: #{cnn_forward.1} parent=11 // pred_region
          _
        $region44: #{cnn_forward.1} parent=11 // pred_fallthru
          _
        // Predicated region
        $region45: #{cnn_forward.1} parent=11 // pred_check
          %p365 = pneg %p237
        $region46: #{cnn_forward.1} parent=11 // pred_check_branch
          %367 = sbr.rel (%p365) target = $region48
        $region47: #{cnn_forward.1} parent=11 // pred_region
          _
        $region48: #{cnn_forward.1} parent=11 // pred_fallthru
          _
        // Predicated region
        $region49: #{cnn_forward.1} parent=11 // pred_check
          %p368 = pneg %p258
        $region50: #{cnn_forward.1} parent=11 // pred_check_branch
          %370 = sbr.rel (%p368) target = $region52
        $region51: #{cnn_forward.1} parent=11 // pred_region
          _
        $region52: #{cnn_forward.1} parent=11 // pred_fallthru
          _
        // Predicated region
        $region53: #{cnn_forward.1} parent=11 // pred_check
          %p371 = pneg %p279
        $region54: #{cnn_forward.1} parent=11 // pred_check_branch
          %373 = sbr.rel (%p371) target = $region56
        $region55: #{cnn_forward.1} parent=11 // pred_region
          _
        $region56: #{cnn_forward.1} parent=11 // pred_fallthru
          _
        // Predicated region
        $region57: #{cnn_forward.1} parent=11 // pred_check
          %p374 = pneg %p300
        $region58: #{cnn_forward.1} parent=11 // pred_check_branch
          %376 = sbr.rel (%p374) target = $region60
        $region59: #{cnn_forward.1} parent=11 // pred_region
          _
        $region60: #{cnn_forward.1} parent=11 // pred_fallthru
          _
      $region12: #{cnn_forward.1} parent=5 // pred_fallthru
        _
      %p377 = scmp.lt.s32.totalorder %s22, 2
      // Predicated region
      $region61: #{cnn_forward.1} parent=5 // pred_check
        %p378 = pneg %p377
      $region62: #{cnn_forward.1} parent=5 // pred_check_branch
        %380 = sbr.rel (%p378) target = $region64
      $region63: #{cnn_forward.1} parent=5 // pred_region
        // Predicated region
        $region65: #{cnn_forward.1} parent=63 // pred_check
          %p381 = pneg %p42
        $region66: #{cnn_forward.1} parent=63 // pred_check_branch
          %383 = sbr.rel (%p381) target = $region68
        $region67: #{cnn_forward.1} parent=63 // pred_region
          %p384 = scmp.lt.s32.totalorder %s22, 1
          %s385 = scalar_select %p384, %s22, 1
          %s386 = smul.addr %s385, 128
          %s387 = smul.addr %s386, 4
          %s388 = scalar_lea.vmem %s0, %s387
        $region68: #{cnn_forward.1} parent=63 // pred_fallthru
          _
      $region64: #{cnn_forward.1} parent=5 // pred_fallthru
        _
      %p389 = scmp.le.s32.totalorder 1, %s22
      %p390 = scmp.lt.s32.totalorder %s22, 3
      %p391 = pnand %p389, %p390
      %p392 = pneg %p391
      // Predicated region
      $region69: #{cnn_forward.1} parent=5 // pred_check
        _
      $region70: #{cnn_forward.1} parent=5 // pred_check_branch
        %394 = sbr.rel (%p391) target = $region72
      $region71: #{cnn_forward.1} parent=5 // pred_region
        %s395 = ssub.s32 %s22, 1
        %p396 = scmp.lt.s32.totalorder %s27, 1
        %s397 = scalar_select %p396, %s27, 1
        %s398 = smul.addr %s397, 128
        %s399 = smul.addr %s398, 4
        %s400 = scalar_lea.vmem %s0, %s399
        %p401 = pneg %p48
        %p402 = pneg %p45
        %p403 = pneg %p69
        %p404 = pneg %p66
        %p405 = pneg %p90
        %p406 = pneg %p87
        %p407 = pneg %p111
        %p408 = pneg %p108
        %p409 = pneg %p132
        %p410 = pneg %p129
        %p411 = pneg %p153
        %p412 = pneg %p150
        %p413 = pneg %p174
        %p414 = pneg %p171
        %p415 = pneg %p195
        %p416 = pneg %p192
        %p417 = pneg %p216
        %p418 = pneg %p213
        %p419 = pneg %p237
        %p420 = pneg %p234
        %p421 = pneg %p258
        %p422 = pneg %p255
        %p423 = pneg %p279
        %p424 = pneg %p276
        %p425 = pneg %p300
        %p426 = pneg %p297
        %p427 = pneg %p326
        %p428 = pneg %p323
        %s429 = sand.u32 %s313, 1
        %s430 = scalar_lea.sflag [#allocation3], %s429
        %s431 = sand.u32 %s313, 1
        %s432 = scalar_lea.vmem [#allocation2], %s431
        %p433 = scmp.lt.s32.totalorder %s27, 1
        %s434 = scalar_select %p433, %s27, 1
        %s435 = smul.addr %s434, 128
        %s436 = smul.addr %s435, 4
        %s437 = scalar_lea.vmem %s0, %s436
        %v439 = vld [vmem:[%s437] sm:$0xf]
        %v440 = vld [vmem:[%s437 + $0x4] sm:$0xf]
        %v441 = vld [vmem:[%s437 + $0x8] sm:$0xf]
        %v442 = vld [vmem:[%s437 + $0xc] sm:$0xf]
        %v443 = vld [vmem:[%s437 + $0x10] sm:$0xf]
        %v444 = vld [vmem:[%s437 + $0x14] sm:$0xf]
        %v445 = vld [vmem:[%s437 + $0x18] sm:$0xf]
        %v446 = vld [vmem:[%s437 + $0x1c] sm:$0xf]
        %v447 = vld [vmem:[%s437 + $0x20] sm:$0xf]
        %v448 = vld [vmem:[%s437 + $0x24] sm:$0xf]
        %v449 = vld [vmem:[%s437 + $0x28] sm:$0xf]
        %v450 = vld [vmem:[%s437 + $0x2c] sm:$0xf]
        %v451 = vld [vmem:[%s437 + $0x30] sm:$0xf]
        %v452 = vld [vmem:[%s437 + $0x34] sm:$0xf]
        %v453 = vld [vmem:[%s437 + $0x38] sm:$0xf]
        %v454 = vld [vmem:[%s437 + $0x3c] sm:$0xf]
        %v455 = vld [vmem:[%s437 + $0x40] sm:$0xf]
        %v456 = vld [vmem:[%s437 + $0x44] sm:$0xf]
        %v457 = vld [vmem:[%s437 + $0x48] sm:$0xf]
        %v458 = vld [vmem:[%s437 + $0x4c] sm:$0xf]
        %v459 = vld [vmem:[%s437 + $0x50] sm:$0xf]
        %v460 = vld [vmem:[%s437 + $0x54] sm:$0xf]
        %v461 = vld [vmem:[%s437 + $0x58] sm:$0xf]
        %v462 = vld [vmem:[%s437 + $0x5c] sm:$0xf]
        %v463 = vld [vmem:[%s437 + $0x60] sm:$0xf]
        %v464 = vld [vmem:[%s437 + $0x64] sm:$0xf]
        %v465 = vld [vmem:[%s437 + $0x68] sm:$0xf]
        %v466 = vld [vmem:[%s437 + $0x6c] sm:$0xf]
        %v467 = vld [vmem:[%s437 + $0x70] sm:$0xf]
        %v468 = vld [vmem:[%s437 + $0x74] sm:$0xf]
        %v469 = vld [vmem:[%s437 + $0x78] sm:$0xf]
        %v470 = vld [vmem:[%s437 + $0x7c] sm:$0xf]
        %v471 = vld [vmem:[%s437 + $0x80] sm:$0xf]
        %v472 = vld [vmem:[%s437 + $0x84] sm:$0xf]
        %v473 = vld [vmem:[%s437 + $0x88] sm:$0xf]
        %v474 = vld [vmem:[%s437 + $0x8c] sm:$0xf]
        %v475 = vld [vmem:[%s437 + $0x90] sm:$0xf]
        %v476 = vld [vmem:[%s437 + $0x94] sm:$0xf]
        %v477 = vld [vmem:[%s437 + $0x98] sm:$0xf]
        %v478 = vld [vmem:[%s437 + $0x9c] sm:$0xf]
        %v479 = vld [vmem:[%s437 + $0xa0] sm:$0xf]
        %v480 = vld [vmem:[%s437 + $0xa4] sm:$0xf]
        %v481 = vld [vmem:[%s437 + $0xa8] sm:$0xf]
        %v482 = vld [vmem:[%s437 + $0xac] sm:$0xf]
        %v483 = vld [vmem:[%s437 + $0xb0] sm:$0xf]
        %v484 = vld [vmem:[%s437 + $0xb4] sm:$0xf]
        %v485 = vld [vmem:[%s437 + $0xb8] sm:$0xf]
        %v486 = vld [vmem:[%s437 + $0xbc] sm:$0xf]
        %v487 = vld [vmem:[%s437 + $0xc0] sm:$0xf]
        %v488 = vld [vmem:[%s437 + $0xc4] sm:$0xf]
        %v489 = vld [vmem:[%s437 + $0xc8] sm:$0xf]
        %v490 = vld [vmem:[%s437 + $0xcc] sm:$0xf]
        %v491 = vld [vmem:[%s437 + $0xd0] sm:$0xf]
        %v492 = vld [vmem:[%s437 + $0xd4] sm:$0xf]
        %v493 = vld [vmem:[%s437 + $0xd8] sm:$0xf]
        %v494 = vld [vmem:[%s437 + $0xdc] sm:$0xf]
        %v495 = vld [vmem:[%s437 + $0xe0] sm:$0xf]
        %v496 = vld [vmem:[%s437 + $0xe4] sm:$0xf]
        %v497 = vld [vmem:[%s437 + $0xe8] sm:$0xf]
        %v498 = vld [vmem:[%s437 + $0xec] sm:$0xf]
        %v499 = vld [vmem:[%s437 + $0xf0] sm:$0xf]
        %v500 = vld [vmem:[%s437 + $0xf4] sm:$0xf]
        %v501 = vld [vmem:[%s437 + $0xf8] sm:$0xf]
        %v502 = vld [vmem:[%s437 + $0xfc] sm:$0xf]
        %v503 = vld [vmem:[%s437 + $0x100] sm:$0xf]
        %v504 = vld [vmem:[%s437 + $0x104] sm:$0xf]
        %v505 = vld [vmem:[%s437 + $0x108] sm:$0xf]
        %v506 = vld [vmem:[%s437 + $0x10c] sm:$0xf]
        %v507 = vld [vmem:[%s437 + $0x110] sm:$0xf]
        %v508 = vld [vmem:[%s437 + $0x114] sm:$0xf]
        %v509 = vld [vmem:[%s437 + $0x118] sm:$0xf]
        %v510 = vld [vmem:[%s437 + $0x11c] sm:$0xf]
        %v511 = vld [vmem:[%s437 + $0x120] sm:$0xf]
        %v512 = vld [vmem:[%s437 + $0x124] sm:$0xf]
        %v513 = vld [vmem:[%s437 + $0x128] sm:$0xf]
        %v514 = vld [vmem:[%s437 + $0x12c] sm:$0xf]
        %v515 = vld [vmem:[%s437 + $0x130] sm:$0xf]
        %v516 = vld [vmem:[%s437 + $0x134] sm:$0xf]
        %v517 = vld [vmem:[%s437 + $0x138] sm:$0xf]
        %v518 = vld [vmem:[%s437 + $0x13c] sm:$0xf]
        %v519 = vld [vmem:[%s437 + $0x140] sm:$0xf]
        %v520 = vld [vmem:[%s437 + $0x144] sm:$0xf]
        %v521 = vld [vmem:[%s437 + $0x148] sm:$0xf]
        %v522 = vld [vmem:[%s437 + $0x14c] sm:$0xf]
        %v523 = vld [vmem:[%s437 + $0x150] sm:$0xf]
        %v524 = vld [vmem:[%s437 + $0x154] sm:$0xf]
        %v525 = vld [vmem:[%s437 + $0x158] sm:$0xf]
        %v526 = vld [vmem:[%s437 + $0x15c] sm:$0xf]
        %v527 = vld [vmem:[%s437 + $0x160] sm:$0xf]
        %v528 = vld [vmem:[%s437 + $0x164] sm:$0xf]
        %v529 = vld [vmem:[%s437 + $0x168] sm:$0xf]
        %v530 = vld [vmem:[%s437 + $0x16c] sm:$0xf]
        %v531 = vld [vmem:[%s437 + $0x170] sm:$0xf]
        %v532 = vld [vmem:[%s437 + $0x174] sm:$0xf]
        %v533 = vld [vmem:[%s437 + $0x178] sm:$0xf]
        %v534 = vld [vmem:[%s437 + $0x17c] sm:$0xf]
        %v535 = vld [vmem:[%s437 + $0x180] sm:$0xf]
        %v536 = vld [vmem:[%s437 + $0x184] sm:$0xf]
        %v537 = vld [vmem:[%s437 + $0x188] sm:$0xf]
        %v538 = vld [vmem:[%s437 + $0x18c] sm:$0xf]
        %v539 = vld [vmem:[%s437 + $0x190] sm:$0xf]
        %v540 = vld [vmem:[%s437 + $0x194] sm:$0xf]
        %v541 = vld [vmem:[%s437 + $0x198] sm:$0xf]
        %v542 = vld [vmem:[%s437 + $0x19c] sm:$0xf]
        %v543 = vld [vmem:[%s437 + $0x1a0] sm:$0xf]
        %v544 = vld [vmem:[%s437 + $0x1a4] sm:$0xf]
        %v545 = vld [vmem:[%s437 + $0x1a8] sm:$0xf]
        %v546 = vld [vmem:[%s437 + $0x1ac] sm:$0xf]
        %v547 = vld [vmem:[%s437 + $0x1b0] sm:$0xf]
        %v548 = vld [vmem:[%s437 + $0x1b4] sm:$0xf]
        %v549 = vld [vmem:[%s437 + $0x1b8] sm:$0xf]
        %v550 = vld [vmem:[%s437 + $0x1bc] sm:$0xf]
        %v551 = vld [vmem:[%s437 + $0x1c0] sm:$0xf]
        %v552 = vld [vmem:[%s437 + $0x1c4] sm:$0xf]
        %v553 = vld [vmem:[%s437 + $0x1c8] sm:$0xf]
        %v554 = vld [vmem:[%s437 + $0x1cc] sm:$0xf]
        %v555 = vld [vmem:[%s437 + $0x1d0] sm:$0xf]
        %v556 = vld [vmem:[%s437 + $0x1d4] sm:$0xf]
        %v557 = vld [vmem:[%s437 + $0x1d8] sm:$0xf]
        %v558 = vld [vmem:[%s437 + $0x1dc] sm:$0xf]
        %v559 = vld [vmem:[%s437 + $0x1e0] sm:$0xf]
        %v560 = vld [vmem:[%s437 + $0x1e4] sm:$0xf]
        %v561 = vld [vmem:[%s437 + $0x1e8] sm:$0xf]
        %v562 = vld [vmem:[%s437 + $0x1ec] sm:$0xf]
        %v563 = vld [vmem:[%s437 + $0x1f0] sm:$0xf]
        %v564 = vld [vmem:[%s437 + $0x1f4] sm:$0xf]
        %v565 = vld [vmem:[%s437 + $0x1f8] sm:$0xf]
        %v566 = vld [vmem:[%s437 + $0x1fc] sm:$0xf]
        %v567 = vld [vmem:[%s1] sm:$0xf]
        %v568 = vld [vmem:[%s1 + $0x4] sm:$0xf]
        %v569 = vld [vmem:[%s1 + $0x8] sm:$0xf]
        %v570 = vld [vmem:[%s1 + $0xc] sm:$0xf]
        %v571 = vld [vmem:[%s1 + $0x10] sm:$0xf]
        %v572 = vld [vmem:[%s1 + $0x14] sm:$0xf]
        %v573 = vld [vmem:[%s1 + $0x18] sm:$0xf]
        %v574 = vld [vmem:[%s1 + $0x1c] sm:$0xf]
        %v575 = vld [vmem:[%s1 + $0x20] sm:$0xf]
        %v576 = vld [vmem:[%s1 + $0x24] sm:$0x3]
        %v577 = vld [vmem:[%s2] sm:$0x1]
        %v690 = vunpack.c.l.b16 %v439
        %v691 = vunpack.c.l.b16 %v440
        %v692 = vunpack.c.l.b16 %v441
        %v693 = vunpack.c.l.b16 %v442
        %v694 = vunpack.c.l.b16 %v443
        %v695 = vunpack.c.l.b16 %v444
        %v696 = vunpack.c.l.b16 %v445
        %v697 = vunpack.c.l.b16 %v446
        %v698 = vunpack.c.l.b16 %v447
        %v699 = vunpack.c.l.b16 %v448
        %v700 = vunpack.c.l.b16 %v449
        %v701 = vunpack.c.l.b16 %v450
        %v702 = vunpack.c.l.b16 %v451
        %v703 = vunpack.c.l.b16 %v452
        %v704 = vunpack.c.l.b16 %v453
        %v705 = vunpack.c.l.b16 %v454
        %v706 = vunpack.c.l.b16 %v455
        %v707 = vunpack.c.l.b16 %v456
        %v708 = vunpack.c.l.b16 %v457
        %v709 = vunpack.c.l.b16 %v458
        %v710 = vunpack.c.l.b16 %v459
        %v711 = vunpack.c.l.b16 %v460
        %v712 = vunpack.c.l.b16 %v461
        %v713 = vunpack.c.l.b16 %v462
        %v714 = vunpack.c.l.b16 %v463
        %v715 = vunpack.c.l.b16 %v464
        %v716 = vunpack.c.l.b16 %v465
        %v717 = vunpack.c.l.b16 %v466
        %v718 = vunpack.c.l.b16 %v467
        %v719 = vunpack.c.l.b16 %v468
        %v720 = vunpack.c.l.b16 %v469
        %v721 = vunpack.c.l.b16 %v470
        %v722 = vunpack.c.l.b16 %v471
        %v723 = vunpack.c.l.b16 %v472
        %v724 = vunpack.c.l.b16 %v473
        %v725 = vunpack.c.l.b16 %v474
        %v726 = vunpack.c.l.b16 %v475
        %v727 = vunpack.c.l.b16 %v476
        %v728 = vunpack.c.l.b16 %v477
        %v729 = vunpack.c.l.b16 %v478
        %v730 = vunpack.c.l.b16 %v479
        %v731 = vunpack.c.l.b16 %v480
        %v732 = vunpack.c.l.b16 %v481
        %v733 = vunpack.c.l.b16 %v482
        %v734 = vunpack.c.l.b16 %v483
        %v735 = vunpack.c.l.b16 %v484
        %v736 = vunpack.c.l.b16 %v485
        %v737 = vunpack.c.l.b16 %v486
        %v738 = vunpack.c.l.b16 %v487
        %v739 = vunpack.c.l.b16 %v488
        %v740 = vunpack.c.l.b16 %v489
        %v741 = vunpack.c.l.b16 %v490
        %v742 = vunpack.c.l.b16 %v491
        %v743 = vunpack.c.l.b16 %v492
        %v744 = vunpack.c.l.b16 %v493
        %v745 = vunpack.c.l.b16 %v494
        %v746 = vunpack.c.l.b16 %v495
        %v747 = vunpack.c.l.b16 %v496
        %v748 = vunpack.c.l.b16 %v497
        %v749 = vunpack.c.l.b16 %v498
        %v750 = vunpack.c.l.b16 %v499
        %v751 = vunpack.c.l.b16 %v500
        %v752 = vunpack.c.l.b16 %v501
        %v753 = vunpack.c.l.b16 %v502
        %v754 = vunpack.c.l.b16 %v503
        %v755 = vunpack.c.l.b16 %v504
        %v756 = vunpack.c.l.b16 %v505
        %v757 = vunpack.c.l.b16 %v506
        %v758 = vunpack.c.l.b16 %v507
        %v759 = vunpack.c.l.b16 %v508
        %v760 = vunpack.c.l.b16 %v509
        %v761 = vunpack.c.l.b16 %v510
        %v762 = vunpack.c.l.b16 %v511
        %v763 = vunpack.c.l.b16 %v512
        %v764 = vunpack.c.l.b16 %v513
        %v765 = vunpack.c.l.b16 %v514
        %v766 = vunpack.c.l.b16 %v515
        %v767 = vunpack.c.l.b16 %v516
        %v768 = vunpack.c.l.b16 %v517
        %v769 = vunpack.c.l.b16 %v518
        %v770 = vunpack.c.l.b16 %v519
        %v771 = vunpack.c.l.b16 %v520
        %v772 = vunpack.c.l.b16 %v521
        %v773 = vunpack.c.l.b16 %v522
        %v774 = vunpack.c.l.b16 %v523
        %v775 = vunpack.c.l.b16 %v524
        %v776 = vunpack.c.l.b16 %v525
        %v777 = vunpack.c.l.b16 %v526
        %v778 = vunpack.c.l.b16 %v527
        %v779 = vunpack.c.l.b16 %v528
        %v780 = vunpack.c.l.b16 %v529
        %v781 = vunpack.c.l.b16 %v530
        %v782 = vunpack.c.l.b16 %v531
        %v783 = vunpack.c.l.b16 %v532
        %v784 = vunpack.c.l.b16 %v533
        %v785 = vunpack.c.l.b16 %v534
        %v786 = vunpack.c.l.b16 %v535
        %v787 = vunpack.c.l.b16 %v536
        %v788 = vunpack.c.l.b16 %v537
        %v789 = vunpack.c.l.b16 %v538
        %v790 = vunpack.c.l.b16 %v539
        %v791 = vunpack.c.l.b16 %v540
        %v792 = vunpack.c.l.b16 %v541
        %v793 = vunpack.c.l.b16 %v542
        %v794 = vunpack.c.l.b16 %v543
        %v795 = vunpack.c.l.b16 %v544
        %v796 = vunpack.c.l.b16 %v545
        %v797 = vunpack.c.l.b16 %v546
        %v798 = vunpack.c.l.b16 %v547
        %v799 = vunpack.c.l.b16 %v548
        %v800 = vunpack.c.l.b16 %v549
        %v801 = vunpack.c.l.b16 %v550
        %v802 = vpack.c.b16 %v691, %v690
        %v803 = vpack.c.b16 %v693, %v692
        %v804 = vpack.c.b16 %v695, %v694
        %v805 = vpack.c.b16 %v697, %v696
        %v806 = vpack.c.b16 %v699, %v698
        %v807 = vpack.c.b16 %v701, %v700
        %v808 = vpack.c.b16 %v703, %v702
        %v809 = vpack.c.b16 %v705, %v704
        %v810 = vpack.c.b16 %v707, %v706
        %v811 = vpack.c.b16 %v709, %v708
        %v812 = vpack.c.b16 %v711, %v710
        %v813 = vpack.c.b16 %v713, %v712
        %v814 = vpack.c.b16 %v715, %v714
        %v815 = vpack.c.b16 %v717, %v716
        %v816 = vpack.c.b16 %v719, %v718
        %v817 = vpack.c.b16 %v721, %v720
        %v818 = vpack.c.b16 %v723, %v722
        %v819 = vpack.c.b16 %v725, %v724
        %v820 = vpack.c.b16 %v727, %v726
        %v821 = vpack.c.b16 %v729, %v728
        %v822 = vpack.c.b16 %v731, %v730
        %v823 = vpack.c.b16 %v733, %v732
        %v824 = vpack.c.b16 %v735, %v734
        %v825 = vpack.c.b16 %v737, %v736
        %v826 = vpack.c.b16 %v739, %v738
        %v827 = vpack.c.b16 %v741, %v740
        %v828 = vpack.c.b16 %v743, %v742
        %v829 = vpack.c.b16 %v745, %v744
        %v830 = vpack.c.b16 %v747, %v746
        %v831 = vpack.c.b16 %v749, %v748
        %v832 = vpack.c.b16 %v751, %v750
        %v833 = vpack.c.b16 %v753, %v752
        %v834 = vpack.c.b16 %v755, %v754
        %v835 = vpack.c.b16 %v757, %v756
        %v836 = vpack.c.b16 %v759, %v758
        %v837 = vpack.c.b16 %v761, %v760
        %v838 = vpack.c.b16 %v763, %v762
        %v839 = vpack.c.b16 %v765, %v764
        %v840 = vpack.c.b16 %v767, %v766
        %v841 = vpack.c.b16 %v769, %v768
        %v842 = vpack.c.b16 %v771, %v770
        %v843 = vpack.c.b16 %v773, %v772
        %v844 = vpack.c.b16 %v775, %v774
        %v845 = vpack.c.b16 %v777, %v776
        %v846 = vpack.c.b16 %v779, %v778
        %v847 = vpack.c.b16 %v781, %v780
        %v848 = vpack.c.b16 %v783, %v782
        %v849 = vpack.c.b16 %v785, %v784
        %v850 = vpack.c.b16 %v787, %v786
        %v851 = vpack.c.b16 %v789, %v788
        %v852 = vpack.c.b16 %v791, %v790
        %v853 = vpack.c.b16 %v793, %v792
        %v854 = vpack.c.b16 %v795, %v794
        %v855 = vpack.c.b16 %v797, %v796
        %v856 = vpack.c.b16 %v799, %v798
        %v857 = vpack.c.b16 %v801, %v800
        %v862 = vunpack.c.l.b16 %v551
        %v863 = vunpack.c.l.b16 %v552
        %v864 = vunpack.c.l.b16 %v553
        %v865 = vunpack.c.l.b16 %v554
        %v866 = vpack.c.b16 %v863, %v862
        %v867 = vpack.c.b16 %v865, %v864
        %868 = vrot.lane.b32.xlu0 %v804, 15
        %v869 = vpop.permute.xlu0 %868
        %870 = vrot.lane.b32.xlu0 %v805, 15
        %v871 = vpop.permute.xlu0 %870
        %872 = vrot.lane.b32.xlu0 %v806, 15
        %v873 = vpop.permute.xlu0 %872
        %874 = vrot.lane.b32.xlu0 %v807, 15
        %v875 = vpop.permute.xlu0 %874
        %876 = vrot.lane.b32.xlu0 %v808, 15
        %v877 = vpop.permute.xlu0 %876
        %878 = vrot.lane.b32.xlu0 %v809, 15
        %v879 = vpop.permute.xlu0 %878
        %880 = vrot.lane.b32.xlu0 %v810, 15
        %v881 = vpop.permute.xlu0 %880
        %882 = vrot.lane.b32.xlu0 %v811, 15
        %v883 = vpop.permute.xlu0 %882
        %884 = vrot.lane.b32.xlu0 %v812, 15
        %v885 = vpop.permute.xlu0 %884
        %886 = vrot.lane.b32.xlu0 %v813, 15
        %v887 = vpop.permute.xlu0 %886
        %888 = vrot.lane.b32.xlu0 %v814, 15
        %v889 = vpop.permute.xlu0 %888
        %890 = vrot.lane.b32.xlu0 %v815, 15
        %v891 = vpop.permute.xlu0 %890
        %892 = vrot.lane.b32.xlu0 %v816, 15
        %v893 = vpop.permute.xlu0 %892
        %894 = vrot.lane.b32.xlu0 %v817, 15
        %v895 = vpop.permute.xlu0 %894
        %896 = vrot.lane.b32.xlu0 %v818, 15
        %v897 = vpop.permute.xlu0 %896
        %898 = vrot.lane.b32.xlu0 %v819, 15
        %v899 = vpop.permute.xlu0 %898
        %900 = vrot.lane.b32.xlu0 %v820, 15
        %v901 = vpop.permute.xlu0 %900
        %902 = vrot.lane.b32.xlu0 %v821, 15
        %v903 = vpop.permute.xlu0 %902
        %904 = vrot.lane.b32.xlu0 %v822, 15
        %v905 = vpop.permute.xlu0 %904
        %906 = vrot.lane.b32.xlu0 %v823, 15
        %v907 = vpop.permute.xlu0 %906
        %908 = vrot.lane.b32.xlu0 %v824, 15
        %v909 = vpop.permute.xlu0 %908
        %910 = vrot.lane.b32.xlu0 %v825, 15
        %v911 = vpop.permute.xlu0 %910
        %912 = vrot.lane.b32.xlu0 %v826, 15
        %v913 = vpop.permute.xlu0 %912
        %914 = vrot.lane.b32.xlu0 %v827, 15
        %v915 = vpop.permute.xlu0 %914
        %916 = vrot.lane.b32.xlu0 %v828, 15
        %v917 = vpop.permute.xlu0 %916
        %918 = vrot.lane.b32.xlu0 %v829, 15
        %v919 = vpop.permute.xlu0 %918
        %920 = vrot.lane.b32.xlu0 %v830, 15
        %v921 = vpop.permute.xlu0 %920
        %922 = vrot.lane.b32.xlu0 %v831, 15
        %v923 = vpop.permute.xlu0 %922
        %924 = vrot.lane.b32.xlu0 %v832, 15
        %v925 = vpop.permute.xlu0 %924
        %926 = vrot.lane.b32.xlu0 %v833, 15
        %v927 = vpop.permute.xlu0 %926
        %928 = vrot.lane.b32.xlu0 %v834, 15
        %v929 = vpop.permute.xlu0 %928
        %930 = vrot.lane.b32.xlu0 %v835, 15
        %v931 = vpop.permute.xlu0 %930
        %932 = vrot.lane.b32.xlu0 %v836, 15
        %v933 = vpop.permute.xlu0 %932
        %934 = vrot.lane.b32.xlu0 %v837, 15
        %v935 = vpop.permute.xlu0 %934
        %936 = vrot.lane.b32.xlu0 %v838, 15
        %v937 = vpop.permute.xlu0 %936
        %938 = vrot.lane.b32.xlu0 %v839, 15
        %v939 = vpop.permute.xlu0 %938
        %940 = vrot.lane.b32.xlu0 %v840, 15
        %v941 = vpop.permute.xlu0 %940
        %942 = vrot.lane.b32.xlu0 %v841, 15
        %v943 = vpop.permute.xlu0 %942
        %944 = vrot.lane.b32.xlu0 %v842, 15
        %v945 = vpop.permute.xlu0 %944
        %946 = vrot.lane.b32.xlu0 %v843, 15
        %v947 = vpop.permute.xlu0 %946
        %948 = vrot.lane.b32.xlu0 %v844, 15
        %v949 = vpop.permute.xlu0 %948
        %950 = vrot.lane.b32.xlu0 %v845, 15
        %v951 = vpop.permute.xlu0 %950
        %952 = vrot.lane.b32.xlu0 %v846, 15
        %v953 = vpop.permute.xlu0 %952
        %954 = vrot.lane.b32.xlu0 %v847, 15
        %v955 = vpop.permute.xlu0 %954
        %956 = vrot.lane.b32.xlu0 %v848, 15
        %v957 = vpop.permute.xlu0 %956
        %958 = vrot.lane.b32.xlu0 %v849, 15
        %v959 = vpop.permute.xlu0 %958
        %960 = vrot.lane.b32.xlu0 %v850, 15
        %v961 = vpop.permute.xlu0 %960
        %962 = vrot.lane.b32.xlu0 %v851, 15
        %v963 = vpop.permute.xlu0 %962
        %964 = vrot.lane.b32.xlu0 %v852, 15
        %v965 = vpop.permute.xlu0 %964
        %966 = vrot.lane.b32.xlu0 %v853, 15
        %v967 = vpop.permute.xlu0 %966
        %968 = vrot.lane.b32.xlu0 %v854, 15
        %v969 = vpop.permute.xlu0 %968
        %970 = vrot.lane.b32.xlu0 %v855, 15
        %v971 = vpop.permute.xlu0 %970
        %972 = vrot.lane.b32.xlu0 %v856, 15
        %v973 = vpop.permute.xlu0 %972
        %974 = vrot.lane.b32.xlu0 %v857, 15
        %v975 = vpop.permute.xlu0 %974
        %976 = vrot.lane.b32.xlu0 %v866, 15
        %v977 = vpop.permute.xlu0 %976
        %978 = vrot.lane.b32.xlu0 %v867, 15
        %v979 = vpop.permute.xlu0 %978
        %v984 = vunpack.c.l.b16 %v555
        %v985 = vunpack.c.l.b16 %v556
        %v986 = vunpack.c.l.b16 %v557
        %v987 = vunpack.c.l.b16 %v558
        %v988 = vpack.c.b16 %v985, %v984
        %v989 = vpack.c.b16 %v987, %v986
        %990 = vrot.lane.b32.xlu0 %v806, 30
        %v991 = vpop.permute.xlu0 %990
        %992 = vrot.lane.b32.xlu0 %v807, 30
        %v993 = vpop.permute.xlu0 %992
        %994 = vrot.lane.b32.xlu0 %v808, 30
        %v995 = vpop.permute.xlu0 %994
        %996 = vrot.lane.b32.xlu0 %v809, 30
        %v997 = vpop.permute.xlu0 %996
        %998 = vrot.lane.b32.xlu0 %v810, 30
        %v999 = vpop.permute.xlu0 %998
        %1000 = vrot.lane.b32.xlu0 %v811, 30
        %v1001 = vpop.permute.xlu0 %1000
        %1002 = vrot.lane.b32.xlu0 %v812, 30
        %v1003 = vpop.permute.xlu0 %1002
        %1004 = vrot.lane.b32.xlu0 %v813, 30
        %v1005 = vpop.permute.xlu0 %1004
        %1006 = vrot.lane.b32.xlu0 %v814, 30
        %v1007 = vpop.permute.xlu0 %1006
        %1008 = vrot.lane.b32.xlu0 %v815, 30
        %v1009 = vpop.permute.xlu0 %1008
        %1010 = vrot.lane.b32.xlu0 %v816, 30
        %v1011 = vpop.permute.xlu0 %1010
        %1012 = vrot.lane.b32.xlu0 %v817, 30
        %v1013 = vpop.permute.xlu0 %1012
        %1014 = vrot.lane.b32.xlu0 %v818, 30
        %v1015 = vpop.permute.xlu0 %1014
        %1016 = vrot.lane.b32.xlu0 %v819, 30
        %v1017 = vpop.permute.xlu0 %1016
        %1018 = vrot.lane.b32.xlu0 %v820, 30
        %v1019 = vpop.permute.xlu0 %1018
        %1020 = vrot.lane.b32.xlu0 %v821, 30
        %v1021 = vpop.permute.xlu0 %1020
        %1022 = vrot.lane.b32.xlu0 %v822, 30
        %v1023 = vpop.permute.xlu0 %1022
        %1024 = vrot.lane.b32.xlu0 %v823, 30
        %v1025 = vpop.permute.xlu0 %1024
        %1026 = vrot.lane.b32.xlu0 %v824, 30
        %v1027 = vpop.permute.xlu0 %1026
        %1028 = vrot.lane.b32.xlu0 %v825, 30
        %v1029 = vpop.permute.xlu0 %1028
        %1030 = vrot.lane.b32.xlu0 %v826, 30
        %v1031 = vpop.permute.xlu0 %1030
        %1032 = vrot.lane.b32.xlu0 %v827, 30
        %v1033 = vpop.permute.xlu0 %1032
        %1034 = vrot.lane.b32.xlu0 %v828, 30
        %v1035 = vpop.permute.xlu0 %1034
        %1036 = vrot.lane.b32.xlu0 %v829, 30
        %v1037 = vpop.permute.xlu0 %1036
        %1038 = vrot.lane.b32.xlu0 %v830, 30
        %v1039 = vpop.permute.xlu0 %1038
        %1040 = vrot.lane.b32.xlu0 %v831, 30
        %v1041 = vpop.permute.xlu0 %1040
        %1042 = vrot.lane.b32.xlu0 %v832, 30
        %v1043 = vpop.permute.xlu0 %1042
        %1044 = vrot.lane.b32.xlu0 %v833, 30
        %v1045 = vpop.permute.xlu0 %1044
        %1046 = vrot.lane.b32.xlu0 %v834, 30
        %v1047 = vpop.permute.xlu0 %1046
        %1048 = vrot.lane.b32.xlu0 %v835, 30
        %v1049 = vpop.permute.xlu0 %1048
        %1050 = vrot.lane.b32.xlu0 %v836, 30
        %v1051 = vpop.permute.xlu0 %1050
        %1052 = vrot.lane.b32.xlu0 %v837, 30
        %v1053 = vpop.permute.xlu0 %1052
        %1054 = vrot.lane.b32.xlu0 %v838, 30
        %v1055 = vpop.permute.xlu0 %1054
        %1056 = vrot.lane.b32.xlu0 %v839, 30
        %v1057 = vpop.permute.xlu0 %1056
        %1058 = vrot.lane.b32.xlu0 %v840, 30
        %v1059 = vpop.permute.xlu0 %1058
        %1060 = vrot.lane.b32.xlu0 %v841, 30
        %v1061 = vpop.permute.xlu0 %1060
        %1062 = vrot.lane.b32.xlu0 %v842, 30
        %v1063 = vpop.permute.xlu0 %1062
        %1064 = vrot.lane.b32.xlu0 %v843, 30
        %v1065 = vpop.permute.xlu0 %1064
        %1066 = vrot.lane.b32.xlu0 %v844, 30
        %v1067 = vpop.permute.xlu0 %1066
        %1068 = vrot.lane.b32.xlu0 %v845, 30
        %v1069 = vpop.permute.xlu0 %1068
        %1070 = vrot.lane.b32.xlu0 %v846, 30
        %v1071 = vpop.permute.xlu0 %1070
        %1072 = vrot.lane.b32.xlu0 %v847, 30
        %v1073 = vpop.permute.xlu0 %1072
        %1074 = vrot.lane.b32.xlu0 %v848, 30
        %v1075 = vpop.permute.xlu0 %1074
        %1076 = vrot.lane.b32.xlu0 %v849, 30
        %v1077 = vpop.permute.xlu0 %1076
        %1078 = vrot.lane.b32.xlu0 %v850, 30
        %v1079 = vpop.permute.xlu0 %1078
        %1080 = vrot.lane.b32.xlu0 %v851, 30
        %v1081 = vpop.permute.xlu0 %1080
        %1082 = vrot.lane.b32.xlu0 %v852, 30
        %v1083 = vpop.permute.xlu0 %1082
        %1084 = vrot.lane.b32.xlu0 %v853, 30
        %v1085 = vpop.permute.xlu0 %1084
        %1086 = vrot.lane.b32.xlu0 %v854, 30
        %v1087 = vpop.permute.xlu0 %1086
        %1088 = vrot.lane.b32.xlu0 %v855, 30
        %v1089 = vpop.permute.xlu0 %1088
        %1090 = vrot.lane.b32.xlu0 %v856, 30
        %v1091 = vpop.permute.xlu0 %1090
        %1092 = vrot.lane.b32.xlu0 %v857, 30
        %v1093 = vpop.permute.xlu0 %1092
        %1094 = vrot.lane.b32.xlu0 %v866, 30
        %v1095 = vpop.permute.xlu0 %1094
        %1096 = vrot.lane.b32.xlu0 %v867, 30
        %v1097 = vpop.permute.xlu0 %1096
        %1098 = vrot.lane.b32.xlu0 %v988, 30
        %v1099 = vpop.permute.xlu0 %1098
        %1100 = vrot.lane.b32.xlu0 %v989, 30
        %v1101 = vpop.permute.xlu0 %1100
        %v1106 = vunpack.c.l.b16 %v559
        %v1107 = vunpack.c.l.b16 %v560
        %v1108 = vunpack.c.l.b16 %v561
        %v1109 = vunpack.c.l.b16 %v562
        %v1110 = vpack.c.b16 %v1107, %v1106
        %v1111 = vpack.c.b16 %v1109, %v1108
        %1112 = vrot.lane.b32.xlu0 %v808, 45
        %v1113 = vpop.permute.xlu0 %1112
        %1114 = vrot.lane.b32.xlu0 %v809, 45
        %v1115 = vpop.permute.xlu0 %1114
        %1116 = vrot.lane.b32.xlu0 %v810, 45
        %v1117 = vpop.permute.xlu0 %1116
        %1118 = vrot.lane.b32.xlu0 %v811, 45
        %v1119 = vpop.permute.xlu0 %1118
        %1120 = vrot.lane.b32.xlu0 %v812, 45
        %v1121 = vpop.permute.xlu0 %1120
        %1122 = vrot.lane.b32.xlu0 %v813, 45
        %v1123 = vpop.permute.xlu0 %1122
        %1124 = vrot.lane.b32.xlu0 %v814, 45
        %v1125 = vpop.permute.xlu0 %1124
        %1126 = vrot.lane.b32.xlu0 %v815, 45
        %v1127 = vpop.permute.xlu0 %1126
        %1128 = vrot.lane.b32.xlu0 %v816, 45
        %v1129 = vpop.permute.xlu0 %1128
        %1130 = vrot.lane.b32.xlu0 %v817, 45
        %v1131 = vpop.permute.xlu0 %1130
        %1132 = vrot.lane.b32.xlu0 %v818, 45
        %v1133 = vpop.permute.xlu0 %1132
        %1134 = vrot.lane.b32.xlu0 %v819, 45
        %v1135 = vpop.permute.xlu0 %1134
        %1136 = vrot.lane.b32.xlu0 %v820, 45
        %v1137 = vpop.permute.xlu0 %1136
        %1138 = vrot.lane.b32.xlu0 %v821, 45
        %v1139 = vpop.permute.xlu0 %1138
        %1140 = vrot.lane.b32.xlu0 %v822, 45
        %v1141 = vpop.permute.xlu0 %1140
        %1142 = vrot.lane.b32.xlu0 %v823, 45
        %v1143 = vpop.permute.xlu0 %1142
        %1144 = vrot.lane.b32.xlu0 %v824, 45
        %v1145 = vpop.permute.xlu0 %1144
        %1146 = vrot.lane.b32.xlu0 %v825, 45
        %v1147 = vpop.permute.xlu0 %1146
        %1148 = vrot.lane.b32.xlu0 %v826, 45
        %v1149 = vpop.permute.xlu0 %1148
        %1150 = vrot.lane.b32.xlu0 %v827, 45
        %v1151 = vpop.permute.xlu0 %1150
        %1152 = vrot.lane.b32.xlu0 %v828, 45
        %v1153 = vpop.permute.xlu0 %1152
        %1154 = vrot.lane.b32.xlu0 %v829, 45
        %v1155 = vpop.permute.xlu0 %1154
        %1156 = vrot.lane.b32.xlu0 %v830, 45
        %v1157 = vpop.permute.xlu0 %1156
        %1158 = vrot.lane.b32.xlu0 %v831, 45
        %v1159 = vpop.permute.xlu0 %1158
        %1160 = vrot.lane.b32.xlu0 %v832, 45
        %v1161 = vpop.permute.xlu0 %1160
        %1162 = vrot.lane.b32.xlu0 %v833, 45
        %v1163 = vpop.permute.xlu0 %1162
        %1164 = vrot.lane.b32.xlu0 %v834, 45
        %v1165 = vpop.permute.xlu0 %1164
        %1166 = vrot.lane.b32.xlu0 %v835, 45
        %v1167 = vpop.permute.xlu0 %1166
        %1168 = vrot.lane.b32.xlu0 %v836, 45
        %v1169 = vpop.permute.xlu0 %1168
        %1170 = vrot.lane.b32.xlu0 %v837, 45
        %v1171 = vpop.permute.xlu0 %1170
        %1172 = vrot.lane.b32.xlu0 %v838, 45
        %v1173 = vpop.permute.xlu0 %1172
        %1174 = vrot.lane.b32.xlu0 %v839, 45
        %v1175 = vpop.permute.xlu0 %1174
        %1176 = vrot.lane.b32.xlu0 %v840, 45
        %v1177 = vpop.permute.xlu0 %1176
        %1178 = vrot.lane.b32.xlu0 %v841, 45
        %v1179 = vpop.permute.xlu0 %1178
        %1180 = vrot.lane.b32.xlu0 %v842, 45
        %v1181 = vpop.permute.xlu0 %1180
        %1182 = vrot.lane.b32.xlu0 %v843, 45
        %v1183 = vpop.permute.xlu0 %1182
        %1184 = vrot.lane.b32.xlu0 %v844, 45
        %v1185 = vpop.permute.xlu0 %1184
        %1186 = vrot.lane.b32.xlu0 %v845, 45
        %v1187 = vpop.permute.xlu0 %1186
        %1188 = vrot.lane.b32.xlu0 %v846, 45
        %v1189 = vpop.permute.xlu0 %1188
        %1190 = vrot.lane.b32.xlu0 %v847, 45
        %v1191 = vpop.permute.xlu0 %1190
        %1192 = vrot.lane.b32.xlu0 %v848, 45
        %v1193 = vpop.permute.xlu0 %1192
        %1194 = vrot.lane.b32.xlu0 %v849, 45
        %v1195 = vpop.permute.xlu0 %1194
        %1196 = vrot.lane.b32.xlu0 %v850, 45
        %v1197 = vpop.permute.xlu0 %1196
        %1198 = vrot.lane.b32.xlu0 %v851, 45
        %v1199 = vpop.permute.xlu0 %1198
        %1200 = vrot.lane.b32.xlu0 %v852, 45
        %v1201 = vpop.permute.xlu0 %1200
        %1202 = vrot.lane.b32.xlu0 %v853, 45
        %v1203 = vpop.permute.xlu0 %1202
        %1204 = vrot.lane.b32.xlu0 %v854, 45
        %v1205 = vpop.permute.xlu0 %1204
        %1206 = vrot.lane.b32.xlu0 %v855, 45
        %v1207 = vpop.permute.xlu0 %1206
        %1208 = vrot.lane.b32.xlu0 %v856, 45
        %v1209 = vpop.permute.xlu0 %1208
        %1210 = vrot.lane.b32.xlu0 %v857, 45
        %v1211 = vpop.permute.xlu0 %1210
        %1212 = vrot.lane.b32.xlu0 %v866, 45
        %v1213 = vpop.permute.xlu0 %1212
        %1214 = vrot.lane.b32.xlu0 %v867, 45
        %v1215 = vpop.permute.xlu0 %1214
        %1216 = vrot.lane.b32.xlu0 %v988, 45
        %v1217 = vpop.permute.xlu0 %1216
        %1218 = vrot.lane.b32.xlu0 %v989, 45
        %v1219 = vpop.permute.xlu0 %1218
        %1220 = vrot.lane.b32.xlu0 %v1110, 45
        %v1221 = vpop.permute.xlu0 %1220
        %1222 = vrot.lane.b32.xlu0 %v1111, 45
        %v1223 = vpop.permute.xlu0 %1222
        %v1228 = vunpack.c.l.b16 %v563
        %v1229 = vunpack.c.l.b16 %v564
        %v1230 = vunpack.c.l.b16 %v565
        %v1231 = vunpack.c.l.b16 %v566
        %v1232 = vpack.c.b16 %v1229, %v1228
        %v1233 = vpack.c.b16 %v1231, %v1230
        %1234 = vrot.lane.b32.xlu0 %v810, 60
        %v1235 = vpop.permute.xlu0 %1234
        %1236 = vrot.lane.b32.xlu0 %v811, 60
        %v1237 = vpop.permute.xlu0 %1236
        %1238 = vrot.lane.b32.xlu0 %v812, 60
        %v1239 = vpop.permute.xlu0 %1238
        %1240 = vrot.lane.b32.xlu0 %v813, 60
        %v1241 = vpop.permute.xlu0 %1240
        %1242 = vrot.lane.b32.xlu0 %v814, 60
        %v1243 = vpop.permute.xlu0 %1242
        %1244 = vrot.lane.b32.xlu0 %v815, 60
        %v1245 = vpop.permute.xlu0 %1244
        %1246 = vrot.lane.b32.xlu0 %v816, 60
        %v1247 = vpop.permute.xlu0 %1246
        %1248 = vrot.lane.b32.xlu0 %v817, 60
        %v1249 = vpop.permute.xlu0 %1248
        %1250 = vrot.lane.b32.xlu0 %v818, 60
        %v1251 = vpop.permute.xlu0 %1250
        %1252 = vrot.lane.b32.xlu0 %v819, 60
        %v1253 = vpop.permute.xlu0 %1252
        %1254 = vrot.lane.b32.xlu0 %v820, 60
        %v1255 = vpop.permute.xlu0 %1254
        %1256 = vrot.lane.b32.xlu0 %v821, 60
        %v1257 = vpop.permute.xlu0 %1256
        %1258 = vrot.lane.b32.xlu0 %v822, 60
        %v1259 = vpop.permute.xlu0 %1258
        %1260 = vrot.lane.b32.xlu0 %v823, 60
        %v1261 = vpop.permute.xlu0 %1260
        %1262 = vrot.lane.b32.xlu0 %v824, 60
        %v1263 = vpop.permute.xlu0 %1262
        %1264 = vrot.lane.b32.xlu0 %v825, 60
        %v1265 = vpop.permute.xlu0 %1264
        %1266 = vrot.lane.b32.xlu0 %v826, 60
        %v1267 = vpop.permute.xlu0 %1266
        %1268 = vrot.lane.b32.xlu0 %v827, 60
        %v1269 = vpop.permute.xlu0 %1268
        %1270 = vrot.lane.b32.xlu0 %v828, 60
        %v1271 = vpop.permute.xlu0 %1270
        %1272 = vrot.lane.b32.xlu0 %v829, 60
        %v1273 = vpop.permute.xlu0 %1272
        %1274 = vrot.lane.b32.xlu0 %v830, 60
        %v1275 = vpop.permute.xlu0 %1274
        %1276 = vrot.lane.b32.xlu0 %v831, 60
        %v1277 = vpop.permute.xlu0 %1276
        %1278 = vrot.lane.b32.xlu0 %v832, 60
        %v1279 = vpop.permute.xlu0 %1278
        %1280 = vrot.lane.b32.xlu0 %v833, 60
        %v1281 = vpop.permute.xlu0 %1280
        %1282 = vrot.lane.b32.xlu0 %v834, 60
        %v1283 = vpop.permute.xlu0 %1282
        %1284 = vrot.lane.b32.xlu0 %v835, 60
        %v1285 = vpop.permute.xlu0 %1284
        %1286 = vrot.lane.b32.xlu0 %v836, 60
        %v1287 = vpop.permute.xlu0 %1286
        %1288 = vrot.lane.b32.xlu0 %v837, 60
        %v1289 = vpop.permute.xlu0 %1288
        %1290 = vrot.lane.b32.xlu0 %v838, 60
        %v1291 = vpop.permute.xlu0 %1290
        %1292 = vrot.lane.b32.xlu0 %v839, 60
        %v1293 = vpop.permute.xlu0 %1292
        %1294 = vrot.lane.b32.xlu0 %v840, 60
        %v1295 = vpop.permute.xlu0 %1294
        %1296 = vrot.lane.b32.xlu0 %v841, 60
        %v1297 = vpop.permute.xlu0 %1296
        %1298 = vrot.lane.b32.xlu0 %v842, 60
        %v1299 = vpop.permute.xlu0 %1298
        %1300 = vrot.lane.b32.xlu0 %v843, 60
        %v1301 = vpop.permute.xlu0 %1300
        %1302 = vrot.lane.b32.xlu0 %v844, 60
        %v1303 = vpop.permute.xlu0 %1302
        %1304 = vrot.lane.b32.xlu0 %v845, 60
        %v1305 = vpop.permute.xlu0 %1304
        %1306 = vrot.lane.b32.xlu0 %v846, 60
        %v1307 = vpop.permute.xlu0 %1306
        %1308 = vrot.lane.b32.xlu0 %v847, 60
        %v1309 = vpop.permute.xlu0 %1308
        %1310 = vrot.lane.b32.xlu0 %v848, 60
        %v1311 = vpop.permute.xlu0 %1310
        %1312 = vrot.lane.b32.xlu0 %v849, 60
        %v1313 = vpop.permute.xlu0 %1312
        %1314 = vrot.lane.b32.xlu0 %v850, 60
        %v1315 = vpop.permute.xlu0 %1314
        %1316 = vrot.lane.b32.xlu0 %v851, 60
        %v1317 = vpop.permute.xlu0 %1316
        %1318 = vrot.lane.b32.xlu0 %v852, 60
        %v1319 = vpop.permute.xlu0 %1318
        %1320 = vrot.lane.b32.xlu0 %v853, 60
        %v1321 = vpop.permute.xlu0 %1320
        %1322 = vrot.lane.b32.xlu0 %v854, 60
        %v1323 = vpop.permute.xlu0 %1322
        %1324 = vrot.lane.b32.xlu0 %v855, 60
        %v1325 = vpop.permute.xlu0 %1324
        %1326 = vrot.lane.b32.xlu0 %v856, 60
        %v1327 = vpop.permute.xlu0 %1326
        %1328 = vrot.lane.b32.xlu0 %v857, 60
        %v1329 = vpop.permute.xlu0 %1328
        %1330 = vrot.lane.b32.xlu0 %v866, 60
        %v1331 = vpop.permute.xlu0 %1330
        %1332 = vrot.lane.b32.xlu0 %v867, 60
        %v1333 = vpop.permute.xlu0 %1332
        %1334 = vrot.lane.b32.xlu0 %v988, 60
        %v1335 = vpop.permute.xlu0 %1334
        %1336 = vrot.lane.b32.xlu0 %v989, 60
        %v1337 = vpop.permute.xlu0 %1336
        %1338 = vrot.lane.b32.xlu0 %v1110, 60
        %v1339 = vpop.permute.xlu0 %1338
        %1340 = vrot.lane.b32.xlu0 %v1111, 60
        %v1341 = vpop.permute.xlu0 %1340
        %1342 = vrot.lane.b32.xlu0 %v1232, 60
        %v1343 = vpop.permute.xlu0 %1342
        %1344 = vrot.lane.b32.xlu0 %v1233, 60
        %v1345 = vpop.permute.xlu0 %1344
        %vm1346 = vcmask 121856
        %v1349 = vsel %vm1346, %v802, %v869
        %v1352 = vsel %vm1346, %v803, %v871
        %v1355 = vsel %vm1346, %v804, %v873
        %v1358 = vsel %vm1346, %v805, %v875
        %v1361 = vsel %vm1346, %v806, %v877
        %v1364 = vsel %vm1346, %v807, %v879
        %v1367 = vsel %vm1346, %v808, %v881
        %v1370 = vsel %vm1346, %v809, %v883
        %v1373 = vsel %vm1346, %v810, %v885
        %v1376 = vsel %vm1346, %v811, %v887
        %v1379 = vsel %vm1346, %v812, %v889
        %v1382 = vsel %vm1346, %v813, %v891
        %v1385 = vsel %vm1346, %v814, %v893
        %v1388 = vsel %vm1346, %v815, %v895
        %v1391 = vsel %vm1346, %v816, %v897
        %v1394 = vsel %vm1346, %v817, %v899
        %v1397 = vsel %vm1346, %v818, %v901
        %v1400 = vsel %vm1346, %v819, %v903
        %v1403 = vsel %vm1346, %v820, %v905
        %v1406 = vsel %vm1346, %v821, %v907
        %v1409 = vsel %vm1346, %v822, %v909
        %v1412 = vsel %vm1346, %v823, %v911
        %v1415 = vsel %vm1346, %v824, %v913
        %v1418 = vsel %vm1346, %v825, %v915
        %v1421 = vsel %vm1346, %v826, %v917
        %v1424 = vsel %vm1346, %v827, %v919
        %v1427 = vsel %vm1346, %v828, %v921
        %v1430 = vsel %vm1346, %v829, %v923
        %v1433 = vsel %vm1346, %v830, %v925
        %v1436 = vsel %vm1346, %v831, %v927
        %v1439 = vsel %vm1346, %v832, %v929
        %v1442 = vsel %vm1346, %v833, %v931
        %v1445 = vsel %vm1346, %v834, %v933
        %v1448 = vsel %vm1346, %v835, %v935
        %v1451 = vsel %vm1346, %v836, %v937
        %v1454 = vsel %vm1346, %v837, %v939
        %v1457 = vsel %vm1346, %v838, %v941
        %v1460 = vsel %vm1346, %v839, %v943
        %v1463 = vsel %vm1346, %v840, %v945
        %v1466 = vsel %vm1346, %v841, %v947
        %v1469 = vsel %vm1346, %v842, %v949
        %v1472 = vsel %vm1346, %v843, %v951
        %v1475 = vsel %vm1346, %v844, %v953
        %v1478 = vsel %vm1346, %v845, %v955
        %v1481 = vsel %vm1346, %v846, %v957
        %v1484 = vsel %vm1346, %v847, %v959
        %v1487 = vsel %vm1346, %v848, %v961
        %v1490 = vsel %vm1346, %v849, %v963
        %v1493 = vsel %vm1346, %v850, %v965
        %v1496 = vsel %vm1346, %v851, %v967
        %v1499 = vsel %vm1346, %v852, %v969
        %v1502 = vsel %vm1346, %v853, %v971
        %v1505 = vsel %vm1346, %v854, %v973
        %v1508 = vsel %vm1346, %v855, %v975
        %v1511 = vsel %vm1346, %v856, %v977
        %v1514 = vsel %vm1346, %v857, %v979
        %vm1515 = vcmask 244736
        %v1517 = vsel %vm1515, %v1349, %v991
        %v1519 = vsel %vm1515, %v1352, %v993
        %v1521 = vsel %vm1515, %v1355, %v995
        %v1523 = vsel %vm1515, %v1358, %v997
        %v1525 = vsel %vm1515, %v1361, %v999
        %v1527 = vsel %vm1515, %v1364, %v1001
        %v1529 = vsel %vm1515, %v1367, %v1003
        %v1531 = vsel %vm1515, %v1370, %v1005
        %v1533 = vsel %vm1515, %v1373, %v1007
        %v1535 = vsel %vm1515, %v1376, %v1009
        %v1537 = vsel %vm1515, %v1379, %v1011
        %v1539 = vsel %vm1515, %v1382, %v1013
        %v1541 = vsel %vm1515, %v1385, %v1015
        %v1543 = vsel %vm1515, %v1388, %v1017
        %v1545 = vsel %vm1515, %v1391, %v1019
        %v1547 = vsel %vm1515, %v1394, %v1021
        %v1549 = vsel %vm1515, %v1397, %v1023
        %v1551 = vsel %vm1515, %v1400, %v1025
        %v1553 = vsel %vm1515, %v1403, %v1027
        %v1555 = vsel %vm1515, %v1406, %v1029
        %v1557 = vsel %vm1515, %v1409, %v1031
        %v1559 = vsel %vm1515, %v1412, %v1033
        %v1561 = vsel %vm1515, %v1415, %v1035
        %v1563 = vsel %vm1515, %v1418, %v1037
        %v1565 = vsel %vm1515, %v1421, %v1039
        %v1567 = vsel %vm1515, %v1424, %v1041
        %v1569 = vsel %vm1515, %v1427, %v1043
        %v1571 = vsel %vm1515, %v1430, %v1045
        %v1573 = vsel %vm1515, %v1433, %v1047
        %v1575 = vsel %vm1515, %v1436, %v1049
        %v1577 = vsel %vm1515, %v1439, %v1051
        %v1579 = vsel %vm1515, %v1442, %v1053
        %v1581 = vsel %vm1515, %v1445, %v1055
        %v1583 = vsel %vm1515, %v1448, %v1057
        %v1585 = vsel %vm1515, %v1451, %v1059
        %v1587 = vsel %vm1515, %v1454, %v1061
        %v1589 = vsel %vm1515, %v1457, %v1063
        %v1591 = vsel %vm1515, %v1460, %v1065
        %v1593 = vsel %vm1515, %v1463, %v1067
        %v1595 = vsel %vm1515, %v1466, %v1069
        %v1597 = vsel %vm1515, %v1469, %v1071
        %v1599 = vsel %vm1515, %v1472, %v1073
        %v1601 = vsel %vm1515, %v1475, %v1075
        %v1603 = vsel %vm1515, %v1478, %v1077
        %v1605 = vsel %vm1515, %v1481, %v1079
        %v1607 = vsel %vm1515, %v1484, %v1081
        %v1609 = vsel %vm1515, %v1487, %v1083
        %v1611 = vsel %vm1515, %v1490, %v1085
        %v1613 = vsel %vm1515, %v1493, %v1087
        %v1615 = vsel %vm1515, %v1496, %v1089
        %v1617 = vsel %vm1515, %v1499, %v1091
        %v1619 = vsel %vm1515, %v1502, %v1093
        %v1621 = vsel %vm1515, %v1505, %v1095
        %v1623 = vsel %vm1515, %v1508, %v1097
        %v1625 = vsel %vm1515, %v1511, %v1099
        %v1627 = vsel %vm1515, %v1514, %v1101
        %vm1628 = vcmask 367616
        %v1630 = vsel %vm1628, %v1517, %v1113
        %v1632 = vsel %vm1628, %v1519, %v1115
        %v1634 = vsel %vm1628, %v1521, %v1117
        %v1636 = vsel %vm1628, %v1523, %v1119
        %v1638 = vsel %vm1628, %v1525, %v1121
        %v1640 = vsel %vm1628, %v1527, %v1123
        %v1642 = vsel %vm1628, %v1529, %v1125
        %v1644 = vsel %vm1628, %v1531, %v1127
        %v1646 = vsel %vm1628, %v1533, %v1129
        %v1648 = vsel %vm1628, %v1535, %v1131
        %v1650 = vsel %vm1628, %v1537, %v1133
        %v1652 = vsel %vm1628, %v1539, %v1135
        %v1654 = vsel %vm1628, %v1541, %v1137
        %v1656 = vsel %vm1628, %v1543, %v1139
        %v1658 = vsel %vm1628, %v1545, %v1141
        %v1660 = vsel %vm1628, %v1547, %v1143
        %v1662 = vsel %vm1628, %v1549, %v1145
        %v1664 = vsel %vm1628, %v1551, %v1147
        %v1666 = vsel %vm1628, %v1553, %v1149
        %v1668 = vsel %vm1628, %v1555, %v1151
        %v1670 = vsel %vm1628, %v1557, %v1153
        %v1672 = vsel %vm1628, %v1559, %v1155
        %v1674 = vsel %vm1628, %v1561, %v1157
        %v1676 = vsel %vm1628, %v1563, %v1159
        %v1678 = vsel %vm1628, %v1565, %v1161
        %v1680 = vsel %vm1628, %v1567, %v1163
        %v1682 = vsel %vm1628, %v1569, %v1165
        %v1684 = vsel %vm1628, %v1571, %v1167
        %v1686 = vsel %vm1628, %v1573, %v1169
        %v1688 = vsel %vm1628, %v1575, %v1171
        %v1690 = vsel %vm1628, %v1577, %v1173
        %v1692 = vsel %vm1628, %v1579, %v1175
        %v1694 = vsel %vm1628, %v1581, %v1177
        %v1696 = vsel %vm1628, %v1583, %v1179
        %v1698 = vsel %vm1628, %v1585, %v1181
        %v1700 = vsel %vm1628, %v1587, %v1183
        %v1702 = vsel %vm1628, %v1589, %v1185
        %v1704 = vsel %vm1628, %v1591, %v1187
        %v1706 = vsel %vm1628, %v1593, %v1189
        %v1708 = vsel %vm1628, %v1595, %v1191
        %v1710 = vsel %vm1628, %v1597, %v1193
        %v1712 = vsel %vm1628, %v1599, %v1195
        %v1714 = vsel %vm1628, %v1601, %v1197
        %v1716 = vsel %vm1628, %v1603, %v1199
        %v1718 = vsel %vm1628, %v1605, %v1201
        %v1720 = vsel %vm1628, %v1607, %v1203
        %v1722 = vsel %vm1628, %v1609, %v1205
        %v1724 = vsel %vm1628, %v1611, %v1207
        %v1726 = vsel %vm1628, %v1613, %v1209
        %v1728 = vsel %vm1628, %v1615, %v1211
        %v1730 = vsel %vm1628, %v1617, %v1213
        %v1732 = vsel %vm1628, %v1619, %v1215
        %v1734 = vsel %vm1628, %v1621, %v1217
        %v1736 = vsel %vm1628, %v1623, %v1219
        %v1738 = vsel %vm1628, %v1625, %v1221
        %v1740 = vsel %vm1628, %v1627, %v1223
        %vm1741 = vcmask 490496
        %v1743 = vsel %vm1741, %v1630, %v1235
        %v1745 = vsel %vm1741, %v1632, %v1237
        %v1747 = vsel %vm1741, %v1634, %v1239
        %v1749 = vsel %vm1741, %v1636, %v1241
        %v1751 = vsel %vm1741, %v1638, %v1243
        %v1753 = vsel %vm1741, %v1640, %v1245
        %v1755 = vsel %vm1741, %v1642, %v1247
        %v1757 = vsel %vm1741, %v1644, %v1249
        %v1759 = vsel %vm1741, %v1646, %v1251
        %v1761 = vsel %vm1741, %v1648, %v1253
        %v1763 = vsel %vm1741, %v1650, %v1255
        %v1765 = vsel %vm1741, %v1652, %v1257
        %v1767 = vsel %vm1741, %v1654, %v1259
        %v1769 = vsel %vm1741, %v1656, %v1261
        %v1771 = vsel %vm1741, %v1658, %v1263
        %v1773 = vsel %vm1741, %v1660, %v1265
        %v1775 = vsel %vm1741, %v1662, %v1267
        %v1777 = vsel %vm1741, %v1664, %v1269
        %v1779 = vsel %vm1741, %v1666, %v1271
        %v1781 = vsel %vm1741, %v1668, %v1273
        %v1783 = vsel %vm1741, %v1670, %v1275
        %v1785 = vsel %vm1741, %v1672, %v1277
        %v1787 = vsel %vm1741, %v1674, %v1279
        %v1789 = vsel %vm1741, %v1676, %v1281
        %v1791 = vsel %vm1741, %v1678, %v1283
        %v1793 = vsel %vm1741, %v1680, %v1285
        %v1795 = vsel %vm1741, %v1682, %v1287
        %v1797 = vsel %vm1741, %v1684, %v1289
        %v1799 = vsel %vm1741, %v1686, %v1291
        %v1801 = vsel %vm1741, %v1688, %v1293
        %v1803 = vsel %vm1741, %v1690, %v1295
        %v1805 = vsel %vm1741, %v1692, %v1297
        %v1807 = vsel %vm1741, %v1694, %v1299
        %v1809 = vsel %vm1741, %v1696, %v1301
        %v1811 = vsel %vm1741, %v1698, %v1303
        %v1813 = vsel %vm1741, %v1700, %v1305
        %v1815 = vsel %vm1741, %v1702, %v1307
        %v1817 = vsel %vm1741, %v1704, %v1309
        %v1819 = vsel %vm1741, %v1706, %v1311
        %v1821 = vsel %vm1741, %v1708, %v1313
        %v1823 = vsel %vm1741, %v1710, %v1315
        %v1825 = vsel %vm1741, %v1712, %v1317
        %v1827 = vsel %vm1741, %v1714, %v1319
        %v1829 = vsel %vm1741, %v1716, %v1321
        %v1831 = vsel %vm1741, %v1718, %v1323
        %v1833 = vsel %vm1741, %v1720, %v1325
        %v1835 = vsel %vm1741, %v1722, %v1327
        %v1837 = vsel %vm1741, %v1724, %v1329
        %v1839 = vsel %vm1741, %v1726, %v1331
        %v1841 = vsel %vm1741, %v1728, %v1333
        %v1843 = vsel %vm1741, %v1730, %v1335
        %v1845 = vsel %vm1741, %v1732, %v1337
        %v1847 = vsel %vm1741, %v1734, %v1339
        %v1849 = vsel %vm1741, %v1736, %v1341
        %v1851 = vsel %vm1741, %v1738, %v1343
        %v1853 = vsel %vm1741, %v1740, %v1345
        %v1864 = vunpack.c.l.b16 %v567
        %v1865 = vunpack.c.l.b16 %v568
        %v1866 = vunpack.c.l.b16 %v569
        %v1867 = vunpack.c.l.b16 %v570
        %v1868 = vunpack.c.l.b16 %v571
        %v1869 = vunpack.c.l.b16 %v572
        %v1870 = vunpack.c.l.b16 %v573
        %v1871 = vunpack.c.l.b16 %v574
        %v1872 = vunpack.c.l.b16 %v575
        %v1873 = vunpack.c.l.b16 %v576
        %v1874 = vpack.c.b16 %v1865, %v1864
        %v1875 = vpack.c.b16 %v1867, %v1866
        %v1876 = vpack.c.b16 %v1869, %v1868
        %v1877 = vpack.c.b16 %v1871, %v1870
        %v1878 = vpack.c.b16 %v1873, %v1872
        %vm1883 = vcmask 613376
        %v1884 = vsel %vm1883, %v1743, 0
        %v1886 = vsel %vm1883, %v1745, 0
        %v1888 = vsel %vm1883, %v1747, 0
        %v1890 = vsel %vm1883, %v1749, 0
        %v1892 = vsel %vm1883, %v1751, 0
        %v1894 = vsel %vm1883, %v1753, 0
        %v1896 = vsel %vm1883, %v1755, 0
        %v1898 = vsel %vm1883, %v1757, 0
        %v1900 = vsel %vm1883, %v1759, 0
        %v1902 = vsel %vm1883, %v1761, 0
        %v1904 = vsel %vm1883, %v1763, 0
        %v1906 = vsel %vm1883, %v1765, 0
        %v1908 = vsel %vm1883, %v1767, 0
        %v1910 = vsel %vm1883, %v1769, 0
        %v1912 = vsel %vm1883, %v1771, 0
        %v1914 = vsel %vm1883, %v1773, 0
        %v1916 = vsel %vm1883, %v1775, 0
        %v1918 = vsel %vm1883, %v1777, 0
        %v1920 = vsel %vm1883, %v1779, 0
        %v1922 = vsel %vm1883, %v1781, 0
        %v1924 = vsel %vm1883, %v1783, 0
        %v1926 = vsel %vm1883, %v1785, 0
        %v1928 = vsel %vm1883, %v1787, 0
        %v1930 = vsel %vm1883, %v1789, 0
        %v1932 = vsel %vm1883, %v1791, 0
        %v1934 = vsel %vm1883, %v1793, 0
        %v1936 = vsel %vm1883, %v1795, 0
        %v1938 = vsel %vm1883, %v1797, 0
        %v1940 = vsel %vm1883, %v1799, 0
        %v1942 = vsel %vm1883, %v1801, 0
        %v1944 = vsel %vm1883, %v1803, 0
        %v1946 = vsel %vm1883, %v1805, 0
        %v1948 = vsel %vm1883, %v1807, 0
        %v1950 = vsel %vm1883, %v1809, 0
        %v1952 = vsel %vm1883, %v1811, 0
        %v1954 = vsel %vm1883, %v1813, 0
        %v1956 = vsel %vm1883, %v1815, 0
        %v1958 = vsel %vm1883, %v1817, 0
        %v1960 = vsel %vm1883, %v1819, 0
        %v1962 = vsel %vm1883, %v1821, 0
        %v1964 = vsel %vm1883, %v1823, 0
        %v1966 = vsel %vm1883, %v1825, 0
        %v1968 = vsel %vm1883, %v1827, 0
        %v1970 = vsel %vm1883, %v1829, 0
        %v1972 = vsel %vm1883, %v1831, 0
        %v1974 = vsel %vm1883, %v1833, 0
        %v1976 = vsel %vm1883, %v1835, 0
        %v1978 = vsel %vm1883, %v1837, 0
        %v1980 = vsel %vm1883, %v1839, 0
        %v1982 = vsel %vm1883, %v1841, 0
        %v1984 = vsel %vm1883, %v1843, 0
        %v1986 = vsel %vm1883, %v1845, 0
        %v1988 = vsel %vm1883, %v1847, 0
        %v1990 = vsel %vm1883, %v1849, 0
        %v1992 = vsel %vm1883, %v1851, 0
        %v1994 = vsel %vm1883, %v1853, 0
        %vm1996 = vcmask 1044480
        %vm1997 = vcmask 1045504
        %v1998 = vsel %vm1996, 4294967295, 65535
        %v1999 = vsel %vm1997, %v1998, 0
        %v2001 = vand.u32 %v1878, %v1999
        %2003 = vmatprep.subr.bf16.mxu0 0
        %2004 = vmatpush1.bf16.msra.mxu0 %v1874
        %2005 = vmatprep.subr.bf16.mxu0 0
        %2006 = vmatpush1.bf16.msra.mxu0 %v1875
        %2007 = vmatprep.subr.bf16.mxu0 0
        %2008 = vmatpush1.bf16.msra.mxu0 %v1876
        %2009 = vmatprep.subr.bf16.mxu0 0
        %2010 = vmatpush1.bf16.msra.mxu0 %v1877
        %2011 = vmatprep.subr.bf16.mxu0 0
        %2012 = vmatpush1.bf16.msra.mxu0 %v2001
        %2013 = vmatprep.subr.bf16.mxu0 0
        %2014 = vmatpush1.bf16.msra.mxu0 0
        %2015 = vmatprep.subr.bf16.mxu0 0
        %2016 = vmatpush1.bf16.msra.mxu0 0
        %2017 = vmatprep.subr.bf16.mxu0 0
        %2018 = vmatpush1.bf16.msra.mxu0 0
        %2019 = vmatprep.subr.bf16.mxu0 0
        %2020 = vmatpush1.bf16.msra.mxu0 0
        %2021 = vmatprep.subr.bf16.mxu0 0
        %2022 = vmatpush1.bf16.msra.mxu0 0
        %2023 = vmatprep.subr.bf16.mxu0 0
        %2024 = vmatpush1.bf16.msra.mxu0 0
        %2025 = vmatprep.subr.bf16.mxu0 0
        %2026 = vmatpush1.bf16.msra.mxu0 0
        %2027 = vmatprep.subr.bf16.mxu0 0
        %2028 = vmatpush1.bf16.msra.mxu0 0
        %2029 = vmatprep.subr.bf16.mxu0 0
        %2030 = vmatpush1.bf16.msra.mxu0 0
        %2031 = vmatprep.subr.bf16.mxu0 0
        %2032 = vmatpush1.bf16.msra.mxu0 0
        %2033 = vmatprep.subr.bf16.mxu0 0
        %2034 = vmatpush1.bf16.msra.mxu0 0
        %2035 = vmatprep.mubr.bf16.mxu0 0
        %2036 = vmatmul.mubr.bf16.gmra.mrb[0].mxu0 %v1884
        %v2037 = vpop.f32.mrb[0].mxu0
        %v2038 = vadd.f32 0.0, %v2037
        %v2039 = vpop.f32.mrb[0].mxu0
        %v2040 = vpop.f32.mrb[0].mxu0
        %v2041 = vadd.f32 0.0, %v2040
        %v2042 = vpop.f32.mrb[0].mxu0
        %2043 = vmatprep.mubr.bf16.mxu0 0
        %2044 = vmatmul.mubr.bf16.gmra.mrb[0].mxu0 %v1886
        %v2045 = vpop.f32.mrb[0].mxu0
        %v2046 = vadd.f32 0.0, %v2045
        %v2047 = vpop.f32.mrb[0].mxu0
        %v2048 = vpop.f32.mrb[0].mxu0
        %v2049 = vadd.f32 0.0, %v2048
        %v2050 = vpop.f32.mrb[0].mxu0
        %2051 = vmatprep.mubr.bf16.mxu0 0
        %2052 = vmatmul.mubr.bf16.gmra.mrb[0].mxu0 %v1888
        %v2053 = vpop.f32.mrb[0].mxu0
        %v2054 = vadd.f32 0.0, %v2053
        %v2055 = vpop.f32.mrb[0].mxu0
        %v2056 = vpop.f32.mrb[0].mxu0
        %v2057 = vadd.f32 0.0, %v2056
        %v2058 = vpop.f32.mrb[0].mxu0
        %2059 = vmatprep.mubr.bf16.mxu0 0
        %2060 = vmatmul.mubr.bf16.gmra.mrb[0].mxu0 %v1890
        %v2061 = vpop.f32.mrb[0].mxu0
        %v2062 = vadd.f32 0.0, %v2061
        %v2063 = vpop.f32.mrb[0].mxu0
        %v2064 = vpop.f32.mrb[0].mxu0
        %v2065 = vadd.f32 0.0, %v2064
        %v2066 = vpop.f32.mrb[0].mxu0
        %2067 = vmatprep.mubr.bf16.mxu0 0
        %2068 = vmatmul.mubr.bf16.gmra.mrb[0].mxu0 %v1892
        %v2069 = vpop.f32.mrb[0].mxu0
        %v2070 = vadd.f32 0.0, %v2069
        %v2071 = vpop.f32.mrb[0].mxu0
        %v2072 = vpop.f32.mrb[0].mxu0
        %v2073 = vadd.f32 0.0, %v2072
        %v2074 = vpop.f32.mrb[0].mxu0
        %2075 = vmatprep.mubr.bf16.mxu0 0
        %2076 = vmatmul.mubr.bf16.gmra.mrb[0].mxu0 %v1894
        %v2077 = vpop.f32.mrb[0].mxu0
        %v2078 = vadd.f32 0.0, %v2077
        %v2079 = vpop.f32.mrb[0].mxu0
        %v2080 = vpop.f32.mrb[0].mxu0
        %v2081 = vadd.f32 0.0, %v2080
        %v2082 = vpop.f32.mrb[0].mxu0
        %2083 = vmatprep.mubr.bf16.mxu0 0
        %2084 = vmatmul.mubr.bf16.gmra.mrb[0].mxu0 %v1896
        %v2085 = vpop.f32.mrb[0].mxu0
        %v2086 = vadd.f32 0.0, %v2085
        %v2087 = vpop.f32.mrb[0].mxu0
        %v2088 = vpop.f32.mrb[0].mxu0
        %v2089 = vadd.f32 0.0, %v2088
        %v2090 = vpop.f32.mrb[0].mxu0
        %2091 = vmatprep.mubr.bf16.mxu0 0
        %2092 = vmatmul.mubr.bf16.gmra.mrb[0].mxu0 %v1898
        %v2093 = vpop.f32.mrb[0].mxu0
        %v2094 = vadd.f32 0.0, %v2093
        %v2095 = vpop.f32.mrb[0].mxu0
        %v2096 = vpop.f32.mrb[0].mxu0
        %v2097 = vadd.f32 0.0, %v2096
        %v2098 = vpop.f32.mrb[0].mxu0
        %2099 = vmatprep.mubr.bf16.mxu0 0
        %2100 = vmatmul.mubr.bf16.gmra.mrb[0].mxu0 %v1900
        %v2101 = vpop.f32.mrb[0].mxu0
        %v2102 = vadd.f32 0.0, %v2101
        %v2103 = vpop.f32.mrb[0].mxu0
        %v2104 = vpop.f32.mrb[0].mxu0
        %v2105 = vadd.f32 0.0, %v2104
        %v2106 = vpop.f32.mrb[0].mxu0
        %2107 = vmatprep.mubr.bf16.mxu0 0
        %2108 = vmatmul.mubr.bf16.gmra.mrb[0].mxu0 %v1902
        %v2109 = vpop.f32.mrb[0].mxu0
        %v2110 = vadd.f32 0.0, %v2109
        %v2111 = vpop.f32.mrb[0].mxu0
        %v2112 = vpop.f32.mrb[0].mxu0
        %v2113 = vadd.f32 0.0, %v2112
        %v2114 = vpop.f32.mrb[0].mxu0
        %2115 = vmatprep.mubr.bf16.mxu0 0
        %2116 = vmatmul.mubr.bf16.gmra.mrb[0].mxu0 %v1904
        %v2117 = vpop.f32.mrb[0].mxu0
        %v2118 = vadd.f32 0.0, %v2117
        %v2119 = vpop.f32.mrb[0].mxu0
        %v2120 = vpop.f32.mrb[0].mxu0
        %v2121 = vadd.f32 0.0, %v2120
        %v2122 = vpop.f32.mrb[0].mxu0
        %2123 = vmatprep.mubr.bf16.mxu0 0
        %2124 = vmatmul.mubr.bf16.gmra.mrb[0].mxu0 %v1906
        %v2125 = vpop.f32.mrb[0].mxu0
        %v2126 = vadd.f32 0.0, %v2125
        %v2127 = vpop.f32.mrb[0].mxu0
        %v2128 = vpop.f32.mrb[0].mxu0
        %v2129 = vadd.f32 0.0, %v2128
        %v2130 = vpop.f32.mrb[0].mxu0
        %2131 = vmatprep.mubr.bf16.mxu0 0
        %2132 = vmatmul.mubr.bf16.gmra.mrb[0].mxu0 %v1908
        %v2133 = vpop.f32.mrb[0].mxu0
        %v2134 = vadd.f32 0.0, %v2133
        %v2135 = vpop.f32.mrb[0].mxu0
        %v2136 = vpop.f32.mrb[0].mxu0
        %v2137 = vadd.f32 0.0, %v2136
        %v2138 = vpop.f32.mrb[0].mxu0
        %2139 = vmatprep.mubr.bf16.mxu0 0
        %2140 = vmatmul.mubr.bf16.gmra.mrb[0].mxu0 %v1910
        %v2141 = vpop.f32.mrb[0].mxu0
        %v2142 = vadd.f32 0.0, %v2141
        %v2143 = vpop.f32.mrb[0].mxu0
        %v2144 = vpop.f32.mrb[0].mxu0
        %v2145 = vadd.f32 0.0, %v2144
        %v2146 = vpop.f32.mrb[0].mxu0
        %2147 = vmatprep.mubr.bf16.mxu0 0
        %2148 = vmatmul.mubr.bf16.gmra.mrb[0].mxu0 %v1912
        %v2149 = vpop.f32.mrb[0].mxu0
        %v2150 = vadd.f32 0.0, %v2149
        %v2151 = vpop.f32.mrb[0].mxu0
        %v2152 = vpop.f32.mrb[0].mxu0
        %v2153 = vadd.f32 0.0, %v2152
        %v2154 = vpop.f32.mrb[0].mxu0
        %2155 = vmatprep.mubr.bf16.mxu0 0
        %2156 = vmatmul.mubr.bf16.gmra.mrb[0].mxu0 %v1914
        %v2157 = vpop.f32.mrb[0].mxu0
        %v2158 = vadd.f32 0.0, %v2157
        %v2159 = vpop.f32.mrb[0].mxu0
        %v2160 = vpop.f32.mrb[0].mxu0
        %v2161 = vadd.f32 0.0, %v2160
        %v2162 = vpop.f32.mrb[0].mxu0
        %2163 = vmatprep.mubr.bf16.mxu0 0
        %2164 = vmatmul.mubr.bf16.gmra.mrb[0].mxu0 %v1916
        %v2165 = vpop.f32.mrb[0].mxu0
        %v2166 = vadd.f32 0.0, %v2165
        %v2167 = vpop.f32.mrb[0].mxu0
        %v2168 = vpop.f32.mrb[0].mxu0
        %v2169 = vadd.f32 0.0, %v2168
        %v2170 = vpop.f32.mrb[0].mxu0
        %2171 = vmatprep.mubr.bf16.mxu0 0
        %2172 = vmatmul.mubr.bf16.gmra.mrb[0].mxu0 %v1918
        %v2173 = vpop.f32.mrb[0].mxu0
        %v2174 = vadd.f32 0.0, %v2173
        %v2175 = vpop.f32.mrb[0].mxu0
        %v2176 = vpop.f32.mrb[0].mxu0
        %v2177 = vadd.f32 0.0, %v2176
        %v2178 = vpop.f32.mrb[0].mxu0
        %2179 = vmatprep.mubr.bf16.mxu0 0
        %2180 = vmatmul.mubr.bf16.gmra.mrb[0].mxu0 %v1920
        %v2181 = vpop.f32.mrb[0].mxu0
        %v2182 = vadd.f32 0.0, %v2181
        %v2183 = vpop.f32.mrb[0].mxu0
        %v2184 = vpop.f32.mrb[0].mxu0
        %v2185 = vadd.f32 0.0, %v2184
        %v2186 = vpop.f32.mrb[0].mxu0
        %2187 = vmatprep.mubr.bf16.mxu0 0
        %2188 = vmatmul.mubr.bf16.gmra.mrb[0].mxu0 %v1922
        %v2189 = vpop.f32.mrb[0].mxu0
        %v2190 = vadd.f32 0.0, %v2189
        %v2191 = vpop.f32.mrb[0].mxu0
        %v2192 = vpop.f32.mrb[0].mxu0
        %v2193 = vadd.f32 0.0, %v2192
        %v2194 = vpop.f32.mrb[0].mxu0
        %2195 = vmatprep.mubr.bf16.mxu0 0
        %2196 = vmatmul.mubr.bf16.gmra.mrb[0].mxu0 %v1924
        %v2197 = vpop.f32.mrb[0].mxu0
        %v2198 = vadd.f32 0.0, %v2197
        %v2199 = vpop.f32.mrb[0].mxu0
        %v2200 = vpop.f32.mrb[0].mxu0
        %v2201 = vadd.f32 0.0, %v2200
        %v2202 = vpop.f32.mrb[0].mxu0
        %2203 = vmatprep.mubr.bf16.mxu0 0
        %2204 = vmatmul.mubr.bf16.gmra.mrb[0].mxu0 %v1926
        %v2205 = vpop.f32.mrb[0].mxu0
        %v2206 = vadd.f32 0.0, %v2205
        %v2207 = vpop.f32.mrb[0].mxu0
        %v2208 = vpop.f32.mrb[0].mxu0
        %v2209 = vadd.f32 0.0, %v2208
        %v2210 = vpop.f32.mrb[0].mxu0
        %2211 = vmatprep.mubr.bf16.mxu0 0
        %2212 = vmatmul.mubr.bf16.gmra.mrb[0].mxu0 %v1928
        %v2213 = vpop.f32.mrb[0].mxu0
        %v2214 = vadd.f32 0.0, %v2213
        %v2215 = vpop.f32.mrb[0].mxu0
        %v2216 = vpop.f32.mrb[0].mxu0
        %v2217 = vadd.f32 0.0, %v2216
        %v2218 = vpop.f32.mrb[0].mxu0
        %2219 = vmatprep.mubr.bf16.mxu0 0
        %2220 = vmatmul.mubr.bf16.gmra.mrb[0].mxu0 %v1930
        %v2221 = vpop.f32.mrb[0].mxu0
        %v2222 = vadd.f32 0.0, %v2221
        %v2223 = vpop.f32.mrb[0].mxu0
        %v2224 = vpop.f32.mrb[0].mxu0
        %v2225 = vadd.f32 0.0, %v2224
        %v2226 = vpop.f32.mrb[0].mxu0
        %2227 = vmatprep.mubr.bf16.mxu0 0
        %2228 = vmatmul.mubr.bf16.gmra.mrb[0].mxu0 %v1932
        %v2229 = vpop.f32.mrb[0].mxu0
        %v2230 = vadd.f32 0.0, %v2229
        %v2231 = vpop.f32.mrb[0].mxu0
        %v2232 = vpop.f32.mrb[0].mxu0
        %v2233 = vadd.f32 0.0, %v2232
        %v2234 = vpop.f32.mrb[0].mxu0
        %2235 = vmatprep.mubr.bf16.mxu0 0
        %2236 = vmatmul.mubr.bf16.gmra.mrb[0].mxu0 %v1934
        %v2237 = vpop.f32.mrb[0].mxu0
        %v2238 = vadd.f32 0.0, %v2237
        %v2239 = vpop.f32.mrb[0].mxu0
        %v2240 = vpop.f32.mrb[0].mxu0
        %v2241 = vadd.f32 0.0, %v2240
        %v2242 = vpop.f32.mrb[0].mxu0
        %2243 = vmatprep.mubr.bf16.mxu0 0
        %2244 = vmatmul.mubr.bf16.gmra.mrb[0].mxu0 %v1936
        %v2245 = vpop.f32.mrb[0].mxu0
        %v2246 = vadd.f32 0.0, %v2245
        %v2247 = vpop.f32.mrb[0].mxu0
        %v2248 = vpop.f32.mrb[0].mxu0
        %v2249 = vadd.f32 0.0, %v2248
        %v2250 = vpop.f32.mrb[0].mxu0
        %2251 = vmatprep.mubr.bf16.mxu0 0
        %2252 = vmatmul.mubr.bf16.gmra.mrb[0].mxu0 %v1938
        %v2253 = vpop.f32.mrb[0].mxu0
        %v2254 = vadd.f32 0.0, %v2253
        %v2255 = vpop.f32.mrb[0].mxu0
        %v2256 = vpop.f32.mrb[0].mxu0
        %v2257 = vadd.f32 0.0, %v2256
        %v2258 = vpop.f32.mrb[0].mxu0
        %2259 = vmatprep.mubr.bf16.mxu0 0
        %2260 = vmatmul.mubr.bf16.gmra.mrb[0].mxu0 %v1940
        %v2261 = vpop.f32.mrb[0].mxu0
        %v2262 = vadd.f32 0.0, %v2261
        %v2263 = vpop.f32.mrb[0].mxu0
        %v2264 = vpop.f32.mrb[0].mxu0
        %v2265 = vadd.f32 0.0, %v2264
        %v2266 = vpop.f32.mrb[0].mxu0
        %2267 = vmatprep.mubr.bf16.mxu0 0
        %2268 = vmatmul.mubr.bf16.gmra.mrb[0].mxu0 %v1942
        %v2269 = vpop.f32.mrb[0].mxu0
        %v2270 = vadd.f32 0.0, %v2269
        %v2271 = vpop.f32.mrb[0].mxu0
        %v2272 = vpop.f32.mrb[0].mxu0
        %v2273 = vadd.f32 0.0, %v2272
        %v2274 = vpop.f32.mrb[0].mxu0
        %2275 = vmatprep.mubr.bf16.mxu0 0
        %2276 = vmatmul.mubr.bf16.gmra.mrb[0].mxu0 %v1944
        %v2277 = vpop.f32.mrb[0].mxu0
        %v2278 = vadd.f32 0.0, %v2277
        %v2279 = vpop.f32.mrb[0].mxu0
        %v2280 = vpop.f32.mrb[0].mxu0
        %v2281 = vadd.f32 0.0, %v2280
        %v2282 = vpop.f32.mrb[0].mxu0
        %2283 = vmatprep.mubr.bf16.mxu0 0
        %2284 = vmatmul.mubr.bf16.gmra.mrb[0].mxu0 %v1946
        %v2285 = vpop.f32.mrb[0].mxu0
        %v2286 = vadd.f32 0.0, %v2285
        %v2287 = vpop.f32.mrb[0].mxu0
        %v2288 = vpop.f32.mrb[0].mxu0
        %v2289 = vadd.f32 0.0, %v2288
        %v2290 = vpop.f32.mrb[0].mxu0
        %2291 = vmatprep.mubr.bf16.mxu0 0
        %2292 = vmatmul.mubr.bf16.gmra.mrb[0].mxu0 %v1948
        %v2293 = vpop.f32.mrb[0].mxu0
        %v2294 = vadd.f32 0.0, %v2293
        %v2295 = vpop.f32.mrb[0].mxu0
        %v2296 = vpop.f32.mrb[0].mxu0
        %v2297 = vadd.f32 0.0, %v2296
        %v2298 = vpop.f32.mrb[0].mxu0
        %2299 = vmatprep.mubr.bf16.mxu0 0
        %2300 = vmatmul.mubr.bf16.gmra.mrb[0].mxu0 %v1950
        %v2301 = vpop.f32.mrb[0].mxu0
        %v2302 = vadd.f32 0.0, %v2301
        %v2303 = vpop.f32.mrb[0].mxu0
        %v2304 = vpop.f32.mrb[0].mxu0
        %v2305 = vadd.f32 0.0, %v2304
        %v2306 = vpop.f32.mrb[0].mxu0
        %2307 = vmatprep.mubr.bf16.mxu0 0
        %2308 = vmatmul.mubr.bf16.gmra.mrb[0].mxu0 %v1952
        %v2309 = vpop.f32.mrb[0].mxu0
        %v2310 = vadd.f32 0.0, %v2309
        %v2311 = vpop.f32.mrb[0].mxu0
        %v2312 = vpop.f32.mrb[0].mxu0
        %v2313 = vadd.f32 0.0, %v2312
        %v2314 = vpop.f32.mrb[0].mxu0
        %2315 = vmatprep.mubr.bf16.mxu0 0
        %2316 = vmatmul.mubr.bf16.gmra.mrb[0].mxu0 %v1954
        %v2317 = vpop.f32.mrb[0].mxu0
        %v2318 = vadd.f32 0.0, %v2317
        %v2319 = vpop.f32.mrb[0].mxu0
        %v2320 = vpop.f32.mrb[0].mxu0
        %v2321 = vadd.f32 0.0, %v2320
        %v2322 = vpop.f32.mrb[0].mxu0
        %2323 = vmatprep.mubr.bf16.mxu0 0
        %2324 = vmatmul.mubr.bf16.gmra.mrb[0].mxu0 %v1956
        %v2325 = vpop.f32.mrb[0].mxu0
        %v2326 = vadd.f32 0.0, %v2325
        %v2327 = vpop.f32.mrb[0].mxu0
        %v2328 = vpop.f32.mrb[0].mxu0
        %v2329 = vadd.f32 0.0, %v2328
        %v2330 = vpop.f32.mrb[0].mxu0
        %2331 = vmatprep.mubr.bf16.mxu0 0
        %2332 = vmatmul.mubr.bf16.gmra.mrb[0].mxu0 %v1958
        %v2333 = vpop.f32.mrb[0].mxu0
        %v2334 = vadd.f32 0.0, %v2333
        %v2335 = vpop.f32.mrb[0].mxu0
        %v2336 = vpop.f32.mrb[0].mxu0
        %v2337 = vadd.f32 0.0, %v2336
        %v2338 = vpop.f32.mrb[0].mxu0
        %2339 = vmatprep.mubr.bf16.mxu0 0
        %2340 = vmatmul.mubr.bf16.gmra.mrb[0].mxu0 %v1960
        %v2341 = vpop.f32.mrb[0].mxu0
        %v2342 = vadd.f32 0.0, %v2341
        %v2343 = vpop.f32.mrb[0].mxu0
        %v2344 = vpop.f32.mrb[0].mxu0
        %v2345 = vadd.f32 0.0, %v2344
        %v2346 = vpop.f32.mrb[0].mxu0
        %2347 = vmatprep.mubr.bf16.mxu0 0
        %2348 = vmatmul.mubr.bf16.gmra.mrb[0].mxu0 %v1962
        %v2349 = vpop.f32.mrb[0].mxu0
        %v2350 = vadd.f32 0.0, %v2349
        %v2351 = vpop.f32.mrb[0].mxu0
        %v2352 = vpop.f32.mrb[0].mxu0
        %v2353 = vadd.f32 0.0, %v2352
        %v2354 = vpop.f32.mrb[0].mxu0
        %2355 = vmatprep.mubr.bf16.mxu0 0
        %2356 = vmatmul.mubr.bf16.gmra.mrb[0].mxu0 %v1964
        %v2357 = vpop.f32.mrb[0].mxu0
        %v2358 = vadd.f32 0.0, %v2357
        %v2359 = vpop.f32.mrb[0].mxu0
        %v2360 = vpop.f32.mrb[0].mxu0
        %v2361 = vadd.f32 0.0, %v2360
        %v2362 = vpop.f32.mrb[0].mxu0
        %2363 = vmatprep.mubr.bf16.mxu0 0
        %2364 = vmatmul.mubr.bf16.gmra.mrb[0].mxu0 %v1966
        %v2365 = vpop.f32.mrb[0].mxu0
        %v2366 = vadd.f32 0.0, %v2365
        %v2367 = vpop.f32.mrb[0].mxu0
        %v2368 = vpop.f32.mrb[0].mxu0
        %v2369 = vadd.f32 0.0, %v2368
        %v2370 = vpop.f32.mrb[0].mxu0
        %2371 = vmatprep.mubr.bf16.mxu0 0
        %2372 = vmatmul.mubr.bf16.gmra.mrb[0].mxu0 %v1968
        %v2373 = vpop.f32.mrb[0].mxu0
        %v2374 = vadd.f32 0.0, %v2373
        %v2375 = vpop.f32.mrb[0].mxu0
        %v2376 = vpop.f32.mrb[0].mxu0
        %v2377 = vadd.f32 0.0, %v2376
        %v2378 = vpop.f32.mrb[0].mxu0
        %2379 = vmatprep.mubr.bf16.mxu0 0
        %2380 = vmatmul.mubr.bf16.gmra.mrb[0].mxu0 %v1970
        %v2381 = vpop.f32.mrb[0].mxu0
        %v2382 = vadd.f32 0.0, %v2381
        %v2383 = vpop.f32.mrb[0].mxu0
        %v2384 = vpop.f32.mrb[0].mxu0
        %v2385 = vadd.f32 0.0, %v2384
        %v2386 = vpop.f32.mrb[0].mxu0
        %2387 = vmatprep.mubr.bf16.mxu0 0
        %2388 = vmatmul.mubr.bf16.gmra.mrb[0].mxu0 %v1972
        %v2389 = vpop.f32.mrb[0].mxu0
        %v2390 = vadd.f32 0.0, %v2389
        %v2391 = vpop.f32.mrb[0].mxu0
        %v2392 = vpop.f32.mrb[0].mxu0
        %v2393 = vadd.f32 0.0, %v2392
        %v2394 = vpop.f32.mrb[0].mxu0
        %2395 = vmatprep.mubr.bf16.mxu0 0
        %2396 = vmatmul.mubr.bf16.gmra.mrb[0].mxu0 %v1974
        %v2397 = vpop.f32.mrb[0].mxu0
        %v2398 = vadd.f32 0.0, %v2397
        %v2399 = vpop.f32.mrb[0].mxu0
        %v2400 = vpop.f32.mrb[0].mxu0
        %v2401 = vadd.f32 0.0, %v2400
        %v2402 = vpop.f32.mrb[0].mxu0
        %2403 = vmatprep.mubr.bf16.mxu0 0
        %2404 = vmatmul.mubr.bf16.gmra.mrb[0].mxu0 %v1976
        %v2405 = vpop.f32.mrb[0].mxu0
        %v2406 = vadd.f32 0.0, %v2405
        %v2407 = vpop.f32.mrb[0].mxu0
        %v2408 = vpop.f32.mrb[0].mxu0
        %v2409 = vadd.f32 0.0, %v2408
        %v2410 = vpop.f32.mrb[0].mxu0
        %2411 = vmatprep.mubr.bf16.mxu0 0
        %2412 = vmatmul.mubr.bf16.gmra.mrb[0].mxu0 %v1978
        %v2413 = vpop.f32.mrb[0].mxu0
        %v2414 = vadd.f32 0.0, %v2413
        %v2415 = vpop.f32.mrb[0].mxu0
        %v2416 = vpop.f32.mrb[0].mxu0
        %v2417 = vadd.f32 0.0, %v2416
        %v2418 = vpop.f32.mrb[0].mxu0
        %2419 = vmatprep.mubr.bf16.mxu0 0
        %2420 = vmatmul.mubr.bf16.gmra.mrb[0].mxu0 %v1980
        %v2421 = vpop.f32.mrb[0].mxu0
        %v2422 = vadd.f32 0.0, %v2421
        %v2423 = vpop.f32.mrb[0].mxu0
        %v2424 = vpop.f32.mrb[0].mxu0
        %v2425 = vadd.f32 0.0, %v2424
        %v2426 = vpop.f32.mrb[0].mxu0
        %2427 = vmatprep.mubr.bf16.mxu0 0
        %2428 = vmatmul.mubr.bf16.gmra.mrb[0].mxu0 %v1982
        %v2429 = vpop.f32.mrb[0].mxu0
        %v2430 = vadd.f32 0.0, %v2429
        %v2431 = vpop.f32.mrb[0].mxu0
        %v2432 = vpop.f32.mrb[0].mxu0
        %v2433 = vadd.f32 0.0, %v2432
        %v2434 = vpop.f32.mrb[0].mxu0
        %2435 = vmatprep.mubr.bf16.mxu0 0
        %2436 = vmatmul.mubr.bf16.gmra.mrb[0].mxu0 %v1984
        %v2437 = vpop.f32.mrb[0].mxu0
        %v2438 = vadd.f32 0.0, %v2437
        %v2439 = vpop.f32.mrb[0].mxu0
        %v2440 = vpop.f32.mrb[0].mxu0
        %v2441 = vadd.f32 0.0, %v2440
        %v2442 = vpop.f32.mrb[0].mxu0
        %2443 = vmatprep.mubr.bf16.mxu0 0
        %2444 = vmatmul.mubr.bf16.gmra.mrb[0].mxu0 %v1986
        %v2445 = vpop.f32.mrb[0].mxu0
        %v2446 = vadd.f32 0.0, %v2445
        %v2447 = vpop.f32.mrb[0].mxu0
        %v2448 = vpop.f32.mrb[0].mxu0
        %v2449 = vadd.f32 0.0, %v2448
        %v2450 = vpop.f32.mrb[0].mxu0
        %2451 = vmatprep.mubr.bf16.mxu0 0
        %2452 = vmatmul.mubr.bf16.gmra.mrb[0].mxu0 %v1988
        %v2453 = vpop.f32.mrb[0].mxu0
        %v2454 = vadd.f32 0.0, %v2453
        %v2455 = vpop.f32.mrb[0].mxu0
        %v2456 = vpop.f32.mrb[0].mxu0
        %v2457 = vadd.f32 0.0, %v2456
        %v2458 = vpop.f32.mrb[0].mxu0
        %2459 = vmatprep.mubr.bf16.mxu0 0
        %2460 = vmatmul.mubr.bf16.gmra.mrb[0].mxu0 %v1990
        %v2461 = vpop.f32.mrb[0].mxu0
        %v2462 = vadd.f32 0.0, %v2461
        %v2463 = vpop.f32.mrb[0].mxu0
        %v2464 = vpop.f32.mrb[0].mxu0
        %v2465 = vadd.f32 0.0, %v2464
        %v2466 = vpop.f32.mrb[0].mxu0
        %2467 = vmatprep.mubr.bf16.mxu0 0
        %2468 = vmatmul.mubr.bf16.gmra.mrb[0].mxu0 %v1992
        %v2469 = vpop.f32.mrb[0].mxu0
        %v2470 = vadd.f32 0.0, %v2469
        %v2471 = vpop.f32.mrb[0].mxu0
        %v2472 = vpop.f32.mrb[0].mxu0
        %v2473 = vadd.f32 0.0, %v2472
        %v2474 = vpop.f32.mrb[0].mxu0
        %2475 = vmatprep.mubr.bf16.mxu0 0
        %2476 = vmatmul.mubr.bf16.gmra.mrb[0].mxu0 %v1994
        %v2477 = vpop.f32.mrb[0].mxu0
        %v2478 = vadd.f32 0.0, %v2477
        %v2479 = vpop.f32.mrb[0].mxu0
        %v2480 = vpop.f32.mrb[0].mxu0
        %v2481 = vadd.f32 0.0, %v2480
        %v2482 = vpop.f32.mrb[0].mxu0
        %2483 = vdwg.mxu0
        %v2484 = vmax.f32 %v2038, %v2054
        %v2485 = vmax.f32 %v2041, %v2057
        %v2486 = vmax.f32 %v2046, %v2062
        %v2487 = vmax.f32 %v2049, %v2065
        %v2488 = vmax.f32 %v2070, %v2086
        %v2489 = vmax.f32 %v2073, %v2089
        %v2490 = vmax.f32 %v2078, %v2094
        %v2491 = vmax.f32 %v2081, %v2097
        %v2492 = vmax.f32 %v2102, %v2118
        %v2493 = vmax.f32 %v2105, %v2121
        %v2494 = vmax.f32 %v2110, %v2126
        %v2495 = vmax.f32 %v2113, %v2129
        %v2496 = vmax.f32 %v2134, %v2150
        %v2497 = vmax.f32 %v2137, %v2153
        %v2498 = vmax.f32 %v2142, %v2158
        %v2499 = vmax.f32 %v2145, %v2161
        %v2500 = vmax.f32 %v2166, %v2182
        %v2501 = vmax.f32 %v2169, %v2185
        %v2502 = vmax.f32 %v2174, %v2190
        %v2503 = vmax.f32 %v2177, %v2193
        %v2504 = vmax.f32 %v2198, %v2214
        %v2505 = vmax.f32 %v2201, %v2217
        %v2506 = vmax.f32 %v2206, %v2222
        %v2507 = vmax.f32 %v2209, %v2225
        %v2508 = vmax.f32 %v2230, %v2246
        %v2509 = vmax.f32 %v2233, %v2249
        %v2510 = vmax.f32 %v2238, %v2254
        %v2511 = vmax.f32 %v2241, %v2257
        %v2512 = vmax.f32 %v2262, %v2278
        %v2513 = vmax.f32 %v2265, %v2281
        %v2514 = vmax.f32 %v2270, %v2286
        %v2515 = vmax.f32 %v2273, %v2289
        %v2516 = vmax.f32 %v2294, %v2310
        %v2517 = vmax.f32 %v2297, %v2313
        %v2518 = vmax.f32 %v2302, %v2318
        %v2519 = vmax.f32 %v2305, %v2321
        %v2520 = vmax.f32 %v2326, %v2342
        %v2521 = vmax.f32 %v2329, %v2345
        %v2522 = vmax.f32 %v2334, %v2350
        %v2523 = vmax.f32 %v2337, %v2353
        %v2524 = vmax.f32 %v2358, %v2374
        %v2525 = vmax.f32 %v2361, %v2377
        %v2526 = vmax.f32 %v2366, %v2382
        %v2527 = vmax.f32 %v2369, %v2385
        %v2528 = vmax.f32 %v2390, %v2406
        %v2529 = vmax.f32 %v2393, %v2409
        %v2530 = vmax.f32 %v2398, %v2414
        %v2531 = vmax.f32 %v2401, %v2417
        %v2532 = vmax.f32 %v2422, %v2438
        %v2533 = vmax.f32 %v2425, %v2441
        %v2534 = vmax.f32 %v2430, %v2446
        %v2535 = vmax.f32 %v2433, %v2449
        %v2536 = vmax.f32 %v2454, %v2470
        %v2537 = vmax.f32 %v2457, %v2473
        %v2538 = vmax.f32 %v2462, %v2478
        %v2539 = vmax.f32 %v2465, %v2481
        %v2596 = vcombine.high %v2484, %v2484
        %v2598 = vunpack.c.l.s4 1983009808
        %v2599 = vunpack.c.0.s8 %v2598
        %v2600 = vlaneseq
        %v2601 = vshrl.u32 %v2600, 7
        %v2602 = vsub.s32 %v2599, %v2601
        %v2603 = vrot.slane %v2484, %v2602
        %v2605 = vunpack.c.l.s4 1983009808
        %v2606 = vunpack.c.0.s8 %v2605
        %v2607 = vlaneseq
        %v2608 = vshrl.u32 %v2607, 7
        %v2609 = vsub.s32 %v2606, %v2608
        %v2610 = vrot.slane %v2596, %v2609
        %v2611 = vcombine.high %v2603, %v2603
        %v2612 = vcombine.high %v2610, %v2610
        %v2613 = vcombine.high %v2485, %v2485
        %v2615 = vunpack.c.l.s4 1983009808
        %v2616 = vunpack.c.0.s8 %v2615
        %v2617 = vlaneseq
        %v2618 = vshrl.u32 %v2617, 7
        %v2619 = vsub.s32 %v2616, %v2618
        %v2620 = vrot.slane %v2485, %v2619
        %v2622 = vunpack.c.l.s4 1983009808
        %v2623 = vunpack.c.0.s8 %v2622
        %v2624 = vlaneseq
        %v2625 = vshrl.u32 %v2624, 7
        %v2626 = vsub.s32 %v2623, %v2625
        %v2627 = vrot.slane %v2613, %v2626
        %v2628 = vcombine.high %v2620, %v2620
        %v2629 = vcombine.high %v2627, %v2627
        %v2630 = vcombine.high %v2486, %v2486
        %v2632 = vunpack.c.l.s4 1983009808
        %v2633 = vunpack.c.0.s8 %v2632
        %v2634 = vlaneseq
        %v2635 = vshrl.u32 %v2634, 7
        %v2636 = vsub.s32 %v2633, %v2635
        %v2637 = vrot.slane %v2486, %v2636
        %v2639 = vunpack.c.l.s4 1983009808
        %v2640 = vunpack.c.0.s8 %v2639
        %v2641 = vlaneseq
        %v2642 = vshrl.u32 %v2641, 7
        %v2643 = vsub.s32 %v2640, %v2642
        %v2644 = vrot.slane %v2630, %v2643
        %v2645 = vcombine.high %v2637, %v2637
        %v2646 = vcombine.high %v2644, %v2644
        %v2648 = vunpack.c.l.s4 1983009808
        %v2649 = vunpack.c.0.s8 %v2648
        %v2650 = vlaneseq
        %v2651 = vshrl.u32 %v2650, 7
        %v2652 = vsub.s32 %v2649, %v2651
        %v2653 = vrot.slane %v2487, %v2652
        %v2654 = vcombine.high %v2653, %v2653
        %v2655 = vcombine.high %v2488, %v2488
        %v2657 = vunpack.c.l.s4 1983009808
        %v2658 = vunpack.c.0.s8 %v2657
        %v2659 = vlaneseq
        %v2660 = vshrl.u32 %v2659, 7
        %v2661 = vsub.s32 %v2658, %v2660
        %v2662 = vrot.slane %v2488, %v2661
        %v2664 = vunpack.c.l.s4 1983009808
        %v2665 = vunpack.c.0.s8 %v2664
        %v2666 = vlaneseq
        %v2667 = vshrl.u32 %v2666, 7
        %v2668 = vsub.s32 %v2665, %v2667
        %v2669 = vrot.slane %v2655, %v2668
        %v2670 = vcombine.high %v2662, %v2662
        %v2671 = vcombine.high %v2669, %v2669
        %v2672 = vcombine.high %v2489, %v2489
        %v2674 = vunpack.c.l.s4 1983009808
        %v2675 = vunpack.c.0.s8 %v2674
        %v2676 = vlaneseq
        %v2677 = vshrl.u32 %v2676, 7
        %v2678 = vsub.s32 %v2675, %v2677
        %v2679 = vrot.slane %v2489, %v2678
        %v2681 = vunpack.c.l.s4 1983009808
        %v2682 = vunpack.c.0.s8 %v2681
        %v2683 = vlaneseq
        %v2684 = vshrl.u32 %v2683, 7
        %v2685 = vsub.s32 %v2682, %v2684
        %v2686 = vrot.slane %v2672, %v2685
        %v2687 = vcombine.high %v2679, %v2679
        %v2688 = vcombine.high %v2686, %v2686
        %v2689 = vcombine.high %v2490, %v2490
        %v2691 = vunpack.c.l.s4 1983009808
        %v2692 = vunpack.c.0.s8 %v2691
        %v2693 = vlaneseq
        %v2694 = vshrl.u32 %v2693, 7
        %v2695 = vsub.s32 %v2692, %v2694
        %v2696 = vrot.slane %v2490, %v2695
        %v2698 = vunpack.c.l.s4 1983009808
        %v2699 = vunpack.c.0.s8 %v2698
        %v2700 = vlaneseq
        %v2701 = vshrl.u32 %v2700, 7
        %v2702 = vsub.s32 %v2699, %v2701
        %v2703 = vrot.slane %v2689, %v2702
        %v2704 = vcombine.high %v2696, %v2696
        %v2705 = vcombine.high %v2703, %v2703
        %v2707 = vunpack.c.l.s4 1983009808
        %v2708 = vunpack.c.0.s8 %v2707
        %v2709 = vlaneseq
        %v2710 = vshrl.u32 %v2709, 7
        %v2711 = vsub.s32 %v2708, %v2710
        %v2712 = vrot.slane %v2491, %v2711
        %v2713 = vcombine.high %v2712, %v2712
        %v2714 = vcombine.high %v2492, %v2492
        %v2716 = vunpack.c.l.s4 1983009808
        %v2717 = vunpack.c.0.s8 %v2716
        %v2718 = vlaneseq
        %v2719 = vshrl.u32 %v2718, 7
        %v2720 = vsub.s32 %v2717, %v2719
        %v2721 = vrot.slane %v2492, %v2720
        %v2723 = vunpack.c.l.s4 1983009808
        %v2724 = vunpack.c.0.s8 %v2723
        %v2725 = vlaneseq
        %v2726 = vshrl.u32 %v2725, 7
        %v2727 = vsub.s32 %v2724, %v2726
        %v2728 = vrot.slane %v2714, %v2727
        %v2729 = vcombine.high %v2721, %v2721
        %v2730 = vcombine.high %v2728, %v2728
        %v2731 = vcombine.high %v2493, %v2493
        %v2733 = vunpack.c.l.s4 1983009808
        %v2734 = vunpack.c.0.s8 %v2733
        %v2735 = vlaneseq
        %v2736 = vshrl.u32 %v2735, 7
        %v2737 = vsub.s32 %v2734, %v2736
        %v2738 = vrot.slane %v2493, %v2737
        %v2740 = vunpack.c.l.s4 1983009808
        %v2741 = vunpack.c.0.s8 %v2740
        %v2742 = vlaneseq
        %v2743 = vshrl.u32 %v2742, 7
        %v2744 = vsub.s32 %v2741, %v2743
        %v2745 = vrot.slane %v2731, %v2744
        %v2746 = vcombine.high %v2738, %v2738
        %v2747 = vcombine.high %v2745, %v2745
        %v2748 = vcombine.high %v2494, %v2494
        %v2750 = vunpack.c.l.s4 1983009808
        %v2751 = vunpack.c.0.s8 %v2750
        %v2752 = vlaneseq
        %v2753 = vshrl.u32 %v2752, 7
        %v2754 = vsub.s32 %v2751, %v2753
        %v2755 = vrot.slane %v2494, %v2754
        %v2757 = vunpack.c.l.s4 1983009808
        %v2758 = vunpack.c.0.s8 %v2757
        %v2759 = vlaneseq
        %v2760 = vshrl.u32 %v2759, 7
        %v2761 = vsub.s32 %v2758, %v2760
        %v2762 = vrot.slane %v2748, %v2761
        %v2763 = vcombine.high %v2755, %v2755
        %v2764 = vcombine.high %v2762, %v2762
        %v2766 = vunpack.c.l.s4 1983009808
        %v2767 = vunpack.c.0.s8 %v2766
        %v2768 = vlaneseq
        %v2769 = vshrl.u32 %v2768, 7
        %v2770 = vsub.s32 %v2767, %v2769
        %v2771 = vrot.slane %v2495, %v2770
        %v2772 = vcombine.high %v2771, %v2771
        %v2773 = vcombine.high %v2496, %v2496
        %v2775 = vunpack.c.l.s4 1983009808
        %v2776 = vunpack.c.0.s8 %v2775
        %v2777 = vlaneseq
        %v2778 = vshrl.u32 %v2777, 7
        %v2779 = vsub.s32 %v2776, %v2778
        %v2780 = vrot.slane %v2496, %v2779
        %v2782 = vunpack.c.l.s4 1983009808
        %v2783 = vunpack.c.0.s8 %v2782
        %v2784 = vlaneseq
        %v2785 = vshrl.u32 %v2784, 7
        %v2786 = vsub.s32 %v2783, %v2785
        %v2787 = vrot.slane %v2773, %v2786
        %v2788 = vcombine.high %v2780, %v2780
        %v2789 = vcombine.high %v2787, %v2787
        %v2790 = vcombine.high %v2497, %v2497
        %v2792 = vunpack.c.l.s4 1983009808
        %v2793 = vunpack.c.0.s8 %v2792
        %v2794 = vlaneseq
        %v2795 = vshrl.u32 %v2794, 7
        %v2796 = vsub.s32 %v2793, %v2795
        %v2797 = vrot.slane %v2497, %v2796
        %v2799 = vunpack.c.l.s4 1983009808
        %v2800 = vunpack.c.0.s8 %v2799
        %v2801 = vlaneseq
        %v2802 = vshrl.u32 %v2801, 7
        %v2803 = vsub.s32 %v2800, %v2802
        %v2804 = vrot.slane %v2790, %v2803
        %v2805 = vcombine.high %v2797, %v2797
        %v2806 = vcombine.high %v2804, %v2804
        %v2807 = vcombine.high %v2498, %v2498
        %v2809 = vunpack.c.l.s4 1983009808
        %v2810 = vunpack.c.0.s8 %v2809
        %v2811 = vlaneseq
        %v2812 = vshrl.u32 %v2811, 7
        %v2813 = vsub.s32 %v2810, %v2812
        %v2814 = vrot.slane %v2498, %v2813
        %v2816 = vunpack.c.l.s4 1983009808
        %v2817 = vunpack.c.0.s8 %v2816
        %v2818 = vlaneseq
        %v2819 = vshrl.u32 %v2818, 7
        %v2820 = vsub.s32 %v2817, %v2819
        %v2821 = vrot.slane %v2807, %v2820
        %v2822 = vcombine.high %v2814, %v2814
        %v2823 = vcombine.high %v2821, %v2821
        %v2825 = vunpack.c.l.s4 1983009808
        %v2826 = vunpack.c.0.s8 %v2825
        %v2827 = vlaneseq
        %v2828 = vshrl.u32 %v2827, 7
        %v2829 = vsub.s32 %v2826, %v2828
        %v2830 = vrot.slane %v2499, %v2829
        %v2831 = vcombine.high %v2830, %v2830
        %v2832 = vcombine.high %v2500, %v2500
        %v2834 = vunpack.c.l.s4 1983009808
        %v2835 = vunpack.c.0.s8 %v2834
        %v2836 = vlaneseq
        %v2837 = vshrl.u32 %v2836, 7
        %v2838 = vsub.s32 %v2835, %v2837
        %v2839 = vrot.slane %v2500, %v2838
        %v2841 = vunpack.c.l.s4 1983009808
        %v2842 = vunpack.c.0.s8 %v2841
        %v2843 = vlaneseq
        %v2844 = vshrl.u32 %v2843, 7
        %v2845 = vsub.s32 %v2842, %v2844
        %v2846 = vrot.slane %v2832, %v2845
        %v2847 = vcombine.high %v2839, %v2839
        %v2848 = vcombine.high %v2846, %v2846
        %v2849 = vcombine.high %v2501, %v2501
        %v2851 = vunpack.c.l.s4 1983009808
        %v2852 = vunpack.c.0.s8 %v2851
        %v2853 = vlaneseq
        %v2854 = vshrl.u32 %v2853, 7
        %v2855 = vsub.s32 %v2852, %v2854
        %v2856 = vrot.slane %v2501, %v2855
        %v2858 = vunpack.c.l.s4 1983009808
        %v2859 = vunpack.c.0.s8 %v2858
        %v2860 = vlaneseq
        %v2861 = vshrl.u32 %v2860, 7
        %v2862 = vsub.s32 %v2859, %v2861
        %v2863 = vrot.slane %v2849, %v2862
        %v2864 = vcombine.high %v2856, %v2856
        %v2865 = vcombine.high %v2863, %v2863
        %v2866 = vcombine.high %v2502, %v2502
        %v2868 = vunpack.c.l.s4 1983009808
        %v2869 = vunpack.c.0.s8 %v2868
        %v2870 = vlaneseq
        %v2871 = vshrl.u32 %v2870, 7
        %v2872 = vsub.s32 %v2869, %v2871
        %v2873 = vrot.slane %v2502, %v2872
        %v2875 = vunpack.c.l.s4 1983009808
        %v2876 = vunpack.c.0.s8 %v2875
        %v2877 = vlaneseq
        %v2878 = vshrl.u32 %v2877, 7
        %v2879 = vsub.s32 %v2876, %v2878
        %v2880 = vrot.slane %v2866, %v2879
        %v2881 = vcombine.high %v2873, %v2873
        %v2882 = vcombine.high %v2880, %v2880
        %v2884 = vunpack.c.l.s4 1983009808
        %v2885 = vunpack.c.0.s8 %v2884
        %v2886 = vlaneseq
        %v2887 = vshrl.u32 %v2886, 7
        %v2888 = vsub.s32 %v2885, %v2887
        %v2889 = vrot.slane %v2503, %v2888
        %v2890 = vcombine.high %v2889, %v2889
        %v2891 = vcombine.high %v2504, %v2504
        %v2893 = vunpack.c.l.s4 1983009808
        %v2894 = vunpack.c.0.s8 %v2893
        %v2895 = vlaneseq
        %v2896 = vshrl.u32 %v2895, 7
        %v2897 = vsub.s32 %v2894, %v2896
        %v2898 = vrot.slane %v2504, %v2897
        %v2900 = vunpack.c.l.s4 1983009808
        %v2901 = vunpack.c.0.s8 %v2900
        %v2902 = vlaneseq
        %v2903 = vshrl.u32 %v2902, 7
        %v2904 = vsub.s32 %v2901, %v2903
        %v2905 = vrot.slane %v2891, %v2904
        %v2906 = vcombine.high %v2898, %v2898
        %v2907 = vcombine.high %v2905, %v2905
        %v2908 = vcombine.high %v2505, %v2505
        %v2910 = vunpack.c.l.s4 1983009808
        %v2911 = vunpack.c.0.s8 %v2910
        %v2912 = vlaneseq
        %v2913 = vshrl.u32 %v2912, 7
        %v2914 = vsub.s32 %v2911, %v2913
        %v2915 = vrot.slane %v2505, %v2914
        %v2917 = vunpack.c.l.s4 1983009808
        %v2918 = vunpack.c.0.s8 %v2917
        %v2919 = vlaneseq
        %v2920 = vshrl.u32 %v2919, 7
        %v2921 = vsub.s32 %v2918, %v2920
        %v2922 = vrot.slane %v2908, %v2921
        %v2923 = vcombine.high %v2915, %v2915
        %v2924 = vcombine.high %v2922, %v2922
        %v2925 = vcombine.high %v2506, %v2506
        %v2927 = vunpack.c.l.s4 1983009808
        %v2928 = vunpack.c.0.s8 %v2927
        %v2929 = vlaneseq
        %v2930 = vshrl.u32 %v2929, 7
        %v2931 = vsub.s32 %v2928, %v2930
        %v2932 = vrot.slane %v2506, %v2931
        %v2934 = vunpack.c.l.s4 1983009808
        %v2935 = vunpack.c.0.s8 %v2934
        %v2936 = vlaneseq
        %v2937 = vshrl.u32 %v2936, 7
        %v2938 = vsub.s32 %v2935, %v2937
        %v2939 = vrot.slane %v2925, %v2938
        %v2940 = vcombine.high %v2932, %v2932
        %v2941 = vcombine.high %v2939, %v2939
        %v2943 = vunpack.c.l.s4 1983009808
        %v2944 = vunpack.c.0.s8 %v2943
        %v2945 = vlaneseq
        %v2946 = vshrl.u32 %v2945, 7
        %v2947 = vsub.s32 %v2944, %v2946
        %v2948 = vrot.slane %v2507, %v2947
        %v2949 = vcombine.high %v2948, %v2948
        %v2950 = vcombine.high %v2508, %v2508
        %v2952 = vunpack.c.l.s4 1983009808
        %v2953 = vunpack.c.0.s8 %v2952
        %v2954 = vlaneseq
        %v2955 = vshrl.u32 %v2954, 7
        %v2956 = vsub.s32 %v2953, %v2955
        %v2957 = vrot.slane %v2508, %v2956
        %v2959 = vunpack.c.l.s4 1983009808
        %v2960 = vunpack.c.0.s8 %v2959
        %v2961 = vlaneseq
        %v2962 = vshrl.u32 %v2961, 7
        %v2963 = vsub.s32 %v2960, %v2962
        %v2964 = vrot.slane %v2950, %v2963
        %v2965 = vcombine.high %v2957, %v2957
        %v2966 = vcombine.high %v2964, %v2964
        %v2967 = vcombine.high %v2509, %v2509
        %v2969 = vunpack.c.l.s4 1983009808
        %v2970 = vunpack.c.0.s8 %v2969
        %v2971 = vlaneseq
        %v2972 = vshrl.u32 %v2971, 7
        %v2973 = vsub.s32 %v2970, %v2972
        %v2974 = vrot.slane %v2509, %v2973
        %v2976 = vunpack.c.l.s4 1983009808
        %v2977 = vunpack.c.0.s8 %v2976
        %v2978 = vlaneseq
        %v2979 = vshrl.u32 %v2978, 7
        %v2980 = vsub.s32 %v2977, %v2979
        %v2981 = vrot.slane %v2967, %v2980
        %v2982 = vcombine.high %v2974, %v2974
        %v2983 = vcombine.high %v2981, %v2981
        %v2984 = vcombine.high %v2510, %v2510
        %v2986 = vunpack.c.l.s4 1983009808
        %v2987 = vunpack.c.0.s8 %v2986
        %v2988 = vlaneseq
        %v2989 = vshrl.u32 %v2988, 7
        %v2990 = vsub.s32 %v2987, %v2989
        %v2991 = vrot.slane %v2510, %v2990
        %v2993 = vunpack.c.l.s4 1983009808
        %v2994 = vunpack.c.0.s8 %v2993
        %v2995 = vlaneseq
        %v2996 = vshrl.u32 %v2995, 7
        %v2997 = vsub.s32 %v2994, %v2996
        %v2998 = vrot.slane %v2984, %v2997
        %v2999 = vcombine.high %v2991, %v2991
        %v3000 = vcombine.high %v2998, %v2998
        %v3002 = vunpack.c.l.s4 1983009808
        %v3003 = vunpack.c.0.s8 %v3002
        %v3004 = vlaneseq
        %v3005 = vshrl.u32 %v3004, 7
        %v3006 = vsub.s32 %v3003, %v3005
        %v3007 = vrot.slane %v2511, %v3006
        %v3008 = vcombine.high %v3007, %v3007
        %v3009 = vcombine.high %v2512, %v2512
        %v3011 = vunpack.c.l.s4 1983009808
        %v3012 = vunpack.c.0.s8 %v3011
        %v3013 = vlaneseq
        %v3014 = vshrl.u32 %v3013, 7
        %v3015 = vsub.s32 %v3012, %v3014
        %v3016 = vrot.slane %v2512, %v3015
        %v3018 = vunpack.c.l.s4 1983009808
        %v3019 = vunpack.c.0.s8 %v3018
        %v3020 = vlaneseq
        %v3021 = vshrl.u32 %v3020, 7
        %v3022 = vsub.s32 %v3019, %v3021
        %v3023 = vrot.slane %v3009, %v3022
        %v3024 = vcombine.high %v3016, %v3016
        %v3025 = vcombine.high %v3023, %v3023
        %v3026 = vcombine.high %v2513, %v2513
        %v3028 = vunpack.c.l.s4 1983009808
        %v3029 = vunpack.c.0.s8 %v3028
        %v3030 = vlaneseq
        %v3031 = vshrl.u32 %v3030, 7
        %v3032 = vsub.s32 %v3029, %v3031
        %v3033 = vrot.slane %v2513, %v3032
        %v3035 = vunpack.c.l.s4 1983009808
        %v3036 = vunpack.c.0.s8 %v3035
        %v3037 = vlaneseq
        %v3038 = vshrl.u32 %v3037, 7
        %v3039 = vsub.s32 %v3036, %v3038
        %v3040 = vrot.slane %v3026, %v3039
        %v3041 = vcombine.high %v3033, %v3033
        %v3042 = vcombine.high %v3040, %v3040
        %v3043 = vcombine.high %v2514, %v2514
        %v3045 = vunpack.c.l.s4 1983009808
        %v3046 = vunpack.c.0.s8 %v3045
        %v3047 = vlaneseq
        %v3048 = vshrl.u32 %v3047, 7
        %v3049 = vsub.s32 %v3046, %v3048
        %v3050 = vrot.slane %v2514, %v3049
        %v3052 = vunpack.c.l.s4 1983009808
        %v3053 = vunpack.c.0.s8 %v3052
        %v3054 = vlaneseq
        %v3055 = vshrl.u32 %v3054, 7
        %v3056 = vsub.s32 %v3053, %v3055
        %v3057 = vrot.slane %v3043, %v3056
        %v3058 = vcombine.high %v3050, %v3050
        %v3059 = vcombine.high %v3057, %v3057
        %v3061 = vunpack.c.l.s4 1983009808
        %v3062 = vunpack.c.0.s8 %v3061
        %v3063 = vlaneseq
        %v3064 = vshrl.u32 %v3063, 7
        %v3065 = vsub.s32 %v3062, %v3064
        %v3066 = vrot.slane %v2515, %v3065
        %v3067 = vcombine.high %v3066, %v3066
        %v3068 = vcombine.high %v2516, %v2516
        %v3070 = vunpack.c.l.s4 1983009808
        %v3071 = vunpack.c.0.s8 %v3070
        %v3072 = vlaneseq
        %v3073 = vshrl.u32 %v3072, 7
        %v3074 = vsub.s32 %v3071, %v3073
        %v3075 = vrot.slane %v2516, %v3074
        %v3077 = vunpack.c.l.s4 1983009808
        %v3078 = vunpack.c.0.s8 %v3077
        %v3079 = vlaneseq
        %v3080 = vshrl.u32 %v3079, 7
        %v3081 = vsub.s32 %v3078, %v3080
        %v3082 = vrot.slane %v3068, %v3081
        %v3083 = vcombine.high %v3075, %v3075
        %v3084 = vcombine.high %v3082, %v3082
        %v3085 = vcombine.high %v2517, %v2517
        %v3087 = vunpack.c.l.s4 1983009808
        %v3088 = vunpack.c.0.s8 %v3087
        %v3089 = vlaneseq
        %v3090 = vshrl.u32 %v3089, 7
        %v3091 = vsub.s32 %v3088, %v3090
        %v3092 = vrot.slane %v2517, %v3091
        %v3094 = vunpack.c.l.s4 1983009808
        %v3095 = vunpack.c.0.s8 %v3094
        %v3096 = vlaneseq
        %v3097 = vshrl.u32 %v3096, 7
        %v3098 = vsub.s32 %v3095, %v3097
        %v3099 = vrot.slane %v3085, %v3098
        %v3100 = vcombine.high %v3092, %v3092
        %v3101 = vcombine.high %v3099, %v3099
        %v3102 = vcombine.high %v2518, %v2518
        %v3104 = vunpack.c.l.s4 1983009808
        %v3105 = vunpack.c.0.s8 %v3104
        %v3106 = vlaneseq
        %v3107 = vshrl.u32 %v3106, 7
        %v3108 = vsub.s32 %v3105, %v3107
        %v3109 = vrot.slane %v2518, %v3108
        %v3111 = vunpack.c.l.s4 1983009808
        %v3112 = vunpack.c.0.s8 %v3111
        %v3113 = vlaneseq
        %v3114 = vshrl.u32 %v3113, 7
        %v3115 = vsub.s32 %v3112, %v3114
        %v3116 = vrot.slane %v3102, %v3115
        %v3117 = vcombine.high %v3109, %v3109
        %v3118 = vcombine.high %v3116, %v3116
        %v3120 = vunpack.c.l.s4 1983009808
        %v3121 = vunpack.c.0.s8 %v3120
        %v3122 = vlaneseq
        %v3123 = vshrl.u32 %v3122, 7
        %v3124 = vsub.s32 %v3121, %v3123
        %v3125 = vrot.slane %v2519, %v3124
        %v3126 = vcombine.high %v3125, %v3125
        %v3127 = vcombine.high %v2520, %v2520
        %v3129 = vunpack.c.l.s4 1983009808
        %v3130 = vunpack.c.0.s8 %v3129
        %v3131 = vlaneseq
        %v3132 = vshrl.u32 %v3131, 7
        %v3133 = vsub.s32 %v3130, %v3132
        %v3134 = vrot.slane %v2520, %v3133
        %v3136 = vunpack.c.l.s4 1983009808
        %v3137 = vunpack.c.0.s8 %v3136
        %v3138 = vlaneseq
        %v3139 = vshrl.u32 %v3138, 7
        %v3140 = vsub.s32 %v3137, %v3139
        %v3141 = vrot.slane %v3127, %v3140
        %v3142 = vcombine.high %v3134, %v3134
        %v3143 = vcombine.high %v3141, %v3141
        %v3144 = vcombine.high %v2521, %v2521
        %v3146 = vunpack.c.l.s4 1983009808
        %v3147 = vunpack.c.0.s8 %v3146
        %v3148 = vlaneseq
        %v3149 = vshrl.u32 %v3148, 7
        %v3150 = vsub.s32 %v3147, %v3149
        %v3151 = vrot.slane %v2521, %v3150
        %v3153 = vunpack.c.l.s4 1983009808
        %v3154 = vunpack.c.0.s8 %v3153
        %v3155 = vlaneseq
        %v3156 = vshrl.u32 %v3155, 7
        %v3157 = vsub.s32 %v3154, %v3156
        %v3158 = vrot.slane %v3144, %v3157
        %v3159 = vcombine.high %v3151, %v3151
        %v3160 = vcombine.high %v3158, %v3158
        %v3161 = vcombine.high %v2522, %v2522
        %v3163 = vunpack.c.l.s4 1983009808
        %v3164 = vunpack.c.0.s8 %v3163
        %v3165 = vlaneseq
        %v3166 = vshrl.u32 %v3165, 7
        %v3167 = vsub.s32 %v3164, %v3166
        %v3168 = vrot.slane %v2522, %v3167
        %v3170 = vunpack.c.l.s4 1983009808
        %v3171 = vunpack.c.0.s8 %v3170
        %v3172 = vlaneseq
        %v3173 = vshrl.u32 %v3172, 7
        %v3174 = vsub.s32 %v3171, %v3173
        %v3175 = vrot.slane %v3161, %v3174
        %v3176 = vcombine.high %v3168, %v3168
        %v3177 = vcombine.high %v3175, %v3175
        %v3179 = vunpack.c.l.s4 1983009808
        %v3180 = vunpack.c.0.s8 %v3179
        %v3181 = vlaneseq
        %v3182 = vshrl.u32 %v3181, 7
        %v3183 = vsub.s32 %v3180, %v3182
        %v3184 = vrot.slane %v2523, %v3183
        %v3185 = vcombine.high %v3184, %v3184
        %v3186 = vcombine.high %v2524, %v2524
        %v3188 = vunpack.c.l.s4 1983009808
        %v3189 = vunpack.c.0.s8 %v3188
        %v3190 = vlaneseq
        %v3191 = vshrl.u32 %v3190, 7
        %v3192 = vsub.s32 %v3189, %v3191
        %v3193 = vrot.slane %v2524, %v3192
        %v3195 = vunpack.c.l.s4 1983009808
        %v3196 = vunpack.c.0.s8 %v3195
        %v3197 = vlaneseq
        %v3198 = vshrl.u32 %v3197, 7
        %v3199 = vsub.s32 %v3196, %v3198
        %v3200 = vrot.slane %v3186, %v3199
        %v3201 = vcombine.high %v3193, %v3193
        %v3202 = vcombine.high %v3200, %v3200
        %v3203 = vcombine.high %v2525, %v2525
        %v3205 = vunpack.c.l.s4 1983009808
        %v3206 = vunpack.c.0.s8 %v3205
        %v3207 = vlaneseq
        %v3208 = vshrl.u32 %v3207, 7
        %v3209 = vsub.s32 %v3206, %v3208
        %v3210 = vrot.slane %v2525, %v3209
        %v3212 = vunpack.c.l.s4 1983009808
        %v3213 = vunpack.c.0.s8 %v3212
        %v3214 = vlaneseq
        %v3215 = vshrl.u32 %v3214, 7
        %v3216 = vsub.s32 %v3213, %v3215
        %v3217 = vrot.slane %v3203, %v3216
        %v3218 = vcombine.high %v3210, %v3210
        %v3219 = vcombine.high %v3217, %v3217
        %v3220 = vcombine.high %v2526, %v2526
        %v3222 = vunpack.c.l.s4 1983009808
        %v3223 = vunpack.c.0.s8 %v3222
        %v3224 = vlaneseq
        %v3225 = vshrl.u32 %v3224, 7
        %v3226 = vsub.s32 %v3223, %v3225
        %v3227 = vrot.slane %v2526, %v3226
        %v3229 = vunpack.c.l.s4 1983009808
        %v3230 = vunpack.c.0.s8 %v3229
        %v3231 = vlaneseq
        %v3232 = vshrl.u32 %v3231, 7
        %v3233 = vsub.s32 %v3230, %v3232
        %v3234 = vrot.slane %v3220, %v3233
        %v3235 = vcombine.high %v3227, %v3227
        %v3236 = vcombine.high %v3234, %v3234
        %v3238 = vunpack.c.l.s4 1983009808
        %v3239 = vunpack.c.0.s8 %v3238
        %v3240 = vlaneseq
        %v3241 = vshrl.u32 %v3240, 7
        %v3242 = vsub.s32 %v3239, %v3241
        %v3243 = vrot.slane %v2527, %v3242
        %v3244 = vcombine.high %v3243, %v3243
        %v3245 = vcombine.high %v2528, %v2528
        %v3247 = vunpack.c.l.s4 1983009808
        %v3248 = vunpack.c.0.s8 %v3247
        %v3249 = vlaneseq
        %v3250 = vshrl.u32 %v3249, 7
        %v3251 = vsub.s32 %v3248, %v3250
        %v3252 = vrot.slane %v2528, %v3251
        %v3254 = vunpack.c.l.s4 1983009808
        %v3255 = vunpack.c.0.s8 %v3254
        %v3256 = vlaneseq
        %v3257 = vshrl.u32 %v3256, 7
        %v3258 = vsub.s32 %v3255, %v3257
        %v3259 = vrot.slane %v3245, %v3258
        %v3260 = vcombine.high %v3252, %v3252
        %v3261 = vcombine.high %v3259, %v3259
        %v3262 = vcombine.high %v2529, %v2529
        %v3264 = vunpack.c.l.s4 1983009808
        %v3265 = vunpack.c.0.s8 %v3264
        %v3266 = vlaneseq
        %v3267 = vshrl.u32 %v3266, 7
        %v3268 = vsub.s32 %v3265, %v3267
        %v3269 = vrot.slane %v2529, %v3268
        %v3271 = vunpack.c.l.s4 1983009808
        %v3272 = vunpack.c.0.s8 %v3271
        %v3273 = vlaneseq
        %v3274 = vshrl.u32 %v3273, 7
        %v3275 = vsub.s32 %v3272, %v3274
        %v3276 = vrot.slane %v3262, %v3275
        %v3277 = vcombine.high %v3269, %v3269
        %v3278 = vcombine.high %v3276, %v3276
        %v3279 = vcombine.high %v2530, %v2530
        %v3281 = vunpack.c.l.s4 1983009808
        %v3282 = vunpack.c.0.s8 %v3281
        %v3283 = vlaneseq
        %v3284 = vshrl.u32 %v3283, 7
        %v3285 = vsub.s32 %v3282, %v3284
        %v3286 = vrot.slane %v2530, %v3285
        %v3288 = vunpack.c.l.s4 1983009808
        %v3289 = vunpack.c.0.s8 %v3288
        %v3290 = vlaneseq
        %v3291 = vshrl.u32 %v3290, 7
        %v3292 = vsub.s32 %v3289, %v3291
        %v3293 = vrot.slane %v3279, %v3292
        %v3294 = vcombine.high %v3286, %v3286
        %v3295 = vcombine.high %v3293, %v3293
        %v3297 = vunpack.c.l.s4 1983009808
        %v3298 = vunpack.c.0.s8 %v3297
        %v3299 = vlaneseq
        %v3300 = vshrl.u32 %v3299, 7
        %v3301 = vsub.s32 %v3298, %v3300
        %v3302 = vrot.slane %v2531, %v3301
        %v3303 = vcombine.high %v3302, %v3302
        %v3304 = vcombine.high %v2532, %v2532
        %v3306 = vunpack.c.l.s4 1983009808
        %v3307 = vunpack.c.0.s8 %v3306
        %v3308 = vlaneseq
        %v3309 = vshrl.u32 %v3308, 7
        %v3310 = vsub.s32 %v3307, %v3309
        %v3311 = vrot.slane %v2532, %v3310
        %v3313 = vunpack.c.l.s4 1983009808
        %v3314 = vunpack.c.0.s8 %v3313
        %v3315 = vlaneseq
        %v3316 = vshrl.u32 %v3315, 7
        %v3317 = vsub.s32 %v3314, %v3316
        %v3318 = vrot.slane %v3304, %v3317
        %v3319 = vcombine.high %v3311, %v3311
        %v3320 = vcombine.high %v3318, %v3318
        %v3321 = vcombine.high %v2533, %v2533
        %v3323 = vunpack.c.l.s4 1983009808
        %v3324 = vunpack.c.0.s8 %v3323
        %v3325 = vlaneseq
        %v3326 = vshrl.u32 %v3325, 7
        %v3327 = vsub.s32 %v3324, %v3326
        %v3328 = vrot.slane %v2533, %v3327
        %v3330 = vunpack.c.l.s4 1983009808
        %v3331 = vunpack.c.0.s8 %v3330
        %v3332 = vlaneseq
        %v3333 = vshrl.u32 %v3332, 7
        %v3334 = vsub.s32 %v3331, %v3333
        %v3335 = vrot.slane %v3321, %v3334
        %v3336 = vcombine.high %v3328, %v3328
        %v3337 = vcombine.high %v3335, %v3335
        %v3338 = vcombine.high %v2534, %v2534
        %v3340 = vunpack.c.l.s4 1983009808
        %v3341 = vunpack.c.0.s8 %v3340
        %v3342 = vlaneseq
        %v3343 = vshrl.u32 %v3342, 7
        %v3344 = vsub.s32 %v3341, %v3343
        %v3345 = vrot.slane %v2534, %v3344
        %v3347 = vunpack.c.l.s4 1983009808
        %v3348 = vunpack.c.0.s8 %v3347
        %v3349 = vlaneseq
        %v3350 = vshrl.u32 %v3349, 7
        %v3351 = vsub.s32 %v3348, %v3350
        %v3352 = vrot.slane %v3338, %v3351
        %v3353 = vcombine.high %v3345, %v3345
        %v3354 = vcombine.high %v3352, %v3352
        %v3356 = vunpack.c.l.s4 1983009808
        %v3357 = vunpack.c.0.s8 %v3356
        %v3358 = vlaneseq
        %v3359 = vshrl.u32 %v3358, 7
        %v3360 = vsub.s32 %v3357, %v3359
        %v3361 = vrot.slane %v2535, %v3360
        %v3362 = vcombine.high %v3361, %v3361
        %v3363 = vcombine.high %v2536, %v2536
        %v3365 = vunpack.c.l.s4 1983009808
        %v3366 = vunpack.c.0.s8 %v3365
        %v3367 = vlaneseq
        %v3368 = vshrl.u32 %v3367, 7
        %v3369 = vsub.s32 %v3366, %v3368
        %v3370 = vrot.slane %v2536, %v3369
        %v3372 = vunpack.c.l.s4 1983009808
        %v3373 = vunpack.c.0.s8 %v3372
        %v3374 = vlaneseq
        %v3375 = vshrl.u32 %v3374, 7
        %v3376 = vsub.s32 %v3373, %v3375
        %v3377 = vrot.slane %v3363, %v3376
        %v3378 = vcombine.high %v3370, %v3370
        %v3379 = vcombine.high %v3377, %v3377
        %v3380 = vcombine.high %v2537, %v2537
        %v3382 = vunpack.c.l.s4 1983009808
        %v3383 = vunpack.c.0.s8 %v3382
        %v3384 = vlaneseq
        %v3385 = vshrl.u32 %v3384, 7
        %v3386 = vsub.s32 %v3383, %v3385
        %v3387 = vrot.slane %v2537, %v3386
        %v3389 = vunpack.c.l.s4 1983009808
        %v3390 = vunpack.c.0.s8 %v3389
        %v3391 = vlaneseq
        %v3392 = vshrl.u32 %v3391, 7
        %v3393 = vsub.s32 %v3390, %v3392
        %v3394 = vrot.slane %v3380, %v3393
        %v3395 = vcombine.high %v3387, %v3387
        %v3396 = vcombine.high %v3394, %v3394
        %v3397 = vcombine.high %v2538, %v2538
        %v3399 = vunpack.c.l.s4 1983009808
        %v3400 = vunpack.c.0.s8 %v3399
        %v3401 = vlaneseq
        %v3402 = vshrl.u32 %v3401, 7
        %v3403 = vsub.s32 %v3400, %v3402
        %v3404 = vrot.slane %v2538, %v3403
        %v3406 = vunpack.c.l.s4 1983009808
        %v3407 = vunpack.c.0.s8 %v3406
        %v3408 = vlaneseq
        %v3409 = vshrl.u32 %v3408, 7
        %v3410 = vsub.s32 %v3407, %v3409
        %v3411 = vrot.slane %v3397, %v3410
        %v3412 = vcombine.high %v3404, %v3404
        %v3413 = vcombine.high %v3411, %v3411
        %v3415 = vunpack.c.l.s4 1983009808
        %v3416 = vunpack.c.0.s8 %v3415
        %v3417 = vlaneseq
        %v3418 = vshrl.u32 %v3417, 7
        %v3419 = vsub.s32 %v3416, %v3418
        %v3420 = vrot.slane %v2539, %v3419
        %v3421 = vcombine.high %v3420, %v3420
        %v3618 = vrot.slane %v2603, 7
        %v3619 = vrot.slane %v3618, 2
        %v3620 = vrot.slane %v2611, 7
        %v3621 = vrot.slane %v3620, 2
        %v3622 = vrot.slane %v2610, 7
        %v3623 = vrot.slane %v3622, 2
        %v3624 = vrot.slane %v2612, 7
        %v3625 = vrot.slane %v3624, 2
        %v3626 = vrot.slane %v2620, 7
        %v3627 = vrot.slane %v3626, 2
        %v3628 = vrot.slane %v2628, 7
        %v3629 = vrot.slane %v3628, 2
        %v3630 = vrot.slane %v2627, 7
        %v3631 = vrot.slane %v3630, 2
        %v3632 = vrot.slane %v2629, 7
        %v3633 = vrot.slane %v3632, 2
        %v3634 = vrot.slane %v2637, 7
        %v3635 = vrot.slane %v3634, 2
        %v3636 = vrot.slane %v2645, 7
        %v3637 = vrot.slane %v3636, 2
        %v3638 = vrot.slane %v2644, 7
        %v3639 = vrot.slane %v3638, 2
        %v3640 = vrot.slane %v2646, 7
        %v3641 = vrot.slane %v3640, 2
        %v3642 = vrot.slane %v2653, 7
        %v3643 = vrot.slane %v3642, 2
        %v3644 = vrot.slane %v2654, 7
        %v3645 = vrot.slane %v3644, 2
        %v3646 = vrot.slane %v2662, 7
        %v3647 = vrot.slane %v3646, 2
        %v3648 = vrot.slane %v2670, 7
        %v3649 = vrot.slane %v3648, 2
        %v3650 = vrot.slane %v2669, 7
        %v3651 = vrot.slane %v3650, 2
        %v3652 = vrot.slane %v2671, 7
        %v3653 = vrot.slane %v3652, 2
        %v3654 = vrot.slane %v2679, 7
        %v3655 = vrot.slane %v3654, 2
        %v3656 = vrot.slane %v2687, 7
        %v3657 = vrot.slane %v3656, 2
        %v3658 = vrot.slane %v2686, 7
        %v3659 = vrot.slane %v3658, 2
        %v3660 = vrot.slane %v2688, 7
        %v3661 = vrot.slane %v3660, 2
        %v3662 = vrot.slane %v2696, 7
        %v3663 = vrot.slane %v3662, 2
        %v3664 = vrot.slane %v2704, 7
        %v3665 = vrot.slane %v3664, 2
        %v3666 = vrot.slane %v2703, 7
        %v3667 = vrot.slane %v3666, 2
        %v3668 = vrot.slane %v2705, 7
        %v3669 = vrot.slane %v3668, 2
        %v3670 = vrot.slane %v2712, 7
        %v3671 = vrot.slane %v3670, 2
        %v3672 = vrot.slane %v2713, 7
        %v3673 = vrot.slane %v3672, 2
        %v3674 = vrot.slane %v2721, 7
        %v3675 = vrot.slane %v3674, 2
        %v3676 = vrot.slane %v2729, 7
        %v3677 = vrot.slane %v3676, 2
        %v3678 = vrot.slane %v2728, 7
        %v3679 = vrot.slane %v3678, 2
        %v3680 = vrot.slane %v2730, 7
        %v3681 = vrot.slane %v3680, 2
        %v3682 = vrot.slane %v2738, 7
        %v3683 = vrot.slane %v3682, 2
        %v3684 = vrot.slane %v2746, 7
        %v3685 = vrot.slane %v3684, 2
        %v3686 = vrot.slane %v2745, 7
        %v3687 = vrot.slane %v3686, 2
        %v3688 = vrot.slane %v2747, 7
        %v3689 = vrot.slane %v3688, 2
        %v3690 = vrot.slane %v2755, 7
        %v3691 = vrot.slane %v3690, 2
        %v3692 = vrot.slane %v2763, 7
        %v3693 = vrot.slane %v3692, 2
        %v3694 = vrot.slane %v2762, 7
        %v3695 = vrot.slane %v3694, 2
        %v3696 = vrot.slane %v2764, 7
        %v3697 = vrot.slane %v3696, 2
        %v3698 = vrot.slane %v2771, 7
        %v3699 = vrot.slane %v3698, 2
        %v3700 = vrot.slane %v2772, 7
        %v3701 = vrot.slane %v3700, 2
        %v3702 = vrot.slane %v2780, 7
        %v3703 = vrot.slane %v3702, 2
        %v3704 = vrot.slane %v2788, 7
        %v3705 = vrot.slane %v3704, 2
        %v3706 = vrot.slane %v2787, 7
        %v3707 = vrot.slane %v3706, 2
        %v3708 = vrot.slane %v2789, 7
        %v3709 = vrot.slane %v3708, 2
        %v3710 = vrot.slane %v2797, 7
        %v3711 = vrot.slane %v3710, 2
        %v3712 = vrot.slane %v2805, 7
        %v3713 = vrot.slane %v3712, 2
        %v3714 = vrot.slane %v2804, 7
        %v3715 = vrot.slane %v3714, 2
        %v3716 = vrot.slane %v2806, 7
        %v3717 = vrot.slane %v3716, 2
        %v3718 = vrot.slane %v2814, 7
        %v3719 = vrot.slane %v3718, 2
        %v3720 = vrot.slane %v2822, 7
        %v3721 = vrot.slane %v3720, 2
        %v3722 = vrot.slane %v2821, 7
        %v3723 = vrot.slane %v3722, 2
        %v3724 = vrot.slane %v2823, 7
        %v3725 = vrot.slane %v3724, 2
        %v3726 = vrot.slane %v2830, 7
        %v3727 = vrot.slane %v3726, 2
        %v3728 = vrot.slane %v2831, 7
        %v3729 = vrot.slane %v3728, 2
        %v3730 = vrot.slane %v2839, 7
        %v3731 = vrot.slane %v3730, 2
        %v3732 = vrot.slane %v2847, 7
        %v3733 = vrot.slane %v3732, 2
        %v3734 = vrot.slane %v2846, 7
        %v3735 = vrot.slane %v3734, 2
        %v3736 = vrot.slane %v2848, 7
        %v3737 = vrot.slane %v3736, 2
        %v3738 = vrot.slane %v2856, 7
        %v3739 = vrot.slane %v3738, 2
        %v3740 = vrot.slane %v2864, 7
        %v3741 = vrot.slane %v3740, 2
        %v3742 = vrot.slane %v2863, 7
        %v3743 = vrot.slane %v3742, 2
        %v3744 = vrot.slane %v2865, 7
        %v3745 = vrot.slane %v3744, 2
        %v3746 = vrot.slane %v2873, 7
        %v3747 = vrot.slane %v3746, 2
        %v3748 = vrot.slane %v2881, 7
        %v3749 = vrot.slane %v3748, 2
        %v3750 = vrot.slane %v2880, 7
        %v3751 = vrot.slane %v3750, 2
        %v3752 = vrot.slane %v2882, 7
        %v3753 = vrot.slane %v3752, 2
        %v3754 = vrot.slane %v2889, 7
        %v3755 = vrot.slane %v3754, 2
        %v3756 = vrot.slane %v2890, 7
        %v3757 = vrot.slane %v3756, 2
        %v3758 = vrot.slane %v2898, 7
        %v3759 = vrot.slane %v3758, 2
        %v3760 = vrot.slane %v2906, 7
        %v3761 = vrot.slane %v3760, 2
        %v3762 = vrot.slane %v2905, 7
        %v3763 = vrot.slane %v3762, 2
        %v3764 = vrot.slane %v2907, 7
        %v3765 = vrot.slane %v3764, 2
        %v3766 = vrot.slane %v2915, 7
        %v3767 = vrot.slane %v3766, 2
        %v3768 = vrot.slane %v2923, 7
        %v3769 = vrot.slane %v3768, 2
        %v3770 = vrot.slane %v2922, 7
        %v3771 = vrot.slane %v3770, 2
        %v3772 = vrot.slane %v2924, 7
        %v3773 = vrot.slane %v3772, 2
        %v3774 = vrot.slane %v2932, 7
        %v3775 = vrot.slane %v3774, 2
        %v3776 = vrot.slane %v2940, 7
        %v3777 = vrot.slane %v3776, 2
        %v3778 = vrot.slane %v2939, 7
        %v3779 = vrot.slane %v3778, 2
        %v3780 = vrot.slane %v2941, 7
        %v3781 = vrot.slane %v3780, 2
        %v3782 = vrot.slane %v2948, 7
        %v3783 = vrot.slane %v3782, 2
        %v3784 = vrot.slane %v2949, 7
        %v3785 = vrot.slane %v3784, 2
        %v3786 = vrot.slane %v2957, 7
        %v3787 = vrot.slane %v3786, 2
        %v3788 = vrot.slane %v2965, 7
        %v3789 = vrot.slane %v3788, 2
        %v3790 = vrot.slane %v2964, 7
        %v3791 = vrot.slane %v3790, 2
        %v3792 = vrot.slane %v2966, 7
        %v3793 = vrot.slane %v3792, 2
        %v3794 = vrot.slane %v2974, 7
        %v3795 = vrot.slane %v3794, 2
        %v3796 = vrot.slane %v2982, 7
        %v3797 = vrot.slane %v3796, 2
        %v3798 = vrot.slane %v2981, 7
        %v3799 = vrot.slane %v3798, 2
        %v3800 = vrot.slane %v2983, 7
        %v3801 = vrot.slane %v3800, 2
        %v3802 = vrot.slane %v2991, 7
        %v3803 = vrot.slane %v3802, 2
        %v3804 = vrot.slane %v2999, 7
        %v3805 = vrot.slane %v3804, 2
        %v3806 = vrot.slane %v2998, 7
        %v3807 = vrot.slane %v3806, 2
        %v3808 = vrot.slane %v3000, 7
        %v3809 = vrot.slane %v3808, 2
        %v3810 = vrot.slane %v3007, 7
        %v3811 = vrot.slane %v3810, 2
        %v3812 = vrot.slane %v3008, 7
        %v3813 = vrot.slane %v3812, 2
        %v3814 = vrot.slane %v3016, 7
        %v3815 = vrot.slane %v3814, 2
        %v3816 = vrot.slane %v3024, 7
        %v3817 = vrot.slane %v3816, 2
        %v3818 = vrot.slane %v3023, 7
        %v3819 = vrot.slane %v3818, 2
        %v3820 = vrot.slane %v3025, 7
        %v3821 = vrot.slane %v3820, 2
        %v3822 = vrot.slane %v3033, 7
        %v3823 = vrot.slane %v3822, 2
        %v3824 = vrot.slane %v3041, 7
        %v3825 = vrot.slane %v3824, 2
        %v3826 = vrot.slane %v3040, 7
        %v3827 = vrot.slane %v3826, 2
        %v3828 = vrot.slane %v3042, 7
        %v3829 = vrot.slane %v3828, 2
        %v3830 = vrot.slane %v3050, 7
        %v3831 = vrot.slane %v3830, 2
        %v3832 = vrot.slane %v3058, 7
        %v3833 = vrot.slane %v3832, 2
        %v3834 = vrot.slane %v3057, 7
        %v3835 = vrot.slane %v3834, 2
        %v3836 = vrot.slane %v3059, 7
        %v3837 = vrot.slane %v3836, 2
        %v3838 = vrot.slane %v3066, 7
        %v3839 = vrot.slane %v3838, 2
        %v3840 = vrot.slane %v3067, 7
        %v3841 = vrot.slane %v3840, 2
        %v3842 = vrot.slane %v3075, 7
        %v3843 = vrot.slane %v3842, 2
        %v3844 = vrot.slane %v3083, 7
        %v3845 = vrot.slane %v3844, 2
        %v3846 = vrot.slane %v3082, 7
        %v3847 = vrot.slane %v3846, 2
        %v3848 = vrot.slane %v3084, 7
        %v3849 = vrot.slane %v3848, 2
        %v3850 = vrot.slane %v3092, 7
        %v3851 = vrot.slane %v3850, 2
        %v3852 = vrot.slane %v3100, 7
        %v3853 = vrot.slane %v3852, 2
        %v3854 = vrot.slane %v3099, 7
        %v3855 = vrot.slane %v3854, 2
        %v3856 = vrot.slane %v3101, 7
        %v3857 = vrot.slane %v3856, 2
        %v3858 = vrot.slane %v3109, 7
        %v3859 = vrot.slane %v3858, 2
        %v3860 = vrot.slane %v3117, 7
        %v3861 = vrot.slane %v3860, 2
        %v3862 = vrot.slane %v3116, 7
        %v3863 = vrot.slane %v3862, 2
        %v3864 = vrot.slane %v3118, 7
        %v3865 = vrot.slane %v3864, 2
        %v3866 = vrot.slane %v3125, 7
        %v3867 = vrot.slane %v3866, 2
        %v3868 = vrot.slane %v3126, 7
        %v3869 = vrot.slane %v3868, 2
        %v3870 = vrot.slane %v3134, 7
        %v3871 = vrot.slane %v3870, 2
        %v3872 = vrot.slane %v3142, 7
        %v3873 = vrot.slane %v3872, 2
        %v3874 = vrot.slane %v3141, 7
        %v3875 = vrot.slane %v3874, 2
        %v3876 = vrot.slane %v3143, 7
        %v3877 = vrot.slane %v3876, 2
        %v3878 = vrot.slane %v3151, 7
        %v3879 = vrot.slane %v3878, 2
        %v3880 = vrot.slane %v3159, 7
        %v3881 = vrot.slane %v3880, 2
        %v3882 = vrot.slane %v3158, 7
        %v3883 = vrot.slane %v3882, 2
        %v3884 = vrot.slane %v3160, 7
        %v3885 = vrot.slane %v3884, 2
        %v3886 = vrot.slane %v3168, 7
        %v3887 = vrot.slane %v3886, 2
        %v3888 = vrot.slane %v3176, 7
        %v3889 = vrot.slane %v3888, 2
        %v3890 = vrot.slane %v3175, 7
        %v3891 = vrot.slane %v3890, 2
        %v3892 = vrot.slane %v3177, 7
        %v3893 = vrot.slane %v3892, 2
        %v3894 = vrot.slane %v3184, 7
        %v3895 = vrot.slane %v3894, 2
        %v3896 = vrot.slane %v3185, 7
        %v3897 = vrot.slane %v3896, 2
        %v3898 = vrot.slane %v3193, 7
        %v3899 = vrot.slane %v3898, 2
        %v3900 = vrot.slane %v3201, 7
        %v3901 = vrot.slane %v3900, 2
        %v3902 = vrot.slane %v3200, 7
        %v3903 = vrot.slane %v3902, 2
        %v3904 = vrot.slane %v3202, 7
        %v3905 = vrot.slane %v3904, 2
        %v3906 = vrot.slane %v3210, 7
        %v3907 = vrot.slane %v3906, 2
        %v3908 = vrot.slane %v3218, 7
        %v3909 = vrot.slane %v3908, 2
        %v3910 = vrot.slane %v3217, 7
        %v3911 = vrot.slane %v3910, 2
        %v3912 = vrot.slane %v3219, 7
        %v3913 = vrot.slane %v3912, 2
        %v3914 = vrot.slane %v3227, 7
        %v3915 = vrot.slane %v3914, 2
        %v3916 = vrot.slane %v3235, 7
        %v3917 = vrot.slane %v3916, 2
        %v3918 = vrot.slane %v3234, 7
        %v3919 = vrot.slane %v3918, 2
        %v3920 = vrot.slane %v3236, 7
        %v3921 = vrot.slane %v3920, 2
        %v3922 = vrot.slane %v3243, 7
        %v3923 = vrot.slane %v3922, 2
        %v3924 = vrot.slane %v3244, 7
        %v3925 = vrot.slane %v3924, 2
        %v3926 = vrot.slane %v3252, 7
        %v3927 = vrot.slane %v3926, 2
        %v3928 = vrot.slane %v3260, 7
        %v3929 = vrot.slane %v3928, 2
        %v3930 = vrot.slane %v3259, 7
        %v3931 = vrot.slane %v3930, 2
        %v3932 = vrot.slane %v3261, 7
        %v3933 = vrot.slane %v3932, 2
        %v3934 = vrot.slane %v3269, 7
        %v3935 = vrot.slane %v3934, 2
        %v3936 = vrot.slane %v3277, 7
        %v3937 = vrot.slane %v3936, 2
        %v3938 = vrot.slane %v3276, 7
        %v3939 = vrot.slane %v3938, 2
        %v3940 = vrot.slane %v3278, 7
        %v3941 = vrot.slane %v3940, 2
        %v3942 = vrot.slane %v3286, 7
        %v3943 = vrot.slane %v3942, 2
        %v3944 = vrot.slane %v3294, 7
        %v3945 = vrot.slane %v3944, 2
        %v3946 = vrot.slane %v3293, 7
        %v3947 = vrot.slane %v3946, 2
        %v3948 = vrot.slane %v3295, 7
        %v3949 = vrot.slane %v3948, 2
        %v3950 = vrot.slane %v3302, 7
        %v3951 = vrot.slane %v3950, 2
        %v3952 = vrot.slane %v3303, 7
        %v3953 = vrot.slane %v3952, 2
        %v3954 = vrot.slane %v3311, 7
        %v3955 = vrot.slane %v3954, 2
        %v3956 = vrot.slane %v3319, 7
        %v3957 = vrot.slane %v3956, 2
        %v3958 = vrot.slane %v3318, 7
        %v3959 = vrot.slane %v3958, 2
        %v3960 = vrot.slane %v3320, 7
        %v3961 = vrot.slane %v3960, 2
        %v3962 = vrot.slane %v3328, 7
        %v3963 = vrot.slane %v3962, 2
        %v3964 = vrot.slane %v3336, 7
        %v3965 = vrot.slane %v3964, 2
        %v3966 = vrot.slane %v3335, 7
        %v3967 = vrot.slane %v3966, 2
        %v3968 = vrot.slane %v3337, 7
        %v3969 = vrot.slane %v3968, 2
        %v3970 = vrot.slane %v3345, 7
        %v3971 = vrot.slane %v3970, 2
        %v3972 = vrot.slane %v3353, 7
        %v3973 = vrot.slane %v3972, 2
        %v3974 = vrot.slane %v3352, 7
        %v3975 = vrot.slane %v3974, 2
        %v3976 = vrot.slane %v3354, 7
        %v3977 = vrot.slane %v3976, 2
        %v3978 = vrot.slane %v3361, 7
        %v3979 = vrot.slane %v3978, 2
        %v3980 = vrot.slane %v3362, 7
        %v3981 = vrot.slane %v3980, 2
        %v3982 = vrot.slane %v3370, 7
        %v3983 = vrot.slane %v3982, 2
        %v3984 = vrot.slane %v3378, 7
        %v3985 = vrot.slane %v3984, 2
        %v3986 = vrot.slane %v3377, 7
        %v3987 = vrot.slane %v3986, 2
        %v3988 = vrot.slane %v3379, 7
        %v3989 = vrot.slane %v3988, 2
        %v3990 = vrot.slane %v3387, 7
        %v3991 = vrot.slane %v3990, 2
        %v3992 = vrot.slane %v3395, 7
        %v3993 = vrot.slane %v3992, 2
        %v3994 = vrot.slane %v3394, 7
        %v3995 = vrot.slane %v3994, 2
        %v3996 = vrot.slane %v3396, 7
        %v3997 = vrot.slane %v3996, 2
        %v3998 = vrot.slane %v3404, 7
        %v3999 = vrot.slane %v3998, 2
        %v4000 = vrot.slane %v3412, 7
        %v4001 = vrot.slane %v4000, 2
        %v4002 = vrot.slane %v3411, 7
        %v4003 = vrot.slane %v4002, 2
        %v4004 = vrot.slane %v3413, 7
        %v4005 = vrot.slane %v4004, 2
        %v4006 = vrot.slane %v3420, 7
        %v4007 = vrot.slane %v4006, 2
        %v4008 = vrot.slane %v3421, 7
        %v4009 = vrot.slane %v4008, 2
        %v4206 = vmax.f32 %v2603, %v3619
        %v4207 = vmax.f32 %v2611, %v3621
        %v4208 = vmax.f32 %v2610, %v3623
        %v4209 = vmax.f32 %v2612, %v3625
        %v4210 = vmax.f32 %v2620, %v3627
        %v4211 = vmax.f32 %v2628, %v3629
        %v4212 = vmax.f32 %v2627, %v3631
        %v4213 = vmax.f32 %v2629, %v3633
        %v4214 = vmax.f32 %v2637, %v3635
        %v4215 = vmax.f32 %v2645, %v3637
        %v4216 = vmax.f32 %v2644, %v3639
        %v4217 = vmax.f32 %v2646, %v3641
        %v4218 = vmax.f32 %v2653, %v3643
        %v4219 = vmax.f32 %v2654, %v3645
        %v4220 = vmax.f32 %v2662, %v3647
        %v4221 = vmax.f32 %v2670, %v3649
        %v4222 = vmax.f32 %v2669, %v3651
        %v4223 = vmax.f32 %v2671, %v3653
        %v4224 = vmax.f32 %v2679, %v3655
        %v4225 = vmax.f32 %v2687, %v3657
        %v4226 = vmax.f32 %v2686, %v3659
        %v4227 = vmax.f32 %v2688, %v3661
        %v4228 = vmax.f32 %v2696, %v3663
        %v4229 = vmax.f32 %v2704, %v3665
        %v4230 = vmax.f32 %v2703, %v3667
        %v4231 = vmax.f32 %v2705, %v3669
        %v4232 = vmax.f32 %v2712, %v3671
        %v4233 = vmax.f32 %v2713, %v3673
        %v4234 = vmax.f32 %v2721, %v3675
        %v4235 = vmax.f32 %v2729, %v3677
        %v4236 = vmax.f32 %v2728, %v3679
        %v4237 = vmax.f32 %v2730, %v3681
        %v4238 = vmax.f32 %v2738, %v3683
        %v4239 = vmax.f32 %v2746, %v3685
        %v4240 = vmax.f32 %v2745, %v3687
        %v4241 = vmax.f32 %v2747, %v3689
        %v4242 = vmax.f32 %v2755, %v3691
        %v4243 = vmax.f32 %v2763, %v3693
        %v4244 = vmax.f32 %v2762, %v3695
        %v4245 = vmax.f32 %v2764, %v3697
        %v4246 = vmax.f32 %v2771, %v3699
        %v4247 = vmax.f32 %v2772, %v3701
        %v4248 = vmax.f32 %v2780, %v3703
        %v4249 = vmax.f32 %v2788, %v3705
        %v4250 = vmax.f32 %v2787, %v3707
        %v4251 = vmax.f32 %v2789, %v3709
        %v4252 = vmax.f32 %v2797, %v3711
        %v4253 = vmax.f32 %v2805, %v3713
        %v4254 = vmax.f32 %v2804, %v3715
        %v4255 = vmax.f32 %v2806, %v3717
        %v4256 = vmax.f32 %v2814, %v3719
        %v4257 = vmax.f32 %v2822, %v3721
        %v4258 = vmax.f32 %v2821, %v3723
        %v4259 = vmax.f32 %v2823, %v3725
        %v4260 = vmax.f32 %v2830, %v3727
        %v4261 = vmax.f32 %v2831, %v3729
        %v4262 = vmax.f32 %v2839, %v3731
        %v4263 = vmax.f32 %v2847, %v3733
        %v4264 = vmax.f32 %v2846, %v3735
        %v4265 = vmax.f32 %v2848, %v3737
        %v4266 = vmax.f32 %v2856, %v3739
        %v4267 = vmax.f32 %v2864, %v3741
        %v4268 = vmax.f32 %v2863, %v3743
        %v4269 = vmax.f32 %v2865, %v3745
        %v4270 = vmax.f32 %v2873, %v3747
        %v4271 = vmax.f32 %v2881, %v3749
        %v4272 = vmax.f32 %v2880, %v3751
        %v4273 = vmax.f32 %v2882, %v3753
        %v4274 = vmax.f32 %v2889, %v3755
        %v4275 = vmax.f32 %v2890, %v3757
        %v4276 = vmax.f32 %v2898, %v3759
        %v4277 = vmax.f32 %v2906, %v3761
        %v4278 = vmax.f32 %v2905, %v3763
        %v4279 = vmax.f32 %v2907, %v3765
        %v4280 = vmax.f32 %v2915, %v3767
        %v4281 = vmax.f32 %v2923, %v3769
        %v4282 = vmax.f32 %v2922, %v3771
        %v4283 = vmax.f32 %v2924, %v3773
        %v4284 = vmax.f32 %v2932, %v3775
        %v4285 = vmax.f32 %v2940, %v3777
        %v4286 = vmax.f32 %v2939, %v3779
        %v4287 = vmax.f32 %v2941, %v3781
        %v4288 = vmax.f32 %v2948, %v3783
        %v4289 = vmax.f32 %v2949, %v3785
        %v4290 = vmax.f32 %v2957, %v3787
        %v4291 = vmax.f32 %v2965, %v3789
        %v4292 = vmax.f32 %v2964, %v3791
        %v4293 = vmax.f32 %v2966, %v3793
        %v4294 = vmax.f32 %v2974, %v3795
        %v4295 = vmax.f32 %v2982, %v3797
        %v4296 = vmax.f32 %v2981, %v3799
        %v4297 = vmax.f32 %v2983, %v3801
        %v4298 = vmax.f32 %v2991, %v3803
        %v4299 = vmax.f32 %v2999, %v3805
        %v4300 = vmax.f32 %v2998, %v3807
        %v4301 = vmax.f32 %v3000, %v3809
        %v4302 = vmax.f32 %v3007, %v3811
        %v4303 = vmax.f32 %v3008, %v3813
        %v4304 = vmax.f32 %v3016, %v3815
        %v4305 = vmax.f32 %v3024, %v3817
        %v4306 = vmax.f32 %v3023, %v3819
        %v4307 = vmax.f32 %v3025, %v3821
        %v4308 = vmax.f32 %v3033, %v3823
        %v4309 = vmax.f32 %v3041, %v3825
        %v4310 = vmax.f32 %v3040, %v3827
        %v4311 = vmax.f32 %v3042, %v3829
        %v4312 = vmax.f32 %v3050, %v3831
        %v4313 = vmax.f32 %v3058, %v3833
        %v4314 = vmax.f32 %v3057, %v3835
        %v4315 = vmax.f32 %v3059, %v3837
        %v4316 = vmax.f32 %v3066, %v3839
        %v4317 = vmax.f32 %v3067, %v3841
        %v4318 = vmax.f32 %v3075, %v3843
        %v4319 = vmax.f32 %v3083, %v3845
        %v4320 = vmax.f32 %v3082, %v3847
        %v4321 = vmax.f32 %v3084, %v3849
        %v4322 = vmax.f32 %v3092, %v3851
        %v4323 = vmax.f32 %v3100, %v3853
        %v4324 = vmax.f32 %v3099, %v3855
        %v4325 = vmax.f32 %v3101, %v3857
        %v4326 = vmax.f32 %v3109, %v3859
        %v4327 = vmax.f32 %v3117, %v3861
        %v4328 = vmax.f32 %v3116, %v3863
        %v4329 = vmax.f32 %v3118, %v3865
        %v4330 = vmax.f32 %v3125, %v3867
        %v4331 = vmax.f32 %v3126, %v3869
        %v4332 = vmax.f32 %v3134, %v3871
        %v4333 = vmax.f32 %v3142, %v3873
        %v4334 = vmax.f32 %v3141, %v3875
        %v4335 = vmax.f32 %v3143, %v3877
        %v4336 = vmax.f32 %v3151, %v3879
        %v4337 = vmax.f32 %v3159, %v3881
        %v4338 = vmax.f32 %v3158, %v3883
        %v4339 = vmax.f32 %v3160, %v3885
        %v4340 = vmax.f32 %v3168, %v3887
        %v4341 = vmax.f32 %v3176, %v3889
        %v4342 = vmax.f32 %v3175, %v3891
        %v4343 = vmax.f32 %v3177, %v3893
        %v4344 = vmax.f32 %v3184, %v3895
        %v4345 = vmax.f32 %v3185, %v3897
        %v4346 = vmax.f32 %v3193, %v3899
        %v4347 = vmax.f32 %v3201, %v3901
        %v4348 = vmax.f32 %v3200, %v3903
        %v4349 = vmax.f32 %v3202, %v3905
        %v4350 = vmax.f32 %v3210, %v3907
        %v4351 = vmax.f32 %v3218, %v3909
        %v4352 = vmax.f32 %v3217, %v3911
        %v4353 = vmax.f32 %v3219, %v3913
        %v4354 = vmax.f32 %v3227, %v3915
        %v4355 = vmax.f32 %v3235, %v3917
        %v4356 = vmax.f32 %v3234, %v3919
        %v4357 = vmax.f32 %v3236, %v3921
        %v4358 = vmax.f32 %v3243, %v3923
        %v4359 = vmax.f32 %v3244, %v3925
        %v4360 = vmax.f32 %v3252, %v3927
        %v4361 = vmax.f32 %v3260, %v3929
        %v4362 = vmax.f32 %v3259, %v3931
        %v4363 = vmax.f32 %v3261, %v3933
        %v4364 = vmax.f32 %v3269, %v3935
        %v4365 = vmax.f32 %v3277, %v3937
        %v4366 = vmax.f32 %v3276, %v3939
        %v4367 = vmax.f32 %v3278, %v3941
        %v4368 = vmax.f32 %v3286, %v3943
        %v4369 = vmax.f32 %v3294, %v3945
        %v4370 = vmax.f32 %v3293, %v3947
        %v4371 = vmax.f32 %v3295, %v3949
        %v4372 = vmax.f32 %v3302, %v3951
        %v4373 = vmax.f32 %v3303, %v3953
        %v4374 = vmax.f32 %v3311, %v3955
        %v4375 = vmax.f32 %v3319, %v3957
        %v4376 = vmax.f32 %v3318, %v3959
        %v4377 = vmax.f32 %v3320, %v3961
        %v4378 = vmax.f32 %v3328, %v3963
        %v4379 = vmax.f32 %v3336, %v3965
        %v4380 = vmax.f32 %v3335, %v3967
        %v4381 = vmax.f32 %v3337, %v3969
        %v4382 = vmax.f32 %v3345, %v3971
        %v4383 = vmax.f32 %v3353, %v3973
        %v4384 = vmax.f32 %v3352, %v3975
        %v4385 = vmax.f32 %v3354, %v3977
        %v4386 = vmax.f32 %v3361, %v3979
        %v4387 = vmax.f32 %v3362, %v3981
        %v4388 = vmax.f32 %v3370, %v3983
        %v4389 = vmax.f32 %v3378, %v3985
        %v4390 = vmax.f32 %v3377, %v3987
        %v4391 = vmax.f32 %v3379, %v3989
        %v4392 = vmax.f32 %v3387, %v3991
        %v4393 = vmax.f32 %v3395, %v3993
        %v4394 = vmax.f32 %v3394, %v3995
        %v4395 = vmax.f32 %v3396, %v3997
        %v4396 = vmax.f32 %v3404, %v3999
        %v4397 = vmax.f32 %v3412, %v4001
        %v4398 = vmax.f32 %v3411, %v4003
        %v4399 = vmax.f32 %v3413, %v4005
        %v4400 = vmax.f32 %v3420, %v4007
        %v4401 = vmax.f32 %v3421, %v4009
        %v4403 = vlaneseq
        %v4404 = vshrl.u32 %v4403, 7
        %v4405 = vsub.s32 0, %v4404
        %v4406 = vrot.slane %v577, %v4405
        %v4407 = vcombine.high %v4406, %v4406
        %v4409 = vunpack.c.l.s4 1983009808
        %v4410 = vunpack.c.0.s8 %v4409
        %v4411 = vlaneseq
        %v4412 = vshrl.u32 %v4411, 7
        %v4413 = vsub.s32 %v4410, %v4412
        %v4414 = vrot.slane %v4406, %v4413
        %v4416 = vunpack.c.l.s4 1983009808
        %v4417 = vunpack.c.0.s8 %v4416
        %v4418 = vlaneseq
        %v4419 = vshrl.u32 %v4418, 7
        %v4420 = vsub.s32 %v4417, %v4419
        %v4421 = vrot.slane %v4407, %v4420
        %v4422 = vcombine.high %v4414, %v4414
        %v4423 = vcombine.high %v4421, %v4421
        %v4424 = vrot.slane %v4414, 1
        %v4425 = vrot.slane %v4422, 1
        %v4426 = vrot.slane %v4421, 1
        %v4427 = vrot.slane %v4423, 1
        %v4436 = vadd.f32 %v4206, %v4414
        %v4437 = vadd.f32 %v4207, %v4424
        %v4438 = vadd.f32 %v4208, %v4422
        %v4439 = vadd.f32 %v4209, %v4425
        %v4440 = vadd.f32 %v4210, %v4421
        %v4441 = vadd.f32 %v4211, %v4426
        %v4442 = vadd.f32 %v4212, %v4423
        %v4443 = vadd.f32 %v4213, %v4427
        %v4444 = vadd.f32 %v4214, %v4414
        %v4445 = vadd.f32 %v4215, %v4424
        %v4446 = vadd.f32 %v4216, %v4422
        %v4447 = vadd.f32 %v4217, %v4425
        %v4448 = vadd.f32 %v4218, %v4421
        %v4449 = vadd.f32 %v4219, %v4426
        %v4450 = vadd.f32 %v4220, %v4414
        %v4451 = vadd.f32 %v4221, %v4424
        %v4452 = vadd.f32 %v4222, %v4422
        %v4453 = vadd.f32 %v4223, %v4425
        %v4454 = vadd.f32 %v4224, %v4421
        %v4455 = vadd.f32 %v4225, %v4426
        %v4456 = vadd.f32 %v4226, %v4423
        %v4457 = vadd.f32 %v4227, %v4427
        %v4458 = vadd.f32 %v4228, %v4414
        %v4459 = vadd.f32 %v4229, %v4424
        %v4460 = vadd.f32 %v4230, %v4422
        %v4461 = vadd.f32 %v4231, %v4425
        %v4462 = vadd.f32 %v4232, %v4421
        %v4463 = vadd.f32 %v4233, %v4426
        %v4464 = vadd.f32 %v4234, %v4414
        %v4465 = vadd.f32 %v4235, %v4424
        %v4466 = vadd.f32 %v4236, %v4422
        %v4467 = vadd.f32 %v4237, %v4425
        %v4468 = vadd.f32 %v4238, %v4421
        %v4469 = vadd.f32 %v4239, %v4426
        %v4470 = vadd.f32 %v4240, %v4423
        %v4471 = vadd.f32 %v4241, %v4427
        %v4472 = vadd.f32 %v4242, %v4414
        %v4473 = vadd.f32 %v4243, %v4424
        %v4474 = vadd.f32 %v4244, %v4422
        %v4475 = vadd.f32 %v4245, %v4425
        %v4476 = vadd.f32 %v4246, %v4421
        %v4477 = vadd.f32 %v4247, %v4426
        %v4478 = vadd.f32 %v4248, %v4414
        %v4479 = vadd.f32 %v4249, %v4424
        %v4480 = vadd.f32 %v4250, %v4422
        %v4481 = vadd.f32 %v4251, %v4425
        %v4482 = vadd.f32 %v4252, %v4421
        %v4483 = vadd.f32 %v4253, %v4426
        %v4484 = vadd.f32 %v4254, %v4423
        %v4485 = vadd.f32 %v4255, %v4427
        %v4486 = vadd.f32 %v4256, %v4414
        %v4487 = vadd.f32 %v4257, %v4424
        %v4488 = vadd.f32 %v4258, %v4422
        %v4489 = vadd.f32 %v4259, %v4425
        %v4490 = vadd.f32 %v4260, %v4421
        %v4491 = vadd.f32 %v4261, %v4426
        %v4492 = vadd.f32 %v4262, %v4414
        %v4493 = vadd.f32 %v4263, %v4424
        %v4494 = vadd.f32 %v4264, %v4422
        %v4495 = vadd.f32 %v4265, %v4425
        %v4496 = vadd.f32 %v4266, %v4421
        %v4497 = vadd.f32 %v4267, %v4426
        %v4498 = vadd.f32 %v4268, %v4423
        %v4499 = vadd.f32 %v4269, %v4427
        %v4500 = vadd.f32 %v4270, %v4414
        %v4501 = vadd.f32 %v4271, %v4424
        %v4502 = vadd.f32 %v4272, %v4422
        %v4503 = vadd.f32 %v4273, %v4425
        %v4504 = vadd.f32 %v4274, %v4421
        %v4505 = vadd.f32 %v4275, %v4426
        %v4506 = vadd.f32 %v4276, %v4414
        %v4507 = vadd.f32 %v4277, %v4424
        %v4508 = vadd.f32 %v4278, %v4422
        %v4509 = vadd.f32 %v4279, %v4425
        %v4510 = vadd.f32 %v4280, %v4421
        %v4511 = vadd.f32 %v4281, %v4426
        %v4512 = vadd.f32 %v4282, %v4423
        %v4513 = vadd.f32 %v4283, %v4427
        %v4514 = vadd.f32 %v4284, %v4414
        %v4515 = vadd.f32 %v4285, %v4424
        %v4516 = vadd.f32 %v4286, %v4422
        %v4517 = vadd.f32 %v4287, %v4425
        %v4518 = vadd.f32 %v4288, %v4421
        %v4519 = vadd.f32 %v4289, %v4426
        %v4520 = vadd.f32 %v4290, %v4414
        %v4521 = vadd.f32 %v4291, %v4424
        %v4522 = vadd.f32 %v4292, %v4422
        %v4523 = vadd.f32 %v4293, %v4425
        %v4524 = vadd.f32 %v4294, %v4421
        %v4525 = vadd.f32 %v4295, %v4426
        %v4526 = vadd.f32 %v4296, %v4423
        %v4527 = vadd.f32 %v4297, %v4427
        %v4528 = vadd.f32 %v4298, %v4414
        %v4529 = vadd.f32 %v4299, %v4424
        %v4530 = vadd.f32 %v4300, %v4422
        %v4531 = vadd.f32 %v4301, %v4425
        %v4532 = vadd.f32 %v4302, %v4421
        %v4533 = vadd.f32 %v4303, %v4426
        %v4534 = vadd.f32 %v4304, %v4414
        %v4535 = vadd.f32 %v4305, %v4424
        %v4536 = vadd.f32 %v4306, %v4422
        %v4537 = vadd.f32 %v4307, %v4425
        %v4538 = vadd.f32 %v4308, %v4421
        %v4539 = vadd.f32 %v4309, %v4426
        %v4540 = vadd.f32 %v4310, %v4423
        %v4541 = vadd.f32 %v4311, %v4427
        %v4542 = vadd.f32 %v4312, %v4414
        %v4543 = vadd.f32 %v4313, %v4424
        %v4544 = vadd.f32 %v4314, %v4422
        %v4545 = vadd.f32 %v4315, %v4425
        %v4546 = vadd.f32 %v4316, %v4421
        %v4547 = vadd.f32 %v4317, %v4426
        %v4548 = vadd.f32 %v4318, %v4414
        %v4549 = vadd.f32 %v4319, %v4424
        %v4550 = vadd.f32 %v4320, %v4422
        %v4551 = vadd.f32 %v4321, %v4425
        %v4552 = vadd.f32 %v4322, %v4421
        %v4553 = vadd.f32 %v4323, %v4426
        %v4554 = vadd.f32 %v4324, %v4423
        %v4555 = vadd.f32 %v4325, %v4427
        %v4556 = vadd.f32 %v4326, %v4414
        %v4557 = vadd.f32 %v4327, %v4424
        %v4558 = vadd.f32 %v4328, %v4422
        %v4559 = vadd.f32 %v4329, %v4425
        %v4560 = vadd.f32 %v4330, %v4421
        %v4561 = vadd.f32 %v4331, %v4426
        %v4562 = vadd.f32 %v4332, %v4414
        %v4563 = vadd.f32 %v4333, %v4424
        %v4564 = vadd.f32 %v4334, %v4422
        %v4565 = vadd.f32 %v4335, %v4425
        %v4566 = vadd.f32 %v4336, %v4421
        %v4567 = vadd.f32 %v4337, %v4426
        %v4568 = vadd.f32 %v4338, %v4423
        %v4569 = vadd.f32 %v4339, %v4427
        %v4570 = vadd.f32 %v4340, %v4414
        %v4571 = vadd.f32 %v4341, %v4424
        %v4572 = vadd.f32 %v4342, %v4422
        %v4573 = vadd.f32 %v4343, %v4425
        %v4574 = vadd.f32 %v4344, %v4421
        %v4575 = vadd.f32 %v4345, %v4426
        %v4576 = vadd.f32 %v4346, %v4414
        %v4577 = vadd.f32 %v4347, %v4424
        %v4578 = vadd.f32 %v4348, %v4422
        %v4579 = vadd.f32 %v4349, %v4425
        %v4580 = vadd.f32 %v4350, %v4421
        %v4581 = vadd.f32 %v4351, %v4426
        %v4582 = vadd.f32 %v4352, %v4423
        %v4583 = vadd.f32 %v4353, %v4427
        %v4584 = vadd.f32 %v4354, %v4414
        %v4585 = vadd.f32 %v4355, %v4424
        %v4586 = vadd.f32 %v4356, %v4422
        %v4587 = vadd.f32 %v4357, %v4425
        %v4588 = vadd.f32 %v4358, %v4421
        %v4589 = vadd.f32 %v4359, %v4426
        %v4590 = vadd.f32 %v4360, %v4414
        %v4591 = vadd.f32 %v4361, %v4424
        %v4592 = vadd.f32 %v4362, %v4422
        %v4593 = vadd.f32 %v4363, %v4425
        %v4594 = vadd.f32 %v4364, %v4421
        %v4595 = vadd.f32 %v4365, %v4426
        %v4596 = vadd.f32 %v4366, %v4423
        %v4597 = vadd.f32 %v4367, %v4427
        %v4598 = vadd.f32 %v4368, %v4414
        %v4599 = vadd.f32 %v4369, %v4424
        %v4600 = vadd.f32 %v4370, %v4422
        %v4601 = vadd.f32 %v4371, %v4425
        %v4602 = vadd.f32 %v4372, %v4421
        %v4603 = vadd.f32 %v4373, %v4426
        %v4604 = vadd.f32 %v4374, %v4414
        %v4605 = vadd.f32 %v4375, %v4424
        %v4606 = vadd.f32 %v4376, %v4422
        %v4607 = vadd.f32 %v4377, %v4425
        %v4608 = vadd.f32 %v4378, %v4421
        %v4609 = vadd.f32 %v4379, %v4426
        %v4610 = vadd.f32 %v4380, %v4423
        %v4611 = vadd.f32 %v4381, %v4427
        %v4612 = vadd.f32 %v4382, %v4414
        %v4613 = vadd.f32 %v4383, %v4424
        %v4614 = vadd.f32 %v4384, %v4422
        %v4615 = vadd.f32 %v4385, %v4425
        %v4616 = vadd.f32 %v4386, %v4421
        %v4617 = vadd.f32 %v4387, %v4426
        %v4618 = vadd.f32 %v4388, %v4414
        %v4619 = vadd.f32 %v4389, %v4424
        %v4620 = vadd.f32 %v4390, %v4422
        %v4621 = vadd.f32 %v4391, %v4425
        %v4622 = vadd.f32 %v4392, %v4421
        %v4623 = vadd.f32 %v4393, %v4426
        %v4624 = vadd.f32 %v4394, %v4423
        %v4625 = vadd.f32 %v4395, %v4427
        %v4626 = vadd.f32 %v4396, %v4414
        %v4627 = vadd.f32 %v4397, %v4424
        %v4628 = vadd.f32 %v4398, %v4422
        %v4629 = vadd.f32 %v4399, %v4425
        %v4630 = vadd.f32 %v4400, %v4421
        %v4631 = vadd.f32 %v4401, %v4426
        %v4632 = vmax.f32 %v4436, 0.0
        %v4633 = vmax.f32 %v4437, 0.0
        %v4634 = vmax.f32 %v4438, 0.0
        %v4635 = vmax.f32 %v4439, 0.0
        %v4636 = vmax.f32 %v4440, 0.0
        %v4637 = vmax.f32 %v4441, 0.0
        %v4638 = vmax.f32 %v4442, 0.0
        %v4639 = vmax.f32 %v4443, 0.0
        %v4640 = vmax.f32 %v4444, 0.0
        %v4641 = vmax.f32 %v4445, 0.0
        %v4642 = vmax.f32 %v4446, 0.0
        %v4643 = vmax.f32 %v4447, 0.0
        %v4644 = vmax.f32 %v4448, 0.0
        %v4645 = vmax.f32 %v4449, 0.0
        %v4646 = vmax.f32 %v4450, 0.0
        %v4647 = vmax.f32 %v4451, 0.0
        %v4648 = vmax.f32 %v4452, 0.0
        %v4649 = vmax.f32 %v4453, 0.0
        %v4650 = vmax.f32 %v4454, 0.0
        %v4651 = vmax.f32 %v4455, 0.0
        %v4652 = vmax.f32 %v4456, 0.0
        %v4653 = vmax.f32 %v4457, 0.0
        %v4654 = vmax.f32 %v4458, 0.0
        %v4655 = vmax.f32 %v4459, 0.0
        %v4656 = vmax.f32 %v4460, 0.0
        %v4657 = vmax.f32 %v4461, 0.0
        %v4658 = vmax.f32 %v4462, 0.0
        %v4659 = vmax.f32 %v4463, 0.0
        %v4660 = vmax.f32 %v4464, 0.0
        %v4661 = vmax.f32 %v4465, 0.0
        %v4662 = vmax.f32 %v4466, 0.0
        %v4663 = vmax.f32 %v4467, 0.0
        %v4664 = vmax.f32 %v4468, 0.0
        %v4665 = vmax.f32 %v4469, 0.0
        %v4666 = vmax.f32 %v4470, 0.0
        %v4667 = vmax.f32 %v4471, 0.0
        %v4668 = vmax.f32 %v4472, 0.0
        %v4669 = vmax.f32 %v4473, 0.0
        %v4670 = vmax.f32 %v4474, 0.0
        %v4671 = vmax.f32 %v4475, 0.0
        %v4672 = vmax.f32 %v4476, 0.0
        %v4673 = vmax.f32 %v4477, 0.0
        %v4674 = vmax.f32 %v4478, 0.0
        %v4675 = vmax.f32 %v4479, 0.0
        %v4676 = vmax.f32 %v4480, 0.0
        %v4677 = vmax.f32 %v4481, 0.0
        %v4678 = vmax.f32 %v4482, 0.0
        %v4679 = vmax.f32 %v4483, 0.0
        %v4680 = vmax.f32 %v4484, 0.0
        %v4681 = vmax.f32 %v4485, 0.0
        %v4682 = vmax.f32 %v4486, 0.0
        %v4683 = vmax.f32 %v4487, 0.0
        %v4684 = vmax.f32 %v4488, 0.0
        %v4685 = vmax.f32 %v4489, 0.0
        %v4686 = vmax.f32 %v4490, 0.0
        %v4687 = vmax.f32 %v4491, 0.0
        %v4688 = vmax.f32 %v4492, 0.0
        %v4689 = vmax.f32 %v4493, 0.0
        %v4690 = vmax.f32 %v4494, 0.0
        %v4691 = vmax.f32 %v4495, 0.0
        %v4692 = vmax.f32 %v4496, 0.0
        %v4693 = vmax.f32 %v4497, 0.0
        %v4694 = vmax.f32 %v4498, 0.0
        %v4695 = vmax.f32 %v4499, 0.0
        %v4696 = vmax.f32 %v4500, 0.0
        %v4697 = vmax.f32 %v4501, 0.0
        %v4698 = vmax.f32 %v4502, 0.0
        %v4699 = vmax.f32 %v4503, 0.0
        %v4700 = vmax.f32 %v4504, 0.0
        %v4701 = vmax.f32 %v4505, 0.0
        %v4702 = vmax.f32 %v4506, 0.0
        %v4703 = vmax.f32 %v4507, 0.0
        %v4704 = vmax.f32 %v4508, 0.0
        %v4705 = vmax.f32 %v4509, 0.0
        %v4706 = vmax.f32 %v4510, 0.0
        %v4707 = vmax.f32 %v4511, 0.0
        %v4708 = vmax.f32 %v4512, 0.0
        %v4709 = vmax.f32 %v4513, 0.0
        %v4710 = vmax.f32 %v4514, 0.0
        %v4711 = vmax.f32 %v4515, 0.0
        %v4712 = vmax.f32 %v4516, 0.0
        %v4713 = vmax.f32 %v4517, 0.0
        %v4714 = vmax.f32 %v4518, 0.0
        %v4715 = vmax.f32 %v4519, 0.0
        %v4716 = vmax.f32 %v4520, 0.0
        %v4717 = vmax.f32 %v4521, 0.0
        %v4718 = vmax.f32 %v4522, 0.0
        %v4719 = vmax.f32 %v4523, 0.0
        %v4720 = vmax.f32 %v4524, 0.0
        %v4721 = vmax.f32 %v4525, 0.0
        %v4722 = vmax.f32 %v4526, 0.0
        %v4723 = vmax.f32 %v4527, 0.0
        %v4724 = vmax.f32 %v4528, 0.0
        %v4725 = vmax.f32 %v4529, 0.0
        %v4726 = vmax.f32 %v4530, 0.0
        %v4727 = vmax.f32 %v4531, 0.0
        %v4728 = vmax.f32 %v4532, 0.0
        %v4729 = vmax.f32 %v4533, 0.0
        %v4730 = vmax.f32 %v4534, 0.0
        %v4731 = vmax.f32 %v4535, 0.0
        %v4732 = vmax.f32 %v4536, 0.0
        %v4733 = vmax.f32 %v4537, 0.0
        %v4734 = vmax.f32 %v4538, 0.0
        %v4735 = vmax.f32 %v4539, 0.0
        %v4736 = vmax.f32 %v4540, 0.0
        %v4737 = vmax.f32 %v4541, 0.0
        %v4738 = vmax.f32 %v4542, 0.0
        %v4739 = vmax.f32 %v4543, 0.0
        %v4740 = vmax.f32 %v4544, 0.0
        %v4741 = vmax.f32 %v4545, 0.0
        %v4742 = vmax.f32 %v4546, 0.0
        %v4743 = vmax.f32 %v4547, 0.0
        %v4744 = vmax.f32 %v4548, 0.0
        %v4745 = vmax.f32 %v4549, 0.0
        %v4746 = vmax.f32 %v4550, 0.0
        %v4747 = vmax.f32 %v4551, 0.0
        %v4748 = vmax.f32 %v4552, 0.0
        %v4749 = vmax.f32 %v4553, 0.0
        %v4750 = vmax.f32 %v4554, 0.0
        %v4751 = vmax.f32 %v4555, 0.0
        %v4752 = vmax.f32 %v4556, 0.0
        %v4753 = vmax.f32 %v4557, 0.0
        %v4754 = vmax.f32 %v4558, 0.0
        %v4755 = vmax.f32 %v4559, 0.0
        %v4756 = vmax.f32 %v4560, 0.0
        %v4757 = vmax.f32 %v4561, 0.0
        %v4758 = vmax.f32 %v4562, 0.0
        %v4759 = vmax.f32 %v4563, 0.0
        %v4760 = vmax.f32 %v4564, 0.0
        %v4761 = vmax.f32 %v4565, 0.0
        %v4762 = vmax.f32 %v4566, 0.0
        %v4763 = vmax.f32 %v4567, 0.0
        %v4764 = vmax.f32 %v4568, 0.0
        %v4765 = vmax.f32 %v4569, 0.0
        %v4766 = vmax.f32 %v4570, 0.0
        %v4767 = vmax.f32 %v4571, 0.0
        %v4768 = vmax.f32 %v4572, 0.0
        %v4769 = vmax.f32 %v4573, 0.0
        %v4770 = vmax.f32 %v4574, 0.0
        %v4771 = vmax.f32 %v4575, 0.0
        %v4772 = vmax.f32 %v4576, 0.0
        %v4773 = vmax.f32 %v4577, 0.0
        %v4774 = vmax.f32 %v4578, 0.0
        %v4775 = vmax.f32 %v4579, 0.0
        %v4776 = vmax.f32 %v4580, 0.0
        %v4777 = vmax.f32 %v4581, 0.0
        %v4778 = vmax.f32 %v4582, 0.0
        %v4779 = vmax.f32 %v4583, 0.0
        %v4780 = vmax.f32 %v4584, 0.0
        %v4781 = vmax.f32 %v4585, 0.0
        %v4782 = vmax.f32 %v4586, 0.0
        %v4783 = vmax.f32 %v4587, 0.0
        %v4784 = vmax.f32 %v4588, 0.0
        %v4785 = vmax.f32 %v4589, 0.0
        %v4786 = vmax.f32 %v4590, 0.0
        %v4787 = vmax.f32 %v4591, 0.0
        %v4788 = vmax.f32 %v4592, 0.0
        %v4789 = vmax.f32 %v4593, 0.0
        %v4790 = vmax.f32 %v4594, 0.0
        %v4791 = vmax.f32 %v4595, 0.0
        %v4792 = vmax.f32 %v4596, 0.0
        %v4793 = vmax.f32 %v4597, 0.0
        %v4794 = vmax.f32 %v4598, 0.0
        %v4795 = vmax.f32 %v4599, 0.0
        %v4796 = vmax.f32 %v4600, 0.0
        %v4797 = vmax.f32 %v4601, 0.0
        %v4798 = vmax.f32 %v4602, 0.0
        %v4799 = vmax.f32 %v4603, 0.0
        %v4800 = vmax.f32 %v4604, 0.0
        %v4801 = vmax.f32 %v4605, 0.0
        %v4802 = vmax.f32 %v4606, 0.0
        %v4803 = vmax.f32 %v4607, 0.0
        %v4804 = vmax.f32 %v4608, 0.0
        %v4805 = vmax.f32 %v4609, 0.0
        %v4806 = vmax.f32 %v4610, 0.0
        %v4807 = vmax.f32 %v4611, 0.0
        %v4808 = vmax.f32 %v4612, 0.0
        %v4809 = vmax.f32 %v4613, 0.0
        %v4810 = vmax.f32 %v4614, 0.0
        %v4811 = vmax.f32 %v4615, 0.0
        %v4812 = vmax.f32 %v4616, 0.0
        %v4813 = vmax.f32 %v4617, 0.0
        %v4814 = vmax.f32 %v4618, 0.0
        %v4815 = vmax.f32 %v4619, 0.0
        %v4816 = vmax.f32 %v4620, 0.0
        %v4817 = vmax.f32 %v4621, 0.0
        %v4818 = vmax.f32 %v4622, 0.0
        %v4819 = vmax.f32 %v4623, 0.0
        %v4820 = vmax.f32 %v4624, 0.0
        %v4821 = vmax.f32 %v4625, 0.0
        %v4822 = vmax.f32 %v4626, 0.0
        %v4823 = vmax.f32 %v4627, 0.0
        %v4824 = vmax.f32 %v4628, 0.0
        %v4825 = vmax.f32 %v4629, 0.0
        %v4826 = vmax.f32 %v4630, 0.0
        %v4827 = vmax.f32 %v4631, 0.0
        %v4828 = vpack.c.bf16 %v4632, %v4632
        %v4829 = vpack.c.bf16 %v4633, %v4633
        %v4830 = vpack.c.bf16 %v4634, %v4634
        %v4831 = vpack.c.bf16 %v4635, %v4635
        %v4832 = vpack.c.bf16 %v4636, %v4636
        %v4833 = vpack.c.bf16 %v4637, %v4637
        %v4834 = vpack.c.bf16 %v4638, %v4638
        %v4835 = vpack.c.bf16 %v4639, %v4639
        %v4836 = vpack.c.bf16 %v4640, %v4640
        %v4837 = vpack.c.bf16 %v4641, %v4641
        %v4838 = vpack.c.bf16 %v4642, %v4642
        %v4839 = vpack.c.bf16 %v4643, %v4643
        %v4840 = vpack.c.bf16 %v4644, %v4644
        %v4841 = vpack.c.bf16 %v4645, %v4645
        %v4842 = vpack.c.bf16 %v4646, %v4646
        %v4843 = vpack.c.bf16 %v4647, %v4647
        %v4844 = vpack.c.bf16 %v4648, %v4648
        %v4845 = vpack.c.bf16 %v4649, %v4649
        %v4846 = vpack.c.bf16 %v4650, %v4650
        %v4847 = vpack.c.bf16 %v4651, %v4651
        %v4848 = vpack.c.bf16 %v4652, %v4652
        %v4849 = vpack.c.bf16 %v4653, %v4653
        %v4850 = vpack.c.bf16 %v4654, %v4654
        %v4851 = vpack.c.bf16 %v4655, %v4655
        %v4852 = vpack.c.bf16 %v4656, %v4656
        %v4853 = vpack.c.bf16 %v4657, %v4657
        %v4854 = vpack.c.bf16 %v4658, %v4658
        %v4855 = vpack.c.bf16 %v4659, %v4659
        %v4856 = vpack.c.bf16 %v4660, %v4660
        %v4857 = vpack.c.bf16 %v4661, %v4661
        %v4858 = vpack.c.bf16 %v4662, %v4662
        %v4859 = vpack.c.bf16 %v4663, %v4663
        %v4860 = vpack.c.bf16 %v4664, %v4664
        %v4861 = vpack.c.bf16 %v4665, %v4665
        %v4862 = vpack.c.bf16 %v4666, %v4666
        %v4863 = vpack.c.bf16 %v4667, %v4667
        %v4864 = vpack.c.bf16 %v4668, %v4668
        %v4865 = vpack.c.bf16 %v4669, %v4669
        %v4866 = vpack.c.bf16 %v4670, %v4670
        %v4867 = vpack.c.bf16 %v4671, %v4671
        %v4868 = vpack.c.bf16 %v4672, %v4672
        %v4869 = vpack.c.bf16 %v4673, %v4673
        %v4870 = vpack.c.bf16 %v4674, %v4674
        %v4871 = vpack.c.bf16 %v4675, %v4675
        %v4872 = vpack.c.bf16 %v4676, %v4676
        %v4873 = vpack.c.bf16 %v4677, %v4677
        %v4874 = vpack.c.bf16 %v4678, %v4678
        %v4875 = vpack.c.bf16 %v4679, %v4679
        %v4876 = vpack.c.bf16 %v4680, %v4680
        %v4877 = vpack.c.bf16 %v4681, %v4681
        %v4878 = vpack.c.bf16 %v4682, %v4682
        %v4879 = vpack.c.bf16 %v4683, %v4683
        %v4880 = vpack.c.bf16 %v4684, %v4684
        %v4881 = vpack.c.bf16 %v4685, %v4685
        %v4882 = vpack.c.bf16 %v4686, %v4686
        %v4883 = vpack.c.bf16 %v4687, %v4687
        %v4884 = vpack.c.bf16 %v4688, %v4688
        %v4885 = vpack.c.bf16 %v4689, %v4689
        %v4886 = vpack.c.bf16 %v4690, %v4690
        %v4887 = vpack.c.bf16 %v4691, %v4691
        %v4888 = vpack.c.bf16 %v4692, %v4692
        %v4889 = vpack.c.bf16 %v4693, %v4693
        %v4890 = vpack.c.bf16 %v4694, %v4694
        %v4891 = vpack.c.bf16 %v4695, %v4695
        %v4892 = vpack.c.bf16 %v4696, %v4696
        %v4893 = vpack.c.bf16 %v4697, %v4697
        %v4894 = vpack.c.bf16 %v4698, %v4698
        %v4895 = vpack.c.bf16 %v4699, %v4699
        %v4896 = vpack.c.bf16 %v4700, %v4700
        %v4897 = vpack.c.bf16 %v4701, %v4701
        %v4898 = vpack.c.bf16 %v4702, %v4702
        %v4899 = vpack.c.bf16 %v4703, %v4703
        %v4900 = vpack.c.bf16 %v4704, %v4704
        %v4901 = vpack.c.bf16 %v4705, %v4705
        %v4902 = vpack.c.bf16 %v4706, %v4706
        %v4903 = vpack.c.bf16 %v4707, %v4707
        %v4904 = vpack.c.bf16 %v4708, %v4708
        %v4905 = vpack.c.bf16 %v4709, %v4709
        %v4906 = vpack.c.bf16 %v4710, %v4710
        %v4907 = vpack.c.bf16 %v4711, %v4711
        %v4908 = vpack.c.bf16 %v4712, %v4712
        %v4909 = vpack.c.bf16 %v4713, %v4713
        %v4910 = vpack.c.bf16 %v4714, %v4714
        %v4911 = vpack.c.bf16 %v4715, %v4715
        %v4912 = vpack.c.bf16 %v4716, %v4716
        %v4913 = vpack.c.bf16 %v4717, %v4717
        %v4914 = vpack.c.bf16 %v4718, %v4718
        %v4915 = vpack.c.bf16 %v4719, %v4719
        %v4916 = vpack.c.bf16 %v4720, %v4720
        %v4917 = vpack.c.bf16 %v4721, %v4721
        %v4918 = vpack.c.bf16 %v4722, %v4722
        %v4919 = vpack.c.bf16 %v4723, %v4723
        %v4920 = vpack.c.bf16 %v4724, %v4724
        %v4921 = vpack.c.bf16 %v4725, %v4725
        %v4922 = vpack.c.bf16 %v4726, %v4726
        %v4923 = vpack.c.bf16 %v4727, %v4727
        %v4924 = vpack.c.bf16 %v4728, %v4728
        %v4925 = vpack.c.bf16 %v4729, %v4729
        %v4926 = vpack.c.bf16 %v4730, %v4730
        %v4927 = vpack.c.bf16 %v4731, %v4731
        %v4928 = vpack.c.bf16 %v4732, %v4732
        %v4929 = vpack.c.bf16 %v4733, %v4733
        %v4930 = vpack.c.bf16 %v4734, %v4734
        %v4931 = vpack.c.bf16 %v4735, %v4735
        %v4932 = vpack.c.bf16 %v4736, %v4736
        %v4933 = vpack.c.bf16 %v4737, %v4737
        %v4934 = vpack.c.bf16 %v4738, %v4738
        %v4935 = vpack.c.bf16 %v4739, %v4739
        %v4936 = vpack.c.bf16 %v4740, %v4740
        %v4937 = vpack.c.bf16 %v4741, %v4741
        %v4938 = vpack.c.bf16 %v4742, %v4742
        %v4939 = vpack.c.bf16 %v4743, %v4743
        %v4940 = vpack.c.bf16 %v4744, %v4744
        %v4941 = vpack.c.bf16 %v4745, %v4745
        %v4942 = vpack.c.bf16 %v4746, %v4746
        %v4943 = vpack.c.bf16 %v4747, %v4747
        %v4944 = vpack.c.bf16 %v4748, %v4748
        %v4945 = vpack.c.bf16 %v4749, %v4749
        %v4946 = vpack.c.bf16 %v4750, %v4750
        %v4947 = vpack.c.bf16 %v4751, %v4751
        %v4948 = vpack.c.bf16 %v4752, %v4752
        %v4949 = vpack.c.bf16 %v4753, %v4753
        %v4950 = vpack.c.bf16 %v4754, %v4754
        %v4951 = vpack.c.bf16 %v4755, %v4755
        %v4952 = vpack.c.bf16 %v4756, %v4756
        %v4953 = vpack.c.bf16 %v4757, %v4757
        %v4954 = vpack.c.bf16 %v4758, %v4758
        %v4955 = vpack.c.bf16 %v4759, %v4759
        %v4956 = vpack.c.bf16 %v4760, %v4760
        %v4957 = vpack.c.bf16 %v4761, %v4761
        %v4958 = vpack.c.bf16 %v4762, %v4762
        %v4959 = vpack.c.bf16 %v4763, %v4763
        %v4960 = vpack.c.bf16 %v4764, %v4764
        %v4961 = vpack.c.bf16 %v4765, %v4765
        %v4962 = vpack.c.bf16 %v4766, %v4766
        %v4963 = vpack.c.bf16 %v4767, %v4767
        %v4964 = vpack.c.bf16 %v4768, %v4768
        %v4965 = vpack.c.bf16 %v4769, %v4769
        %v4966 = vpack.c.bf16 %v4770, %v4770
        %v4967 = vpack.c.bf16 %v4771, %v4771
        %v4968 = vpack.c.bf16 %v4772, %v4772
        %v4969 = vpack.c.bf16 %v4773, %v4773
        %v4970 = vpack.c.bf16 %v4774, %v4774
        %v4971 = vpack.c.bf16 %v4775, %v4775
        %v4972 = vpack.c.bf16 %v4776, %v4776
        %v4973 = vpack.c.bf16 %v4777, %v4777
        %v4974 = vpack.c.bf16 %v4778, %v4778
        %v4975 = vpack.c.bf16 %v4779, %v4779
        %v4976 = vpack.c.bf16 %v4780, %v4780
        %v4977 = vpack.c.bf16 %v4781, %v4781
        %v4978 = vpack.c.bf16 %v4782, %v4782
        %v4979 = vpack.c.bf16 %v4783, %v4783
        %v4980 = vpack.c.bf16 %v4784, %v4784
        %v4981 = vpack.c.bf16 %v4785, %v4785
        %v4982 = vpack.c.bf16 %v4786, %v4786
        %v4983 = vpack.c.bf16 %v4787, %v4787
        %v4984 = vpack.c.bf16 %v4788, %v4788
        %v4985 = vpack.c.bf16 %v4789, %v4789
        %v4986 = vpack.c.bf16 %v4790, %v4790
        %v4987 = vpack.c.bf16 %v4791, %v4791
        %v4988 = vpack.c.bf16 %v4792, %v4792
        %v4989 = vpack.c.bf16 %v4793, %v4793
        %v4990 = vpack.c.bf16 %v4794, %v4794
        %v4991 = vpack.c.bf16 %v4795, %v4795
        %v4992 = vpack.c.bf16 %v4796, %v4796
        %v4993 = vpack.c.bf16 %v4797, %v4797
        %v4994 = vpack.c.bf16 %v4798, %v4798
        %v4995 = vpack.c.bf16 %v4799, %v4799
        %v4996 = vpack.c.bf16 %v4800, %v4800
        %v4997 = vpack.c.bf16 %v4801, %v4801
        %v4998 = vpack.c.bf16 %v4802, %v4802
        %v4999 = vpack.c.bf16 %v4803, %v4803
        %v5000 = vpack.c.bf16 %v4804, %v4804
        %v5001 = vpack.c.bf16 %v4805, %v4805
        %v5002 = vpack.c.bf16 %v4806, %v4806
        %v5003 = vpack.c.bf16 %v4807, %v4807
        %v5004 = vpack.c.bf16 %v4808, %v4808
        %v5005 = vpack.c.bf16 %v4809, %v4809
        %v5006 = vpack.c.bf16 %v4810, %v4810
        %v5007 = vpack.c.bf16 %v4811, %v4811
        %v5008 = vpack.c.bf16 %v4812, %v4812
        %v5009 = vpack.c.bf16 %v4813, %v4813
        %v5010 = vpack.c.bf16 %v4814, %v4814
        %v5011 = vpack.c.bf16 %v4815, %v4815
        %v5012 = vpack.c.bf16 %v4816, %v4816
        %v5013 = vpack.c.bf16 %v4817, %v4817
        %v5014 = vpack.c.bf16 %v4818, %v4818
        %v5015 = vpack.c.bf16 %v4819, %v4819
        %v5016 = vpack.c.bf16 %v4820, %v4820
        %v5017 = vpack.c.bf16 %v4821, %v4821
        %v5018 = vpack.c.bf16 %v4822, %v4822
        %v5019 = vpack.c.bf16 %v4823, %v4823
        %v5020 = vpack.c.bf16 %v4824, %v4824
        %v5021 = vpack.c.bf16 %v4825, %v4825
        %v5022 = vpack.c.bf16 %v4826, %v4826
        %v5023 = vpack.c.bf16 %v4827, %v4827
        %v5220 = vunpack.c.l.b16 %v4828
        %v5221 = vunpack.c.l.b16 %v4829
        %v5222 = vunpack.c.l.b16 %v4830
        %v5223 = vunpack.c.l.b16 %v4831
        %v5224 = vunpack.c.l.b16 %v4832
        %v5225 = vunpack.c.l.b16 %v4833
        %v5226 = vunpack.c.l.b16 %v4834
        %v5227 = vunpack.c.l.b16 %v4835
        %v5228 = vunpack.c.l.b16 %v4836
        %v5229 = vunpack.c.l.b16 %v4837
        %v5230 = vunpack.c.l.b16 %v4838
        %v5231 = vunpack.c.l.b16 %v4839
        %v5232 = vunpack.c.l.b16 %v4840
        %v5233 = vunpack.c.l.b16 %v4841
        %v5234 = vunpack.c.l.b16 %v4842
        %v5235 = vunpack.c.l.b16 %v4843
        %v5236 = vunpack.c.l.b16 %v4844
        %v5237 = vunpack.c.l.b16 %v4845
        %v5238 = vunpack.c.l.b16 %v4846
        %v5239 = vunpack.c.l.b16 %v4847
        %v5240 = vunpack.c.l.b16 %v4848
        %v5241 = vunpack.c.l.b16 %v4849
        %v5242 = vunpack.c.l.b16 %v4850
        %v5243 = vunpack.c.l.b16 %v4851
        %v5244 = vunpack.c.l.b16 %v4852
        %v5245 = vunpack.c.l.b16 %v4853
        %v5246 = vunpack.c.l.b16 %v4854
        %v5247 = vunpack.c.l.b16 %v4855
        %v5248 = vunpack.c.l.b16 %v4856
        %v5249 = vunpack.c.l.b16 %v4857
        %v5250 = vunpack.c.l.b16 %v4858
        %v5251 = vunpack.c.l.b16 %v4859
        %v5252 = vunpack.c.l.b16 %v4860
        %v5253 = vunpack.c.l.b16 %v4861
        %v5254 = vunpack.c.l.b16 %v4862
        %v5255 = vunpack.c.l.b16 %v4863
        %v5256 = vunpack.c.l.b16 %v4864
        %v5257 = vunpack.c.l.b16 %v4865
        %v5258 = vunpack.c.l.b16 %v4866
        %v5259 = vunpack.c.l.b16 %v4867
        %v5260 = vunpack.c.l.b16 %v4868
        %v5261 = vunpack.c.l.b16 %v4869
        %v5262 = vunpack.c.l.b16 %v4870
        %v5263 = vunpack.c.l.b16 %v4871
        %v5264 = vunpack.c.l.b16 %v4872
        %v5265 = vunpack.c.l.b16 %v4873
        %v5266 = vunpack.c.l.b16 %v4874
        %v5267 = vunpack.c.l.b16 %v4875
        %v5268 = vunpack.c.l.b16 %v4876
        %v5269 = vunpack.c.l.b16 %v4877
        %v5270 = vunpack.c.l.b16 %v4878
        %v5271 = vunpack.c.l.b16 %v4879
        %v5272 = vunpack.c.l.b16 %v4880
        %v5273 = vunpack.c.l.b16 %v4881
        %v5274 = vunpack.c.l.b16 %v4882
        %v5275 = vunpack.c.l.b16 %v4883
        %v5276 = vunpack.c.l.b16 %v4884
        %v5277 = vunpack.c.l.b16 %v4885
        %v5278 = vunpack.c.l.b16 %v4886
        %v5279 = vunpack.c.l.b16 %v4887
        %v5280 = vunpack.c.l.b16 %v4888
        %v5281 = vunpack.c.l.b16 %v4889
        %v5282 = vunpack.c.l.b16 %v4890
        %v5283 = vunpack.c.l.b16 %v4891
        %v5284 = vunpack.c.l.b16 %v4892
        %v5285 = vunpack.c.l.b16 %v4893
        %v5286 = vunpack.c.l.b16 %v4894
        %v5287 = vunpack.c.l.b16 %v4895
        %v5288 = vunpack.c.l.b16 %v4896
        %v5289 = vunpack.c.l.b16 %v4897
        %v5290 = vunpack.c.l.b16 %v4898
        %v5291 = vunpack.c.l.b16 %v4899
        %v5292 = vunpack.c.l.b16 %v4900
        %v5293 = vunpack.c.l.b16 %v4901
        %v5294 = vunpack.c.l.b16 %v4902
        %v5295 = vunpack.c.l.b16 %v4903
        %v5296 = vunpack.c.l.b16 %v4904
        %v5297 = vunpack.c.l.b16 %v4905
        %v5298 = vunpack.c.l.b16 %v4906
        %v5299 = vunpack.c.l.b16 %v4907
        %v5300 = vunpack.c.l.b16 %v4908
        %v5301 = vunpack.c.l.b16 %v4909
        %v5302 = vunpack.c.l.b16 %v4910
        %v5303 = vunpack.c.l.b16 %v4911
        %v5304 = vunpack.c.l.b16 %v4912
        %v5305 = vunpack.c.l.b16 %v4913
        %v5306 = vunpack.c.l.b16 %v4914
        %v5307 = vunpack.c.l.b16 %v4915
        %v5308 = vunpack.c.l.b16 %v4916
        %v5309 = vunpack.c.l.b16 %v4917
        %v5310 = vunpack.c.l.b16 %v4918
        %v5311 = vunpack.c.l.b16 %v4919
        %v5312 = vunpack.c.l.b16 %v4920
        %v5313 = vunpack.c.l.b16 %v4921
        %v5314 = vunpack.c.l.b16 %v4922
        %v5315 = vunpack.c.l.b16 %v4923
        %v5316 = vunpack.c.l.b16 %v4924
        %v5317 = vunpack.c.l.b16 %v4925
        %v5318 = vunpack.c.l.b16 %v4926
        %v5319 = vunpack.c.l.b16 %v4927
        %v5320 = vunpack.c.l.b16 %v4928
        %v5321 = vunpack.c.l.b16 %v4929
        %v5322 = vunpack.c.l.b16 %v4930
        %v5323 = vunpack.c.l.b16 %v4931
        %v5324 = vunpack.c.l.b16 %v4932
        %v5325 = vunpack.c.l.b16 %v4933
        %v5326 = vunpack.c.l.b16 %v4934
        %v5327 = vunpack.c.l.b16 %v4935
        %v5328 = vunpack.c.l.b16 %v4936
        %v5329 = vunpack.c.l.b16 %v4937
        %v5330 = vunpack.c.l.b16 %v4938
        %v5331 = vunpack.c.l.b16 %v4939
        %v5332 = vunpack.c.l.b16 %v4940
        %v5333 = vunpack.c.l.b16 %v4941
        %v5334 = vunpack.c.l.b16 %v4942
        %v5335 = vunpack.c.l.b16 %v4943
        %v5336 = vunpack.c.l.b16 %v4944
        %v5337 = vunpack.c.l.b16 %v4945
        %v5338 = vunpack.c.l.b16 %v4946
        %v5339 = vunpack.c.l.b16 %v4947
        %v5340 = vunpack.c.l.b16 %v4948
        %v5341 = vunpack.c.l.b16 %v4949
        %v5342 = vunpack.c.l.b16 %v4950
        %v5343 = vunpack.c.l.b16 %v4951
        %v5344 = vunpack.c.l.b16 %v4952
        %v5345 = vunpack.c.l.b16 %v4953
        %v5346 = vunpack.c.l.b16 %v4954
        %v5347 = vunpack.c.l.b16 %v4955
        %v5348 = vunpack.c.l.b16 %v4956
        %v5349 = vunpack.c.l.b16 %v4957
        %v5350 = vunpack.c.l.b16 %v4958
        %v5351 = vunpack.c.l.b16 %v4959
        %v5352 = vunpack.c.l.b16 %v4960
        %v5353 = vunpack.c.l.b16 %v4961
        %v5354 = vunpack.c.l.b16 %v4962
        %v5355 = vunpack.c.l.b16 %v4963
        %v5356 = vunpack.c.l.b16 %v4964
        %v5357 = vunpack.c.l.b16 %v4965
        %v5358 = vunpack.c.l.b16 %v4966
        %v5359 = vunpack.c.l.b16 %v4967
        %v5360 = vunpack.c.l.b16 %v4968
        %v5361 = vunpack.c.l.b16 %v4969
        %v5362 = vunpack.c.l.b16 %v4970
        %v5363 = vunpack.c.l.b16 %v4971
        %v5364 = vunpack.c.l.b16 %v4972
        %v5365 = vunpack.c.l.b16 %v4973
        %v5366 = vunpack.c.l.b16 %v4974
        %v5367 = vunpack.c.l.b16 %v4975
        %v5368 = vunpack.c.l.b16 %v4976
        %v5369 = vunpack.c.l.b16 %v4977
        %v5370 = vunpack.c.l.b16 %v4978
        %v5371 = vunpack.c.l.b16 %v4979
        %v5372 = vunpack.c.l.b16 %v4980
        %v5373 = vunpack.c.l.b16 %v4981
        %v5374 = vunpack.c.l.b16 %v4982
        %v5375 = vunpack.c.l.b16 %v4983
        %v5376 = vunpack.c.l.b16 %v4984
        %v5377 = vunpack.c.l.b16 %v4985
        %v5378 = vunpack.c.l.b16 %v4986
        %v5379 = vunpack.c.l.b16 %v4987
        %v5380 = vunpack.c.l.b16 %v4988
        %v5381 = vunpack.c.l.b16 %v4989
        %v5382 = vunpack.c.l.b16 %v4990
        %v5383 = vunpack.c.l.b16 %v4991
        %v5384 = vunpack.c.l.b16 %v4992
        %v5385 = vunpack.c.l.b16 %v4993
        %v5386 = vunpack.c.l.b16 %v4994
        %v5387 = vunpack.c.l.b16 %v4995
        %v5388 = vunpack.c.l.b16 %v4996
        %v5389 = vunpack.c.l.b16 %v4997
        %v5390 = vunpack.c.l.b16 %v4998
        %v5391 = vunpack.c.l.b16 %v4999
        %v5392 = vunpack.c.l.b16 %v5000
        %v5393 = vunpack.c.l.b16 %v5001
        %v5394 = vunpack.c.l.b16 %v5002
        %v5395 = vunpack.c.l.b16 %v5003
        %v5396 = vunpack.c.l.b16 %v5004
        %v5397 = vunpack.c.l.b16 %v5005
        %v5398 = vunpack.c.l.b16 %v5006
        %v5399 = vunpack.c.l.b16 %v5007
        %v5400 = vunpack.c.l.b16 %v5008
        %v5401 = vunpack.c.l.b16 %v5009
        %v5402 = vunpack.c.l.b16 %v5010
        %v5403 = vunpack.c.l.b16 %v5011
        %v5404 = vunpack.c.l.b16 %v5012
        %v5405 = vunpack.c.l.b16 %v5013
        %v5406 = vunpack.c.l.b16 %v5014
        %v5407 = vunpack.c.l.b16 %v5015
        %v5408 = vunpack.c.l.b16 %v5016
        %v5409 = vunpack.c.l.b16 %v5017
        %v5410 = vunpack.c.l.b16 %v5018
        %v5411 = vunpack.c.l.b16 %v5019
        %v5412 = vunpack.c.l.b16 %v5020
        %v5413 = vunpack.c.l.b16 %v5021
        %v5414 = vunpack.c.l.b16 %v5022
        %v5415 = vunpack.c.l.b16 %v5023
        %v5416 = vrot.slane %v5221, 7
        %vm5417 = vcmask 1041409
        %v5418 = vsel %vm5417, %v5416, %v5220
        %v5419 = vrot.slane %v5222, 6
        %vm5420 = vcmask 1042434
        %v5421 = vsel %vm5420, %v5419, %v5418
        %v5422 = vrot.slane %v5223, 5
        %vm5423 = vcmask 1043459
        %v5424 = vsel %vm5423, %v5422, %v5421
        %v5425 = vrot.slane %v5224, 4
        %vm5426 = vcmask 1044484
        %v5427 = vsel %vm5426, %v5425, %v5424
        %v5428 = vrot.slane %v5225, 3
        %vm5429 = vcmask 1045509
        %v5430 = vsel %vm5429, %v5428, %v5427
        %v5431 = vrot.slane %v5226, 2
        %vm5432 = vcmask 1046534
        %v5433 = vsel %vm5432, %v5431, %v5430
        %v5434 = vrot.slane %v5227, 1
        %vm5435 = vcmask 1047559
        %v5436 = vsel %vm5435, %v5434, %v5433
        %v5437 = vrot.slane %v5229, 7
        %v5438 = vsel %vm5417, %v5437, %v5228
        %v5439 = vrot.slane %v5230, 6
        %v5440 = vsel %vm5420, %v5439, %v5438
        %v5441 = vrot.slane %v5231, 5
        %v5442 = vsel %vm5423, %v5441, %v5440
        %v5443 = vrot.slane %v5232, 4
        %v5444 = vsel %vm5426, %v5443, %v5442
        %v5445 = vrot.slane %v5233, 3
        %v5446 = vsel %vm5429, %v5445, %v5444
        %v5447 = vrot.slane %v5234, 2
        %v5448 = vsel %vm5432, %v5447, %v5446
        %v5449 = vrot.slane %v5235, 1
        %v5450 = vsel %vm5435, %v5449, %v5448
        %v5451 = vrot.slane %v5237, 7
        %v5452 = vsel %vm5417, %v5451, %v5236
        %v5453 = vrot.slane %v5238, 6
        %v5454 = vsel %vm5420, %v5453, %v5452
        %v5455 = vrot.slane %v5239, 5
        %v5456 = vsel %vm5423, %v5455, %v5454
        %v5457 = vrot.slane %v5240, 4
        %v5458 = vsel %vm5426, %v5457, %v5456
        %v5459 = vrot.slane %v5241, 3
        %v5460 = vsel %vm5429, %v5459, %v5458
        %v5461 = vrot.slane %v5242, 2
        %v5462 = vsel %vm5432, %v5461, %v5460
        %v5463 = vrot.slane %v5243, 1
        %v5464 = vsel %vm5435, %v5463, %v5462
        %v5465 = vrot.slane %v5245, 7
        %v5466 = vsel %vm5417, %v5465, %v5244
        %v5467 = vrot.slane %v5246, 6
        %v5468 = vsel %vm5420, %v5467, %v5466
        %v5469 = vrot.slane %v5247, 5
        %v5470 = vsel %vm5423, %v5469, %v5468
        %v5471 = vrot.slane %v5248, 4
        %v5472 = vsel %vm5426, %v5471, %v5470
        %v5473 = vrot.slane %v5249, 3
        %v5474 = vsel %vm5429, %v5473, %v5472
        %v5475 = vrot.slane %v5250, 2
        %v5476 = vsel %vm5432, %v5475, %v5474
        %v5477 = vrot.slane %v5251, 1
        %v5478 = vsel %vm5435, %v5477, %v5476
        %v5479 = vrot.slane %v5253, 7
        %v5480 = vsel %vm5417, %v5479, %v5252
        %v5481 = vrot.slane %v5254, 6
        %v5482 = vsel %vm5420, %v5481, %v5480
        %v5483 = vrot.slane %v5255, 5
        %v5484 = vsel %vm5423, %v5483, %v5482
        %v5485 = vrot.slane %v5256, 4
        %v5486 = vsel %vm5426, %v5485, %v5484
        %v5487 = vrot.slane %v5257, 3
        %v5488 = vsel %vm5429, %v5487, %v5486
        %v5489 = vrot.slane %v5258, 2
        %v5490 = vsel %vm5432, %v5489, %v5488
        %v5491 = vrot.slane %v5259, 1
        %v5492 = vsel %vm5435, %v5491, %v5490
        %v5493 = vrot.slane %v5261, 7
        %v5494 = vsel %vm5417, %v5493, %v5260
        %v5495 = vrot.slane %v5262, 6
        %v5496 = vsel %vm5420, %v5495, %v5494
        %v5497 = vrot.slane %v5263, 5
        %v5498 = vsel %vm5423, %v5497, %v5496
        %v5499 = vrot.slane %v5264, 4
        %v5500 = vsel %vm5426, %v5499, %v5498
        %v5501 = vrot.slane %v5265, 3
        %v5502 = vsel %vm5429, %v5501, %v5500
        %v5503 = vrot.slane %v5266, 2
        %v5504 = vsel %vm5432, %v5503, %v5502
        %v5505 = vrot.slane %v5267, 1
        %v5506 = vsel %vm5435, %v5505, %v5504
        %v5507 = vrot.slane %v5269, 7
        %v5508 = vsel %vm5417, %v5507, %v5268
        %v5509 = vrot.slane %v5270, 6
        %v5510 = vsel %vm5420, %v5509, %v5508
        %v5511 = vrot.slane %v5271, 5
        %v5512 = vsel %vm5423, %v5511, %v5510
        %v5513 = vrot.slane %v5272, 4
        %v5514 = vsel %vm5426, %v5513, %v5512
        %v5515 = vrot.slane %v5273, 3
        %v5516 = vsel %vm5429, %v5515, %v5514
        %v5517 = vrot.slane %v5274, 2
        %v5518 = vsel %vm5432, %v5517, %v5516
        %v5519 = vrot.slane %v5275, 1
        %v5520 = vsel %vm5435, %v5519, %v5518
        %v5521 = vrot.slane %v5277, 7
        %v5522 = vsel %vm5417, %v5521, %v5276
        %v5523 = vrot.slane %v5278, 6
        %v5524 = vsel %vm5420, %v5523, %v5522
        %v5525 = vrot.slane %v5279, 5
        %v5526 = vsel %vm5423, %v5525, %v5524
        %v5527 = vrot.slane %v5280, 4
        %v5528 = vsel %vm5426, %v5527, %v5526
        %v5529 = vrot.slane %v5281, 3
        %v5530 = vsel %vm5429, %v5529, %v5528
        %v5531 = vrot.slane %v5282, 2
        %v5532 = vsel %vm5432, %v5531, %v5530
        %v5533 = vrot.slane %v5283, 1
        %v5534 = vsel %vm5435, %v5533, %v5532
        %v5535 = vrot.slane %v5285, 7
        %v5536 = vsel %vm5417, %v5535, %v5284
        %v5537 = vrot.slane %v5286, 6
        %v5538 = vsel %vm5420, %v5537, %v5536
        %v5539 = vrot.slane %v5287, 5
        %v5540 = vsel %vm5423, %v5539, %v5538
        %v5541 = vrot.slane %v5288, 4
        %v5542 = vsel %vm5426, %v5541, %v5540
        %v5543 = vrot.slane %v5289, 3
        %v5544 = vsel %vm5429, %v5543, %v5542
        %v5545 = vrot.slane %v5290, 2
        %v5546 = vsel %vm5432, %v5545, %v5544
        %v5547 = vrot.slane %v5291, 1
        %v5548 = vsel %vm5435, %v5547, %v5546
        %v5549 = vrot.slane %v5293, 7
        %v5550 = vsel %vm5417, %v5549, %v5292
        %v5551 = vrot.slane %v5294, 6
        %v5552 = vsel %vm5420, %v5551, %v5550
        %v5553 = vrot.slane %v5295, 5
        %v5554 = vsel %vm5423, %v5553, %v5552
        %v5555 = vrot.slane %v5296, 4
        %v5556 = vsel %vm5426, %v5555, %v5554
        %v5557 = vrot.slane %v5297, 3
        %v5558 = vsel %vm5429, %v5557, %v5556
        %v5559 = vrot.slane %v5298, 2
        %v5560 = vsel %vm5432, %v5559, %v5558
        %v5561 = vrot.slane %v5299, 1
        %v5562 = vsel %vm5435, %v5561, %v5560
        %v5563 = vrot.slane %v5301, 7
        %v5564 = vsel %vm5417, %v5563, %v5300
        %v5565 = vrot.slane %v5302, 6
        %v5566 = vsel %vm5420, %v5565, %v5564
        %v5567 = vrot.slane %v5303, 5
        %v5568 = vsel %vm5423, %v5567, %v5566
        %v5569 = vrot.slane %v5304, 4
        %v5570 = vsel %vm5426, %v5569, %v5568
        %v5571 = vrot.slane %v5305, 3
        %v5572 = vsel %vm5429, %v5571, %v5570
        %v5573 = vrot.slane %v5306, 2
        %v5574 = vsel %vm5432, %v5573, %v5572
        %v5575 = vrot.slane %v5307, 1
        %v5576 = vsel %vm5435, %v5575, %v5574
        %v5577 = vrot.slane %v5309, 7
        %v5578 = vsel %vm5417, %v5577, %v5308
        %v5579 = vrot.slane %v5310, 6
        %v5580 = vsel %vm5420, %v5579, %v5578
        %v5581 = vrot.slane %v5311, 5
        %v5582 = vsel %vm5423, %v5581, %v5580
        %v5583 = vrot.slane %v5312, 4
        %v5584 = vsel %vm5426, %v5583, %v5582
        %v5585 = vrot.slane %v5313, 3
        %v5586 = vsel %vm5429, %v5585, %v5584
        %v5587 = vrot.slane %v5314, 2
        %v5588 = vsel %vm5432, %v5587, %v5586
        %v5589 = vrot.slane %v5315, 1
        %v5590 = vsel %vm5435, %v5589, %v5588
        %v5591 = vrot.slane %v5317, 7
        %v5592 = vsel %vm5417, %v5591, %v5316
        %v5593 = vrot.slane %v5318, 6
        %v5594 = vsel %vm5420, %v5593, %v5592
        %v5595 = vrot.slane %v5319, 5
        %v5596 = vsel %vm5423, %v5595, %v5594
        %v5597 = vrot.slane %v5320, 4
        %v5598 = vsel %vm5426, %v5597, %v5596
        %v5599 = vrot.slane %v5321, 3
        %v5600 = vsel %vm5429, %v5599, %v5598
        %v5601 = vrot.slane %v5322, 2
        %v5602 = vsel %vm5432, %v5601, %v5600
        %v5603 = vrot.slane %v5323, 1
        %v5604 = vsel %vm5435, %v5603, %v5602
        %v5605 = vrot.slane %v5325, 7
        %v5606 = vsel %vm5417, %v5605, %v5324
        %v5607 = vrot.slane %v5326, 6
        %v5608 = vsel %vm5420, %v5607, %v5606
        %v5609 = vrot.slane %v5327, 5
        %v5610 = vsel %vm5423, %v5609, %v5608
        %v5611 = vrot.slane %v5328, 4
        %v5612 = vsel %vm5426, %v5611, %v5610
        %v5613 = vrot.slane %v5329, 3
        %v5614 = vsel %vm5429, %v5613, %v5612
        %v5615 = vrot.slane %v5330, 2
        %v5616 = vsel %vm5432, %v5615, %v5614
        %v5617 = vrot.slane %v5331, 1
        %v5618 = vsel %vm5435, %v5617, %v5616
        %v5619 = vrot.slane %v5333, 7
        %v5620 = vsel %vm5417, %v5619, %v5332
        %v5621 = vrot.slane %v5334, 6
        %v5622 = vsel %vm5420, %v5621, %v5620
        %v5623 = vrot.slane %v5335, 5
        %v5624 = vsel %vm5423, %v5623, %v5622
        %v5625 = vrot.slane %v5336, 4
        %v5626 = vsel %vm5426, %v5625, %v5624
        %v5627 = vrot.slane %v5337, 3
        %v5628 = vsel %vm5429, %v5627, %v5626
        %v5629 = vrot.slane %v5338, 2
        %v5630 = vsel %vm5432, %v5629, %v5628
        %v5631 = vrot.slane %v5339, 1
        %v5632 = vsel %vm5435, %v5631, %v5630
        %v5633 = vrot.slane %v5341, 7
        %v5634 = vsel %vm5417, %v5633, %v5340
        %v5635 = vrot.slane %v5342, 6
        %v5636 = vsel %vm5420, %v5635, %v5634
        %v5637 = vrot.slane %v5343, 5
        %v5638 = vsel %vm5423, %v5637, %v5636
        %v5639 = vrot.slane %v5344, 4
        %v5640 = vsel %vm5426, %v5639, %v5638
        %v5641 = vrot.slane %v5345, 3
        %v5642 = vsel %vm5429, %v5641, %v5640
        %v5643 = vrot.slane %v5346, 2
        %v5644 = vsel %vm5432, %v5643, %v5642
        %v5645 = vrot.slane %v5347, 1
        %v5646 = vsel %vm5435, %v5645, %v5644
        %v5647 = vrot.slane %v5349, 7
        %v5648 = vsel %vm5417, %v5647, %v5348
        %v5649 = vrot.slane %v5350, 6
        %v5650 = vsel %vm5420, %v5649, %v5648
        %v5651 = vrot.slane %v5351, 5
        %v5652 = vsel %vm5423, %v5651, %v5650
        %v5653 = vrot.slane %v5352, 4
        %v5654 = vsel %vm5426, %v5653, %v5652
        %v5655 = vrot.slane %v5353, 3
        %v5656 = vsel %vm5429, %v5655, %v5654
        %v5657 = vrot.slane %v5354, 2
        %v5658 = vsel %vm5432, %v5657, %v5656
        %v5659 = vrot.slane %v5355, 1
        %v5660 = vsel %vm5435, %v5659, %v5658
        %v5661 = vrot.slane %v5357, 7
        %v5662 = vsel %vm5417, %v5661, %v5356
        %v5663 = vrot.slane %v5358, 6
        %v5664 = vsel %vm5420, %v5663, %v5662
        %v5665 = vrot.slane %v5359, 5
        %v5666 = vsel %vm5423, %v5665, %v5664
        %v5667 = vrot.slane %v5360, 4
        %v5668 = vsel %vm5426, %v5667, %v5666
        %v5669 = vrot.slane %v5361, 3
        %v5670 = vsel %vm5429, %v5669, %v5668
        %v5671 = vrot.slane %v5362, 2
        %v5672 = vsel %vm5432, %v5671, %v5670
        %v5673 = vrot.slane %v5363, 1
        %v5674 = vsel %vm5435, %v5673, %v5672
        %v5675 = vrot.slane %v5365, 7
        %v5676 = vsel %vm5417, %v5675, %v5364
        %v5677 = vrot.slane %v5366, 6
        %v5678 = vsel %vm5420, %v5677, %v5676
        %v5679 = vrot.slane %v5367, 5
        %v5680 = vsel %vm5423, %v5679, %v5678
        %v5681 = vrot.slane %v5368, 4
        %v5682 = vsel %vm5426, %v5681, %v5680
        %v5683 = vrot.slane %v5369, 3
        %v5684 = vsel %vm5429, %v5683, %v5682
        %v5685 = vrot.slane %v5370, 2
        %v5686 = vsel %vm5432, %v5685, %v5684
        %v5687 = vrot.slane %v5371, 1
        %v5688 = vsel %vm5435, %v5687, %v5686
        %v5689 = vrot.slane %v5373, 7
        %v5690 = vsel %vm5417, %v5689, %v5372
        %v5691 = vrot.slane %v5374, 6
        %v5692 = vsel %vm5420, %v5691, %v5690
        %v5693 = vrot.slane %v5375, 5
        %v5694 = vsel %vm5423, %v5693, %v5692
        %v5695 = vrot.slane %v5376, 4
        %v5696 = vsel %vm5426, %v5695, %v5694
        %v5697 = vrot.slane %v5377, 3
        %v5698 = vsel %vm5429, %v5697, %v5696
        %v5699 = vrot.slane %v5378, 2
        %v5700 = vsel %vm5432, %v5699, %v5698
        %v5701 = vrot.slane %v5379, 1
        %v5702 = vsel %vm5435, %v5701, %v5700
        %v5703 = vrot.slane %v5381, 7
        %v5704 = vsel %vm5417, %v5703, %v5380
        %v5705 = vrot.slane %v5382, 6
        %v5706 = vsel %vm5420, %v5705, %v5704
        %v5707 = vrot.slane %v5383, 5
        %v5708 = vsel %vm5423, %v5707, %v5706
        %v5709 = vrot.slane %v5384, 4
        %v5710 = vsel %vm5426, %v5709, %v5708
        %v5711 = vrot.slane %v5385, 3
        %v5712 = vsel %vm5429, %v5711, %v5710
        %v5713 = vrot.slane %v5386, 2
        %v5714 = vsel %vm5432, %v5713, %v5712
        %v5715 = vrot.slane %v5387, 1
        %v5716 = vsel %vm5435, %v5715, %v5714
        %v5717 = vrot.slane %v5389, 7
        %v5718 = vsel %vm5417, %v5717, %v5388
        %v5719 = vrot.slane %v5390, 6
        %v5720 = vsel %vm5420, %v5719, %v5718
        %v5721 = vrot.slane %v5391, 5
        %v5722 = vsel %vm5423, %v5721, %v5720
        %v5723 = vrot.slane %v5392, 4
        %v5724 = vsel %vm5426, %v5723, %v5722
        %v5725 = vrot.slane %v5393, 3
        %v5726 = vsel %vm5429, %v5725, %v5724
        %v5727 = vrot.slane %v5394, 2
        %v5728 = vsel %vm5432, %v5727, %v5726
        %v5729 = vrot.slane %v5395, 1
        %v5730 = vsel %vm5435, %v5729, %v5728
        %v5731 = vrot.slane %v5397, 7
        %v5732 = vsel %vm5417, %v5731, %v5396
        %v5733 = vrot.slane %v5398, 6
        %v5734 = vsel %vm5420, %v5733, %v5732
        %v5735 = vrot.slane %v5399, 5
        %v5736 = vsel %vm5423, %v5735, %v5734
        %v5737 = vrot.slane %v5400, 4
        %v5738 = vsel %vm5426, %v5737, %v5736
        %v5739 = vrot.slane %v5401, 3
        %v5740 = vsel %vm5429, %v5739, %v5738
        %v5741 = vrot.slane %v5402, 2
        %v5742 = vsel %vm5432, %v5741, %v5740
        %v5743 = vrot.slane %v5403, 1
        %v5744 = vsel %vm5435, %v5743, %v5742
        %v5745 = vrot.slane %v5405, 7
        %v5746 = vsel %vm5417, %v5745, %v5404
        %v5747 = vrot.slane %v5406, 6
        %v5748 = vsel %vm5420, %v5747, %v5746
        %v5749 = vrot.slane %v5407, 5
        %v5750 = vsel %vm5423, %v5749, %v5748
        %v5751 = vrot.slane %v5408, 4
        %v5752 = vsel %vm5426, %v5751, %v5750
        %v5753 = vrot.slane %v5409, 3
        %v5754 = vsel %vm5429, %v5753, %v5752
        %v5755 = vrot.slane %v5410, 2
        %v5756 = vsel %vm5432, %v5755, %v5754
        %v5757 = vrot.slane %v5411, 1
        %v5758 = vsel %vm5435, %v5757, %v5756
        %v5759 = vrot.slane %v5413, 7
        %v5760 = vsel %vm5417, %v5759, %v5412
        %v5761 = vrot.slane %v5414, 6
        %v5762 = vsel %vm5420, %v5761, %v5760
        %v5763 = vrot.slane %v5415, 5
        %v5764 = vsel %vm5423, %v5763, %v5762
        %v5765 = vpack.c.b16 %v5450, %v5436
        %v5766 = vpack.c.b16 %v5478, %v5464
        %v5767 = vpack.c.b16 %v5506, %v5492
        %v5768 = vpack.c.b16 %v5534, %v5520
        %v5769 = vpack.c.b16 %v5562, %v5548
        %v5770 = vpack.c.b16 %v5590, %v5576
        %v5771 = vpack.c.b16 %v5618, %v5604
        %v5772 = vpack.c.b16 %v5646, %v5632
        %v5773 = vpack.c.b16 %v5674, %v5660
        %v5774 = vpack.c.b16 %v5702, %v5688
        %v5775 = vpack.c.b16 %v5730, %v5716
        %v5776 = vpack.c.b16 %v5758, %v5744
        %v5777 = vpack.c.b16 %v5764, %v5764
        %vm5778 = vcmask 1041408
        %v5781 = vsel %vm5778, %v5777, 0
        %v5782 = vld [vmem:[%s3] sm:$0xf]
        %v5783 = vld [vmem:[%s3 + $0x4] sm:$0xf]
        %v5784 = vld [vmem:[%s3 + $0x8] sm:$0xf]
        %v5785 = vld [vmem:[%s3 + $0xc] sm:$0xf]
        %v5786 = vld [vmem:[%s3 + $0x10] sm:$0xf]
        %v5787 = vld [vmem:[%s3 + $0x14] sm:$0xf]
        %v5788 = vld [vmem:[%s3 + $0x18] sm:$0xf]
        %v5789 = vld [vmem:[%s3 + $0x1c] sm:$0xf]
        %v5790 = vld [vmem:[%s3 + $0x20] sm:$0xf]
        %v5791 = vld [vmem:[%s3 + $0x24] sm:$0xf]
        %v5792 = vld [vmem:[%s3 + $0x28] sm:$0xf]
        %v5793 = vld [vmem:[%s3 + $0x2c] sm:$0xf]
        %v5794 = vld [vmem:[%s3 + $0x30] sm:$0xf]
        %v5795 = vld [vmem:[%s3 + $0x34] sm:$0xf]
        %v5796 = vld [vmem:[%s3 + $0x38] sm:$0xf]
        %v5797 = vld [vmem:[%s3 + $0x3c] sm:$0xf]
        %v5798 = vld [vmem:[%s3 + $0x40] sm:$0xf]
        %v5799 = vld [vmem:[%s3 + $0x44] sm:$0xf]
        %v5800 = vld [vmem:[%s3 + $0x48] sm:$0xf]
        %v5801 = vld [vmem:[%s3 + $0x4c] sm:$0xf]
        %v5802 = vld [vmem:[%s3 + $0x50] sm:$0xf]
        %v5803 = vld [vmem:[%s3 + $0x54] sm:$0xf]
        %v5804 = vld [vmem:[%s3 + $0x58] sm:$0x3]
        %v5805 = vld [vmem:[%s4] sm:$0x1]
        %vm5806 = vsmask.f32 7424
        %v5808 = vshrl.u32 %v5765, 16
        %v5810 = vshll.u32 %v5765, 16
        %v5812 = vrot.slane %v5810, 1
        %v5813 = vor.u32 %v5808, %v5812
        %v5815 = vshll.u32 %v5766, 16
        %v5817 = vrot.slane %v5815, 1
        %v5818 = vsel %vm5806, %v5813, %v5817
        %v5819 = vshrl.u32 %v5766, 16
        %v5821 = vor.u32 %v5819, %v5817
        %v5823 = vshll.u32 %v5767, 16
        %v5825 = vrot.slane %v5823, 1
        %v5826 = vsel %vm5806, %v5821, %v5825
        %v5827 = vshrl.u32 %v5767, 16
        %v5829 = vor.u32 %v5827, %v5825
        %v5831 = vshll.u32 %v5768, 16
        %v5833 = vrot.slane %v5831, 1
        %v5834 = vsel %vm5806, %v5829, %v5833
        %v5835 = vshrl.u32 %v5768, 16
        %v5837 = vor.u32 %v5835, %v5833
        %v5839 = vshll.u32 %v5769, 16
        %v5841 = vrot.slane %v5839, 1
        %v5842 = vsel %vm5806, %v5837, %v5841
        %v5843 = vshrl.u32 %v5769, 16
        %v5845 = vor.u32 %v5843, %v5841
        %v5847 = vshll.u32 %v5770, 16
        %v5849 = vrot.slane %v5847, 1
        %v5850 = vsel %vm5806, %v5845, %v5849
        %v5851 = vshrl.u32 %v5770, 16
        %v5853 = vor.u32 %v5851, %v5849
        %v5855 = vshll.u32 %v5771, 16
        %v5857 = vrot.slane %v5855, 1
        %v5858 = vsel %vm5806, %v5853, %v5857
        %v5859 = vshrl.u32 %v5771, 16
        %v5861 = vor.u32 %v5859, %v5857
        %v5863 = vshll.u32 %v5772, 16
        %v5865 = vrot.slane %v5863, 1
        %v5866 = vsel %vm5806, %v5861, %v5865
        %v5867 = vshrl.u32 %v5772, 16
        %v5869 = vor.u32 %v5867, %v5865
        %v5871 = vshll.u32 %v5773, 16
        %v5873 = vrot.slane %v5871, 1
        %v5874 = vsel %vm5806, %v5869, %v5873
        %v5875 = vshrl.u32 %v5773, 16
        %v5877 = vor.u32 %v5875, %v5873
        %v5879 = vshll.u32 %v5774, 16
        %v5881 = vrot.slane %v5879, 1
        %v5882 = vsel %vm5806, %v5877, %v5881
        %v5883 = vshrl.u32 %v5774, 16
        %v5885 = vor.u32 %v5883, %v5881
        %v5887 = vshll.u32 %v5775, 16
        %v5889 = vrot.slane %v5887, 1
        %v5890 = vsel %vm5806, %v5885, %v5889
        %v5891 = vshrl.u32 %v5775, 16
        %v5893 = vor.u32 %v5891, %v5889
        %5894 = vrot.lane.b32.xlu0 %v5818, 20
        %v5895 = vpop.permute.xlu0 %5894
        %5896 = vrot.lane.b32.xlu0 %v5826, 20
        %v5897 = vpop.permute.xlu0 %5896
        %5898 = vrot.lane.b32.xlu0 %v5834, 20
        %v5899 = vpop.permute.xlu0 %5898
        %5900 = vrot.lane.b32.xlu0 %v5842, 20
        %v5901 = vpop.permute.xlu0 %5900
        %5902 = vrot.lane.b32.xlu0 %v5850, 20
        %v5903 = vpop.permute.xlu0 %5902
        %5904 = vrot.lane.b32.xlu0 %v5858, 20
        %v5905 = vpop.permute.xlu0 %5904
        %5906 = vrot.lane.b32.xlu0 %v5866, 20
        %v5907 = vpop.permute.xlu0 %5906
        %5908 = vrot.lane.b32.xlu0 %v5874, 20
        %v5909 = vpop.permute.xlu0 %5908
        %5910 = vrot.lane.b32.xlu0 %v5882, 20
        %v5911 = vpop.permute.xlu0 %5910
        %5912 = vrot.lane.b32.xlu0 %v5890, 20
        %v5913 = vpop.permute.xlu0 %5912
        %5914 = vrot.lane.b32.xlu0 %v5893, 20
        %v5915 = vpop.permute.xlu0 %5914
        %vm5916 = vcmask 1046528
        %v5917 = vrot.slane %v5765, 1
        %v5918 = vrot.slane %v5766, 1
        %v5919 = vsel %vm5916, %v5917, %v5918
        %v5920 = vrot.slane %v5767, 1
        %v5921 = vsel %vm5916, %v5918, %v5920
        %v5922 = vrot.slane %v5768, 1
        %v5923 = vsel %vm5916, %v5920, %v5922
        %v5924 = vrot.slane %v5769, 1
        %v5925 = vsel %vm5916, %v5922, %v5924
        %v5926 = vrot.slane %v5770, 1
        %v5927 = vsel %vm5916, %v5924, %v5926
        %v5928 = vrot.slane %v5771, 1
        %v5929 = vsel %vm5916, %v5926, %v5928
        %v5930 = vrot.slane %v5772, 1
        %v5931 = vsel %vm5916, %v5928, %v5930
        %v5932 = vrot.slane %v5773, 1
        %v5933 = vsel %vm5916, %v5930, %v5932
        %v5934 = vrot.slane %v5774, 1
        %v5935 = vsel %vm5916, %v5932, %v5934
        %v5936 = vrot.slane %v5775, 1
        %v5937 = vsel %vm5916, %v5934, %v5936
        %5938 = vrot.lane.b32.xlu0 %v5919, 40
        %v5939 = vpop.permute.xlu0 %5938
        %5940 = vrot.lane.b32.xlu0 %v5921, 40
        %v5941 = vpop.permute.xlu0 %5940
        %5942 = vrot.lane.b32.xlu0 %v5923, 40
        %v5943 = vpop.permute.xlu0 %5942
        %5944 = vrot.lane.b32.xlu0 %v5925, 40
        %v5945 = vpop.permute.xlu0 %5944
        %5946 = vrot.lane.b32.xlu0 %v5927, 40
        %v5947 = vpop.permute.xlu0 %5946
        %5948 = vrot.lane.b32.xlu0 %v5929, 40
        %v5949 = vpop.permute.xlu0 %5948
        %5950 = vrot.lane.b32.xlu0 %v5931, 40
        %v5951 = vpop.permute.xlu0 %5950
        %5952 = vrot.lane.b32.xlu0 %v5933, 40
        %v5953 = vpop.permute.xlu0 %5952
        %5954 = vrot.lane.b32.xlu0 %v5935, 40
        %v5955 = vpop.permute.xlu0 %5954
        %5956 = vrot.lane.b32.xlu0 %v5937, 40
        %v5957 = vpop.permute.xlu0 %5956
        %5958 = vrot.lane.b32.xlu0 %v5936, 40
        %v5959 = vpop.permute.xlu0 %5958
        %vm5960 = vcmask 1040384
        %v5961 = vrot.slane %v5765, 7
        %v5962 = vrot.slane %v5766, 7
        %v5963 = vsel %vm5960, %v5961, %v5962
        %v5964 = vrot.slane %v5767, 7
        %v5965 = vsel %vm5960, %v5962, %v5964
        %v5966 = vrot.slane %v5768, 7
        %v5967 = vsel %vm5960, %v5964, %v5966
        %v5968 = vrot.slane %v5769, 7
        %v5969 = vsel %vm5960, %v5966, %v5968
        %v5970 = vrot.slane %v5770, 7
        %v5971 = vsel %vm5960, %v5968, %v5970
        %v5972 = vrot.slane %v5771, 7
        %v5973 = vsel %vm5960, %v5970, %v5972
        %v5974 = vrot.slane %v5772, 7
        %v5975 = vsel %vm5960, %v5972, %v5974
        %v5976 = vrot.slane %v5773, 7
        %v5977 = vsel %vm5960, %v5974, %v5976
        %v5978 = vrot.slane %v5774, 7
        %v5979 = vsel %vm5960, %v5976, %v5978
        %v5980 = vrot.slane %v5775, 7
        %v5981 = vsel %vm5960, %v5978, %v5980
        %v5982 = vrot.slane %v5776, 7
        %v5983 = vsel %vm5960, %v5980, %v5982
        %5984 = vrot.lane.b32.xlu0 %v5963, 60
        %v5985 = vpop.permute.xlu0 %5984
        %5986 = vrot.lane.b32.xlu0 %v5965, 60
        %v5987 = vpop.permute.xlu0 %5986
        %5988 = vrot.lane.b32.xlu0 %v5967, 60
        %v5989 = vpop.permute.xlu0 %5988
        %5990 = vrot.lane.b32.xlu0 %v5969, 60
        %v5991 = vpop.permute.xlu0 %5990
        %5992 = vrot.lane.b32.xlu0 %v5971, 60
        %v5993 = vpop.permute.xlu0 %5992
        %5994 = vrot.lane.b32.xlu0 %v5973, 60
        %v5995 = vpop.permute.xlu0 %5994
        %5996 = vrot.lane.b32.xlu0 %v5975, 60
        %v5997 = vpop.permute.xlu0 %5996
        %5998 = vrot.lane.b32.xlu0 %v5977, 60
        %v5999 = vpop.permute.xlu0 %5998
        %6000 = vrot.lane.b32.xlu0 %v5979, 60
        %v6001 = vpop.permute.xlu0 %6000
        %6002 = vrot.lane.b32.xlu0 %v5981, 60
        %v6003 = vpop.permute.xlu0 %6002
        %6004 = vrot.lane.b32.xlu0 %v5983, 60
        %v6005 = vpop.permute.xlu0 %6004
        %vm6006 = vsmask.f32 256
        %v6007 = vrot.slane %v5808, 7
        %v6008 = vrot.slane %v5819, 7
        %v6009 = vor.u32 %v6008, %v5815
        %v6010 = vsel %vm6006, %v6007, %v6009
        %v6011 = vrot.slane %v5827, 7
        %v6012 = vor.u32 %v6011, %v5823
        %v6013 = vsel %vm6006, %v6008, %v6012
        %v6014 = vrot.slane %v5835, 7
        %v6015 = vor.u32 %v6014, %v5831
        %v6016 = vsel %vm6006, %v6011, %v6015
        %v6017 = vrot.slane %v5843, 7
        %v6018 = vor.u32 %v6017, %v5839
        %v6019 = vsel %vm6006, %v6014, %v6018
        %v6020 = vrot.slane %v5851, 7
        %v6021 = vor.u32 %v6020, %v5847
        %v6022 = vsel %vm6006, %v6017, %v6021
        %v6023 = vrot.slane %v5859, 7
        %v6024 = vor.u32 %v6023, %v5855
        %v6025 = vsel %vm6006, %v6020, %v6024
        %v6026 = vrot.slane %v5867, 7
        %v6027 = vor.u32 %v6026, %v5863
        %v6028 = vsel %vm6006, %v6023, %v6027
        %v6029 = vrot.slane %v5875, 7
        %v6030 = vor.u32 %v6029, %v5871
        %v6031 = vsel %vm6006, %v6026, %v6030
        %v6032 = vrot.slane %v5883, 7
        %v6033 = vor.u32 %v6032, %v5879
        %v6034 = vsel %vm6006, %v6029, %v6033
        %v6035 = vrot.slane %v5891, 7
        %v6036 = vor.u32 %v6035, %v5887
        %v6037 = vsel %vm6006, %v6032, %v6036
        %v6039 = vshrl.u32 %v5776, 16
        %v6041 = vrot.slane %v6039, 7
        %v6042 = vshll.u32 %v5776, 16
        %v6044 = vor.u32 %v6041, %v6042
        %v6045 = vsel %vm6006, %v6035, %v6044
        %6046 = vrot.lane.b32.xlu0 %v6010, 80
        %v6047 = vpop.permute.xlu0 %6046
        %6048 = vrot.lane.b32.xlu0 %v6013, 80
        %v6049 = vpop.permute.xlu0 %6048
        %6050 = vrot.lane.b32.xlu0 %v6016, 80
        %v6051 = vpop.permute.xlu0 %6050
        %6052 = vrot.lane.b32.xlu0 %v6019, 80
        %v6053 = vpop.permute.xlu0 %6052
        %6054 = vrot.lane.b32.xlu0 %v6022, 80
        %v6055 = vpop.permute.xlu0 %6054
        %6056 = vrot.lane.b32.xlu0 %v6025, 80
        %v6057 = vpop.permute.xlu0 %6056
        %6058 = vrot.lane.b32.xlu0 %v6028, 80
        %v6059 = vpop.permute.xlu0 %6058
        %6060 = vrot.lane.b32.xlu0 %v6031, 80
        %v6061 = vpop.permute.xlu0 %6060
        %6062 = vrot.lane.b32.xlu0 %v6034, 80
        %v6063 = vpop.permute.xlu0 %6062
        %6064 = vrot.lane.b32.xlu0 %v6037, 80
        %v6065 = vpop.permute.xlu0 %6064
        %6066 = vrot.lane.b32.xlu0 %v6045, 80
        %v6067 = vpop.permute.xlu0 %6066
        %6068 = vrot.lane.b32.xlu0 %v5766, 100
        %v6069 = vpop.permute.xlu0 %6068
        %6070 = vrot.lane.b32.xlu0 %v5767, 100
        %v6071 = vpop.permute.xlu0 %6070
        %6072 = vrot.lane.b32.xlu0 %v5768, 100
        %v6073 = vpop.permute.xlu0 %6072
        %6074 = vrot.lane.b32.xlu0 %v5769, 100
        %v6075 = vpop.permute.xlu0 %6074
        %6076 = vrot.lane.b32.xlu0 %v5770, 100
        %v6077 = vpop.permute.xlu0 %6076
        %6078 = vrot.lane.b32.xlu0 %v5771, 100
        %v6079 = vpop.permute.xlu0 %6078
        %6080 = vrot.lane.b32.xlu0 %v5772, 100
        %v6081 = vpop.permute.xlu0 %6080
        %6082 = vrot.lane.b32.xlu0 %v5773, 100
        %v6083 = vpop.permute.xlu0 %6082
        %6084 = vrot.lane.b32.xlu0 %v5774, 100
        %v6085 = vpop.permute.xlu0 %6084
        %6086 = vrot.lane.b32.xlu0 %v5775, 100
        %v6087 = vpop.permute.xlu0 %6086
        %6088 = vrot.lane.b32.xlu0 %v5776, 100
        %v6089 = vpop.permute.xlu0 %6088
        %vm6091 = vcmask 1041408
        %v6092 = vrot.slane %v5766, 6
        %v6093 = vrot.slane %v5767, 6
        %v6094 = vsel %vm6091, %v6092, %v6093
        %v6095 = vrot.slane %v5768, 6
        %v6096 = vsel %vm6091, %v6093, %v6095
        %v6097 = vrot.slane %v5769, 6
        %v6098 = vsel %vm6091, %v6095, %v6097
        %v6099 = vrot.slane %v5770, 6
        %v6100 = vsel %vm6091, %v6097, %v6099
        %v6101 = vrot.slane %v5771, 6
        %v6102 = vsel %vm6091, %v6099, %v6101
        %v6103 = vrot.slane %v5772, 6
        %v6104 = vsel %vm6091, %v6101, %v6103
        %v6105 = vrot.slane %v5773, 6
        %v6106 = vsel %vm6091, %v6103, %v6105
        %v6107 = vrot.slane %v5774, 6
        %v6108 = vsel %vm6091, %v6105, %v6107
        %v6109 = vrot.slane %v5775, 6
        %v6110 = vsel %vm6091, %v6107, %v6109
        %v6111 = vrot.slane %v5776, 6
        %v6112 = vsel %vm6091, %v6109, %v6111
        %v6113 = vrot.slane %v5781, 6
        %v6114 = vsel %vm6091, %v6111, %v6113
        %6115 = vrot.lane.b32.xlu0 %v6094, 120
        %v6116 = vpop.permute.xlu0 %6115
        %6117 = vrot.lane.b32.xlu0 %v6096, 120
        %v6118 = vpop.permute.xlu0 %6117
        %6119 = vrot.lane.b32.xlu0 %v6098, 120
        %v6120 = vpop.permute.xlu0 %6119
        %6121 = vrot.lane.b32.xlu0 %v6100, 120
        %v6122 = vpop.permute.xlu0 %6121
        %6123 = vrot.lane.b32.xlu0 %v6102, 120
        %v6124 = vpop.permute.xlu0 %6123
        %6125 = vrot.lane.b32.xlu0 %v6104, 120
        %v6126 = vpop.permute.xlu0 %6125
        %6127 = vrot.lane.b32.xlu0 %v6106, 120
        %v6128 = vpop.permute.xlu0 %6127
        %6129 = vrot.lane.b32.xlu0 %v6108, 120
        %v6130 = vpop.permute.xlu0 %6129
        %6131 = vrot.lane.b32.xlu0 %v6110, 120
        %v6132 = vpop.permute.xlu0 %6131
        %6133 = vrot.lane.b32.xlu0 %v6112, 120
        %v6134 = vpop.permute.xlu0 %6133
        %6135 = vrot.lane.b32.xlu0 %v6114, 120
        %v6136 = vpop.permute.xlu0 %6135
        %vm6137 = vsmask.f32 1280
        %v6138 = vrot.slane %v5819, 6
        %v6139 = vrot.slane %v5815, 7
        %v6140 = vor.u32 %v6138, %v6139
        %v6141 = vrot.slane %v5827, 6
        %v6142 = vrot.slane %v5823, 7
        %v6143 = vor.u32 %v6141, %v6142
        %v6144 = vsel %vm6137, %v6140, %v6143
        %v6145 = vrot.slane %v5835, 6
        %v6146 = vrot.slane %v5831, 7
        %v6147 = vor.u32 %v6145, %v6146
        %v6148 = vsel %vm6137, %v6143, %v6147
        %v6149 = vrot.slane %v5843, 6
        %v6150 = vrot.slane %v5839, 7
        %v6151 = vor.u32 %v6149, %v6150
        %v6152 = vsel %vm6137, %v6147, %v6151
        %v6153 = vrot.slane %v5851, 6
        %v6154 = vrot.slane %v5847, 7
        %v6155 = vor.u32 %v6153, %v6154
        %v6156 = vsel %vm6137, %v6151, %v6155
        %v6157 = vrot.slane %v5859, 6
        %v6158 = vrot.slane %v5855, 7
        %v6159 = vor.u32 %v6157, %v6158
        %v6160 = vsel %vm6137, %v6155, %v6159
        %v6161 = vrot.slane %v5867, 6
        %v6162 = vrot.slane %v5863, 7
        %v6163 = vor.u32 %v6161, %v6162
        %v6164 = vsel %vm6137, %v6159, %v6163
        %v6165 = vrot.slane %v5875, 6
        %v6166 = vrot.slane %v5871, 7
        %v6167 = vor.u32 %v6165, %v6166
        %v6168 = vsel %vm6137, %v6163, %v6167
        %v6169 = vrot.slane %v5883, 6
        %v6170 = vrot.slane %v5879, 7
        %v6171 = vor.u32 %v6169, %v6170
        %v6172 = vsel %vm6137, %v6167, %v6171
        %v6173 = vrot.slane %v5891, 6
        %v6174 = vrot.slane %v5887, 7
        %v6175 = vor.u32 %v6173, %v6174
        %v6176 = vsel %vm6137, %v6171, %v6175
        %v6177 = vrot.slane %v6039, 6
        %v6178 = vrot.slane %v6042, 7
        %v6179 = vor.u32 %v6177, %v6178
        %v6180 = vsel %vm6137, %v6175, %v6179
        %v6181 = vshrl.u32 %v5781, 16
        %v6183 = vrot.slane %v6181, 6
        %v6184 = vshll.u32 %v5781, 16
        %v6186 = vrot.slane %v6184, 7
        %v6187 = vor.u32 %v6183, %v6186
        %v6188 = vsel %vm6137, %v6179, %v6187
        %6189 = vrot.lane.b32.xlu0 %v6144, 12
        %v6190 = vpop.permute.xlu0 %6189
        %6191 = vrot.lane.b32.xlu0 %v6148, 12
        %v6192 = vpop.permute.xlu0 %6191
        %6193 = vrot.lane.b32.xlu0 %v6152, 12
        %v6194 = vpop.permute.xlu0 %6193
        %6195 = vrot.lane.b32.xlu0 %v6156, 12
        %v6196 = vpop.permute.xlu0 %6195
        %6197 = vrot.lane.b32.xlu0 %v6160, 12
        %v6198 = vpop.permute.xlu0 %6197
        %6199 = vrot.lane.b32.xlu0 %v6164, 12
        %v6200 = vpop.permute.xlu0 %6199
        %6201 = vrot.lane.b32.xlu0 %v6168, 12
        %v6202 = vpop.permute.xlu0 %6201
        %6203 = vrot.lane.b32.xlu0 %v6172, 12
        %v6204 = vpop.permute.xlu0 %6203
        %6205 = vrot.lane.b32.xlu0 %v6176, 12
        %v6206 = vpop.permute.xlu0 %6205
        %6207 = vrot.lane.b32.xlu0 %v6180, 12
        %v6208 = vpop.permute.xlu0 %6207
        %6209 = vrot.lane.b32.xlu0 %v6188, 12
        %v6210 = vpop.permute.xlu0 %6209
        %v6211 = vrot.slane %v5781, 7
        %v6212 = vsel %vm5960, %v5982, %v6211
        %6213 = vrot.lane.b32.xlu0 %v5965, 32
        %v6214 = vpop.permute.xlu0 %6213
        %6215 = vrot.lane.b32.xlu0 %v5967, 32
        %v6216 = vpop.permute.xlu0 %6215
        %6217 = vrot.lane.b32.xlu0 %v5969, 32
        %v6218 = vpop.permute.xlu0 %6217
        %6219 = vrot.lane.b32.xlu0 %v5971, 32
        %v6220 = vpop.permute.xlu0 %6219
        %6221 = vrot.lane.b32.xlu0 %v5973, 32
        %v6222 = vpop.permute.xlu0 %6221
        %6223 = vrot.lane.b32.xlu0 %v5975, 32
        %v6224 = vpop.permute.xlu0 %6223
        %6225 = vrot.lane.b32.xlu0 %v5977, 32
        %v6226 = vpop.permute.xlu0 %6225
        %6227 = vrot.lane.b32.xlu0 %v5979, 32
        %v6228 = vpop.permute.xlu0 %6227
        %6229 = vrot.lane.b32.xlu0 %v5981, 32
        %v6230 = vpop.permute.xlu0 %6229
        %6231 = vrot.lane.b32.xlu0 %v5983, 32
        %v6232 = vpop.permute.xlu0 %6231
        %6233 = vrot.lane.b32.xlu0 %v6212, 32
        %v6234 = vpop.permute.xlu0 %6233
        %vm6235 = vcmask 162816
        %v6237 = vsel %vm6235, %v5765, %v5895
        %v6239 = vsel %vm6235, %v5766, %v5897
        %v6241 = vsel %vm6235, %v5767, %v5899
        %v6243 = vsel %vm6235, %v5768, %v5901
        %v6245 = vsel %vm6235, %v5769, %v5903
        %v6247 = vsel %vm6235, %v5770, %v5905
        %v6249 = vsel %vm6235, %v5771, %v5907
        %v6251 = vsel %vm6235, %v5772, %v5909
        %v6253 = vsel %vm6235, %v5773, %v5911
        %v6255 = vsel %vm6235, %v5774, %v5913
        %v6257 = vsel %vm6235, %v5775, %v5915
        %vm6258 = vcmask 326656
        %v6260 = vsel %vm6258, %v6237, %v5939
        %v6262 = vsel %vm6258, %v6239, %v5941
        %v6264 = vsel %vm6258, %v6241, %v5943
        %v6266 = vsel %vm6258, %v6243, %v5945
        %v6268 = vsel %vm6258, %v6245, %v5947
        %v6270 = vsel %vm6258, %v6247, %v5949
        %v6272 = vsel %vm6258, %v6249, %v5951
        %v6274 = vsel %vm6258, %v6251, %v5953
        %v6276 = vsel %vm6258, %v6253, %v5955
        %v6278 = vsel %vm6258, %v6255, %v5957
        %v6280 = vsel %vm6258, %v6257, %v5959
        %v6282 = vsel %vm1741, %v6260, %v5985
        %v6284 = vsel %vm1741, %v6262, %v5987
        %v6286 = vsel %vm1741, %v6264, %v5989
        %v6288 = vsel %vm1741, %v6266, %v5991
        %v6290 = vsel %vm1741, %v6268, %v5993
        %v6292 = vsel %vm1741, %v6270, %v5995
        %v6294 = vsel %vm1741, %v6272, %v5997
        %v6296 = vsel %vm1741, %v6274, %v5999
        %v6298 = vsel %vm1741, %v6276, %v6001
        %v6300 = vsel %vm1741, %v6278, %v6003
        %v6302 = vsel %vm1741, %v6280, %v6005
        %vm6303 = vcmask 654336
        %v6305 = vsel %vm6303, %v6282, %v6047
        %v6307 = vsel %vm6303, %v6284, %v6049
        %v6309 = vsel %vm6303, %v6286, %v6051
        %v6311 = vsel %vm6303, %v6288, %v6053
        %v6313 = vsel %vm6303, %v6290, %v6055
        %v6315 = vsel %vm6303, %v6292, %v6057
        %v6317 = vsel %vm6303, %v6294, %v6059
        %v6319 = vsel %vm6303, %v6296, %v6061
        %v6321 = vsel %vm6303, %v6298, %v6063
        %v6323 = vsel %vm6303, %v6300, %v6065
        %v6325 = vsel %vm6303, %v6302, %v6067
        %vm6326 = vcmask 818176
        %v6328 = vsel %vm6326, %v6305, %v6069
        %v6330 = vsel %vm6326, %v6307, %v6071
        %v6332 = vsel %vm6326, %v6309, %v6073
        %v6334 = vsel %vm6326, %v6311, %v6075
        %v6336 = vsel %vm6326, %v6313, %v6077
        %v6338 = vsel %vm6326, %v6315, %v6079
        %v6340 = vsel %vm6326, %v6317, %v6081
        %v6342 = vsel %vm6326, %v6319, %v6083
        %v6344 = vsel %vm6326, %v6321, %v6085
        %v6346 = vsel %vm6326, %v6323, %v6087
        %v6348 = vsel %vm6326, %v6325, %v6089
        %vm6349 = vcmask 982016
        %v6351 = vsel %vm6349, %v6328, %v6116
        %v6354 = vsel %vm6349, %v6330, %v6118
        %v6357 = vsel %vm6349, %v6332, %v6120
        %v6360 = vsel %vm6349, %v6334, %v6122
        %v6363 = vsel %vm6349, %v6336, %v6124
        %v6366 = vsel %vm6349, %v6338, %v6126
        %v6369 = vsel %vm6349, %v6340, %v6128
        %v6372 = vsel %vm6349, %v6342, %v6130
        %v6375 = vsel %vm6349, %v6344, %v6132
        %v6378 = vsel %vm6349, %v6346, %v6134
        %v6381 = vsel %vm6349, %v6348, %v6136
        %vm6383 = vcmask 97280
        %v6385 = vsel %vm6383, %v6116, %v6190
        %v6387 = vsel %vm6383, %v6118, %v6192
        %v6389 = vsel %vm6383, %v6120, %v6194
        %v6391 = vsel %vm6383, %v6122, %v6196
        %v6393 = vsel %vm6383, %v6124, %v6198
        %v6395 = vsel %vm6383, %v6126, %v6200
        %v6397 = vsel %vm6383, %v6128, %v6202
        %v6399 = vsel %vm6383, %v6130, %v6204
        %v6401 = vsel %vm6383, %v6132, %v6206
        %v6403 = vsel %vm6383, %v6134, %v6208
        %v6405 = vsel %vm6383, %v6136, %v6210
        %vm6406 = vcmask 261120
        %v6408 = vsel %vm6406, %v6385, %v6214
        %v6410 = vsel %vm6406, %v6387, %v6216
        %v6412 = vsel %vm6406, %v6389, %v6218
        %v6414 = vsel %vm6406, %v6391, %v6220
        %v6416 = vsel %vm6406, %v6393, %v6222
        %v6418 = vsel %vm6406, %v6395, %v6224
        %v6420 = vsel %vm6406, %v6397, %v6226
        %v6422 = vsel %vm6406, %v6399, %v6228
        %v6424 = vsel %vm6406, %v6401, %v6230
        %v6426 = vsel %vm6406, %v6403, %v6232
        %v6428 = vsel %vm6406, %v6405, %v6234
        %v6452 = vunpack.c.l.b16 %v5782
        %v6453 = vunpack.c.l.b16 %v5783
        %v6454 = vunpack.c.l.b16 %v5784
        %v6455 = vunpack.c.l.b16 %v5785
        %v6456 = vunpack.c.l.b16 %v5786
        %v6457 = vunpack.c.l.b16 %v5787
        %v6458 = vunpack.c.l.b16 %v5788
        %v6459 = vunpack.c.l.b16 %v5789
        %v6460 = vunpack.c.l.b16 %v5790
        %v6461 = vunpack.c.l.b16 %v5791
        %v6462 = vunpack.c.l.b16 %v5792
        %v6463 = vunpack.c.l.b16 %v5793
        %v6464 = vunpack.c.l.b16 %v5794
        %v6465 = vunpack.c.l.b16 %v5795
        %v6466 = vunpack.c.l.b16 %v5796
        %v6467 = vunpack.c.l.b16 %v5797
        %v6468 = vunpack.c.l.b16 %v5798
        %v6469 = vunpack.c.l.b16 %v5799
        %v6470 = vunpack.c.l.b16 %v5800
        %v6471 = vunpack.c.l.b16 %v5801
        %v6472 = vunpack.c.l.b16 %v5802
        %v6473 = vunpack.c.l.b16 %v5803
        %v6474 = vunpack.c.l.b16 %v5804
        %v6475 = vpack.c.b16 %v6453, %v6452
        %v6476 = vpack.c.b16 %v6455, %v6454
        %v6477 = vpack.c.b16 %v6457, %v6456
        %v6478 = vpack.c.b16 %v6459, %v6458
        %v6479 = vpack.c.b16 %v6461, %v6460
        %v6480 = vpack.c.b16 %v6463, %v6462
        %v6481 = vpack.c.b16 %v6465, %v6464
        %v6482 = vpack.c.b16 %v6467, %v6466
        %v6483 = vpack.c.b16 %v6469, %v6468
        %v6484 = vpack.c.b16 %v6471, %v6470
        %v6485 = vpack.c.b16 %v6473, %v6472
        %v6486 = vpack.c.b16 %v6474, %v6474
        %vm6498 = vcmask 424960
        %v6499 = vsel %vm6498, %v6408, 0
        %v6501 = vsel %vm6498, %v6410, 0
        %v6503 = vsel %vm6498, %v6412, 0
        %v6505 = vsel %vm6498, %v6414, 0
        %v6507 = vsel %vm6498, %v6416, 0
        %v6509 = vsel %vm6498, %v6418, 0
        %v6511 = vsel %vm6498, %v6420, 0
        %v6513 = vsel %vm6498, %v6422, 0
        %v6515 = vsel %vm6498, %v6424, 0
        %v6517 = vsel %vm6498, %v6426, 0
        %v6519 = vsel %vm6498, %v6428, 0
        %v6522 = vsel %vm5778, %v6486, 0
        %6524 = vmatprep.subr.bf16.mxu0 0
        %6525 = vmatpush1.bf16.msra.mxu0 %v6475
        %6526 = vmatprep.subr.bf16.mxu0 0
        %6527 = vmatpush1.bf16.msra.mxu0 %v6476
        %6528 = vmatprep.subr.bf16.mxu0 0
        %6529 = vmatpush1.bf16.msra.mxu0 %v6477
        %6530 = vmatprep.subr.bf16.mxu0 0
        %6531 = vmatpush1.bf16.msra.mxu0 %v6478
        %6532 = vmatprep.subr.bf16.mxu0 0
        %6533 = vmatpush1.bf16.msra.mxu0 %v6479
        %6534 = vmatprep.subr.bf16.mxu0 0
        %6535 = vmatpush1.bf16.msra.mxu0 %v6480
        %6536 = vmatprep.subr.bf16.mxu0 0
        %6537 = vmatpush1.bf16.msra.mxu0 %v6481
        %6538 = vmatprep.subr.bf16.mxu0 0
        %6539 = vmatpush1.bf16.msra.mxu0 %v6482
        %6540 = vmatprep.subr.bf16.mxu0 0
        %6541 = vmatpush1.bf16.msra.mxu0 %v6483
        %6542 = vmatprep.subr.bf16.mxu0 0
        %6543 = vmatpush1.bf16.msra.mxu0 %v6484
        %6544 = vmatprep.subr.bf16.mxu0 0
        %6545 = vmatpush1.bf16.msra.mxu0 %v6485
        %6546 = vmatprep.subr.bf16.mxu0 0
        %6547 = vmatpush1.bf16.msra.mxu0 %v6522
        %6548 = vmatprep.subr.bf16.mxu0 0
        %6549 = vmatpush1.bf16.msra.mxu0 0
        %6550 = vmatprep.subr.bf16.mxu0 0
        %6551 = vmatpush1.bf16.msra.mxu0 0
        %6552 = vmatprep.subr.bf16.mxu0 0
        %6553 = vmatpush1.bf16.msra.mxu0 0
        %6554 = vmatprep.subr.bf16.mxu0 0
        %6555 = vmatpush1.bf16.msra.mxu0 0
        %6556 = vmatprep.mubr.bf16.mxu0 %v6499
        %6557 = vmatmul.mubr.bf16.gmra.mrb[0].mxu0 %v6351
        %v6558 = vpop.f32.mrb[0].mxu0
        %v6559 = vadd.f32 0.0, %v6558
        %v6560 = vpop.f32.mrb[0].mxu0
        %v6561 = vpop.f32.mrb[0].mxu0
        %v6562 = vadd.f32 0.0, %v6561
        %v6563 = vpop.f32.mrb[0].mxu0
        %6564 = vmatprep.mubr.bf16.mxu0 %v6501
        %6565 = vmatmul.mubr.bf16.gmra.mrb[0].mxu0 %v6354
        %v6566 = vpop.f32.mrb[0].mxu0
        %v6567 = vadd.f32 0.0, %v6566
        %v6568 = vpop.f32.mrb[0].mxu0
        %v6569 = vpop.f32.mrb[0].mxu0
        %v6570 = vadd.f32 0.0, %v6569
        %v6571 = vpop.f32.mrb[0].mxu0
        %6572 = vmatprep.mubr.bf16.mxu0 %v6503
        %6573 = vmatmul.mubr.bf16.gmra.mrb[0].mxu0 %v6357
        %v6574 = vpop.f32.mrb[0].mxu0
        %v6575 = vadd.f32 0.0, %v6574
        %v6576 = vpop.f32.mrb[0].mxu0
        %v6577 = vpop.f32.mrb[0].mxu0
        %v6578 = vadd.f32 0.0, %v6577
        %v6579 = vpop.f32.mrb[0].mxu0
        %6580 = vmatprep.mubr.bf16.mxu0 %v6505
        %6581 = vmatmul.mubr.bf16.gmra.mrb[0].mxu0 %v6360
        %v6582 = vpop.f32.mrb[0].mxu0
        %v6583 = vadd.f32 0.0, %v6582
        %v6584 = vpop.f32.mrb[0].mxu0
        %v6585 = vpop.f32.mrb[0].mxu0
        %v6586 = vadd.f32 0.0, %v6585
        %v6587 = vpop.f32.mrb[0].mxu0
        %6588 = vmatprep.mubr.bf16.mxu0 %v6507
        %6589 = vmatmul.mubr.bf16.gmra.mrb[0].mxu0 %v6363
        %v6590 = vpop.f32.mrb[0].mxu0
        %v6591 = vadd.f32 0.0, %v6590
        %v6592 = vpop.f32.mrb[0].mxu0
        %v6593 = vpop.f32.mrb[0].mxu0
        %v6594 = vadd.f32 0.0, %v6593
        %v6595 = vpop.f32.mrb[0].mxu0
        %6596 = vmatprep.mubr.bf16.mxu0 %v6509
        %6597 = vmatmul.mubr.bf16.gmra.mrb[0].mxu0 %v6366
        %v6598 = vpop.f32.mrb[0].mxu0
        %v6599 = vadd.f32 0.0, %v6598
        %v6600 = vpop.f32.mrb[0].mxu0
        %v6601 = vpop.f32.mrb[0].mxu0
        %v6602 = vadd.f32 0.0, %v6601
        %v6603 = vpop.f32.mrb[0].mxu0
        %6604 = vmatprep.mubr.bf16.mxu0 %v6511
        %6605 = vmatmul.mubr.bf16.gmra.mrb[0].mxu0 %v6369
        %v6606 = vpop.f32.mrb[0].mxu0
        %v6607 = vadd.f32 0.0, %v6606
        %v6608 = vpop.f32.mrb[0].mxu0
        %v6609 = vpop.f32.mrb[0].mxu0
        %v6610 = vadd.f32 0.0, %v6609
        %v6611 = vpop.f32.mrb[0].mxu0
        %6612 = vmatprep.mubr.bf16.mxu0 %v6513
        %6613 = vmatmul.mubr.bf16.gmra.mrb[0].mxu0 %v6372
        %v6614 = vpop.f32.mrb[0].mxu0
        %v6615 = vadd.f32 0.0, %v6614
        %v6616 = vpop.f32.mrb[0].mxu0
        %v6617 = vpop.f32.mrb[0].mxu0
        %v6618 = vadd.f32 0.0, %v6617
        %v6619 = vpop.f32.mrb[0].mxu0
        %6620 = vmatprep.mubr.bf16.mxu0 %v6515
        %6621 = vmatmul.mubr.bf16.gmra.mrb[0].mxu0 %v6375
        %v6622 = vpop.f32.mrb[0].mxu0
        %v6623 = vadd.f32 0.0, %v6622
        %v6624 = vpop.f32.mrb[0].mxu0
        %v6625 = vpop.f32.mrb[0].mxu0
        %v6626 = vadd.f32 0.0, %v6625
        %v6627 = vpop.f32.mrb[0].mxu0
        %6628 = vmatprep.mubr.bf16.mxu0 %v6517
        %6629 = vmatmul.mubr.bf16.gmra.mrb[0].mxu0 %v6378
        %v6630 = vpop.f32.mrb[0].mxu0
        %v6631 = vadd.f32 0.0, %v6630
        %v6632 = vpop.f32.mrb[0].mxu0
        %v6633 = vpop.f32.mrb[0].mxu0
        %v6634 = vadd.f32 0.0, %v6633
        %v6635 = vpop.f32.mrb[0].mxu0
        %6636 = vmatprep.mubr.bf16.mxu0 %v6519
        %6637 = vmatmul.mubr.bf16.gmra.mrb[0].mxu0 %v6381
        %v6638 = vpop.f32.mrb[0].mxu0
        %v6639 = vadd.f32 0.0, %v6638
        %v6640 = vpop.f32.mrb[0].mxu0
        %v6641 = vpop.f32.mrb[0].mxu0
        %v6642 = vpop.f32.mrb[0].mxu0
        %6643 = vdwg.mxu0
        %v6665 = vcombine.high %v6559, %v6559
        %v6667 = vunpack.c.l.s4 1983009808
        %v6668 = vunpack.c.0.s8 %v6667
        %v6669 = vlaneseq
        %v6670 = vshrl.u32 %v6669, 7
        %v6671 = vsub.s32 %v6668, %v6670
        %v6672 = vrot.slane %v6559, %v6671
        %v6674 = vunpack.c.l.s4 1983009808
        %v6675 = vunpack.c.0.s8 %v6674
        %v6676 = vlaneseq
        %v6677 = vshrl.u32 %v6676, 7
        %v6678 = vsub.s32 %v6675, %v6677
        %v6679 = vrot.slane %v6665, %v6678
        %v6680 = vcombine.high %v6672, %v6672
        %v6681 = vcombine.high %v6679, %v6679
        %v6682 = vcombine.high %v6562, %v6562
        %v6684 = vunpack.c.l.s4 1983009808
        %v6685 = vunpack.c.0.s8 %v6684
        %v6686 = vlaneseq
        %v6687 = vshrl.u32 %v6686, 7
        %v6688 = vsub.s32 %v6685, %v6687
        %v6689 = vrot.slane %v6562, %v6688
        %v6691 = vunpack.c.l.s4 1983009808
        %v6692 = vunpack.c.0.s8 %v6691
        %v6693 = vlaneseq
        %v6694 = vshrl.u32 %v6693, 7
        %v6695 = vsub.s32 %v6692, %v6694
        %v6696 = vrot.slane %v6682, %v6695
        %v6697 = vcombine.high %v6689, %v6689
        %v6698 = vcombine.high %v6696, %v6696
        %v6699 = vcombine.high %v6567, %v6567
        %v6701 = vunpack.c.l.s4 1983009808
        %v6702 = vunpack.c.0.s8 %v6701
        %v6703 = vlaneseq
        %v6704 = vshrl.u32 %v6703, 7
        %v6705 = vsub.s32 %v6702, %v6704
        %v6706 = vrot.slane %v6567, %v6705
        %v6708 = vunpack.c.l.s4 1983009808
        %v6709 = vunpack.c.0.s8 %v6708
        %v6710 = vlaneseq
        %v6711 = vshrl.u32 %v6710, 7
        %v6712 = vsub.s32 %v6709, %v6711
        %v6713 = vrot.slane %v6699, %v6712
        %v6714 = vcombine.high %v6706, %v6706
        %v6715 = vcombine.high %v6713, %v6713
        %v6716 = vcombine.high %v6570, %v6570
        %v6718 = vunpack.c.l.s4 1983009808
        %v6719 = vunpack.c.0.s8 %v6718
        %v6720 = vlaneseq
        %v6721 = vshrl.u32 %v6720, 7
        %v6722 = vsub.s32 %v6719, %v6721
        %v6723 = vrot.slane %v6570, %v6722
        %v6725 = vunpack.c.l.s4 1983009808
        %v6726 = vunpack.c.0.s8 %v6725
        %v6727 = vlaneseq
        %v6728 = vshrl.u32 %v6727, 7
        %v6729 = vsub.s32 %v6726, %v6728
        %v6730 = vrot.slane %v6716, %v6729
        %v6731 = vcombine.high %v6730, %v6730
        %v6732 = vcombine.high %v6575, %v6575
        %v6734 = vunpack.c.l.s4 1983009808
        %v6735 = vunpack.c.0.s8 %v6734
        %v6736 = vlaneseq
        %v6737 = vshrl.u32 %v6736, 7
        %v6738 = vsub.s32 %v6735, %v6737
        %v6739 = vrot.slane %v6575, %v6738
        %v6741 = vunpack.c.l.s4 1983009808
        %v6742 = vunpack.c.0.s8 %v6741
        %v6743 = vlaneseq
        %v6744 = vshrl.u32 %v6743, 7
        %v6745 = vsub.s32 %v6742, %v6744
        %v6746 = vrot.slane %v6732, %v6745
        %v6747 = vcombine.high %v6739, %v6739
        %v6748 = vcombine.high %v6746, %v6746
        %v6749 = vcombine.high %v6578, %v6578
        %v6751 = vunpack.c.l.s4 1983009808
        %v6752 = vunpack.c.0.s8 %v6751
        %v6753 = vlaneseq
        %v6754 = vshrl.u32 %v6753, 7
        %v6755 = vsub.s32 %v6752, %v6754
        %v6756 = vrot.slane %v6578, %v6755
        %v6758 = vunpack.c.l.s4 1983009808
        %v6759 = vunpack.c.0.s8 %v6758
        %v6760 = vlaneseq
        %v6761 = vshrl.u32 %v6760, 7
        %v6762 = vsub.s32 %v6759, %v6761
        %v6763 = vrot.slane %v6749, %v6762
        %v6764 = vcombine.high %v6756, %v6756
        %v6765 = vcombine.high %v6763, %v6763
        %v6766 = vcombine.high %v6583, %v6583
        %v6768 = vunpack.c.l.s4 1983009808
        %v6769 = vunpack.c.0.s8 %v6768
        %v6770 = vlaneseq
        %v6771 = vshrl.u32 %v6770, 7
        %v6772 = vsub.s32 %v6769, %v6771
        %v6773 = vrot.slane %v6583, %v6772
        %v6775 = vunpack.c.l.s4 1983009808
        %v6776 = vunpack.c.0.s8 %v6775
        %v6777 = vlaneseq
        %v6778 = vshrl.u32 %v6777, 7
        %v6779 = vsub.s32 %v6776, %v6778
        %v6780 = vrot.slane %v6766, %v6779
        %v6781 = vcombine.high %v6773, %v6773
        %v6782 = vcombine.high %v6586, %v6586
        %v6784 = vunpack.c.l.s4 1983009808
        %v6785 = vunpack.c.0.s8 %v6784
        %v6786 = vlaneseq
        %v6787 = vshrl.u32 %v6786, 7
        %v6788 = vsub.s32 %v6785, %v6787
        %v6789 = vrot.slane %v6586, %v6788
        %v6791 = vunpack.c.l.s4 1983009808
        %v6792 = vunpack.c.0.s8 %v6791
        %v6793 = vlaneseq
        %v6794 = vshrl.u32 %v6793, 7
        %v6795 = vsub.s32 %v6792, %v6794
        %v6796 = vrot.slane %v6782, %v6795
        %v6797 = vcombine.high %v6789, %v6789
        %v6798 = vcombine.high %v6796, %v6796
        %v6799 = vcombine.high %v6591, %v6591
        %v6801 = vunpack.c.l.s4 1983009808
        %v6802 = vunpack.c.0.s8 %v6801
        %v6803 = vlaneseq
        %v6804 = vshrl.u32 %v6803, 7
        %v6805 = vsub.s32 %v6802, %v6804
        %v6806 = vrot.slane %v6591, %v6805
        %v6808 = vunpack.c.l.s4 1983009808
        %v6809 = vunpack.c.0.s8 %v6808
        %v6810 = vlaneseq
        %v6811 = vshrl.u32 %v6810, 7
        %v6812 = vsub.s32 %v6809, %v6811
        %v6813 = vrot.slane %v6799, %v6812
        %v6814 = vcombine.high %v6806, %v6806
        %v6815 = vcombine.high %v6813, %v6813
        %v6816 = vcombine.high %v6594, %v6594
        %v6818 = vunpack.c.l.s4 1983009808
        %v6819 = vunpack.c.0.s8 %v6818
        %v6820 = vlaneseq
        %v6821 = vshrl.u32 %v6820, 7
        %v6822 = vsub.s32 %v6819, %v6821
        %v6823 = vrot.slane %v6594, %v6822
        %v6825 = vunpack.c.l.s4 1983009808
        %v6826 = vunpack.c.0.s8 %v6825
        %v6827 = vlaneseq
        %v6828 = vshrl.u32 %v6827, 7
        %v6829 = vsub.s32 %v6826, %v6828
        %v6830 = vrot.slane %v6816, %v6829
        %v6831 = vcombine.high %v6823, %v6823
        %v6832 = vcombine.high %v6830, %v6830
        %v6833 = vcombine.high %v6599, %v6599
        %v6835 = vunpack.c.l.s4 1983009808
        %v6836 = vunpack.c.0.s8 %v6835
        %v6837 = vlaneseq
        %v6838 = vshrl.u32 %v6837, 7
        %v6839 = vsub.s32 %v6836, %v6838
        %v6840 = vrot.slane %v6599, %v6839
        %v6842 = vunpack.c.l.s4 1983009808
        %v6843 = vunpack.c.0.s8 %v6842
        %v6844 = vlaneseq
        %v6845 = vshrl.u32 %v6844, 7
        %v6846 = vsub.s32 %v6843, %v6845
        %v6847 = vrot.slane %v6833, %v6846
        %v6848 = vcombine.high %v6847, %v6847
        %v6849 = vcombine.high %v6602, %v6602
        %v6851 = vunpack.c.l.s4 1983009808
        %v6852 = vunpack.c.0.s8 %v6851
        %v6853 = vlaneseq
        %v6854 = vshrl.u32 %v6853, 7
        %v6855 = vsub.s32 %v6852, %v6854
        %v6856 = vrot.slane %v6602, %v6855
        %v6858 = vunpack.c.l.s4 1983009808
        %v6859 = vunpack.c.0.s8 %v6858
        %v6860 = vlaneseq
        %v6861 = vshrl.u32 %v6860, 7
        %v6862 = vsub.s32 %v6859, %v6861
        %v6863 = vrot.slane %v6849, %v6862
        %v6864 = vcombine.high %v6856, %v6856
        %v6865 = vcombine.high %v6863, %v6863
        %v6866 = vcombine.high %v6607, %v6607
        %v6868 = vunpack.c.l.s4 1983009808
        %v6869 = vunpack.c.0.s8 %v6868
        %v6870 = vlaneseq
        %v6871 = vshrl.u32 %v6870, 7
        %v6872 = vsub.s32 %v6869, %v6871
        %v6873 = vrot.slane %v6607, %v6872
        %v6875 = vunpack.c.l.s4 1983009808
        %v6876 = vunpack.c.0.s8 %v6875
        %v6877 = vlaneseq
        %v6878 = vshrl.u32 %v6877, 7
        %v6879 = vsub.s32 %v6876, %v6878
        %v6880 = vrot.slane %v6866, %v6879
        %v6881 = vcombine.high %v6873, %v6873
        %v6882 = vcombine.high %v6880, %v6880
        %v6883 = vcombine.high %v6610, %v6610
        %v6885 = vunpack.c.l.s4 1983009808
        %v6886 = vunpack.c.0.s8 %v6885
        %v6887 = vlaneseq
        %v6888 = vshrl.u32 %v6887, 7
        %v6889 = vsub.s32 %v6886, %v6888
        %v6890 = vrot.slane %v6610, %v6889
        %v6892 = vunpack.c.l.s4 1983009808
        %v6893 = vunpack.c.0.s8 %v6892
        %v6894 = vlaneseq
        %v6895 = vshrl.u32 %v6894, 7
        %v6896 = vsub.s32 %v6893, %v6895
        %v6897 = vrot.slane %v6883, %v6896
        %v6898 = vcombine.high %v6890, %v6890
        %v6899 = vcombine.high %v6615, %v6615
        %v6901 = vunpack.c.l.s4 1983009808
        %v6902 = vunpack.c.0.s8 %v6901
        %v6903 = vlaneseq
        %v6904 = vshrl.u32 %v6903, 7
        %v6905 = vsub.s32 %v6902, %v6904
        %v6906 = vrot.slane %v6615, %v6905
        %v6908 = vunpack.c.l.s4 1983009808
        %v6909 = vunpack.c.0.s8 %v6908
        %v6910 = vlaneseq
        %v6911 = vshrl.u32 %v6910, 7
        %v6912 = vsub.s32 %v6909, %v6911
        %v6913 = vrot.slane %v6899, %v6912
        %v6914 = vcombine.high %v6906, %v6906
        %v6915 = vcombine.high %v6913, %v6913
        %v6916 = vcombine.high %v6618, %v6618
        %v6918 = vunpack.c.l.s4 1983009808
        %v6919 = vunpack.c.0.s8 %v6918
        %v6920 = vlaneseq
        %v6921 = vshrl.u32 %v6920, 7
        %v6922 = vsub.s32 %v6919, %v6921
        %v6923 = vrot.slane %v6618, %v6922
        %v6925 = vunpack.c.l.s4 1983009808
        %v6926 = vunpack.c.0.s8 %v6925
        %v6927 = vlaneseq
        %v6928 = vshrl.u32 %v6927, 7
        %v6929 = vsub.s32 %v6926, %v6928
        %v6930 = vrot.slane %v6916, %v6929
        %v6931 = vcombine.high %v6923, %v6923
        %v6932 = vcombine.high %v6930, %v6930
        %v6933 = vcombine.high %v6623, %v6623
        %v6935 = vunpack.c.l.s4 1983009808
        %v6936 = vunpack.c.0.s8 %v6935
        %v6937 = vlaneseq
        %v6938 = vshrl.u32 %v6937, 7
        %v6939 = vsub.s32 %v6936, %v6938
        %v6940 = vrot.slane %v6623, %v6939
        %v6942 = vunpack.c.l.s4 1983009808
        %v6943 = vunpack.c.0.s8 %v6942
        %v6944 = vlaneseq
        %v6945 = vshrl.u32 %v6944, 7
        %v6946 = vsub.s32 %v6943, %v6945
        %v6947 = vrot.slane %v6933, %v6946
        %v6948 = vcombine.high %v6940, %v6940
        %v6949 = vcombine.high %v6947, %v6947
        %v6950 = vcombine.high %v6626, %v6626
        %v6952 = vunpack.c.l.s4 1983009808
        %v6953 = vunpack.c.0.s8 %v6952
        %v6954 = vlaneseq
        %v6955 = vshrl.u32 %v6954, 7
        %v6956 = vsub.s32 %v6953, %v6955
        %v6957 = vrot.slane %v6626, %v6956
        %v6959 = vunpack.c.l.s4 1983009808
        %v6960 = vunpack.c.0.s8 %v6959
        %v6961 = vlaneseq
        %v6962 = vshrl.u32 %v6961, 7
        %v6963 = vsub.s32 %v6960, %v6962
        %v6964 = vrot.slane %v6950, %v6963
        %v6965 = vcombine.high %v6964, %v6964
        %v6966 = vcombine.high %v6631, %v6631
        %v6968 = vunpack.c.l.s4 1983009808
        %v6969 = vunpack.c.0.s8 %v6968
        %v6970 = vlaneseq
        %v6971 = vshrl.u32 %v6970, 7
        %v6972 = vsub.s32 %v6969, %v6971
        %v6973 = vrot.slane %v6631, %v6972
        %v6975 = vunpack.c.l.s4 1983009808
        %v6976 = vunpack.c.0.s8 %v6975
        %v6977 = vlaneseq
        %v6978 = vshrl.u32 %v6977, 7
        %v6979 = vsub.s32 %v6976, %v6978
        %v6980 = vrot.slane %v6966, %v6979
        %v6981 = vcombine.high %v6973, %v6973
        %v6982 = vcombine.high %v6980, %v6980
        %v6983 = vcombine.high %v6634, %v6634
        %v6985 = vunpack.c.l.s4 1983009808
        %v6986 = vunpack.c.0.s8 %v6985
        %v6987 = vlaneseq
        %v6988 = vshrl.u32 %v6987, 7
        %v6989 = vsub.s32 %v6986, %v6988
        %v6990 = vrot.slane %v6634, %v6989
        %v6992 = vunpack.c.l.s4 1983009808
        %v6993 = vunpack.c.0.s8 %v6992
        %v6994 = vlaneseq
        %v6995 = vshrl.u32 %v6994, 7
        %v6996 = vsub.s32 %v6993, %v6995
        %v6997 = vrot.slane %v6983, %v6996
        %v6998 = vcombine.high %v6990, %v6990
        %v6999 = vcombine.high %v6997, %v6997
        %v7000 = vcombine.high %v6639, %v6639
        %v7002 = vunpack.c.l.s4 1983009808
        %v7003 = vunpack.c.0.s8 %v7002
        %v7004 = vlaneseq
        %v7005 = vshrl.u32 %v7004, 7
        %v7006 = vsub.s32 %v7003, %v7005
        %v7007 = vrot.slane %v6639, %v7006
        %v7009 = vunpack.c.l.s4 1983009808
        %v7010 = vunpack.c.0.s8 %v7009
        %v7011 = vlaneseq
        %v7012 = vshrl.u32 %v7011, 7
        %v7013 = vsub.s32 %v7010, %v7012
        %v7014 = vrot.slane %v7000, %v7013
        %v7015 = vcombine.high %v7007, %v7007
        %v7088 = vmax.f32 %v6672, %v6698
        %v7089 = vmax.f32 %v6680, %v6706
        %v7090 = vmax.f32 %v6679, %v6714
        %v7091 = vmax.f32 %v6681, %v6713
        %v7092 = vmax.f32 %v6689, %v6715
        %v7093 = vmax.f32 %v6697, %v6723
        %v7094 = vmax.f32 %v6730, %v6764
        %v7095 = vmax.f32 %v6731, %v6763
        %v7096 = vmax.f32 %v6739, %v6765
        %v7097 = vmax.f32 %v6747, %v6773
        %v7098 = vmax.f32 %v6746, %v6781
        %v7099 = vmax.f32 %v6748, %v6780
        %v7100 = vmax.f32 %v6789, %v6815
        %v7101 = vmax.f32 %v6797, %v6823
        %v7102 = vmax.f32 %v6796, %v6831
        %v7103 = vmax.f32 %v6798, %v6830
        %v7104 = vmax.f32 %v6806, %v6832
        %v7105 = vmax.f32 %v6814, %v6840
        %v7106 = vmax.f32 %v6847, %v6881
        %v7107 = vmax.f32 %v6848, %v6880
        %v7108 = vmax.f32 %v6856, %v6882
        %v7109 = vmax.f32 %v6864, %v6890
        %v7110 = vmax.f32 %v6863, %v6898
        %v7111 = vmax.f32 %v6865, %v6897
        %v7112 = vmax.f32 %v6906, %v6932
        %v7113 = vmax.f32 %v6914, %v6940
        %v7114 = vmax.f32 %v6913, %v6948
        %v7115 = vmax.f32 %v6915, %v6947
        %v7116 = vmax.f32 %v6923, %v6949
        %v7117 = vmax.f32 %v6931, %v6957
        %v7118 = vmax.f32 %v6964, %v6998
        %v7119 = vmax.f32 %v6965, %v6997
        %v7120 = vmax.f32 %v6973, %v6999
        %v7121 = vmax.f32 %v6981, %v7007
        %v7122 = vmax.f32 %v6980, %v7015
        %v7123 = vmax.f32 %v6982, %v7014
        %v7160 = vrot.slane %v7088, 7
        %v7161 = vrot.slane %v7160, 2
        %v7162 = vrot.slane %v7089, 7
        %v7163 = vrot.slane %v7162, 2
        %v7164 = vrot.slane %v7090, 7
        %v7165 = vrot.slane %v7164, 2
        %v7166 = vrot.slane %v7091, 7
        %v7167 = vrot.slane %v7166, 2
        %v7168 = vrot.slane %v7092, 7
        %v7169 = vrot.slane %v7168, 2
        %v7170 = vrot.slane %v7093, 7
        %v7171 = vrot.slane %v7170, 2
        %v7172 = vrot.slane %v7094, 7
        %v7173 = vrot.slane %v7172, 2
        %v7174 = vrot.slane %v7095, 7
        %v7175 = vrot.slane %v7174, 2
        %v7176 = vrot.slane %v7096, 7
        %v7177 = vrot.slane %v7176, 2
        %v7178 = vrot.slane %v7097, 7
        %v7179 = vrot.slane %v7178, 2
        %v7180 = vrot.slane %v7098, 7
        %v7181 = vrot.slane %v7180, 2
        %v7182 = vrot.slane %v7099, 7
        %v7183 = vrot.slane %v7182, 2
        %v7184 = vrot.slane %v7100, 7
        %v7185 = vrot.slane %v7184, 2
        %v7186 = vrot.slane %v7101, 7
        %v7187 = vrot.slane %v7186, 2
        %v7188 = vrot.slane %v7102, 7
        %v7189 = vrot.slane %v7188, 2
        %v7190 = vrot.slane %v7103, 7
        %v7191 = vrot.slane %v7190, 2
        %v7192 = vrot.slane %v7104, 7
        %v7193 = vrot.slane %v7192, 2
        %v7194 = vrot.slane %v7105, 7
        %v7195 = vrot.slane %v7194, 2
        %v7196 = vrot.slane %v7106, 7
        %v7197 = vrot.slane %v7196, 2
        %v7198 = vrot.slane %v7107, 7
        %v7199 = vrot.slane %v7198, 2
        %v7200 = vrot.slane %v7108, 7
        %v7201 = vrot.slane %v7200, 2
        %v7202 = vrot.slane %v7109, 7
        %v7203 = vrot.slane %v7202, 2
        %v7204 = vrot.slane %v7110, 7
        %v7205 = vrot.slane %v7204, 2
        %v7206 = vrot.slane %v7111, 7
        %v7207 = vrot.slane %v7206, 2
        %v7208 = vrot.slane %v7112, 7
        %v7209 = vrot.slane %v7208, 2
        %v7210 = vrot.slane %v7113, 7
        %v7211 = vrot.slane %v7210, 2
        %v7212 = vrot.slane %v7114, 7
        %v7213 = vrot.slane %v7212, 2
        %v7214 = vrot.slane %v7115, 7
        %v7215 = vrot.slane %v7214, 2
        %v7216 = vrot.slane %v7116, 7
        %v7217 = vrot.slane %v7216, 2
        %v7218 = vrot.slane %v7117, 7
        %v7219 = vrot.slane %v7218, 2
        %v7220 = vrot.slane %v7118, 7
        %v7221 = vrot.slane %v7220, 2
        %v7222 = vrot.slane %v7119, 7
        %v7223 = vrot.slane %v7222, 2
        %v7224 = vrot.slane %v7120, 7
        %v7225 = vrot.slane %v7224, 2
        %v7226 = vrot.slane %v7121, 7
        %v7227 = vrot.slane %v7226, 2
        %v7228 = vrot.slane %v7122, 7
        %v7229 = vrot.slane %v7228, 2
        %v7230 = vrot.slane %v7123, 7
        %v7231 = vrot.slane %v7230, 2
        %v7268 = vmax.f32 %v7088, %v7161
        %v7269 = vmax.f32 %v7089, %v7163
        %v7270 = vmax.f32 %v7090, %v7165
        %v7271 = vmax.f32 %v7091, %v7167
        %v7272 = vmax.f32 %v7092, %v7169
        %v7273 = vmax.f32 %v7093, %v7171
        %v7274 = vmax.f32 %v7094, %v7173
        %v7275 = vmax.f32 %v7095, %v7175
        %v7276 = vmax.f32 %v7096, %v7177
        %v7277 = vmax.f32 %v7097, %v7179
        %v7278 = vmax.f32 %v7098, %v7181
        %v7279 = vmax.f32 %v7099, %v7183
        %v7280 = vmax.f32 %v7100, %v7185
        %v7281 = vmax.f32 %v7101, %v7187
        %v7282 = vmax.f32 %v7102, %v7189
        %v7283 = vmax.f32 %v7103, %v7191
        %v7284 = vmax.f32 %v7104, %v7193
        %v7285 = vmax.f32 %v7105, %v7195
        %v7286 = vmax.f32 %v7106, %v7197
        %v7287 = vmax.f32 %v7107, %v7199
        %v7288 = vmax.f32 %v7108, %v7201
        %v7289 = vmax.f32 %v7109, %v7203
        %v7290 = vmax.f32 %v7110, %v7205
        %v7291 = vmax.f32 %v7111, %v7207
        %v7292 = vmax.f32 %v7112, %v7209
        %v7293 = vmax.f32 %v7113, %v7211
        %v7294 = vmax.f32 %v7114, %v7213
        %v7295 = vmax.f32 %v7115, %v7215
        %v7296 = vmax.f32 %v7116, %v7217
        %v7297 = vmax.f32 %v7117, %v7219
        %v7298 = vmax.f32 %v7118, %v7221
        %v7299 = vmax.f32 %v7119, %v7223
        %v7300 = vmax.f32 %v7120, %v7225
        %v7301 = vmax.f32 %v7121, %v7227
        %v7302 = vmax.f32 %v7122, %v7229
        %v7303 = vmax.f32 %v7123, %v7231
        %v7305 = vlaneseq
        %v7306 = vshrl.u32 %v7305, 7
        %v7307 = vsub.s32 0, %v7306
        %v7308 = vrot.slane %v5805, %v7307
        %v7309 = vcombine.high %v7308, %v7308
        %v7311 = vunpack.c.l.s4 1983009808
        %v7312 = vunpack.c.0.s8 %v7311
        %v7313 = vlaneseq
        %v7314 = vshrl.u32 %v7313, 7
        %v7315 = vsub.s32 %v7312, %v7314
        %v7316 = vrot.slane %v7308, %v7315
        %v7318 = vunpack.c.l.s4 1983009808
        %v7319 = vunpack.c.0.s8 %v7318
        %v7320 = vlaneseq
        %v7321 = vshrl.u32 %v7320, 7
        %v7322 = vsub.s32 %v7319, %v7321
        %v7323 = vrot.slane %v7309, %v7322
        %v7324 = vcombine.high %v7316, %v7316
        %v7325 = vrot.slane %v7316, 1
        %v7326 = vrot.slane %v7324, 1
        %v7327 = vrot.slane %v7323, 1
        %v7334 = vadd.f32 %v7268, %v7316
        %v7335 = vadd.f32 %v7269, %v7325
        %v7336 = vadd.f32 %v7270, %v7324
        %v7337 = vadd.f32 %v7271, %v7326
        %v7338 = vadd.f32 %v7272, %v7323
        %v7339 = vadd.f32 %v7273, %v7327
        %v7340 = vadd.f32 %v7274, %v7316
        %v7341 = vadd.f32 %v7275, %v7325
        %v7342 = vadd.f32 %v7276, %v7324
        %v7343 = vadd.f32 %v7277, %v7326
        %v7344 = vadd.f32 %v7278, %v7323
        %v7345 = vadd.f32 %v7279, %v7327
        %v7346 = vadd.f32 %v7280, %v7316
        %v7347 = vadd.f32 %v7281, %v7325
        %v7348 = vadd.f32 %v7282, %v7324
        %v7349 = vadd.f32 %v7283, %v7326
        %v7350 = vadd.f32 %v7284, %v7323
        %v7351 = vadd.f32 %v7285, %v7327
        %v7352 = vadd.f32 %v7286, %v7316
        %v7353 = vadd.f32 %v7287, %v7325
        %v7354 = vadd.f32 %v7288, %v7324
        %v7355 = vadd.f32 %v7289, %v7326
        %v7356 = vadd.f32 %v7290, %v7323
        %v7357 = vadd.f32 %v7291, %v7327
        %v7358 = vadd.f32 %v7292, %v7316
        %v7359 = vadd.f32 %v7293, %v7325
        %v7360 = vadd.f32 %v7294, %v7324
        %v7361 = vadd.f32 %v7295, %v7326
        %v7362 = vadd.f32 %v7296, %v7323
        %v7363 = vadd.f32 %v7297, %v7327
        %v7364 = vadd.f32 %v7298, %v7316
        %v7365 = vadd.f32 %v7299, %v7325
        %v7366 = vadd.f32 %v7300, %v7324
        %v7367 = vadd.f32 %v7301, %v7326
        %v7368 = vadd.f32 %v7302, %v7323
        %v7369 = vadd.f32 %v7303, %v7327
        %v7370 = vmax.f32 %v7334, 0.0
        %v7371 = vmax.f32 %v7335, 0.0
        %v7372 = vmax.f32 %v7336, 0.0
        %v7373 = vmax.f32 %v7337, 0.0
        %v7374 = vmax.f32 %v7338, 0.0
        %v7375 = vmax.f32 %v7339, 0.0
        %v7376 = vmax.f32 %v7340, 0.0
        %v7377 = vmax.f32 %v7341, 0.0
        %v7378 = vmax.f32 %v7342, 0.0
        %v7379 = vmax.f32 %v7343, 0.0
        %v7380 = vmax.f32 %v7344, 0.0
        %v7381 = vmax.f32 %v7345, 0.0
        %v7382 = vmax.f32 %v7346, 0.0
        %v7383 = vmax.f32 %v7347, 0.0
        %v7384 = vmax.f32 %v7348, 0.0
        %v7385 = vmax.f32 %v7349, 0.0
        %v7386 = vmax.f32 %v7350, 0.0
        %v7387 = vmax.f32 %v7351, 0.0
        %v7388 = vmax.f32 %v7352, 0.0
        %v7389 = vmax.f32 %v7353, 0.0
        %v7390 = vmax.f32 %v7354, 0.0
        %v7391 = vmax.f32 %v7355, 0.0
        %v7392 = vmax.f32 %v7356, 0.0
        %v7393 = vmax.f32 %v7357, 0.0
        %v7394 = vmax.f32 %v7358, 0.0
        %v7395 = vmax.f32 %v7359, 0.0
        %v7396 = vmax.f32 %v7360, 0.0
        %v7397 = vmax.f32 %v7361, 0.0
        %v7398 = vmax.f32 %v7362, 0.0
        %v7399 = vmax.f32 %v7363, 0.0
        %v7400 = vmax.f32 %v7364, 0.0
        %v7401 = vmax.f32 %v7365, 0.0
        %v7402 = vmax.f32 %v7366, 0.0
        %v7403 = vmax.f32 %v7367, 0.0
        %v7404 = vmax.f32 %v7368, 0.0
        %v7405 = vmax.f32 %v7369, 0.0
        %v7406 = vpack.c.bf16 %v7370, %v7370
        %v7407 = vpack.c.bf16 %v7371, %v7371
        %v7408 = vpack.c.bf16 %v7372, %v7372
        %v7409 = vpack.c.bf16 %v7373, %v7373
        %v7410 = vpack.c.bf16 %v7374, %v7374
        %v7411 = vpack.c.bf16 %v7375, %v7375
        %v7412 = vpack.c.bf16 %v7376, %v7376
        %v7413 = vpack.c.bf16 %v7377, %v7377
        %v7414 = vpack.c.bf16 %v7378, %v7378
        %v7415 = vpack.c.bf16 %v7379, %v7379
        %v7416 = vpack.c.bf16 %v7380, %v7380
        %v7417 = vpack.c.bf16 %v7381, %v7381
        %v7418 = vpack.c.bf16 %v7382, %v7382
        %v7419 = vpack.c.bf16 %v7383, %v7383
        %v7420 = vpack.c.bf16 %v7384, %v7384
        %v7421 = vpack.c.bf16 %v7385, %v7385
        %v7422 = vpack.c.bf16 %v7386, %v7386
        %v7423 = vpack.c.bf16 %v7387, %v7387
        %v7424 = vpack.c.bf16 %v7388, %v7388
        %v7425 = vpack.c.bf16 %v7389, %v7389
        %v7426 = vpack.c.bf16 %v7390, %v7390
        %v7427 = vpack.c.bf16 %v7391, %v7391
        %v7428 = vpack.c.bf16 %v7392, %v7392
        %v7429 = vpack.c.bf16 %v7393, %v7393
        %v7430 = vpack.c.bf16 %v7394, %v7394
        %v7431 = vpack.c.bf16 %v7395, %v7395
        %v7432 = vpack.c.bf16 %v7396, %v7396
        %v7433 = vpack.c.bf16 %v7397, %v7397
        %v7434 = vpack.c.bf16 %v7398, %v7398
        %v7435 = vpack.c.bf16 %v7399, %v7399
        %v7436 = vpack.c.bf16 %v7400, %v7400
        %v7437 = vpack.c.bf16 %v7401, %v7401
        %v7438 = vpack.c.bf16 %v7402, %v7402
        %v7439 = vpack.c.bf16 %v7403, %v7403
        %v7440 = vpack.c.bf16 %v7404, %v7404
        %v7441 = vpack.c.bf16 %v7405, %v7405
        %v7478 = vunpack.c.l.b16 %v7406
        %v7479 = vunpack.c.l.b16 %v7407
        %v7480 = vunpack.c.l.b16 %v7408
        %v7481 = vunpack.c.l.b16 %v7409
        %v7482 = vunpack.c.l.b16 %v7410
        %v7483 = vunpack.c.l.b16 %v7411
        %v7484 = vunpack.c.l.b16 %v7412
        %v7485 = vunpack.c.l.b16 %v7413
        %v7486 = vunpack.c.l.b16 %v7414
        %v7487 = vunpack.c.l.b16 %v7415
        %v7488 = vunpack.c.l.b16 %v7416
        %v7489 = vunpack.c.l.b16 %v7417
        %v7490 = vunpack.c.l.b16 %v7418
        %v7491 = vunpack.c.l.b16 %v7419
        %v7492 = vunpack.c.l.b16 %v7420
        %v7493 = vunpack.c.l.b16 %v7421
        %v7494 = vunpack.c.l.b16 %v7422
        %v7495 = vunpack.c.l.b16 %v7423
        %v7496 = vunpack.c.l.b16 %v7424
        %v7497 = vunpack.c.l.b16 %v7425
        %v7498 = vunpack.c.l.b16 %v7426
        %v7499 = vunpack.c.l.b16 %v7427
        %v7500 = vunpack.c.l.b16 %v7428
        %v7501 = vunpack.c.l.b16 %v7429
        %v7502 = vunpack.c.l.b16 %v7430
        %v7503 = vunpack.c.l.b16 %v7431
        %v7504 = vunpack.c.l.b16 %v7432
        %v7505 = vunpack.c.l.b16 %v7433
        %v7506 = vunpack.c.l.b16 %v7434
        %v7507 = vunpack.c.l.b16 %v7435
        %v7508 = vunpack.c.l.b16 %v7436
        %v7509 = vunpack.c.l.b16 %v7437
        %v7510 = vunpack.c.l.b16 %v7438
        %v7511 = vunpack.c.l.b16 %v7439
        %v7512 = vunpack.c.l.b16 %v7440
        %v7513 = vunpack.c.l.b16 %v7441
        %v7514 = vrot.slane %v7479, 7
        %v7515 = vsel %vm5417, %v7514, %v7478
        %v7516 = vrot.slane %v7480, 6
        %v7517 = vsel %vm5420, %v7516, %v7515
        %v7518 = vrot.slane %v7481, 5
        %v7519 = vsel %vm5423, %v7518, %v7517
        %v7520 = vrot.slane %v7482, 4
        %v7521 = vsel %vm5426, %v7520, %v7519
        %v7522 = vrot.slane %v7483, 3
        %v7523 = vsel %vm5429, %v7522, %v7521
        %v7524 = vrot.slane %v7484, 2
        %v7525 = vsel %vm5432, %v7524, %v7523
        %v7526 = vrot.slane %v7485, 1
        %v7527 = vsel %vm5435, %v7526, %v7525
        %v7528 = vrot.slane %v7487, 7
        %v7529 = vsel %vm5417, %v7528, %v7486
        %v7530 = vrot.slane %v7488, 6
        %v7531 = vsel %vm5420, %v7530, %v7529
        %v7532 = vrot.slane %v7489, 5
        %v7533 = vsel %vm5423, %v7532, %v7531
        %v7534 = vrot.slane %v7490, 4
        %v7535 = vsel %vm5426, %v7534, %v7533
        %v7536 = vrot.slane %v7491, 3
        %v7537 = vsel %vm5429, %v7536, %v7535
        %v7538 = vrot.slane %v7492, 2
        %v7539 = vsel %vm5432, %v7538, %v7537
        %v7540 = vrot.slane %v7493, 1
        %v7541 = vsel %vm5435, %v7540, %v7539
        %v7542 = vrot.slane %v7495, 7
        %v7543 = vsel %vm5417, %v7542, %v7494
        %v7544 = vrot.slane %v7496, 6
        %v7545 = vsel %vm5420, %v7544, %v7543
        %v7546 = vrot.slane %v7497, 5
        %v7547 = vsel %vm5423, %v7546, %v7545
        %v7548 = vrot.slane %v7498, 4
        %v7549 = vsel %vm5426, %v7548, %v7547
        %v7550 = vrot.slane %v7499, 3
        %v7551 = vsel %vm5429, %v7550, %v7549
        %v7552 = vrot.slane %v7500, 2
        %v7553 = vsel %vm5432, %v7552, %v7551
        %v7554 = vrot.slane %v7501, 1
        %v7555 = vsel %vm5435, %v7554, %v7553
        %v7556 = vrot.slane %v7503, 7
        %v7557 = vsel %vm5417, %v7556, %v7502
        %v7558 = vrot.slane %v7504, 6
        %v7559 = vsel %vm5420, %v7558, %v7557
        %v7560 = vrot.slane %v7505, 5
        %v7561 = vsel %vm5423, %v7560, %v7559
        %v7562 = vrot.slane %v7506, 4
        %v7563 = vsel %vm5426, %v7562, %v7561
        %v7564 = vrot.slane %v7507, 3
        %v7565 = vsel %vm5429, %v7564, %v7563
        %v7566 = vrot.slane %v7508, 2
        %v7567 = vsel %vm5432, %v7566, %v7565
        %v7568 = vrot.slane %v7509, 1
        %v7569 = vsel %vm5435, %v7568, %v7567
        %v7570 = vrot.slane %v7511, 7
        %v7571 = vsel %vm5417, %v7570, %v7510
        %v7572 = vrot.slane %v7512, 6
        %v7573 = vsel %vm5420, %v7572, %v7571
        %v7574 = vrot.slane %v7513, 5
        %v7575 = vsel %vm5423, %v7574, %v7573
        %v7576 = vpack.c.b16 %v7541, %v7527
        %v7577 = vpack.c.b16 %v7569, %v7555
        %v7578 = vpack.c.b16 %v7575, %v7575
        %v7582 = vsel %vm5778, %v7578, 0
        %v7583 = vld [vmem:[%s5] sm:$0xff]
        %v7584 = vld [vmem:[%s5 + $0x8] sm:$0xff]
        %v7585 = vld [vmem:[%s5 + $0x10] sm:$0xff]
        %v7586 = vld [vmem:[%s5 + $0x18] sm:$0xff]
        %v7587 = vld [vmem:[%s5 + $0x20] sm:$0xff]
        %v7588 = vld [vmem:[%s5 + $0x28] sm:$0xff]
        %v7589 = vld [vmem:[%s5 + $0x30] sm:$0xff]
        %v7590 = vld [vmem:[%s5 + $0x38] sm:$0xff]
        %v7591 = vld [vmem:[%s5 + $0x40] sm:$0xff]
        %v7592 = vld [vmem:[%s5 + $0x48] sm:$0xff]
        %v7593 = vld [vmem:[%s5 + $0x50] sm:$0xff]
        %v7594 = vld [vmem:[%s5 + $0x58] sm:$0xff]
        %v7595 = vld [vmem:[%s5 + $0x60] sm:$0xff]
        %v7596 = vld [vmem:[%s5 + $0x68] sm:$0xff]
        %v7597 = vld [vmem:[%s5 + $0x70] sm:$0xff]
        %v7598 = vld [vmem:[%s5 + $0x78] sm:$0xff]
        %v7599 = vld [vmem:[%s5 + $0x80] sm:$0xff]
        %v7600 = vld [vmem:[%s5 + $0x88] sm:$0xff]
        %v7601 = vld [vmem:[%s5 + $0x90] sm:$0xff]
        %v7602 = vld [vmem:[%s5 + $0x98] sm:$0xff]
        %v7603 = vld [vmem:[%s5 + $0xa0] sm:$0xff]
        %v7604 = vld [vmem:[%s5 + $0xa8] sm:$0xff]
        %v7605 = vld [vmem:[%s5 + $0xb0] sm:$0xff]
        %v7606 = vld [vmem:[%s5 + $0xb8] sm:$0xff]
        %v7607 = vld [vmem:[%s5 + $0xc0] sm:$0xff]
        %v7608 = vld [vmem:[%s5 + $0xc8] sm:$0xff]
        %v7609 = vld [vmem:[%s5 + $0xd0] sm:$0xff]
        %v7610 = vld [vmem:[%s5 + $0xd8] sm:$0xff]
        %v7611 = vld [vmem:[%s5 + $0xe0] sm:$0xff]
        %v7612 = vld [vmem:[%s5 + $0xe8] sm:$0xff]
        %v7613 = vld [vmem:[%s5 + $0xf0] sm:$0xff]
        %v7614 = vld [vmem:[%s5 + $0xf8] sm:$0xff]
        %v7615 = vld [vmem:[%s5 + $0x100] sm:$0xff]
        %v7616 = vld [vmem:[%s5 + $0x108] sm:$0xff]
        %v7617 = vld [vmem:[%s5 + $0x110] sm:$0xff]
        %v7618 = vld [vmem:[%s5 + $0x118] sm:$0xff]
        %v7619 = vld [vmem:[%s5 + $0x120] sm:$0xff]
        %v7620 = vld [vmem:[%s5 + $0x128] sm:$0xff]
        %v7621 = vld [vmem:[%s5 + $0x130] sm:$0xff]
        %v7622 = vld [vmem:[%s5 + $0x138] sm:$0xff]
        %v7623 = vld [vmem:[%s5 + $0x140] sm:$0xff]
        %v7624 = vld [vmem:[%s5 + $0x148] sm:$0xff]
        %v7625 = vld [vmem:[%s5 + $0x150] sm:$0xff]
        %v7626 = vld [vmem:[%s5 + $0x158] sm:$0xff]
        %v7627 = vld [vmem:[%s5 + $0x160] sm:$0xff]
        %v7628 = vld [vmem:[%s5 + $0x168] sm:$0xff]
        %v7629 = vld [vmem:[%s5 + $0x170] sm:$0xff]
        %v7630 = vld [vmem:[%s5 + $0x178] sm:$0xff]
        %v7631 = vld [vmem:[%s5 + $0x180] sm:$0xff]
        %v7632 = vld [vmem:[%s5 + $0x188] sm:$0xff]
        %v7633 = vld [vmem:[%s5 + $0x190] sm:$0xff]
        %v7634 = vld [vmem:[%s5 + $0x198] sm:$0xff]
        %v7635 = vld [vmem:[%s5 + $0x1a0] sm:$0xff]
        %v7636 = vld [vmem:[%s5 + $0x1a8] sm:$0xff]
        %v7637 = vld [vmem:[%s5 + $0x1b0] sm:$0xff]
        %v7638 = vld [vmem:[%s5 + $0x1b8] sm:$0xff]
        %v7639 = vld [vmem:[%s5 + $0x1c0] sm:$0xff]
        %v7640 = vld [vmem:[%s5 + $0x1c8] sm:$0xff]
        %v7641 = vld [vmem:[%s5 + $0x1d0] sm:$0xff]
        %v7642 = vld [vmem:[%s5 + $0x1d8] sm:$0xff]
        %v7643 = vld [vmem:[%s5 + $0x1e0] sm:$0xff]
        %v7644 = vld [vmem:[%s5 + $0x1e8] sm:$0xff]
        %v7645 = vld [vmem:[%s5 + $0x1f0] sm:$0xff]
        %v7646 = vld [vmem:[%s5 + $0x1f8] sm:$0xff]
        %v7647 = vld [vmem:[%s5 + $0x200] sm:$0xff]
        %v7648 = vld [vmem:[%s5 + $0x208] sm:$0xff]
        %v7649 = vld [vmem:[%s5 + $0x210] sm:$0xff]
        %v7650 = vld [vmem:[%s5 + $0x218] sm:$0xff]
        %v7651 = vld [vmem:[%s5 + $0x220] sm:$0xff]
        %v7652 = vld [vmem:[%s5 + $0x228] sm:$0xff]
        %v7653 = vld [vmem:[%s5 + $0x230] sm:$0xff]
        %v7654 = vld [vmem:[%s5 + $0x238] sm:$0xff]
        %v7655 = vld [vmem:[%s5 + $0x240] sm:$0xff]
        %v7656 = vld [vmem:[%s5 + $0x248] sm:$0xff]
        %v7657 = vld [vmem:[%s5 + $0x250] sm:$0xff]
        %v7658 = vld [vmem:[%s5 + $0x258] sm:$0xff]
        %v7659 = vld [vmem:[%s5 + $0x260] sm:$0xff]
        %v7660 = vld [vmem:[%s5 + $0x268] sm:$0xff]
        %v7661 = vld [vmem:[%s5 + $0x270] sm:$0xff]
        %v7662 = vld [vmem:[%s5 + $0x278] sm:$0xff]
        %v7663 = vld [vmem:[%s5 + $0x280] sm:$0xff]
        %v7664 = vld [vmem:[%s5 + $0x288] sm:$0xff]
        %v7665 = vld [vmem:[%s5 + $0x290] sm:$0xff]
        %v7666 = vld [vmem:[%s5 + $0x298] sm:$0xff]
        %v7667 = vld [vmem:[%s5 + $0x2a0] sm:$0xff]
        %v7668 = vld [vmem:[%s5 + $0x2a8] sm:$0xff]
        %v7669 = vld [vmem:[%s5 + $0x2b0] sm:$0xff]
        %v7670 = vld [vmem:[%s5 + $0x2b8] sm:$0xff]
        %v7671 = vld [vmem:[%s5 + $0x2c0] sm:$0xff]
        %v7672 = vld [vmem:[%s5 + $0x2c8] sm:$0xff]
        %v7673 = vld [vmem:[%s5 + $0x2d0] sm:$0xff]
        %v7674 = vld [vmem:[%s5 + $0x2d8] sm:$0xff]
        %v7675 = vld [vmem:[%s5 + $0x2e0] sm:$0xff]
        %v7676 = vld [vmem:[%s5 + $0x2e8] sm:$0xff]
        %v7677 = vld [vmem:[%s5 + $0x2f0] sm:$0xff]
        %v7678 = vld [vmem:[%s5 + $0x2f8] sm:$0xff]
        %v7679 = vld [vmem:[%s5 + $0x300] sm:$0xff]
        %v7680 = vld [vmem:[%s5 + $0x308] sm:$0xff]
        %v7681 = vld [vmem:[%s5 + $0x310] sm:$0xff]
        %v7682 = vld [vmem:[%s5 + $0x318] sm:$0xff]
        %v7683 = vld [vmem:[%s5 + $0x320] sm:$0xff]
        %v7684 = vld [vmem:[%s5 + $0x328] sm:$0xff]
        %v7685 = vld [vmem:[%s5 + $0x330] sm:$0xff]
        %v7686 = vld [vmem:[%s5 + $0x338] sm:$0xff]
        %v7687 = vld [vmem:[%s5 + $0x340] sm:$0xff]
        %v7688 = vld [vmem:[%s5 + $0x348] sm:$0xff]
        %v7689 = vld [vmem:[%s5 + $0x350] sm:$0xff]
        %v7690 = vld [vmem:[%s5 + $0x358] sm:$0xff]
        %v7691 = vld [vmem:[%s5 + $0x360] sm:$0xff]
        %v7692 = vld [vmem:[%s5 + $0x368] sm:$0xff]
        %v7693 = vld [vmem:[%s5 + $0x370] sm:$0xff]
        %v7694 = vld [vmem:[%s5 + $0x378] sm:$0xff]
        %v7695 = vld [vmem:[%s5 + $0x380] sm:$0xff]
        %v7696 = vld [vmem:[%s5 + $0x388] sm:$0xff]
        %v7697 = vld [vmem:[%s5 + $0x390] sm:$0xff]
        %v7698 = vld [vmem:[%s5 + $0x398] sm:$0xff]
        %v7699 = vld [vmem:[%s5 + $0x3a0] sm:$0xff]
        %v7700 = vld [vmem:[%s5 + $0x3a8] sm:$0xff]
        %v7701 = vld [vmem:[%s5 + $0x3b0] sm:$0xff]
        %v7702 = vld [vmem:[%s5 + $0x3b8] sm:$0xff]
        %v7703 = vld [vmem:[%s5 + $0x3c0] sm:$0xff]
        %v7704 = vld [vmem:[%s5 + $0x3c8] sm:$0xff]
        %v7705 = vld [vmem:[%s5 + $0x3d0] sm:$0xff]
        %v7706 = vld [vmem:[%s5 + $0x3d8] sm:$0xff]
        %v7707 = vld [vmem:[%s5 + $0x3e0] sm:$0xff]
        %v7708 = vld [vmem:[%s5 + $0x3e8] sm:$0xff]
        %v7709 = vld [vmem:[%s5 + $0x3f0] sm:$0xff]
        %v7710 = vld [vmem:[%s5 + $0x3f8] sm:$0xff]
        %v7711 = vld [vmem:[%s5 + $0x400] sm:$0xff]
        %v7712 = vld [vmem:[%s5 + $0x408] sm:$0xff]
        %v7713 = vld [vmem:[%s5 + $0x410] sm:$0xff]
        %v7714 = vld [vmem:[%s5 + $0x418] sm:$0xff]
        %v7715 = vld [vmem:[%s5 + $0x420] sm:$0xff]
        %v7716 = vld [vmem:[%s5 + $0x428] sm:$0xff]
        %v7717 = vld [vmem:[%s5 + $0x430] sm:$0xff]
        %v7718 = vld [vmem:[%s5 + $0x438] sm:$0xff]
        %v7719 = vld [vmem:[%s5 + $0x440] sm:$0xff]
        %v7720 = vld [vmem:[%s5 + $0x448] sm:$0xff]
        %v7721 = vld [vmem:[%s5 + $0x450] sm:$0xff]
        %v7722 = vld [vmem:[%s5 + $0x458] sm:$0xff]
        %v7723 = vld [vmem:[%s5 + $0x460] sm:$0xff]
        %v7724 = vld [vmem:[%s5 + $0x468] sm:$0xff]
        %v7725 = vld [vmem:[%s5 + $0x470] sm:$0xff]
        %v7726 = vld [vmem:[%s5 + $0x478] sm:$0xff]
        %v7727 = vld [vmem:[%s5 + $0x480] sm:$0xff]
        %v7728 = vld [vmem:[%s5 + $0x488] sm:$0xff]
        %v7729 = vld [vmem:[%s5 + $0x490] sm:$0xff]
        %v7730 = vld [vmem:[%s5 + $0x498] sm:$0xff]
        %v7731 = vld [vmem:[%s5 + $0x4a0] sm:$0xff]
        %v7732 = vld [vmem:[%s5 + $0x4a8] sm:$0xff]
        %v7733 = vld [vmem:[%s5 + $0x4b0] sm:$0xff]
        %v7734 = vld [vmem:[%s5 + $0x4b8] sm:$0xff]
        %v7735 = vld [vmem:[%s5 + $0x4c0] sm:$0xff]
        %v7736 = vld [vmem:[%s5 + $0x4c8] sm:$0xff]
        %v7737 = vld [vmem:[%s5 + $0x4d0] sm:$0xff]
        %v7738 = vld [vmem:[%s5 + $0x4d8] sm:$0xff]
        %v7739 = vld [vmem:[%s5 + $0x4e0] sm:$0xff]
        %v7740 = vld [vmem:[%s5 + $0x4e8] sm:$0xff]
        %v7741 = vld [vmem:[%s5 + $0x4f0] sm:$0xff]
        %v7742 = vld [vmem:[%s5 + $0x4f8] sm:$0xff]
        %v7743 = vld [vmem:[%s5 + $0x500] sm:$0xff]
        %v7744 = vld [vmem:[%s5 + $0x508] sm:$0xff]
        %v7745 = vld [vmem:[%s5 + $0x510] sm:$0xff]
        %v7746 = vld [vmem:[%s5 + $0x518] sm:$0xff]
        %v7747 = vld [vmem:[%s5 + $0x520] sm:$0xff]
        %v7748 = vld [vmem:[%s5 + $0x528] sm:$0xff]
        %v7749 = vld [vmem:[%s5 + $0x530] sm:$0xff]
        %v7750 = vld [vmem:[%s5 + $0x538] sm:$0xff]
        %v7751 = vld [vmem:[%s5 + $0x540] sm:$0xff]
        %v7752 = vld [vmem:[%s5 + $0x548] sm:$0xff]
        %v7753 = vld [vmem:[%s5 + $0x550] sm:$0xff]
        %v7754 = vld [vmem:[%s5 + $0x558] sm:$0xff]
        %v7755 = vld [vmem:[%s5 + $0x560] sm:$0xff]
        %v7756 = vld [vmem:[%s5 + $0x568] sm:$0xff]
        %v7757 = vld [vmem:[%s5 + $0x570] sm:$0xff]
        %v7758 = vld [vmem:[%s5 + $0x578] sm:$0xff]
        %v7759 = vld [vmem:[%s5 + $0x580] sm:$0xff]
        %v7760 = vld [vmem:[%s5 + $0x588] sm:$0xff]
        %v7761 = vld [vmem:[%s5 + $0x590] sm:$0xff]
        %v7762 = vld [vmem:[%s5 + $0x598] sm:$0xff]
        %v7763 = vld [vmem:[%s5 + $0x5a0] sm:$0xff]
        %v7764 = vld [vmem:[%s5 + $0x5a8] sm:$0xff]
        %v7765 = vld [vmem:[%s5 + $0x5b0] sm:$0xff]
        %v7766 = vld [vmem:[%s5 + $0x5b8] sm:$0xff]
        %v7767 = vld [vmem:[%s5 + $0x5c0] sm:$0xff]
        %v7768 = vld [vmem:[%s5 + $0x5c8] sm:$0xff]
        %v7769 = vld [vmem:[%s5 + $0x5d0] sm:$0xff]
        %v7770 = vld [vmem:[%s5 + $0x5d8] sm:$0xff]
        %v7771 = vld [vmem:[%s5 + $0x5e0] sm:$0xff]
        %v7772 = vld [vmem:[%s5 + $0x5e8] sm:$0xff]
        %v7773 = vld [vmem:[%s5 + $0x5f0] sm:$0xff]
        %v7774 = vld [vmem:[%s5 + $0x5f8] sm:$0xff]
        %v7775 = vld [vmem:[%s5 + $0x600] sm:$0xff]
        %v7776 = vld [vmem:[%s5 + $0x608] sm:$0xff]
        %v7777 = vld [vmem:[%s5 + $0x610] sm:$0xff]
        %v7778 = vld [vmem:[%s5 + $0x618] sm:$0xff]
        %v7779 = vld [vmem:[%s5 + $0x620] sm:$0xff]
        %v7780 = vld [vmem:[%s5 + $0x628] sm:$0xff]
        %v7781 = vld [vmem:[%s5 + $0x630] sm:$0xff]
        %v7782 = vld [vmem:[%s5 + $0x638] sm:$0xff]
        %v7783 = vld [vmem:[%s5 + $0x640] sm:$0xff]
        %v7784 = vld [vmem:[%s5 + $0x648] sm:$0xff]
        %v7785 = vld [vmem:[%s5 + $0x650] sm:$0xff]
        %v7786 = vld [vmem:[%s5 + $0x658] sm:$0xff]
        %v7787 = vld [vmem:[%s5 + $0x660] sm:$0xff]
        %v7788 = vld [vmem:[%s5 + $0x668] sm:$0xff]
        %v7789 = vld [vmem:[%s5 + $0x670] sm:$0xff]
        %v7790 = vld [vmem:[%s5 + $0x678] sm:$0xff]
        %v7791 = vld [vmem:[%s5 + $0x680] sm:$0xff]
        %v7792 = vld [vmem:[%s5 + $0x688] sm:$0xff]
        %v7793 = vld [vmem:[%s5 + $0x690] sm:$0xff]
        %v7794 = vld [vmem:[%s5 + $0x698] sm:$0xff]
        %v7795 = vld [vmem:[%s5 + $0x6a0] sm:$0xff]
        %v7796 = vld [vmem:[%s5 + $0x6a8] sm:$0xff]
        %v7797 = vld [vmem:[%s5 + $0x6b0] sm:$0xff]
        %v7798 = vld [vmem:[%s5 + $0x6b8] sm:$0xff]
        %v7799 = vld [vmem:[%s5 + $0x6c0] sm:$0xff]
        %v7800 = vld [vmem:[%s5 + $0x6c8] sm:$0xff]
        %v7801 = vld [vmem:[%s5 + $0x6d0] sm:$0xff]
        %v7802 = vld [vmem:[%s5 + $0x6d8] sm:$0xff]
        %v7803 = vld [vmem:[%s5 + $0x6e0] sm:$0xff]
        %v7804 = vld [vmem:[%s5 + $0x6e8] sm:$0xff]
        %v7805 = vld [vmem:[%s5 + $0x6f0] sm:$0xff]
        %v7806 = vld [vmem:[%s5 + $0x6f8] sm:$0xff]
        %v7807 = vld [vmem:[%s5 + $0x700] sm:$0xff]
        %v7808 = vld [vmem:[%s5 + $0x708] sm:$0xff]
        %v7809 = vld [vmem:[%s5 + $0x710] sm:$0xff]
        %v7810 = vld [vmem:[%s5 + $0x718] sm:$0xff]
        %v7811 = vld [vmem:[%s5 + $0x720] sm:$0xff]
        %v7812 = vld [vmem:[%s5 + $0x728] sm:$0xff]
        %v7813 = vld [vmem:[%s5 + $0x730] sm:$0xff]
        %v7814 = vld [vmem:[%s5 + $0x738] sm:$0xff]
        %v7815 = vld [vmem:[%s5 + $0x740] sm:$0xff]
        %v7816 = vld [vmem:[%s5 + $0x748] sm:$0xff]
        %v7817 = vld [vmem:[%s5 + $0x750] sm:$0xff]
        %v7818 = vld [vmem:[%s5 + $0x758] sm:$0xff]
        %v7819 = vld [vmem:[%s5 + $0x760] sm:$0xff]
        %v7820 = vld [vmem:[%s5 + $0x768] sm:$0xff]
        %v7821 = vld [vmem:[%s5 + $0x770] sm:$0xff]
        %v7822 = vld [vmem:[%s5 + $0x778] sm:$0xff]
        %v7823 = vld [vmem:[%s5 + $0x780] sm:$0xff]
        %v7824 = vld [vmem:[%s5 + $0x788] sm:$0xff]
        %v7825 = vld [vmem:[%s5 + $0x790] sm:$0xff]
        %v7826 = vld [vmem:[%s5 + $0x798] sm:$0xff]
        %v7827 = vld [vmem:[%s5 + $0x7a0] sm:$0xff]
        %v7828 = vld [vmem:[%s5 + $0x7a8] sm:$0xff]
        %v7829 = vld [vmem:[%s5 + $0x7b0] sm:$0xff]
        %v7830 = vld [vmem:[%s5 + $0x7b8] sm:$0xff]
        %v7831 = vld [vmem:[%s5 + $0x7c0] sm:$0xff]
        %v7832 = vld [vmem:[%s5 + $0x7c8] sm:$0xff]
        %v7833 = vld [vmem:[%s5 + $0x7d0] sm:$0xff]
        %v7834 = vld [vmem:[%s5 + $0x7d8] sm:$0xff]
        %v7835 = vld [vmem:[%s5 + $0x7e0] sm:$0xff]
        %v7836 = vld [vmem:[%s5 + $0x7e8] sm:$0xff]
        %v7837 = vld [vmem:[%s5 + $0x7f0] sm:$0xff]
        %v7838 = vld [vmem:[%s5 + $0x7f8] sm:$0xff]
        %v7839 = vld [vmem:[%s5 + $0x800] sm:$0xff]
        %v7840 = vld [vmem:[%s5 + $0x808] sm:$0xff]
        %v7841 = vld [vmem:[%s5 + $0x810] sm:$0xff]
        %v7842 = vld [vmem:[%s5 + $0x818] sm:$0xff]
        %v7843 = vld [vmem:[%s5 + $0x820] sm:$0xff]
        %v7844 = vld [vmem:[%s5 + $0x828] sm:$0xff]
        %v7845 = vld [vmem:[%s5 + $0x830] sm:$0xff]
        %v7846 = vld [vmem:[%s5 + $0x838] sm:$0xff]
        %v7847 = vld [vmem:[%s5 + $0x840] sm:$0xff]
        %v7848 = vld [vmem:[%s5 + $0x848] sm:$0xff]
        %v7849 = vld [vmem:[%s5 + $0x850] sm:$0xff]
        %v7850 = vld [vmem:[%s5 + $0x858] sm:$0xff]
        %v7851 = vld [vmem:[%s5 + $0x860] sm:$0xff]
        %v7852 = vld [vmem:[%s5 + $0x868] sm:$0xff]
        %v7853 = vld [vmem:[%s5 + $0x870] sm:$0xff]
        %v7854 = vld [vmem:[%s5 + $0x878] sm:$0xff]
        %v7855 = vld [vmem:[%s5 + $0x880] sm:$0xff]
        %v7856 = vld [vmem:[%s5 + $0x888] sm:$0xff]
        %v7857 = vld [vmem:[%s5 + $0x890] sm:$0xff]
        %v7858 = vld [vmem:[%s5 + $0x898] sm:$0xff]
        %v7859 = vld [vmem:[%s5 + $0x8a0] sm:$0xff]
        %v7860 = vld [vmem:[%s5 + $0x8a8] sm:$0xff]
        %v7861 = vld [vmem:[%s5 + $0x8b0] sm:$0xff]
        %v7862 = vld [vmem:[%s5 + $0x8b8] sm:$0xff]
        %v7863 = vld [vmem:[%s5 + $0x8c0] sm:$0xff]
        %v7864 = vld [vmem:[%s5 + $0x8c8] sm:$0xff]
        %v7865 = vld [vmem:[%s5 + $0x8d0] sm:$0xff]
        %v7866 = vld [vmem:[%s5 + $0x8d8] sm:$0xff]
        %v7867 = vld [vmem:[%s5 + $0x8e0] sm:$0xff]
        %v7868 = vld [vmem:[%s5 + $0x8e8] sm:$0xff]
        %v7869 = vld [vmem:[%s5 + $0x8f0] sm:$0xff]
        %v7870 = vld [vmem:[%s5 + $0x8f8] sm:$0xff]
        %v7871 = vld [vmem:[%s6] sm:$0xf]
        %v7873 = vshrl.u32 %v7576, 16
        %v7875 = vshll.u32 %v7576, 16
        %v7877 = vrot.slane %v7875, 1
        %v7878 = vor.u32 %v7873, %v7877
        %v7880 = vshll.u32 %v7577, 16
        %v7882 = vrot.slane %v7880, 1
        %v7883 = vsel %vm5806, %v7878, %v7882
        %v7884 = vshrl.u32 %v7577, 16
        %v7886 = vor.u32 %v7884, %v7882
        %v7889 = vrot.slane %v7576, 1
        %v7890 = vrot.slane %v7577, 1
        %v7891 = vsel %vm5916, %v7889, %v7890
        %vm7894 = vcmask 1044480
        %v7895 = vrot.slane %v7576, 3
        %v7896 = vrot.slane %v7577, 3
        %v7897 = vsel %vm7894, %v7895, %v7896
        %vm7900 = vsmask.f32 4352
        %v7901 = vrot.slane %v7873, 3
        %v7902 = vrot.slane %v7875, 4
        %v7903 = vor.u32 %v7901, %v7902
        %v7904 = vrot.slane %v7884, 3
        %v7905 = vrot.slane %v7880, 4
        %v7906 = vor.u32 %v7904, %v7905
        %v7907 = vsel %vm7900, %v7903, %v7906
        %vm7910 = vcmask 1043456
        %v7911 = vrot.slane %v7576, 4
        %v7912 = vrot.slane %v7577, 4
        %v7913 = vsel %vm7910, %v7911, %v7912
        %v7917 = vrot.slane %v7576, 6
        %v7918 = vrot.slane %v7577, 6
        %v7919 = vsel %vm6091, %v7917, %v7918
        %v7920 = vrot.slane %v7582, 6
        %v7921 = vsel %vm6091, %v7918, %v7920
        %v7924 = vrot.slane %v7873, 6
        %v7925 = vrot.slane %v7875, 7
        %v7926 = vor.u32 %v7924, %v7925
        %v7927 = vrot.slane %v7884, 6
        %v7928 = vrot.slane %v7880, 7
        %v7929 = vor.u32 %v7927, %v7928
        %v7930 = vsel %vm6137, %v7926, %v7929
        %v7931 = vshrl.u32 %v7582, 16
        %v7933 = vrot.slane %v7931, 6
        %v7934 = vshll.u32 %v7582, 16
        %v7936 = vrot.slane %v7934, 7
        %v7937 = vor.u32 %v7933, %v7936
        %v7938 = vsel %vm6137, %v7929, %v7937
        %v7941 = vrot.slane %v7576, 7
        %v7942 = vrot.slane %v7577, 7
        %v7943 = vsel %vm5960, %v7941, %v7942
        %v7944 = vrot.slane %v7582, 7
        %v7945 = vsel %vm5960, %v7942, %v7944
        %v8236 = vunpack.c.l.b16 %v7583
        %v8237 = vunpack.c.h.b16 %v7583
        %v8238 = vunpack.c.l.b16 %v7584
        %v8239 = vunpack.c.h.b16 %v7584
        %v8240 = vunpack.c.l.b16 %v7585
        %v8241 = vunpack.c.h.b16 %v7585
        %v8242 = vunpack.c.l.b16 %v7586
        %v8243 = vunpack.c.h.b16 %v7586
        %v8244 = vunpack.c.l.b16 %v7587
        %v8245 = vunpack.c.h.b16 %v7587
        %v8246 = vunpack.c.l.b16 %v7588
        %v8247 = vunpack.c.h.b16 %v7588
        %v8248 = vunpack.c.l.b16 %v7589
        %v8249 = vunpack.c.h.b16 %v7589
        %v8250 = vunpack.c.l.b16 %v7590
        %v8251 = vunpack.c.h.b16 %v7590
        %v8252 = vunpack.c.l.b16 %v7591
        %v8253 = vunpack.c.h.b16 %v7591
        %v8254 = vunpack.c.l.b16 %v7592
        %v8255 = vunpack.c.h.b16 %v7592
        %v8256 = vunpack.c.l.b16 %v7593
        %v8257 = vunpack.c.h.b16 %v7593
        %v8258 = vunpack.c.l.b16 %v7594
        %v8259 = vunpack.c.h.b16 %v7594
        %v8260 = vunpack.c.l.b16 %v7595
        %v8261 = vunpack.c.h.b16 %v7595
        %v8262 = vunpack.c.l.b16 %v7596
        %v8263 = vunpack.c.h.b16 %v7596
        %v8264 = vunpack.c.l.b16 %v7597
        %v8265 = vunpack.c.h.b16 %v7597
        %v8266 = vunpack.c.l.b16 %v7598
        %v8267 = vunpack.c.h.b16 %v7598
        %v8268 = vunpack.c.l.b16 %v7599
        %v8269 = vunpack.c.h.b16 %v7599
        %v8270 = vunpack.c.l.b16 %v7600
        %v8271 = vunpack.c.h.b16 %v7600
        %v8272 = vunpack.c.l.b16 %v7601
        %v8273 = vunpack.c.h.b16 %v7601
        %v8274 = vunpack.c.l.b16 %v7602
        %v8275 = vunpack.c.h.b16 %v7602
        %v8276 = vunpack.c.l.b16 %v7603
        %v8277 = vunpack.c.h.b16 %v7603
        %v8278 = vunpack.c.l.b16 %v7604
        %v8279 = vunpack.c.h.b16 %v7604
        %v8280 = vunpack.c.l.b16 %v7605
        %v8281 = vunpack.c.h.b16 %v7605
        %v8282 = vunpack.c.l.b16 %v7606
        %v8283 = vunpack.c.h.b16 %v7606
        %v8284 = vunpack.c.l.b16 %v7607
        %v8285 = vunpack.c.h.b16 %v7607
        %v8286 = vunpack.c.l.b16 %v7608
        %v8287 = vunpack.c.h.b16 %v7608
        %v8288 = vunpack.c.l.b16 %v7609
        %v8289 = vunpack.c.h.b16 %v7609
        %v8290 = vunpack.c.l.b16 %v7610
        %v8291 = vunpack.c.h.b16 %v7610
        %v8292 = vunpack.c.l.b16 %v7611
        %v8293 = vunpack.c.h.b16 %v7611
        %v8294 = vunpack.c.l.b16 %v7612
        %v8295 = vunpack.c.h.b16 %v7612
        %v8296 = vunpack.c.l.b16 %v7613
        %v8297 = vunpack.c.h.b16 %v7613
        %v8298 = vunpack.c.l.b16 %v7614
        %v8299 = vunpack.c.h.b16 %v7614
        %v8300 = vunpack.c.l.b16 %v7615
        %v8301 = vunpack.c.h.b16 %v7615
        %v8302 = vunpack.c.l.b16 %v7616
        %v8303 = vunpack.c.h.b16 %v7616
        %v8304 = vunpack.c.l.b16 %v7617
        %v8305 = vunpack.c.h.b16 %v7617
        %v8306 = vunpack.c.l.b16 %v7618
        %v8307 = vunpack.c.h.b16 %v7618
        %v8308 = vunpack.c.l.b16 %v7619
        %v8309 = vunpack.c.h.b16 %v7619
        %v8310 = vunpack.c.l.b16 %v7620
        %v8311 = vunpack.c.h.b16 %v7620
        %v8312 = vunpack.c.l.b16 %v7621
        %v8313 = vunpack.c.h.b16 %v7621
        %v8314 = vunpack.c.l.b16 %v7622
        %v8315 = vunpack.c.h.b16 %v7622
        %v8316 = vunpack.c.l.b16 %v7623
        %v8317 = vunpack.c.h.b16 %v7623
        %v8318 = vunpack.c.l.b16 %v7624
        %v8319 = vunpack.c.h.b16 %v7624
        %v8320 = vunpack.c.l.b16 %v7625
        %v8321 = vunpack.c.h.b16 %v7625
        %v8322 = vunpack.c.l.b16 %v7626
        %v8323 = vunpack.c.h.b16 %v7626
        %v8324 = vunpack.c.l.b16 %v7627
        %v8325 = vunpack.c.h.b16 %v7627
        %v8326 = vunpack.c.l.b16 %v7628
        %v8327 = vunpack.c.h.b16 %v7628
        %v8328 = vunpack.c.l.b16 %v7629
        %v8329 = vunpack.c.h.b16 %v7629
        %v8330 = vunpack.c.l.b16 %v7630
        %v8331 = vunpack.c.h.b16 %v7630
        %v8332 = vunpack.c.l.b16 %v7631
        %v8333 = vunpack.c.h.b16 %v7631
        %v8334 = vunpack.c.l.b16 %v7632
        %v8335 = vunpack.c.h.b16 %v7632
        %v8336 = vunpack.c.l.b16 %v7633
        %v8337 = vunpack.c.h.b16 %v7633
        %v8338 = vunpack.c.l.b16 %v7634
        %v8339 = vunpack.c.h.b16 %v7634
        %v8340 = vunpack.c.l.b16 %v7635
        %v8341 = vunpack.c.h.b16 %v7635
        %v8342 = vunpack.c.l.b16 %v7636
        %v8343 = vunpack.c.h.b16 %v7636
        %v8344 = vunpack.c.l.b16 %v7637
        %v8345 = vunpack.c.h.b16 %v7637
        %v8346 = vunpack.c.l.b16 %v7638
        %v8347 = vunpack.c.h.b16 %v7638
        %v8348 = vunpack.c.l.b16 %v7639
        %v8349 = vunpack.c.h.b16 %v7639
        %v8350 = vunpack.c.l.b16 %v7640
        %v8351 = vunpack.c.h.b16 %v7640
        %v8352 = vunpack.c.l.b16 %v7641
        %v8353 = vunpack.c.h.b16 %v7641
        %v8354 = vunpack.c.l.b16 %v7642
        %v8355 = vunpack.c.h.b16 %v7642
        %v8356 = vunpack.c.l.b16 %v7643
        %v8357 = vunpack.c.h.b16 %v7643
        %v8358 = vunpack.c.l.b16 %v7644
        %v8359 = vunpack.c.h.b16 %v7644
        %v8360 = vunpack.c.l.b16 %v7645
        %v8361 = vunpack.c.h.b16 %v7645
        %v8362 = vunpack.c.l.b16 %v7646
        %v8363 = vunpack.c.h.b16 %v7646
        %v8364 = vunpack.c.l.b16 %v7647
        %v8365 = vunpack.c.h.b16 %v7647
        %v8366 = vunpack.c.l.b16 %v7648
        %v8367 = vunpack.c.h.b16 %v7648
        %v8368 = vunpack.c.l.b16 %v7649
        %v8369 = vunpack.c.h.b16 %v7649
        %v8370 = vunpack.c.l.b16 %v7650
        %v8371 = vunpack.c.h.b16 %v7650
        %v8372 = vunpack.c.l.b16 %v7651
        %v8373 = vunpack.c.h.b16 %v7651
        %v8374 = vunpack.c.l.b16 %v7652
        %v8375 = vunpack.c.h.b16 %v7652
        %v8376 = vunpack.c.l.b16 %v7653
        %v8377 = vunpack.c.h.b16 %v7653
        %v8378 = vunpack.c.l.b16 %v7654
        %v8379 = vunpack.c.h.b16 %v7654
        %v8380 = vunpack.c.l.b16 %v7655
        %v8381 = vunpack.c.h.b16 %v7655
        %v8382 = vunpack.c.l.b16 %v7656
        %v8383 = vunpack.c.h.b16 %v7656
        %v8384 = vunpack.c.l.b16 %v7657
        %v8385 = vunpack.c.h.b16 %v7657
        %v8386 = vunpack.c.l.b16 %v7658
        %v8387 = vunpack.c.h.b16 %v7658
        %v8388 = vunpack.c.l.b16 %v7659
        %v8389 = vunpack.c.h.b16 %v7659
        %v8390 = vunpack.c.l.b16 %v7660
        %v8391 = vunpack.c.h.b16 %v7660
        %v8392 = vunpack.c.l.b16 %v7661
        %v8393 = vunpack.c.h.b16 %v7661
        %v8394 = vunpack.c.l.b16 %v7662
        %v8395 = vunpack.c.h.b16 %v7662
        %v8396 = vunpack.c.l.b16 %v7663
        %v8397 = vunpack.c.h.b16 %v7663
        %v8398 = vunpack.c.l.b16 %v7664
        %v8399 = vunpack.c.h.b16 %v7664
        %v8400 = vunpack.c.l.b16 %v7665
        %v8401 = vunpack.c.h.b16 %v7665
        %v8402 = vunpack.c.l.b16 %v7666
        %v8403 = vunpack.c.h.b16 %v7666
        %v8404 = vunpack.c.l.b16 %v7667
        %v8405 = vunpack.c.h.b16 %v7667
        %v8406 = vunpack.c.l.b16 %v7668
        %v8407 = vunpack.c.h.b16 %v7668
        %v8408 = vunpack.c.l.b16 %v7669
        %v8409 = vunpack.c.h.b16 %v7669
        %v8410 = vunpack.c.l.b16 %v7670
        %v8411 = vunpack.c.h.b16 %v7670
        %v8412 = vunpack.c.l.b16 %v7671
        %v8413 = vunpack.c.h.b16 %v7671
        %v8414 = vunpack.c.l.b16 %v7672
        %v8415 = vunpack.c.h.b16 %v7672
        %v8416 = vunpack.c.l.b16 %v7673
        %v8417 = vunpack.c.h.b16 %v7673
        %v8418 = vunpack.c.l.b16 %v7674
        %v8419 = vunpack.c.h.b16 %v7674
        %v8420 = vunpack.c.l.b16 %v7675
        %v8421 = vunpack.c.h.b16 %v7675
        %v8422 = vunpack.c.l.b16 %v7676
        %v8423 = vunpack.c.h.b16 %v7676
        %v8424 = vunpack.c.l.b16 %v7677
        %v8425 = vunpack.c.h.b16 %v7677
        %v8426 = vunpack.c.l.b16 %v7678
        %v8427 = vunpack.c.h.b16 %v7678
        %v8428 = vunpack.c.l.b16 %v7679
        %v8429 = vunpack.c.h.b16 %v7679
        %v8430 = vunpack.c.l.b16 %v7680
        %v8431 = vunpack.c.h.b16 %v7680
        %v8432 = vunpack.c.l.b16 %v7681
        %v8433 = vunpack.c.h.b16 %v7681
        %v8434 = vunpack.c.l.b16 %v7682
        %v8435 = vunpack.c.h.b16 %v7682
        %v8436 = vunpack.c.l.b16 %v7683
        %v8437 = vunpack.c.h.b16 %v7683
        %v8438 = vunpack.c.l.b16 %v7684
        %v8439 = vunpack.c.h.b16 %v7684
        %v8440 = vunpack.c.l.b16 %v7685
        %v8441 = vunpack.c.h.b16 %v7685
        %v8442 = vunpack.c.l.b16 %v7686
        %v8443 = vunpack.c.h.b16 %v7686
        %v8444 = vunpack.c.l.b16 %v7687
        %v8445 = vunpack.c.h.b16 %v7687
        %v8446 = vunpack.c.l.b16 %v7688
        %v8447 = vunpack.c.h.b16 %v7688
        %v8448 = vunpack.c.l.b16 %v7689
        %v8449 = vunpack.c.h.b16 %v7689
        %v8450 = vunpack.c.l.b16 %v7690
        %v8451 = vunpack.c.h.b16 %v7690
        %v8452 = vunpack.c.l.b16 %v7691
        %v8453 = vunpack.c.h.b16 %v7691
        %v8454 = vunpack.c.l.b16 %v7692
        %v8455 = vunpack.c.h.b16 %v7692
        %v8456 = vunpack.c.l.b16 %v7693
        %v8457 = vunpack.c.h.b16 %v7693
        %v8458 = vunpack.c.l.b16 %v7694
        %v8459 = vunpack.c.h.b16 %v7694
        %v8460 = vunpack.c.l.b16 %v7695
        %v8461 = vunpack.c.h.b16 %v7695
        %v8462 = vunpack.c.l.b16 %v7696
        %v8463 = vunpack.c.h.b16 %v7696
        %v8464 = vunpack.c.l.b16 %v7697
        %v8465 = vunpack.c.h.b16 %v7697
        %v8466 = vunpack.c.l.b16 %v7698
        %v8467 = vunpack.c.h.b16 %v7698
        %v8468 = vunpack.c.l.b16 %v7699
        %v8469 = vunpack.c.h.b16 %v7699
        %v8470 = vunpack.c.l.b16 %v7700
        %v8471 = vunpack.c.h.b16 %v7700
        %v8472 = vunpack.c.l.b16 %v7701
        %v8473 = vunpack.c.h.b16 %v7701
        %v8474 = vunpack.c.l.b16 %v7702
        %v8475 = vunpack.c.h.b16 %v7702
        %v8476 = vunpack.c.l.b16 %v7703
        %v8477 = vunpack.c.h.b16 %v7703
        %v8478 = vunpack.c.l.b16 %v7704
        %v8479 = vunpack.c.h.b16 %v7704
        %v8480 = vunpack.c.l.b16 %v7705
        %v8481 = vunpack.c.h.b16 %v7705
        %v8482 = vunpack.c.l.b16 %v7706
        %v8483 = vunpack.c.h.b16 %v7706
        %v8484 = vunpack.c.l.b16 %v7707
        %v8485 = vunpack.c.h.b16 %v7707
        %v8486 = vunpack.c.l.b16 %v7708
        %v8487 = vunpack.c.h.b16 %v7708
        %v8488 = vunpack.c.l.b16 %v7709
        %v8489 = vunpack.c.h.b16 %v7709
        %v8490 = vunpack.c.l.b16 %v7710
        %v8491 = vunpack.c.h.b16 %v7710
        %v8492 = vunpack.c.l.b16 %v7711
        %v8493 = vunpack.c.h.b16 %v7711
        %v8494 = vunpack.c.l.b16 %v7712
        %v8495 = vunpack.c.h.b16 %v7712
        %v8496 = vunpack.c.l.b16 %v7713
        %v8497 = vunpack.c.h.b16 %v7713
        %v8498 = vunpack.c.l.b16 %v7714
        %v8499 = vunpack.c.h.b16 %v7714
        %v8500 = vunpack.c.l.b16 %v7715
        %v8501 = vunpack.c.h.b16 %v7715
        %v8502 = vunpack.c.l.b16 %v7716
        %v8503 = vunpack.c.h.b16 %v7716
        %v8504 = vunpack.c.l.b16 %v7717
        %v8505 = vunpack.c.h.b16 %v7717
        %v8506 = vunpack.c.l.b16 %v7718
        %v8507 = vunpack.c.h.b16 %v7718
        %v8508 = vunpack.c.l.b16 %v7719
        %v8509 = vunpack.c.h.b16 %v7719
        %v8510 = vunpack.c.l.b16 %v7720
        %v8511 = vunpack.c.h.b16 %v7720
        %v8512 = vunpack.c.l.b16 %v7721
        %v8513 = vunpack.c.h.b16 %v7721
        %v8514 = vunpack.c.l.b16 %v7722
        %v8515 = vunpack.c.h.b16 %v7722
        %v8516 = vunpack.c.l.b16 %v7723
        %v8517 = vunpack.c.h.b16 %v7723
        %v8518 = vunpack.c.l.b16 %v7724
        %v8519 = vunpack.c.h.b16 %v7724
        %v8520 = vunpack.c.l.b16 %v7725
        %v8521 = vunpack.c.h.b16 %v7725
        %v8522 = vunpack.c.l.b16 %v7726
        %v8523 = vunpack.c.h.b16 %v7726
        %v8524 = vunpack.c.l.b16 %v7727
        %v8525 = vunpack.c.h.b16 %v7727
        %v8526 = vunpack.c.l.b16 %v7728
        %v8527 = vunpack.c.h.b16 %v7728
        %v8528 = vunpack.c.l.b16 %v7729
        %v8529 = vunpack.c.h.b16 %v7729
        %v8530 = vunpack.c.l.b16 %v7730
        %v8531 = vunpack.c.h.b16 %v7730
        %v8532 = vunpack.c.l.b16 %v7731
        %v8533 = vunpack.c.h.b16 %v7731
        %v8534 = vunpack.c.l.b16 %v7732
        %v8535 = vunpack.c.h.b16 %v7732
        %v8536 = vunpack.c.l.b16 %v7733
        %v8537 = vunpack.c.h.b16 %v7733
        %v8538 = vunpack.c.l.b16 %v7734
        %v8539 = vunpack.c.h.b16 %v7734
        %v8540 = vunpack.c.l.b16 %v7735
        %v8541 = vunpack.c.h.b16 %v7735
        %v8542 = vunpack.c.l.b16 %v7736
        %v8543 = vunpack.c.h.b16 %v7736
        %v8544 = vunpack.c.l.b16 %v7737
        %v8545 = vunpack.c.h.b16 %v7737
        %v8546 = vunpack.c.l.b16 %v7738
        %v8547 = vunpack.c.h.b16 %v7738
        %v8548 = vunpack.c.l.b16 %v7739
        %v8549 = vunpack.c.h.b16 %v7739
        %v8550 = vunpack.c.l.b16 %v7740
        %v8551 = vunpack.c.h.b16 %v7740
        %v8552 = vunpack.c.l.b16 %v7741
        %v8553 = vunpack.c.h.b16 %v7741
        %v8554 = vunpack.c.l.b16 %v7742
        %v8555 = vunpack.c.h.b16 %v7742
        %v8556 = vunpack.c.l.b16 %v7743
        %v8557 = vunpack.c.h.b16 %v7743
        %v8558 = vunpack.c.l.b16 %v7744
        %v8559 = vunpack.c.h.b16 %v7744
        %v8560 = vunpack.c.l.b16 %v7745
        %v8561 = vunpack.c.h.b16 %v7745
        %v8562 = vunpack.c.l.b16 %v7746
        %v8563 = vunpack.c.h.b16 %v7746
        %v8564 = vunpack.c.l.b16 %v7747
        %v8565 = vunpack.c.h.b16 %v7747
        %v8566 = vunpack.c.l.b16 %v7748
        %v8567 = vunpack.c.h.b16 %v7748
        %v8568 = vunpack.c.l.b16 %v7749
        %v8569 = vunpack.c.h.b16 %v7749
        %v8570 = vunpack.c.l.b16 %v7750
        %v8571 = vunpack.c.h.b16 %v7750
        %v8572 = vunpack.c.l.b16 %v7751
        %v8573 = vunpack.c.h.b16 %v7751
        %v8574 = vunpack.c.l.b16 %v7752
        %v8575 = vunpack.c.h.b16 %v7752
        %v8576 = vunpack.c.l.b16 %v7753
        %v8577 = vunpack.c.h.b16 %v7753
        %v8578 = vunpack.c.l.b16 %v7754
        %v8579 = vunpack.c.h.b16 %v7754
        %v8580 = vunpack.c.l.b16 %v7755
        %v8581 = vunpack.c.h.b16 %v7755
        %v8582 = vunpack.c.l.b16 %v7756
        %v8583 = vunpack.c.h.b16 %v7756
        %v8584 = vunpack.c.l.b16 %v7757
        %v8585 = vunpack.c.h.b16 %v7757
        %v8586 = vunpack.c.l.b16 %v7758
        %v8587 = vunpack.c.h.b16 %v7758
        %v8588 = vunpack.c.l.b16 %v7759
        %v8589 = vunpack.c.h.b16 %v7759
        %v8590 = vunpack.c.l.b16 %v7760
        %v8591 = vunpack.c.h.b16 %v7760
        %v8592 = vunpack.c.l.b16 %v7761
        %v8593 = vunpack.c.h.b16 %v7761
        %v8594 = vunpack.c.l.b16 %v7762
        %v8595 = vunpack.c.h.b16 %v7762
        %v8596 = vunpack.c.l.b16 %v7763
        %v8597 = vunpack.c.h.b16 %v7763
        %v8598 = vunpack.c.l.b16 %v7764
        %v8599 = vunpack.c.h.b16 %v7764
        %v8600 = vunpack.c.l.b16 %v7765
        %v8601 = vunpack.c.h.b16 %v7765
        %v8602 = vunpack.c.l.b16 %v7766
        %v8603 = vunpack.c.h.b16 %v7766
        %v8604 = vunpack.c.l.b16 %v7767
        %v8605 = vunpack.c.h.b16 %v7767
        %v8606 = vunpack.c.l.b16 %v7768
        %v8607 = vunpack.c.h.b16 %v7768
        %v8608 = vunpack.c.l.b16 %v7769
        %v8609 = vunpack.c.h.b16 %v7769
        %v8610 = vunpack.c.l.b16 %v7770
        %v8611 = vunpack.c.h.b16 %v7770
        %v8612 = vunpack.c.l.b16 %v7771
        %v8613 = vunpack.c.h.b16 %v7771
        %v8614 = vunpack.c.l.b16 %v7772
        %v8615 = vunpack.c.h.b16 %v7772
        %v8616 = vunpack.c.l.b16 %v7773
        %v8617 = vunpack.c.h.b16 %v7773
        %v8618 = vunpack.c.l.b16 %v7774
        %v8619 = vunpack.c.h.b16 %v7774
        %v8620 = vunpack.c.l.b16 %v7775
        %v8621 = vunpack.c.h.b16 %v7775
        %v8622 = vunpack.c.l.b16 %v7776
        %v8623 = vunpack.c.h.b16 %v7776
        %v8624 = vunpack.c.l.b16 %v7777
        %v8625 = vunpack.c.h.b16 %v7777
        %v8626 = vunpack.c.l.b16 %v7778
        %v8627 = vunpack.c.h.b16 %v7778
        %v8628 = vunpack.c.l.b16 %v7779
        %v8629 = vunpack.c.h.b16 %v7779
        %v8630 = vunpack.c.l.b16 %v7780
        %v8631 = vunpack.c.h.b16 %v7780
        %v8632 = vunpack.c.l.b16 %v7781
        %v8633 = vunpack.c.h.b16 %v7781
        %v8634 = vunpack.c.l.b16 %v7782
        %v8635 = vunpack.c.h.b16 %v7782
        %v8636 = vunpack.c.l.b16 %v7783
        %v8637 = vunpack.c.h.b16 %v7783
        %v8638 = vunpack.c.l.b16 %v7784
        %v8639 = vunpack.c.h.b16 %v7784
        %v8640 = vunpack.c.l.b16 %v7785
        %v8641 = vunpack.c.h.b16 %v7785
        %v8642 = vunpack.c.l.b16 %v7786
        %v8643 = vunpack.c.h.b16 %v7786
        %v8644 = vunpack.c.l.b16 %v7787
        %v8645 = vunpack.c.h.b16 %v7787
        %v8646 = vunpack.c.l.b16 %v7788
        %v8647 = vunpack.c.h.b16 %v7788
        %v8648 = vunpack.c.l.b16 %v7789
        %v8649 = vunpack.c.h.b16 %v7789
        %v8650 = vunpack.c.l.b16 %v7790
        %v8651 = vunpack.c.h.b16 %v7790
        %v8652 = vunpack.c.l.b16 %v7791
        %v8653 = vunpack.c.h.b16 %v7791
        %v8654 = vunpack.c.l.b16 %v7792
        %v8655 = vunpack.c.h.b16 %v7792
        %v8656 = vunpack.c.l.b16 %v7793
        %v8657 = vunpack.c.h.b16 %v7793
        %v8658 = vunpack.c.l.b16 %v7794
        %v8659 = vunpack.c.h.b16 %v7794
        %v8660 = vunpack.c.l.b16 %v7795
        %v8661 = vunpack.c.h.b16 %v7795
        %v8662 = vunpack.c.l.b16 %v7796
        %v8663 = vunpack.c.h.b16 %v7796
        %v8664 = vunpack.c.l.b16 %v7797
        %v8665 = vunpack.c.h.b16 %v7797
        %v8666 = vunpack.c.l.b16 %v7798
        %v8667 = vunpack.c.h.b16 %v7798
        %v8668 = vunpack.c.l.b16 %v7799
        %v8669 = vunpack.c.h.b16 %v7799
        %v8670 = vunpack.c.l.b16 %v7800
        %v8671 = vunpack.c.h.b16 %v7800
        %v8672 = vunpack.c.l.b16 %v7801
        %v8673 = vunpack.c.h.b16 %v7801
        %v8674 = vunpack.c.l.b16 %v7802
        %v8675 = vunpack.c.h.b16 %v7802
        %v8676 = vunpack.c.l.b16 %v7803
        %v8677 = vunpack.c.h.b16 %v7803
        %v8678 = vunpack.c.l.b16 %v7804
        %v8679 = vunpack.c.h.b16 %v7804
        %v8680 = vunpack.c.l.b16 %v7805
        %v8681 = vunpack.c.h.b16 %v7805
        %v8682 = vunpack.c.l.b16 %v7806
        %v8683 = vunpack.c.h.b16 %v7806
        %v8684 = vunpack.c.l.b16 %v7807
        %v8685 = vunpack.c.h.b16 %v7807
        %v8686 = vunpack.c.l.b16 %v7808
        %v8687 = vunpack.c.h.b16 %v7808
        %v8688 = vunpack.c.l.b16 %v7809
        %v8689 = vunpack.c.h.b16 %v7809
        %v8690 = vunpack.c.l.b16 %v7810
        %v8691 = vunpack.c.h.b16 %v7810
        %v8692 = vunpack.c.l.b16 %v7811
        %v8693 = vunpack.c.h.b16 %v7811
        %v8694 = vunpack.c.l.b16 %v7812
        %v8695 = vunpack.c.h.b16 %v7812
        %v8696 = vunpack.c.l.b16 %v7813
        %v8697 = vunpack.c.h.b16 %v7813
        %v8698 = vunpack.c.l.b16 %v7814
        %v8699 = vunpack.c.h.b16 %v7814
        %v8700 = vunpack.c.l.b16 %v7815
        %v8701 = vunpack.c.h.b16 %v7815
        %v8702 = vunpack.c.l.b16 %v7816
        %v8703 = vunpack.c.h.b16 %v7816
        %v8704 = vunpack.c.l.b16 %v7817
        %v8705 = vunpack.c.h.b16 %v7817
        %v8706 = vunpack.c.l.b16 %v7818
        %v8707 = vunpack.c.h.b16 %v7818
        %v8708 = vunpack.c.l.b16 %v7819
        %v8709 = vunpack.c.h.b16 %v7819
        %v8710 = vunpack.c.l.b16 %v7820
        %v8711 = vunpack.c.h.b16 %v7820
        %v8712 = vunpack.c.l.b16 %v7821
        %v8713 = vunpack.c.h.b16 %v7821
        %v8714 = vunpack.c.l.b16 %v7822
        %v8715 = vunpack.c.h.b16 %v7822
        %v8716 = vunpack.c.l.b16 %v7823
        %v8717 = vunpack.c.h.b16 %v7823
        %v8718 = vunpack.c.l.b16 %v7824
        %v8719 = vunpack.c.h.b16 %v7824
        %v8720 = vunpack.c.l.b16 %v7825
        %v8721 = vunpack.c.h.b16 %v7825
        %v8722 = vunpack.c.l.b16 %v7826
        %v8723 = vunpack.c.h.b16 %v7826
        %v8724 = vunpack.c.l.b16 %v7827
        %v8725 = vunpack.c.h.b16 %v7827
        %v8726 = vunpack.c.l.b16 %v7828
        %v8727 = vunpack.c.h.b16 %v7828
        %v8728 = vunpack.c.l.b16 %v7829
        %v8729 = vunpack.c.h.b16 %v7829
        %v8730 = vunpack.c.l.b16 %v7830
        %v8731 = vunpack.c.h.b16 %v7830
        %v8732 = vunpack.c.l.b16 %v7831
        %v8733 = vunpack.c.h.b16 %v7831
        %v8734 = vunpack.c.l.b16 %v7832
        %v8735 = vunpack.c.h.b16 %v7832
        %v8736 = vunpack.c.l.b16 %v7833
        %v8737 = vunpack.c.h.b16 %v7833
        %v8738 = vunpack.c.l.b16 %v7834
        %v8739 = vunpack.c.h.b16 %v7834
        %v8740 = vunpack.c.l.b16 %v7835
        %v8741 = vunpack.c.h.b16 %v7835
        %v8742 = vunpack.c.l.b16 %v7836
        %v8743 = vunpack.c.h.b16 %v7836
        %v8744 = vunpack.c.l.b16 %v7837
        %v8745 = vunpack.c.h.b16 %v7837
        %v8746 = vunpack.c.l.b16 %v7838
        %v8747 = vunpack.c.h.b16 %v7838
        %v8748 = vunpack.c.l.b16 %v7839
        %v8749 = vunpack.c.h.b16 %v7839
        %v8750 = vunpack.c.l.b16 %v7840
        %v8751 = vunpack.c.h.b16 %v7840
        %v8752 = vunpack.c.l.b16 %v7841
        %v8753 = vunpack.c.h.b16 %v7841
        %v8754 = vunpack.c.l.b16 %v7842
        %v8755 = vunpack.c.h.b16 %v7842
        %v8756 = vunpack.c.l.b16 %v7843
        %v8757 = vunpack.c.h.b16 %v7843
        %v8758 = vunpack.c.l.b16 %v7844
        %v8759 = vunpack.c.h.b16 %v7844
        %v8760 = vunpack.c.l.b16 %v7845
        %v8761 = vunpack.c.h.b16 %v7845
        %v8762 = vunpack.c.l.b16 %v7846
        %v8763 = vunpack.c.h.b16 %v7846
        %v8764 = vunpack.c.l.b16 %v7847
        %v8765 = vunpack.c.h.b16 %v7847
        %v8766 = vunpack.c.l.b16 %v7848
        %v8767 = vunpack.c.h.b16 %v7848
        %v8768 = vunpack.c.l.b16 %v7849
        %v8769 = vunpack.c.h.b16 %v7849
        %v8770 = vunpack.c.l.b16 %v7850
        %v8771 = vunpack.c.h.b16 %v7850
        %v8772 = vunpack.c.l.b16 %v7851
        %v8773 = vunpack.c.h.b16 %v7851
        %v8774 = vunpack.c.l.b16 %v7852
        %v8775 = vunpack.c.h.b16 %v7852
        %v8776 = vunpack.c.l.b16 %v7853
        %v8777 = vunpack.c.h.b16 %v7853
        %v8778 = vunpack.c.l.b16 %v7854
        %v8779 = vunpack.c.h.b16 %v7854
        %v8780 = vunpack.c.l.b16 %v7855
        %v8781 = vunpack.c.h.b16 %v7855
        %v8782 = vunpack.c.l.b16 %v7856
        %v8783 = vunpack.c.h.b16 %v7856
        %v8784 = vunpack.c.l.b16 %v7857
        %v8785 = vunpack.c.h.b16 %v7857
        %v8786 = vunpack.c.l.b16 %v7858
        %v8787 = vunpack.c.h.b16 %v7858
        %v8788 = vunpack.c.l.b16 %v7859
        %v8789 = vunpack.c.h.b16 %v7859
        %v8790 = vunpack.c.l.b16 %v7860
        %v8791 = vunpack.c.h.b16 %v7860
        %v8792 = vunpack.c.l.b16 %v7861
        %v8793 = vunpack.c.h.b16 %v7861
        %v8794 = vunpack.c.l.b16 %v7862
        %v8795 = vunpack.c.h.b16 %v7862
        %v8796 = vunpack.c.l.b16 %v7863
        %v8797 = vunpack.c.h.b16 %v7863
        %v8798 = vunpack.c.l.b16 %v7864
        %v8799 = vunpack.c.h.b16 %v7864
        %v8800 = vunpack.c.l.b16 %v7865
        %v8801 = vunpack.c.h.b16 %v7865
        %v8802 = vunpack.c.l.b16 %v7866
        %v8803 = vunpack.c.h.b16 %v7866
        %v8804 = vunpack.c.l.b16 %v7867
        %v8805 = vunpack.c.h.b16 %v7867
        %v8806 = vunpack.c.l.b16 %v7868
        %v8807 = vunpack.c.h.b16 %v7868
        %v8808 = vunpack.c.l.b16 %v7869
        %v8809 = vunpack.c.h.b16 %v7869
        %v8810 = vunpack.c.l.b16 %v7870
        %v8811 = vunpack.c.h.b16 %v7870
        %v8812 = vpack.c.b16 %v8240, %v8236
        %v8813 = vpack.c.b16 %v8241, %v8237
        %v8814 = vpack.c.b16 %v8242, %v8238
        %v8815 = vpack.c.b16 %v8243, %v8239
        %v8816 = vpack.c.b16 %v8248, %v8244
        %v8817 = vpack.c.b16 %v8249, %v8245
        %v8818 = vpack.c.b16 %v8250, %v8246
        %v8819 = vpack.c.b16 %v8251, %v8247
        %v8820 = vpack.c.b16 %v8256, %v8252
        %v8821 = vpack.c.b16 %v8257, %v8253
        %v8822 = vpack.c.b16 %v8258, %v8254
        %v8823 = vpack.c.b16 %v8259, %v8255
        %v8824 = vpack.c.b16 %v8264, %v8260
        %v8825 = vpack.c.b16 %v8265, %v8261
        %v8826 = vpack.c.b16 %v8266, %v8262
        %v8827 = vpack.c.b16 %v8267, %v8263
        %v8828 = vpack.c.b16 %v8272, %v8268
        %v8829 = vpack.c.b16 %v8273, %v8269
        %v8830 = vpack.c.b16 %v8274, %v8270
        %v8831 = vpack.c.b16 %v8275, %v8271
        %v8832 = vpack.c.b16 %v8280, %v8276
        %v8833 = vpack.c.b16 %v8281, %v8277
        %v8834 = vpack.c.b16 %v8282, %v8278
        %v8835 = vpack.c.b16 %v8283, %v8279
        %v8836 = vpack.c.b16 %v8288, %v8284
        %v8837 = vpack.c.b16 %v8289, %v8285
        %v8838 = vpack.c.b16 %v8290, %v8286
        %v8839 = vpack.c.b16 %v8291, %v8287
        %v8840 = vpack.c.b16 %v8296, %v8292
        %v8841 = vpack.c.b16 %v8297, %v8293
        %v8842 = vpack.c.b16 %v8298, %v8294
        %v8843 = vpack.c.b16 %v8299, %v8295
        %v8844 = vpack.c.b16 %v8304, %v8300
        %v8845 = vpack.c.b16 %v8305, %v8301
        %v8846 = vpack.c.b16 %v8306, %v8302
        %v8847 = vpack.c.b16 %v8307, %v8303
        %v8848 = vpack.c.b16 %v8312, %v8308
        %v8849 = vpack.c.b16 %v8313, %v8309
        %v8850 = vpack.c.b16 %v8314, %v8310
        %v8851 = vpack.c.b16 %v8315, %v8311
        %v8852 = vpack.c.b16 %v8320, %v8316
        %v8853 = vpack.c.b16 %v8321, %v8317
        %v8854 = vpack.c.b16 %v8322, %v8318
        %v8855 = vpack.c.b16 %v8323, %v8319
        %v8856 = vpack.c.b16 %v8328, %v8324
        %v8857 = vpack.c.b16 %v8329, %v8325
        %v8858 = vpack.c.b16 %v8330, %v8326
        %v8859 = vpack.c.b16 %v8331, %v8327
        %v8860 = vpack.c.b16 %v8336, %v8332
        %v8861 = vpack.c.b16 %v8337, %v8333
        %v8862 = vpack.c.b16 %v8338, %v8334
        %v8863 = vpack.c.b16 %v8339, %v8335
        %v8864 = vpack.c.b16 %v8344, %v8340
        %v8865 = vpack.c.b16 %v8345, %v8341
        %v8866 = vpack.c.b16 %v8346, %v8342
        %v8867 = vpack.c.b16 %v8347, %v8343
        %v8868 = vpack.c.b16 %v8352, %v8348
        %v8869 = vpack.c.b16 %v8353, %v8349
        %v8870 = vpack.c.b16 %v8354, %v8350
        %v8871 = vpack.c.b16 %v8355, %v8351
        %v8872 = vpack.c.b16 %v8360, %v8356
        %v8873 = vpack.c.b16 %v8361, %v8357
        %v8874 = vpack.c.b16 %v8362, %v8358
        %v8875 = vpack.c.b16 %v8363, %v8359
        %v8876 = vpack.c.b16 %v8368, %v8364
        %v8877 = vpack.c.b16 %v8369, %v8365
        %v8878 = vpack.c.b16 %v8370, %v8366
        %v8879 = vpack.c.b16 %v8371, %v8367
        %v8880 = vpack.c.b16 %v8376, %v8372
        %v8881 = vpack.c.b16 %v8377, %v8373
        %v8882 = vpack.c.b16 %v8378, %v8374
        %v8883 = vpack.c.b16 %v8379, %v8375
        %v8884 = vpack.c.b16 %v8384, %v8380
        %v8885 = vpack.c.b16 %v8385, %v8381
        %v8886 = vpack.c.b16 %v8386, %v8382
        %v8887 = vpack.c.b16 %v8387, %v8383
        %v8888 = vpack.c.b16 %v8392, %v8388
        %v8889 = vpack.c.b16 %v8393, %v8389
        %v8890 = vpack.c.b16 %v8394, %v8390
        %v8891 = vpack.c.b16 %v8395, %v8391
        %v8892 = vpack.c.b16 %v8400, %v8396
        %v8893 = vpack.c.b16 %v8401, %v8397
        %v8894 = vpack.c.b16 %v8402, %v8398
        %v8895 = vpack.c.b16 %v8403, %v8399
        %v8896 = vpack.c.b16 %v8408, %v8404
        %v8897 = vpack.c.b16 %v8409, %v8405
        %v8898 = vpack.c.b16 %v8410, %v8406
        %v8899 = vpack.c.b16 %v8411, %v8407
        %v8900 = vpack.c.b16 %v8416, %v8412
        %v8901 = vpack.c.b16 %v8417, %v8413
        %v8902 = vpack.c.b16 %v8418, %v8414
        %v8903 = vpack.c.b16 %v8419, %v8415
        %v8904 = vpack.c.b16 %v8424, %v8420
        %v8905 = vpack.c.b16 %v8425, %v8421
        %v8906 = vpack.c.b16 %v8426, %v8422
        %v8907 = vpack.c.b16 %v8427, %v8423
        %v8908 = vpack.c.b16 %v8432, %v8428
        %v8909 = vpack.c.b16 %v8433, %v8429
        %v8910 = vpack.c.b16 %v8434, %v8430
        %v8911 = vpack.c.b16 %v8435, %v8431
        %v8912 = vpack.c.b16 %v8440, %v8436
        %v8913 = vpack.c.b16 %v8441, %v8437
        %v8914 = vpack.c.b16 %v8442, %v8438
        %v8915 = vpack.c.b16 %v8443, %v8439
        %v8916 = vpack.c.b16 %v8448, %v8444
        %v8917 = vpack.c.b16 %v8449, %v8445
        %v8918 = vpack.c.b16 %v8450, %v8446
        %v8919 = vpack.c.b16 %v8451, %v8447
        %v8920 = vpack.c.b16 %v8456, %v8452
        %v8921 = vpack.c.b16 %v8457, %v8453
        %v8922 = vpack.c.b16 %v8458, %v8454
        %v8923 = vpack.c.b16 %v8459, %v8455
        %v8924 = vpack.c.b16 %v8464, %v8460
        %v8925 = vpack.c.b16 %v8465, %v8461
        %v8926 = vpack.c.b16 %v8466, %v8462
        %v8927 = vpack.c.b16 %v8467, %v8463
        %v8928 = vpack.c.b16 %v8472, %v8468
        %v8929 = vpack.c.b16 %v8473, %v8469
        %v8930 = vpack.c.b16 %v8474, %v8470
        %v8931 = vpack.c.b16 %v8475, %v8471
        %v8932 = vpack.c.b16 %v8480, %v8476
        %v8933 = vpack.c.b16 %v8481, %v8477
        %v8934 = vpack.c.b16 %v8482, %v8478
        %v8935 = vpack.c.b16 %v8483, %v8479
        %v8936 = vpack.c.b16 %v8488, %v8484
        %v8937 = vpack.c.b16 %v8489, %v8485
        %v8938 = vpack.c.b16 %v8490, %v8486
        %v8939 = vpack.c.b16 %v8491, %v8487
        %v8940 = vpack.c.b16 %v8496, %v8492
        %v8941 = vpack.c.b16 %v8497, %v8493
        %v8942 = vpack.c.b16 %v8498, %v8494
        %v8943 = vpack.c.b16 %v8499, %v8495
        %v8944 = vpack.c.b16 %v8504, %v8500
        %v8945 = vpack.c.b16 %v8505, %v8501
        %v8946 = vpack.c.b16 %v8506, %v8502
        %v8947 = vpack.c.b16 %v8507, %v8503
        %v8948 = vpack.c.b16 %v8512, %v8508
        %v8949 = vpack.c.b16 %v8513, %v8509
        %v8950 = vpack.c.b16 %v8514, %v8510
        %v8951 = vpack.c.b16 %v8515, %v8511
        %v8952 = vpack.c.b16 %v8520, %v8516
        %v8953 = vpack.c.b16 %v8521, %v8517
        %v8954 = vpack.c.b16 %v8522, %v8518
        %v8955 = vpack.c.b16 %v8523, %v8519
        %v8956 = vpack.c.b16 %v8528, %v8524
        %v8957 = vpack.c.b16 %v8529, %v8525
        %v8958 = vpack.c.b16 %v8530, %v8526
        %v8959 = vpack.c.b16 %v8531, %v8527
        %v8960 = vpack.c.b16 %v8536, %v8532
        %v8961 = vpack.c.b16 %v8537, %v8533
        %v8962 = vpack.c.b16 %v8538, %v8534
        %v8963 = vpack.c.b16 %v8539, %v8535
        %v8964 = vpack.c.b16 %v8544, %v8540
        %v8965 = vpack.c.b16 %v8545, %v8541
        %v8966 = vpack.c.b16 %v8546, %v8542
        %v8967 = vpack.c.b16 %v8547, %v8543
        %v8968 = vpack.c.b16 %v8552, %v8548
        %v8969 = vpack.c.b16 %v8553, %v8549
        %v8970 = vpack.c.b16 %v8554, %v8550
        %v8971 = vpack.c.b16 %v8555, %v8551
        %v8972 = vpack.c.b16 %v8560, %v8556
        %v8973 = vpack.c.b16 %v8561, %v8557
        %v8974 = vpack.c.b16 %v8562, %v8558
        %v8975 = vpack.c.b16 %v8563, %v8559
        %v8976 = vpack.c.b16 %v8568, %v8564
        %v8977 = vpack.c.b16 %v8569, %v8565
        %v8978 = vpack.c.b16 %v8570, %v8566
        %v8979 = vpack.c.b16 %v8571, %v8567
        %v8980 = vpack.c.b16 %v8576, %v8572
        %v8981 = vpack.c.b16 %v8577, %v8573
        %v8982 = vpack.c.b16 %v8578, %v8574
        %v8983 = vpack.c.b16 %v8579, %v8575
        %v8984 = vpack.c.b16 %v8584, %v8580
        %v8985 = vpack.c.b16 %v8585, %v8581
        %v8986 = vpack.c.b16 %v8586, %v8582
        %v8987 = vpack.c.b16 %v8587, %v8583
        %v8988 = vpack.c.b16 %v8592, %v8588
        %v8989 = vpack.c.b16 %v8593, %v8589
        %v8990 = vpack.c.b16 %v8594, %v8590
        %v8991 = vpack.c.b16 %v8595, %v8591
        %v8992 = vpack.c.b16 %v8600, %v8596
        %v8993 = vpack.c.b16 %v8601, %v8597
        %v8994 = vpack.c.b16 %v8602, %v8598
        %v8995 = vpack.c.b16 %v8603, %v8599
        %v8996 = vpack.c.b16 %v8608, %v8604
        %v8997 = vpack.c.b16 %v8609, %v8605
        %v8998 = vpack.c.b16 %v8610, %v8606
        %v8999 = vpack.c.b16 %v8611, %v8607
        %v9000 = vpack.c.b16 %v8616, %v8612
        %v9001 = vpack.c.b16 %v8617, %v8613
        %v9002 = vpack.c.b16 %v8618, %v8614
        %v9003 = vpack.c.b16 %v8619, %v8615
        %v9004 = vpack.c.b16 %v8624, %v8620
        %v9005 = vpack.c.b16 %v8625, %v8621
        %v9006 = vpack.c.b16 %v8626, %v8622
        %v9007 = vpack.c.b16 %v8627, %v8623
        %v9008 = vpack.c.b16 %v8632, %v8628
        %v9009 = vpack.c.b16 %v8633, %v8629
        %v9010 = vpack.c.b16 %v8634, %v8630
        %v9011 = vpack.c.b16 %v8635, %v8631
        %v9012 = vpack.c.b16 %v8640, %v8636
        %v9013 = vpack.c.b16 %v8641, %v8637
        %v9014 = vpack.c.b16 %v8642, %v8638
        %v9015 = vpack.c.b16 %v8643, %v8639
        %v9016 = vpack.c.b16 %v8648, %v8644
        %v9017 = vpack.c.b16 %v8649, %v8645
        %v9018 = vpack.c.b16 %v8650, %v8646
        %v9019 = vpack.c.b16 %v8651, %v8647
        %v9020 = vpack.c.b16 %v8656, %v8652
        %v9021 = vpack.c.b16 %v8657, %v8653
        %v9022 = vpack.c.b16 %v8658, %v8654
        %v9023 = vpack.c.b16 %v8659, %v8655
        %v9024 = vpack.c.b16 %v8664, %v8660
        %v9025 = vpack.c.b16 %v8665, %v8661
        %v9026 = vpack.c.b16 %v8666, %v8662
        %v9027 = vpack.c.b16 %v8667, %v8663
        %v9028 = vpack.c.b16 %v8672, %v8668
        %v9029 = vpack.c.b16 %v8673, %v8669
        %v9030 = vpack.c.b16 %v8674, %v8670
        %v9031 = vpack.c.b16 %v8675, %v8671
        %v9032 = vpack.c.b16 %v8680, %v8676
        %v9033 = vpack.c.b16 %v8681, %v8677
        %v9034 = vpack.c.b16 %v8682, %v8678
        %v9035 = vpack.c.b16 %v8683, %v8679
        %v9036 = vpack.c.b16 %v8688, %v8684
        %v9037 = vpack.c.b16 %v8689, %v8685
        %v9038 = vpack.c.b16 %v8690, %v8686
        %v9039 = vpack.c.b16 %v8691, %v8687
        %v9040 = vpack.c.b16 %v8696, %v8692
        %v9041 = vpack.c.b16 %v8697, %v8693
        %v9042 = vpack.c.b16 %v8698, %v8694
        %v9043 = vpack.c.b16 %v8699, %v8695
        %v9044 = vpack.c.b16 %v8704, %v8700
        %v9045 = vpack.c.b16 %v8705, %v8701
        %v9046 = vpack.c.b16 %v8706, %v8702
        %v9047 = vpack.c.b16 %v8707, %v8703
        %v9048 = vpack.c.b16 %v8712, %v8708
        %v9049 = vpack.c.b16 %v8713, %v8709
        %v9050 = vpack.c.b16 %v8714, %v8710
        %v9051 = vpack.c.b16 %v8715, %v8711
        %v9052 = vpack.c.b16 %v8720, %v8716
        %v9053 = vpack.c.b16 %v8721, %v8717
        %v9054 = vpack.c.b16 %v8722, %v8718
        %v9055 = vpack.c.b16 %v8723, %v8719
        %v9056 = vpack.c.b16 %v8728, %v8724
        %v9057 = vpack.c.b16 %v8729, %v8725
        %v9058 = vpack.c.b16 %v8730, %v8726
        %v9059 = vpack.c.b16 %v8731, %v8727
        %v9060 = vpack.c.b16 %v8736, %v8732
        %v9061 = vpack.c.b16 %v8737, %v8733
        %v9062 = vpack.c.b16 %v8738, %v8734
        %v9063 = vpack.c.b16 %v8739, %v8735
        %v9064 = vpack.c.b16 %v8744, %v8740
        %v9065 = vpack.c.b16 %v8745, %v8741
        %v9066 = vpack.c.b16 %v8746, %v8742
        %v9067 = vpack.c.b16 %v8747, %v8743
        %v9068 = vpack.c.b16 %v8752, %v8748
        %v9069 = vpack.c.b16 %v8753, %v8749
        %v9070 = vpack.c.b16 %v8754, %v8750
        %v9071 = vpack.c.b16 %v8755, %v8751
        %v9072 = vpack.c.b16 %v8760, %v8756
        %v9073 = vpack.c.b16 %v8761, %v8757
        %v9074 = vpack.c.b16 %v8762, %v8758
        %v9075 = vpack.c.b16 %v8763, %v8759
        %v9076 = vpack.c.b16 %v8768, %v8764
        %v9077 = vpack.c.b16 %v8769, %v8765
        %v9078 = vpack.c.b16 %v8770, %v8766
        %v9079 = vpack.c.b16 %v8771, %v8767
        %v9080 = vpack.c.b16 %v8776, %v8772
        %v9081 = vpack.c.b16 %v8777, %v8773
        %v9082 = vpack.c.b16 %v8778, %v8774
        %v9083 = vpack.c.b16 %v8779, %v8775
        %v9084 = vpack.c.b16 %v8784, %v8780
        %v9085 = vpack.c.b16 %v8785, %v8781
        %v9086 = vpack.c.b16 %v8786, %v8782
        %v9087 = vpack.c.b16 %v8787, %v8783
        %v9088 = vpack.c.b16 %v8792, %v8788
        %v9089 = vpack.c.b16 %v8793, %v8789
        %v9090 = vpack.c.b16 %v8794, %v8790
        %v9091 = vpack.c.b16 %v8795, %v8791
        %v9092 = vpack.c.b16 %v8800, %v8796
        %v9093 = vpack.c.b16 %v8801, %v8797
        %v9094 = vpack.c.b16 %v8802, %v8798
        %v9095 = vpack.c.b16 %v8803, %v8799
        %v9096 = vpack.c.b16 %v8808, %v8804
        %v9097 = vpack.c.b16 %v8809, %v8805
        %v9098 = vpack.c.b16 %v8810, %v8806
        %v9099 = vpack.c.b16 %v8811, %v8807
        %9388 = vmatprep.subr.bf16.mxu0 %v8813
        %9389 = vmatpush1.bf16.msra.mxu0 %v8812
        %9390 = vmatprep.subr.bf16.mxu0 %v8817
        %9391 = vmatpush1.bf16.msra.mxu0 %v8816
        %9392 = vmatprep.subr.bf16.mxu0 %v8821
        %9393 = vmatpush1.bf16.msra.mxu0 %v8820
        %9394 = vmatprep.subr.bf16.mxu0 %v8825
        %9395 = vmatpush1.bf16.msra.mxu0 %v8824
        %9396 = vmatprep.subr.bf16.mxu0 %v8829
        %9397 = vmatpush1.bf16.msra.mxu0 %v8828
        %9398 = vmatprep.subr.bf16.mxu0 %v8833
        %9399 = vmatpush1.bf16.msra.mxu0 %v8832
        %9400 = vmatprep.subr.bf16.mxu0 %v8837
        %9401 = vmatpush1.bf16.msra.mxu0 %v8836
        %9402 = vmatprep.subr.bf16.mxu0 %v8841
        %9403 = vmatpush1.bf16.msra.mxu0 %v8840
        %9404 = vmatprep.subr.bf16.mxu0 %v8845
        %9405 = vmatpush1.bf16.msra.mxu0 %v8844
        %9406 = vmatprep.subr.bf16.mxu0 %v8849
        %9407 = vmatpush1.bf16.msra.mxu0 %v8848
        %9408 = vmatprep.subr.bf16.mxu0 %v8853
        %9409 = vmatpush1.bf16.msra.mxu0 %v8852
        %9410 = vmatprep.subr.bf16.mxu0 %v8857
        %9411 = vmatpush1.bf16.msra.mxu0 %v8856
        %9412 = vmatprep.subr.bf16.mxu0 %v8861
        %9413 = vmatpush1.bf16.msra.mxu0 %v8860
        %9414 = vmatprep.subr.bf16.mxu0 %v8865
        %9415 = vmatpush1.bf16.msra.mxu0 %v8864
        %9416 = vmatprep.subr.bf16.mxu0 %v8869
        %9417 = vmatpush1.bf16.msra.mxu0 %v8868
        %9418 = vmatprep.subr.bf16.mxu0 %v8873
        %9419 = vmatpush1.bf16.msra.mxu0 %v8872
        %9420 = vmatprep.mubr.bf16.mxu0 %v7883
        %9421 = vmatmul.mubr.bf16.gmra.mrb[0].mxu0 %v7576
        %v9422 = vpop.f32.mrb[0].mxu0
        %v9423 = vadd.f32 0.0, %v9422
        %v9424 = vpop.f32.mrb[0].mxu0
        %v9425 = vadd.f32 0.0, %v9424
        %v9426 = vpop.f32.mrb[0].mxu0
        %v9427 = vadd.f32 0.0, %v9426
        %v9428 = vpop.f32.mrb[0].mxu0
        %v9429 = vadd.f32 0.0, %v9428
        %9430 = vmatprep.mubr.bf16.mxu0 %v7886
        %9431 = vmatmul.mubr.bf16.gmra.mrb[0].mxu0 %v7577
        %v9432 = vpop.f32.mrb[0].mxu0
        %v9433 = vadd.f32 0.0, %v9432
        %v9434 = vpop.f32.mrb[0].mxu0
        %v9435 = vadd.f32 0.0, %v9434
        %v9436 = vpop.f32.mrb[0].mxu0
        %v9437 = vpop.f32.mrb[0].mxu0
        %9438 = vdwg.mxu0
        %9439 = vmatprep.subr.bf16.mxu0 %v8877
        %9440 = vmatpush1.bf16.msra.mxu0 %v8876
        %9441 = vmatprep.subr.bf16.mxu0 %v8881
        %9442 = vmatpush1.bf16.msra.mxu0 %v8880
        %9443 = vmatprep.subr.bf16.mxu0 %v8885
        %9444 = vmatpush1.bf16.msra.mxu0 %v8884
        %9445 = vmatprep.subr.bf16.mxu0 %v8889
        %9446 = vmatpush1.bf16.msra.mxu0 %v8888
        %9447 = vmatprep.subr.bf16.mxu0 %v8893
        %9448 = vmatpush1.bf16.msra.mxu0 %v8892
        %9449 = vmatprep.subr.bf16.mxu0 %v8897
        %9450 = vmatpush1.bf16.msra.mxu0 %v8896
        %9451 = vmatprep.subr.bf16.mxu0 %v8901
        %9452 = vmatpush1.bf16.msra.mxu0 %v8900
        %9453 = vmatprep.subr.bf16.mxu0 %v8905
        %9454 = vmatpush1.bf16.msra.mxu0 %v8904
        %9455 = vmatprep.subr.bf16.mxu0 %v8909
        %9456 = vmatpush1.bf16.msra.mxu0 %v8908
        %9457 = vmatprep.subr.bf16.mxu0 %v8913
        %9458 = vmatpush1.bf16.msra.mxu0 %v8912
        %9459 = vmatprep.subr.bf16.mxu0 %v8917
        %9460 = vmatpush1.bf16.msra.mxu0 %v8916
        %9461 = vmatprep.subr.bf16.mxu0 %v8921
        %9462 = vmatpush1.bf16.msra.mxu0 %v8920
        %9463 = vmatprep.subr.bf16.mxu0 %v8925
        %9464 = vmatpush1.bf16.msra.mxu0 %v8924
        %9465 = vmatprep.subr.bf16.mxu0 %v8929
        %9466 = vmatpush1.bf16.msra.mxu0 %v8928
        %9467 = vmatprep.subr.bf16.mxu0 %v8933
        %9468 = vmatpush1.bf16.msra.mxu0 %v8932
        %9469 = vmatprep.subr.bf16.mxu0 %v8937
        %9470 = vmatpush1.bf16.msra.mxu0 %v8936
        %9471 = vmatprep.mubr.bf16.mxu0 %v7897
        %9472 = vmatmul.mubr.bf16.gmra.mrb[0].mxu0 %v7891
        %v9473 = vpop.f32.mrb[0].mxu0
        %v9474 = vadd.f32 %v9423, %v9473
        %v9475 = vpop.f32.mrb[0].mxu0
        %v9476 = vadd.f32 %v9425, %v9475
        %v9477 = vpop.f32.mrb[0].mxu0
        %v9478 = vadd.f32 %v9427, %v9477
        %v9479 = vpop.f32.mrb[0].mxu0
        %v9480 = vadd.f32 %v9429, %v9479
        %9481 = vmatprep.mubr.bf16.mxu0 %v7896
        %9482 = vmatmul.mubr.bf16.gmra.mrb[0].mxu0 %v7890
        %v9483 = vpop.f32.mrb[0].mxu0
        %v9484 = vadd.f32 %v9433, %v9483
        %v9485 = vpop.f32.mrb[0].mxu0
        %v9486 = vadd.f32 %v9435, %v9485
        %v9487 = vpop.f32.mrb[0].mxu0
        %v9488 = vpop.f32.mrb[0].mxu0
        %9489 = vdwg.mxu0
        %9490 = vmatprep.subr.bf16.mxu0 %v8941
        %9491 = vmatpush1.bf16.msra.mxu0 %v8940
        %9492 = vmatprep.subr.bf16.mxu0 %v8945
        %9493 = vmatpush1.bf16.msra.mxu0 %v8944
        %9494 = vmatprep.subr.bf16.mxu0 %v8949
        %9495 = vmatpush1.bf16.msra.mxu0 %v8948
        %9496 = vmatprep.subr.bf16.mxu0 %v8953
        %9497 = vmatpush1.bf16.msra.mxu0 %v8952
        %9498 = vmatprep.subr.bf16.mxu0 %v8957
        %9499 = vmatpush1.bf16.msra.mxu0 %v8956
        %9500 = vmatprep.subr.bf16.mxu0 %v8961
        %9501 = vmatpush1.bf16.msra.mxu0 %v8960
        %9502 = vmatprep.subr.bf16.mxu0 %v8965
        %9503 = vmatpush1.bf16.msra.mxu0 %v8964
        %9504 = vmatprep.subr.bf16.mxu0 %v8969
        %9505 = vmatpush1.bf16.msra.mxu0 %v8968
        %9506 = vmatprep.subr.bf16.mxu0 %v8973
        %9507 = vmatpush1.bf16.msra.mxu0 %v8972
        %9508 = vmatprep.subr.bf16.mxu0 %v8977
        %9509 = vmatpush1.bf16.msra.mxu0 %v8976
        %9510 = vmatprep.subr.bf16.mxu0 %v8981
        %9511 = vmatpush1.bf16.msra.mxu0 %v8980
        %9512 = vmatprep.subr.bf16.mxu0 %v8985
        %9513 = vmatpush1.bf16.msra.mxu0 %v8984
        %9514 = vmatprep.subr.bf16.mxu0 %v8989
        %9515 = vmatpush1.bf16.msra.mxu0 %v8988
        %9516 = vmatprep.subr.bf16.mxu0 %v8993
        %9517 = vmatpush1.bf16.msra.mxu0 %v8992
        %9518 = vmatprep.subr.bf16.mxu0 %v8997
        %9519 = vmatpush1.bf16.msra.mxu0 %v8996
        %9520 = vmatprep.subr.bf16.mxu0 %v9001
        %9521 = vmatpush1.bf16.msra.mxu0 %v9000
        %9522 = vmatprep.mubr.bf16.mxu0 %v7913
        %9523 = vmatmul.mubr.bf16.gmra.mrb[0].mxu0 %v7907
        %v9524 = vpop.f32.mrb[0].mxu0
        %v9525 = vadd.f32 %v9474, %v9524
        %v9526 = vpop.f32.mrb[0].mxu0
        %v9527 = vadd.f32 %v9476, %v9526
        %v9528 = vpop.f32.mrb[0].mxu0
        %v9529 = vadd.f32 %v9478, %v9528
        %v9530 = vpop.f32.mrb[0].mxu0
        %v9531 = vadd.f32 %v9480, %v9530
        %9532 = vmatprep.mubr.bf16.mxu0 %v7912
        %9533 = vmatmul.mubr.bf16.gmra.mrb[0].mxu0 %v7906
        %v9534 = vpop.f32.mrb[0].mxu0
        %v9535 = vadd.f32 %v9484, %v9534
        %v9536 = vpop.f32.mrb[0].mxu0
        %v9537 = vadd.f32 %v9486, %v9536
        %v9538 = vpop.f32.mrb[0].mxu0
        %v9539 = vpop.f32.mrb[0].mxu0
        %9540 = vdwg.mxu0
        %9541 = vmatprep.subr.bf16.mxu0 %v9005
        %9542 = vmatpush1.bf16.msra.mxu0 %v9004
        %9543 = vmatprep.subr.bf16.mxu0 %v9009
        %9544 = vmatpush1.bf16.msra.mxu0 %v9008
        %9545 = vmatprep.subr.bf16.mxu0 %v9013
        %9546 = vmatpush1.bf16.msra.mxu0 %v9012
        %9547 = vmatprep.subr.bf16.mxu0 %v9017
        %9548 = vmatpush1.bf16.msra.mxu0 %v9016
        %9549 = vmatprep.subr.bf16.mxu0 %v9021
        %9550 = vmatpush1.bf16.msra.mxu0 %v9020
        %9551 = vmatprep.subr.bf16.mxu0 %v9025
        %9552 = vmatpush1.bf16.msra.mxu0 %v9024
        %9553 = vmatprep.subr.bf16.mxu0 %v9029
        %9554 = vmatpush1.bf16.msra.mxu0 %v9028
        %9555 = vmatprep.subr.bf16.mxu0 %v9033
        %9556 = vmatpush1.bf16.msra.mxu0 %v9032
        %9557 = vmatprep.subr.bf16.mxu0 %v9037
        %9558 = vmatpush1.bf16.msra.mxu0 %v9036
        %9559 = vmatprep.subr.bf16.mxu0 %v9041
        %9560 = vmatpush1.bf16.msra.mxu0 %v9040
        %9561 = vmatprep.subr.bf16.mxu0 %v9045
        %9562 = vmatpush1.bf16.msra.mxu0 %v9044
        %9563 = vmatprep.subr.bf16.mxu0 %v9049
        %9564 = vmatpush1.bf16.msra.mxu0 %v9048
        %9565 = vmatprep.subr.bf16.mxu0 %v9053
        %9566 = vmatpush1.bf16.msra.mxu0 %v9052
        %9567 = vmatprep.subr.bf16.mxu0 %v9057
        %9568 = vmatpush1.bf16.msra.mxu0 %v9056
        %9569 = vmatprep.subr.bf16.mxu0 %v9061
        %9570 = vmatpush1.bf16.msra.mxu0 %v9060
        %9571 = vmatprep.subr.bf16.mxu0 %v9065
        %9572 = vmatpush1.bf16.msra.mxu0 %v9064
        %9573 = vmatprep.mubr.bf16.mxu0 %v7930
        %9574 = vmatmul.mubr.bf16.gmra.mrb[0].mxu0 %v7919
        %v9575 = vpop.f32.mrb[0].mxu0
        %v9576 = vadd.f32 %v9525, %v9575
        %v9577 = vpop.f32.mrb[0].mxu0
        %v9578 = vadd.f32 %v9527, %v9577
        %v9579 = vpop.f32.mrb[0].mxu0
        %v9580 = vadd.f32 %v9529, %v9579
        %v9581 = vpop.f32.mrb[0].mxu0
        %v9582 = vadd.f32 %v9531, %v9581
        %9583 = vmatprep.mubr.bf16.mxu0 %v7938
        %9584 = vmatmul.mubr.bf16.gmra.mrb[0].mxu0 %v7921
        %v9585 = vpop.f32.mrb[0].mxu0
        %v9586 = vadd.f32 %v9535, %v9585
        %v9587 = vpop.f32.mrb[0].mxu0
        %v9588 = vadd.f32 %v9537, %v9587
        %v9589 = vpop.f32.mrb[0].mxu0
        %v9590 = vpop.f32.mrb[0].mxu0
        %9591 = vdwg.mxu0
        %9592 = vmatprep.subr.bf16.mxu0 %v9069
        %9593 = vmatpush1.bf16.msra.mxu0 %v9068
        %9594 = vmatprep.subr.bf16.mxu0 %v9073
        %9595 = vmatpush1.bf16.msra.mxu0 %v9072
        %9596 = vmatprep.subr.bf16.mxu0 %v9077
        %9597 = vmatpush1.bf16.msra.mxu0 %v9076
        %9598 = vmatprep.subr.bf16.mxu0 %v9081
        %9599 = vmatpush1.bf16.msra.mxu0 %v9080
        %9600 = vmatprep.subr.bf16.mxu0 %v9085
        %9601 = vmatpush1.bf16.msra.mxu0 %v9084
        %9602 = vmatprep.subr.bf16.mxu0 %v9089
        %9603 = vmatpush1.bf16.msra.mxu0 %v9088
        %9604 = vmatprep.subr.bf16.mxu0 %v9093
        %9605 = vmatpush1.bf16.msra.mxu0 %v9092
        %9606 = vmatprep.subr.bf16.mxu0 %v9097
        %9607 = vmatpush1.bf16.msra.mxu0 %v9096
        %9608 = vmatprep.subr.bf16.mxu0 0
        %9609 = vmatpush1.bf16.msra.mxu0 0
        %9610 = vmatprep.subr.bf16.mxu0 0
        %9611 = vmatpush1.bf16.msra.mxu0 0
        %9612 = vmatprep.subr.bf16.mxu0 0
        %9613 = vmatpush1.bf16.msra.mxu0 0
        %9614 = vmatprep.subr.bf16.mxu0 0
        %9615 = vmatpush1.bf16.msra.mxu0 0
        %9616 = vmatprep.subr.bf16.mxu0 0
        %9617 = vmatpush1.bf16.msra.mxu0 0
        %9618 = vmatprep.subr.bf16.mxu0 0
        %9619 = vmatpush1.bf16.msra.mxu0 0
        %9620 = vmatprep.subr.bf16.mxu0 0
        %9621 = vmatpush1.bf16.msra.mxu0 0
        %9622 = vmatprep.subr.bf16.mxu0 0
        %9623 = vmatpush1.bf16.msra.mxu0 0
        %9624 = vmatprep.mubr.bf16.mxu0 0
        %9625 = vmatmul.mubr.bf16.gmra.mrb[0].mxu0 %v7943
        %v9626 = vpop.f32.mrb[0].mxu0
        %v9627 = vadd.f32 %v9576, %v9626
        %v9628 = vpop.f32.mrb[0].mxu0
        %v9629 = vadd.f32 %v9578, %v9628
        %v9630 = vpop.f32.mrb[0].mxu0
        %v9631 = vadd.f32 %v9580, %v9630
        %v9632 = vpop.f32.mrb[0].mxu0
        %v9633 = vadd.f32 %v9582, %v9632
        %9634 = vmatprep.mubr.bf16.mxu0 0
        %9635 = vmatmul.mubr.bf16.gmra.mrb[0].mxu0 %v7945
        %v9636 = vpop.f32.mrb[0].mxu0
        %v9637 = vadd.f32 %v9586, %v9636
        %v9638 = vpop.f32.mrb[0].mxu0
        %v9639 = vadd.f32 %v9588, %v9638
        %v9640 = vpop.f32.mrb[0].mxu0
        %v9641 = vpop.f32.mrb[0].mxu0
        %9642 = vdwg.mxu0
        %9643 = vmatprep.subr.bf16.mxu0 %v8815
        %9644 = vmatpush1.bf16.msra.mxu0 %v8814
        %9645 = vmatprep.subr.bf16.mxu0 %v8819
        %9646 = vmatpush1.bf16.msra.mxu0 %v8818
        %9647 = vmatprep.subr.bf16.mxu0 %v8823
        %9648 = vmatpush1.bf16.msra.mxu0 %v8822
        %9649 = vmatprep.subr.bf16.mxu0 %v8827
        %9650 = vmatpush1.bf16.msra.mxu0 %v8826
        %9651 = vmatprep.subr.bf16.mxu0 %v8831
        %9652 = vmatpush1.bf16.msra.mxu0 %v8830
        %9653 = vmatprep.subr.bf16.mxu0 %v8835
        %9654 = vmatpush1.bf16.msra.mxu0 %v8834
        %9655 = vmatprep.subr.bf16.mxu0 %v8839
        %9656 = vmatpush1.bf16.msra.mxu0 %v8838
        %9657 = vmatprep.subr.bf16.mxu0 %v8843
        %9658 = vmatpush1.bf16.msra.mxu0 %v8842
        %9659 = vmatprep.subr.bf16.mxu0 %v8847
        %9660 = vmatpush1.bf16.msra.mxu0 %v8846
        %9661 = vmatprep.subr.bf16.mxu0 %v8851
        %9662 = vmatpush1.bf16.msra.mxu0 %v8850
        %9663 = vmatprep.subr.bf16.mxu0 %v8855
        %9664 = vmatpush1.bf16.msra.mxu0 %v8854
        %9665 = vmatprep.subr.bf16.mxu0 %v8859
        %9666 = vmatpush1.bf16.msra.mxu0 %v8858
        %9667 = vmatprep.subr.bf16.mxu0 %v8863
        %9668 = vmatpush1.bf16.msra.mxu0 %v8862
        %9669 = vmatprep.subr.bf16.mxu0 %v8867
        %9670 = vmatpush1.bf16.msra.mxu0 %v8866
        %9671 = vmatprep.subr.bf16.mxu0 %v8871
        %9672 = vmatpush1.bf16.msra.mxu0 %v8870
        %9673 = vmatprep.subr.bf16.mxu0 %v8875
        %9674 = vmatpush1.bf16.msra.mxu0 %v8874
        %9675 = vmatprep.mubr.bf16.mxu0 %v7883
        %9676 = vmatmul.mubr.bf16.gmra.mrb[0].mxu0 %v7576
        %v9677 = vpop.f32.mrb[0].mxu0
        %v9678 = vadd.f32 0.0, %v9677
        %v9679 = vpop.f32.mrb[0].mxu0
        %v9680 = vadd.f32 0.0, %v9679
        %v9681 = vpop.f32.mrb[0].mxu0
        %v9682 = vadd.f32 0.0, %v9681
        %v9683 = vpop.f32.mrb[0].mxu0
        %v9684 = vadd.f32 0.0, %v9683
        %9685 = vmatprep.mubr.bf16.mxu0 %v7886
        %9686 = vmatmul.mubr.bf16.gmra.mrb[0].mxu0 %v7577
        %v9687 = vpop.f32.mrb[0].mxu0
        %v9688 = vadd.f32 0.0, %v9687
        %v9689 = vpop.f32.mrb[0].mxu0
        %v9690 = vadd.f32 0.0, %v9689
        %v9691 = vpop.f32.mrb[0].mxu0
        %v9692 = vpop.f32.mrb[0].mxu0
        %9693 = vdwg.mxu0
        %9694 = vmatprep.subr.bf16.mxu0 %v8879
        %9695 = vmatpush1.bf16.msra.mxu0 %v8878
        %9696 = vmatprep.subr.bf16.mxu0 %v8883
        %9697 = vmatpush1.bf16.msra.mxu0 %v8882
        %9698 = vmatprep.subr.bf16.mxu0 %v8887
        %9699 = vmatpush1.bf16.msra.mxu0 %v8886
        %9700 = vmatprep.subr.bf16.mxu0 %v8891
        %9701 = vmatpush1.bf16.msra.mxu0 %v8890
        %9702 = vmatprep.subr.bf16.mxu0 %v8895
        %9703 = vmatpush1.bf16.msra.mxu0 %v8894
        %9704 = vmatprep.subr.bf16.mxu0 %v8899
        %9705 = vmatpush1.bf16.msra.mxu0 %v8898
        %9706 = vmatprep.subr.bf16.mxu0 %v8903
        %9707 = vmatpush1.bf16.msra.mxu0 %v8902
        %9708 = vmatprep.subr.bf16.mxu0 %v8907
        %9709 = vmatpush1.bf16.msra.mxu0 %v8906
        %9710 = vmatprep.subr.bf16.mxu0 %v8911
        %9711 = vmatpush1.bf16.msra.mxu0 %v8910
        %9712 = vmatprep.subr.bf16.mxu0 %v8915
        %9713 = vmatpush1.bf16.msra.mxu0 %v8914
        %9714 = vmatprep.subr.bf16.mxu0 %v8919
        %9715 = vmatpush1.bf16.msra.mxu0 %v8918
        %9716 = vmatprep.subr.bf16.mxu0 %v8923
        %9717 = vmatpush1.bf16.msra.mxu0 %v8922
        %9718 = vmatprep.subr.bf16.mxu0 %v8927
        %9719 = vmatpush1.bf16.msra.mxu0 %v8926
        %9720 = vmatprep.subr.bf16.mxu0 %v8931
        %9721 = vmatpush1.bf16.msra.mxu0 %v8930
        %9722 = vmatprep.subr.bf16.mxu0 %v8935
        %9723 = vmatpush1.bf16.msra.mxu0 %v8934
        %9724 = vmatprep.subr.bf16.mxu0 %v8939
        %9725 = vmatpush1.bf16.msra.mxu0 %v8938
        %9726 = vmatprep.mubr.bf16.mxu0 %v7897
        %9727 = vmatmul.mubr.bf16.gmra.mrb[0].mxu0 %v7891
        %v9728 = vpop.f32.mrb[0].mxu0
        %v9729 = vadd.f32 %v9678, %v9728
        %v9730 = vpop.f32.mrb[0].mxu0
        %v9731 = vadd.f32 %v9680, %v9730
        %v9732 = vpop.f32.mrb[0].mxu0
        %v9733 = vadd.f32 %v9682, %v9732
        %v9734 = vpop.f32.mrb[0].mxu0
        %v9735 = vadd.f32 %v9684, %v9734
        %9736 = vmatprep.mubr.bf16.mxu0 %v7896
        %9737 = vmatmul.mubr.bf16.gmra.mrb[0].mxu0 %v7890
        %v9738 = vpop.f32.mrb[0].mxu0
        %v9739 = vadd.f32 %v9688, %v9738
        %v9740 = vpop.f32.mrb[0].mxu0
        %v9741 = vadd.f32 %v9690, %v9740
        %v9742 = vpop.f32.mrb[0].mxu0
        %v9743 = vpop.f32.mrb[0].mxu0
        %9744 = vdwg.mxu0
        %9745 = vmatprep.subr.bf16.mxu0 %v8943
        %9746 = vmatpush1.bf16.msra.mxu0 %v8942
        %9747 = vmatprep.subr.bf16.mxu0 %v8947
        %9748 = vmatpush1.bf16.msra.mxu0 %v8946
        %9749 = vmatprep.subr.bf16.mxu0 %v8951
        %9750 = vmatpush1.bf16.msra.mxu0 %v8950
        %9751 = vmatprep.subr.bf16.mxu0 %v8955
        %9752 = vmatpush1.bf16.msra.mxu0 %v8954
        %9753 = vmatprep.subr.bf16.mxu0 %v8959
        %9754 = vmatpush1.bf16.msra.mxu0 %v8958
        %9755 = vmatprep.subr.bf16.mxu0 %v8963
        %9756 = vmatpush1.bf16.msra.mxu0 %v8962
        %9757 = vmatprep.subr.bf16.mxu0 %v8967
        %9758 = vmatpush1.bf16.msra.mxu0 %v8966
        %9759 = vmatprep.subr.bf16.mxu0 %v8971
        %9760 = vmatpush1.bf16.msra.mxu0 %v8970
        %9761 = vmatprep.subr.bf16.mxu0 %v8975
        %9762 = vmatpush1.bf16.msra.mxu0 %v8974
        %9763 = vmatprep.subr.bf16.mxu0 %v8979
        %9764 = vmatpush1.bf16.msra.mxu0 %v8978
        %9765 = vmatprep.subr.bf16.mxu0 %v8983
        %9766 = vmatpush1.bf16.msra.mxu0 %v8982
        %9767 = vmatprep.subr.bf16.mxu0 %v8987
        %9768 = vmatpush1.bf16.msra.mxu0 %v8986
        %9769 = vmatprep.subr.bf16.mxu0 %v8991
        %9770 = vmatpush1.bf16.msra.mxu0 %v8990
        %9771 = vmatprep.subr.bf16.mxu0 %v8995
        %9772 = vmatpush1.bf16.msra.mxu0 %v8994
        %9773 = vmatprep.subr.bf16.mxu0 %v8999
        %9774 = vmatpush1.bf16.msra.mxu0 %v8998
        %9775 = vmatprep.subr.bf16.mxu0 %v9003
        %9776 = vmatpush1.bf16.msra.mxu0 %v9002
        %9777 = vmatprep.mubr.bf16.mxu0 %v7913
        %9778 = vmatmul.mubr.bf16.gmra.mrb[0].mxu0 %v7907
        %v9779 = vpop.f32.mrb[0].mxu0
        %v9780 = vadd.f32 %v9729, %v9779
        %v9781 = vpop.f32.mrb[0].mxu0
        %v9782 = vadd.f32 %v9731, %v9781
        %v9783 = vpop.f32.mrb[0].mxu0
        %v9784 = vadd.f32 %v9733, %v9783
        %v9785 = vpop.f32.mrb[0].mxu0
        %v9786 = vadd.f32 %v9735, %v9785
        %9787 = vmatprep.mubr.bf16.mxu0 %v7912
        %9788 = vmatmul.mubr.bf16.gmra.mrb[0].mxu0 %v7906
        %v9789 = vpop.f32.mrb[0].mxu0
        %v9790 = vadd.f32 %v9739, %v9789
        %v9791 = vpop.f32.mrb[0].mxu0
        %v9792 = vadd.f32 %v9741, %v9791
        %v9793 = vpop.f32.mrb[0].mxu0
        %v9794 = vpop.f32.mrb[0].mxu0
        %9795 = vdwg.mxu0
        %9796 = vmatprep.subr.bf16.mxu0 %v9007
        %9797 = vmatpush1.bf16.msra.mxu0 %v9006
        %9798 = vmatprep.subr.bf16.mxu0 %v9011
        %9799 = vmatpush1.bf16.msra.mxu0 %v9010
        %9800 = vmatprep.subr.bf16.mxu0 %v9015
        %9801 = vmatpush1.bf16.msra.mxu0 %v9014
        %9802 = vmatprep.subr.bf16.mxu0 %v9019
        %9803 = vmatpush1.bf16.msra.mxu0 %v9018
        %9804 = vmatprep.subr.bf16.mxu0 %v9023
        %9805 = vmatpush1.bf16.msra.mxu0 %v9022
        %9806 = vmatprep.subr.bf16.mxu0 %v9027
        %9807 = vmatpush1.bf16.msra.mxu0 %v9026
        %9808 = vmatprep.subr.bf16.mxu0 %v9031
        %9809 = vmatpush1.bf16.msra.mxu0 %v9030
        %9810 = vmatprep.subr.bf16.mxu0 %v9035
        %9811 = vmatpush1.bf16.msra.mxu0 %v9034
        %9812 = vmatprep.subr.bf16.mxu0 %v9039
        %9813 = vmatpush1.bf16.msra.mxu0 %v9038
        %9814 = vmatprep.subr.bf16.mxu0 %v9043
        %9815 = vmatpush1.bf16.msra.mxu0 %v9042
        %9816 = vmatprep.subr.bf16.mxu0 %v9047
        %9817 = vmatpush1.bf16.msra.mxu0 %v9046
        %9818 = vmatprep.subr.bf16.mxu0 %v9051
        %9819 = vmatpush1.bf16.msra.mxu0 %v9050
        %9820 = vmatprep.subr.bf16.mxu0 %v9055
        %9821 = vmatpush1.bf16.msra.mxu0 %v9054
        %9822 = vmatprep.subr.bf16.mxu0 %v9059
        %9823 = vmatpush1.bf16.msra.mxu0 %v9058
        %9824 = vmatprep.subr.bf16.mxu0 %v9063
        %9825 = vmatpush1.bf16.msra.mxu0 %v9062
        %9826 = vmatprep.subr.bf16.mxu0 %v9067
        %9827 = vmatpush1.bf16.msra.mxu0 %v9066
        %9828 = vmatprep.mubr.bf16.mxu0 %v7930
        %9829 = vmatmul.mubr.bf16.gmra.mrb[0].mxu0 %v7919
        %v9830 = vpop.f32.mrb[0].mxu0
        %v9831 = vadd.f32 %v9780, %v9830
        %v9832 = vpop.f32.mrb[0].mxu0
        %v9833 = vadd.f32 %v9782, %v9832
        %v9834 = vpop.f32.mrb[0].mxu0
        %v9835 = vadd.f32 %v9784, %v9834
        %v9836 = vpop.f32.mrb[0].mxu0
        %v9837 = vadd.f32 %v9786, %v9836
        %9838 = vmatprep.mubr.bf16.mxu0 %v7938
        %9839 = vmatmul.mubr.bf16.gmra.mrb[0].mxu0 %v7921
        %v9840 = vpop.f32.mrb[0].mxu0
        %v9841 = vadd.f32 %v9790, %v9840
        %v9842 = vpop.f32.mrb[0].mxu0
        %v9843 = vadd.f32 %v9792, %v9842
        %v9844 = vpop.f32.mrb[0].mxu0
        %v9845 = vpop.f32.mrb[0].mxu0
        %9846 = vdwg.mxu0
        %9847 = vmatprep.subr.bf16.mxu0 %v9071
        %9848 = vmatpush1.bf16.msra.mxu0 %v9070
        %9849 = vmatprep.subr.bf16.mxu0 %v9075
        %9850 = vmatpush1.bf16.msra.mxu0 %v9074
        %9851 = vmatprep.subr.bf16.mxu0 %v9079
        %9852 = vmatpush1.bf16.msra.mxu0 %v9078
        %9853 = vmatprep.subr.bf16.mxu0 %v9083
        %9854 = vmatpush1.bf16.msra.mxu0 %v9082
        %9855 = vmatprep.subr.bf16.mxu0 %v9087
        %9856 = vmatpush1.bf16.msra.mxu0 %v9086
        %9857 = vmatprep.subr.bf16.mxu0 %v9091
        %9858 = vmatpush1.bf16.msra.mxu0 %v9090
        %9859 = vmatprep.subr.bf16.mxu0 %v9095
        %9860 = vmatpush1.bf16.msra.mxu0 %v9094
        %9861 = vmatprep.subr.bf16.mxu0 %v9099
        %9862 = vmatpush1.bf16.msra.mxu0 %v9098
        %9863 = vmatprep.subr.bf16.mxu0 0
        %9864 = vmatpush1.bf16.msra.mxu0 0
        %9865 = vmatprep.subr.bf16.mxu0 0
        %9866 = vmatpush1.bf16.msra.mxu0 0
        %9867 = vmatprep.subr.bf16.mxu0 0
        %9868 = vmatpush1.bf16.msra.mxu0 0
        %9869 = vmatprep.subr.bf16.mxu0 0
        %9870 = vmatpush1.bf16.msra.mxu0 0
        %9871 = vmatprep.subr.bf16.mxu0 0
        %9872 = vmatpush1.bf16.msra.mxu0 0
        %9873 = vmatprep.subr.bf16.mxu0 0
        %9874 = vmatpush1.bf16.msra.mxu0 0
        %9875 = vmatprep.subr.bf16.mxu0 0
        %9876 = vmatpush1.bf16.msra.mxu0 0
        %9877 = vmatprep.subr.bf16.mxu0 0
        %9878 = vmatpush1.bf16.msra.mxu0 0
        %9879 = vmatprep.mubr.bf16.mxu0 0
        %9880 = vmatmul.mubr.bf16.gmra.mrb[0].mxu0 %v7943
        %v9881 = vpop.f32.mrb[0].mxu0
        %v9882 = vadd.f32 %v9831, %v9881
        %v9883 = vpop.f32.mrb[0].mxu0
        %v9884 = vadd.f32 %v9833, %v9883
        %v9885 = vpop.f32.mrb[0].mxu0
        %v9886 = vadd.f32 %v9835, %v9885
        %v9887 = vpop.f32.mrb[0].mxu0
        %v9888 = vadd.f32 %v9837, %v9887
        %9889 = vmatprep.mubr.bf16.mxu0 0
        %9890 = vmatmul.mubr.bf16.gmra.mrb[0].mxu0 %v7945
        %v9891 = vpop.f32.mrb[0].mxu0
        %v9892 = vadd.f32 %v9841, %v9891
        %v9893 = vpop.f32.mrb[0].mxu0
        %v9894 = vadd.f32 %v9843, %v9893
        %v9895 = vpop.f32.mrb[0].mxu0
        %v9896 = vpop.f32.mrb[0].mxu0
        %9897 = vdwg.mxu0
        %v9910 = vcombine.low %v9627, %v9629
        %v9911 = vcombine.high %v9627, %v9629
        %v9912 = vcombine.low %v9882, %v9884
        %v9913 = vcombine.high %v9882, %v9884
        %v9915 = vunpack.c.l.s4 1983009808
        %v9916 = vunpack.c.0.s8 %v9915
        %v9917 = vlaneseq
        %v9918 = vshrl.u32 %v9917, 7
        %v9919 = vsub.s32 %v9916, %v9918
        %v9920 = vrot.slane %v9910, %v9919
        %v9922 = vunpack.c.l.s4 1983009808
        %v9923 = vunpack.c.0.s8 %v9922
        %v9924 = vlaneseq
        %v9925 = vshrl.u32 %v9924, 7
        %v9926 = vsub.s32 %v9923, %v9925
        %v9927 = vrot.slane %v9911, %v9926
        %v9929 = vunpack.c.l.s4 1983009808
        %v9930 = vunpack.c.0.s8 %v9929
        %v9931 = vlaneseq
        %v9932 = vshrl.u32 %v9931, 7
        %v9933 = vsub.s32 %v9930, %v9932
        %v9934 = vrot.slane %v9912, %v9933
        %v9936 = vunpack.c.l.s4 1983009808
        %v9937 = vunpack.c.0.s8 %v9936
        %v9938 = vlaneseq
        %v9939 = vshrl.u32 %v9938, 7
        %v9940 = vsub.s32 %v9937, %v9939
        %v9941 = vrot.slane %v9913, %v9940
        %v9942 = vcombine.low %v9920, %v9934
        %v9943 = vcombine.high %v9920, %v9934
        %v9944 = vcombine.high %v9927, %v9941
        %v9945 = vcombine.low %v9631, %v9633
        %v9946 = vcombine.high %v9631, %v9633
        %v9947 = vcombine.low %v9886, %v9888
        %v9948 = vcombine.high %v9886, %v9888
        %v9950 = vunpack.c.l.s4 1983009808
        %v9951 = vunpack.c.0.s8 %v9950
        %v9952 = vlaneseq
        %v9953 = vshrl.u32 %v9952, 7
        %v9954 = vsub.s32 %v9951, %v9953
        %v9955 = vrot.slane %v9945, %v9954
        %v9957 = vunpack.c.l.s4 1983009808
        %v9958 = vunpack.c.0.s8 %v9957
        %v9959 = vlaneseq
        %v9960 = vshrl.u32 %v9959, 7
        %v9961 = vsub.s32 %v9958, %v9960
        %v9962 = vrot.slane %v9946, %v9961
        %v9964 = vunpack.c.l.s4 1983009808
        %v9965 = vunpack.c.0.s8 %v9964
        %v9966 = vlaneseq
        %v9967 = vshrl.u32 %v9966, 7
        %v9968 = vsub.s32 %v9965, %v9967
        %v9969 = vrot.slane %v9947, %v9968
        %v9971 = vunpack.c.l.s4 1983009808
        %v9972 = vunpack.c.0.s8 %v9971
        %v9973 = vlaneseq
        %v9974 = vshrl.u32 %v9973, 7
        %v9975 = vsub.s32 %v9972, %v9974
        %v9976 = vrot.slane %v9948, %v9975
        %v9977 = vcombine.low %v9955, %v9969
        %v9978 = vcombine.low %v9962, %v9976
        %v9979 = vcombine.high %v9962, %v9976
        %v9980 = vcombine.low %v9637, %v9639
        %v9981 = vcombine.high %v9637, %v9639
        %v9982 = vcombine.low %v9892, %v9894
        %v9983 = vcombine.high %v9892, %v9894
        %v9985 = vunpack.c.l.s4 1983009808
        %v9986 = vunpack.c.0.s8 %v9985
        %v9987 = vlaneseq
        %v9988 = vshrl.u32 %v9987, 7
        %v9989 = vsub.s32 %v9986, %v9988
        %v9990 = vrot.slane %v9980, %v9989
        %v9992 = vunpack.c.l.s4 1983009808
        %v9993 = vunpack.c.0.s8 %v9992
        %v9994 = vlaneseq
        %v9995 = vshrl.u32 %v9994, 7
        %v9996 = vsub.s32 %v9993, %v9995
        %v9997 = vrot.slane %v9981, %v9996
        %v9999 = vunpack.c.l.s4 1983009808
        %v10000 = vunpack.c.0.s8 %v9999
        %v10001 = vlaneseq
        %v10002 = vshrl.u32 %v10001, 7
        %v10003 = vsub.s32 %v10000, %v10002
        %v10004 = vrot.slane %v9982, %v10003
        %v10006 = vunpack.c.l.s4 1983009808
        %v10007 = vunpack.c.0.s8 %v10006
        %v10008 = vlaneseq
        %v10009 = vshrl.u32 %v10008, 7
        %v10010 = vsub.s32 %v10007, %v10009
        %v10011 = vrot.slane %v9983, %v10010
        %v10012 = vcombine.high %v9990, %v10004
        %v10013 = vcombine.low %v9997, %v10011
        %v10022 = vmax.f32 %v9942, %v9944
        %v10023 = vmax.f32 %v9943, %v9977
        %v10024 = vmax.f32 %v9978, %v10012
        %v10025 = vmax.f32 %v9979, %v10013
        %v10030 = vrot.slane %v10022, 7
        %v10031 = vrot.slane %v10030, 2
        %v10032 = vrot.slane %v10023, 7
        %v10033 = vrot.slane %v10032, 2
        %v10034 = vrot.slane %v10024, 7
        %v10035 = vrot.slane %v10034, 2
        %v10036 = vrot.slane %v10025, 7
        %v10037 = vrot.slane %v10036, 2
        %v10042 = vmax.f32 %v10022, %v10031
        %v10043 = vmax.f32 %v10023, %v10033
        %v10044 = vmax.f32 %v10024, %v10035
        %v10045 = vmax.f32 %v10025, %v10037
        %v10047 = vlaneseq
        %v10048 = vshrl.u32 %v10047, 7
        %v10049 = vsub.s32 0, %v10048
        %v10050 = vrot.slane %v7871, %v10049
        %v10051 = vlaneseq
        %v10052 = vshrl.u32 %v10051, 7
        %v10053 = vsub.s32 1, %v10052
        %v10054 = vrot.slane %v7871, %v10053
        %v10055 = vlaneseq
        %v10056 = vshrl.u32 %v10055, 7
        %v10057 = vsub.s32 2, %v10056
        %v10058 = vrot.slane %v7871, %v10057
        %v10059 = vlaneseq
        %v10060 = vshrl.u32 %v10059, 7
        %v10061 = vsub.s32 3, %v10060
        %v10062 = vrot.slane %v7871, %v10061
        %v10063 = vcombine.low %v10050, %v10054
        %v10064 = vcombine.low %v10058, %v10062
        %v10066 = vunpack.c.l.s4 1983009808
        %v10067 = vunpack.c.0.s8 %v10066
        %v10068 = vlaneseq
        %v10069 = vshrl.u32 %v10068, 7
        %v10070 = vsub.s32 %v10067, %v10069
        %v10071 = vrot.slane %v10063, %v10070
        %v10073 = vunpack.c.l.s4 1983009808
        %v10074 = vunpack.c.0.s8 %v10073
        %v10075 = vlaneseq
        %v10076 = vshrl.u32 %v10075, 7
        %v10077 = vsub.s32 %v10074, %v10076
        %v10078 = vrot.slane %v10064, %v10077
        %v10079 = vcombine.low %v10071, %v10078
        %v10080 = vrot.slane %v10079, 1
        %v10083 = vadd.f32 %v10042, %v10079
        %v10084 = vadd.f32 %v10043, %v10080
        %v10085 = vadd.f32 %v10044, %v10079
        %v10086 = vadd.f32 %v10045, %v10080
        %v10087 = vmax.f32 %v10083, 0.0
        %v10088 = vmax.f32 %v10084, 0.0
        %v10089 = vmax.f32 %v10085, 0.0
        %v10090 = vmax.f32 %v10086, 0.0
        %v10095 = vlaneseq
        %v10096 = vshrl.u32 %v10095, 7
        %v10097 = vsub.s32 0, %v10096
        %v10098 = vrot.slane %v10087, %v10097
        %v10099 = vlaneseq
        %v10100 = vshrl.u32 %v10099, 7
        %v10101 = vsub.s32 2, %v10100
        %v10102 = vrot.slane %v10087, %v10101
        %v10103 = vlaneseq
        %v10104 = vshrl.u32 %v10103, 7
        %v10105 = vsub.s32 4, %v10104
        %v10106 = vrot.slane %v10087, %v10105
        %v10107 = vlaneseq
        %v10108 = vshrl.u32 %v10107, 7
        %v10109 = vsub.s32 6, %v10108
        %v10110 = vrot.slane %v10087, %v10109
        %v10111 = vlaneseq
        %v10112 = vshrl.u32 %v10111, 7
        %v10113 = vsub.s32 0, %v10112
        %v10114 = vrot.slane %v10088, %v10113
        %v10115 = vlaneseq
        %v10116 = vshrl.u32 %v10115, 7
        %v10117 = vsub.s32 2, %v10116
        %v10118 = vrot.slane %v10088, %v10117
        %v10119 = vlaneseq
        %v10120 = vshrl.u32 %v10119, 7
        %v10121 = vsub.s32 4, %v10120
        %v10122 = vrot.slane %v10088, %v10121
        %v10123 = vlaneseq
        %v10124 = vshrl.u32 %v10123, 7
        %v10125 = vsub.s32 6, %v10124
        %v10126 = vrot.slane %v10088, %v10125
        %v10127 = vlaneseq
        %v10128 = vshrl.u32 %v10127, 7
        %v10129 = vsub.s32 0, %v10128
        %v10130 = vrot.slane %v10089, %v10129
        %v10131 = vlaneseq
        %v10132 = vshrl.u32 %v10131, 7
        %v10133 = vsub.s32 2, %v10132
        %v10134 = vrot.slane %v10089, %v10133
        %v10135 = vlaneseq
        %v10136 = vshrl.u32 %v10135, 7
        %v10137 = vsub.s32 4, %v10136
        %v10138 = vrot.slane %v10089, %v10137
        %v10139 = vlaneseq
        %v10140 = vshrl.u32 %v10139, 7
        %v10141 = vsub.s32 6, %v10140
        %v10142 = vrot.slane %v10089, %v10141
        %v10143 = vlaneseq
        %v10144 = vshrl.u32 %v10143, 7
        %v10145 = vsub.s32 0, %v10144
        %v10146 = vrot.slane %v10090, %v10145
        %v10147 = vlaneseq
        %v10148 = vshrl.u32 %v10147, 7
        %v10149 = vsub.s32 2, %v10148
        %v10150 = vrot.slane %v10090, %v10149
        %v10151 = vlaneseq
        %v10152 = vshrl.u32 %v10151, 7
        %v10153 = vsub.s32 4, %v10152
        %v10154 = vrot.slane %v10090, %v10153
        %v10155 = vlaneseq
        %v10156 = vshrl.u32 %v10155, 7
        %v10157 = vsub.s32 6, %v10156
        %v10158 = vrot.slane %v10090, %v10157
        %v10175 = vpack.c.bf16 %v10098, %v10098
        %v10176 = vpack.c.bf16 %v10102, %v10102
        %v10177 = vpack.c.bf16 %v10106, %v10106
        %v10178 = vpack.c.bf16 %v10110, %v10110
        %v10179 = vpack.c.bf16 %v10114, %v10114
        %v10180 = vpack.c.bf16 %v10118, %v10118
        %v10181 = vpack.c.bf16 %v10122, %v10122
        %v10182 = vpack.c.bf16 %v10126, %v10126
        %v10183 = vpack.c.bf16 %v10130, %v10130
        %v10184 = vpack.c.bf16 %v10134, %v10134
        %v10185 = vpack.c.bf16 %v10138, %v10138
        %v10186 = vpack.c.bf16 %v10142, %v10142
        %v10187 = vpack.c.bf16 %v10146, %v10146
        %v10188 = vpack.c.bf16 %v10150, %v10150
        %v10189 = vpack.c.bf16 %v10154, %v10154
        %v10190 = vpack.c.bf16 %v10158, %v10158
        %v10191 = vld [vmem:[%s7] sm:$0xf]
        %v10192 = vld [vmem:[%s7 + $0x4] sm:$0xf]
        %v10193 = vld [vmem:[%s7 + $0x8] sm:$0xf]
        %v10194 = vld [vmem:[%s7 + $0xc] sm:$0xf]
        %v10195 = vld [vmem:[%s7 + $0x10] sm:$0xf]
        %v10196 = vld [vmem:[%s7 + $0x14] sm:$0xf]
        %v10197 = vld [vmem:[%s7 + $0x18] sm:$0xf]
        %v10198 = vld [vmem:[%s7 + $0x1c] sm:$0xf]
        %v10199 = vld [vmem:[%s7 + $0x20] sm:$0xf]
        %v10200 = vld [vmem:[%s7 + $0x24] sm:$0xf]
        %v10201 = vld [vmem:[%s7 + $0x28] sm:$0xf]
        %v10202 = vld [vmem:[%s7 + $0x2c] sm:$0xf]
        %v10203 = vld [vmem:[%s7 + $0x30] sm:$0xf]
        %v10204 = vld [vmem:[%s7 + $0x34] sm:$0xf]
        %v10205 = vld [vmem:[%s7 + $0x38] sm:$0xf]
        %v10206 = vld [vmem:[%s7 + $0x3c] sm:$0xf]
        %v10207 = vld [vmem:[%s7 + $0x40] sm:$0xf]
        %v10208 = vld [vmem:[%s7 + $0x44] sm:$0xf]
        %v10209 = vld [vmem:[%s7 + $0x48] sm:$0xf]
        %v10210 = vld [vmem:[%s7 + $0x4c] sm:$0xf]
        %v10211 = vld [vmem:[%s7 + $0x50] sm:$0xf]
        %v10212 = vld [vmem:[%s7 + $0x54] sm:$0xf]
        %v10213 = vld [vmem:[%s7 + $0x58] sm:$0xf]
        %v10214 = vld [vmem:[%s7 + $0x5c] sm:$0xf]
        %v10215 = vld [vmem:[%s7 + $0x60] sm:$0xf]
        %v10216 = vld [vmem:[%s7 + $0x64] sm:$0xf]
        %v10217 = vld [vmem:[%s7 + $0x68] sm:$0xf]
        %v10218 = vld [vmem:[%s7 + $0x6c] sm:$0xf]
        %v10219 = vld [vmem:[%s7 + $0x70] sm:$0xf]
        %v10220 = vld [vmem:[%s7 + $0x74] sm:$0xf]
        %v10221 = vld [vmem:[%s7 + $0x78] sm:$0xf]
        %v10222 = vld [vmem:[%s7 + $0x7c] sm:$0xf]
        %v10223 = vld [vmem:[%s7 + $0x80] sm:$0xf]
        %v10224 = vld [vmem:[%s7 + $0x84] sm:$0xf]
        %v10225 = vld [vmem:[%s7 + $0x88] sm:$0xf]
        %v10226 = vld [vmem:[%s7 + $0x8c] sm:$0xf]
        %v10227 = vld [vmem:[%s7 + $0x90] sm:$0xf]
        %v10228 = vld [vmem:[%s7 + $0x94] sm:$0xf]
        %v10229 = vld [vmem:[%s7 + $0x98] sm:$0xf]
        %v10230 = vld [vmem:[%s7 + $0x9c] sm:$0xf]
        %v10231 = vld [vmem:[%s7 + $0xa0] sm:$0xf]
        %v10232 = vld [vmem:[%s7 + $0xa4] sm:$0xf]
        %v10233 = vld [vmem:[%s7 + $0xa8] sm:$0xf]
        %v10234 = vld [vmem:[%s7 + $0xac] sm:$0xf]
        %v10235 = vld [vmem:[%s7 + $0xb0] sm:$0xf]
        %v10236 = vld [vmem:[%s7 + $0xb4] sm:$0xf]
        %v10237 = vld [vmem:[%s7 + $0xb8] sm:$0xf]
        %v10238 = vld [vmem:[%s7 + $0xbc] sm:$0xf]
        %v10239 = vld [vmem:[%s7 + $0xc0] sm:$0xf]
        %v10240 = vld [vmem:[%s7 + $0xc4] sm:$0xf]
        %v10241 = vld [vmem:[%s7 + $0xc8] sm:$0xf]
        %v10242 = vld [vmem:[%s7 + $0xcc] sm:$0xf]
        %v10243 = vld [vmem:[%s7 + $0xd0] sm:$0xf]
        %v10244 = vld [vmem:[%s7 + $0xd4] sm:$0xf]
        %v10245 = vld [vmem:[%s7 + $0xd8] sm:$0xf]
        %v10246 = vld [vmem:[%s7 + $0xdc] sm:$0xf]
        %v10247 = vld [vmem:[%s7 + $0xe0] sm:$0xf]
        %v10248 = vld [vmem:[%s7 + $0xe4] sm:$0xf]
        %v10249 = vld [vmem:[%s7 + $0xe8] sm:$0xf]
        %v10250 = vld [vmem:[%s7 + $0xec] sm:$0xf]
        %v10251 = vld [vmem:[%s7 + $0xf0] sm:$0xf]
        %v10252 = vld [vmem:[%s7 + $0xf4] sm:$0xf]
        %v10253 = vld [vmem:[%s7 + $0xf8] sm:$0xf]
        %v10254 = vld [vmem:[%s7 + $0xfc] sm:$0xf]
        %s10255 = scalar_lea.vmem %s7, 256
        %v10256 = vld [vmem:[%s10255] sm:$0xf]
        %v10257 = vld [vmem:[%s10255 + $0x4] sm:$0xf]
        %v10258 = vld [vmem:[%s10255 + $0x8] sm:$0xf]
        %v10259 = vld [vmem:[%s10255 + $0xc] sm:$0xf]
        %v10260 = vld [vmem:[%s10255 + $0x10] sm:$0xf]
        %v10261 = vld [vmem:[%s10255 + $0x14] sm:$0xf]
        %v10262 = vld [vmem:[%s10255 + $0x18] sm:$0xf]
        %v10263 = vld [vmem:[%s10255 + $0x1c] sm:$0xf]
        %v10264 = vld [vmem:[%s10255 + $0x20] sm:$0xf]
        %v10265 = vld [vmem:[%s10255 + $0x24] sm:$0xf]
        %v10266 = vld [vmem:[%s10255 + $0x28] sm:$0xf]
        %v10267 = vld [vmem:[%s10255 + $0x2c] sm:$0xf]
        %v10268 = vld [vmem:[%s10255 + $0x30] sm:$0xf]
        %v10269 = vld [vmem:[%s10255 + $0x34] sm:$0xf]
        %v10270 = vld [vmem:[%s10255 + $0x38] sm:$0xf]
        %v10271 = vld [vmem:[%s10255 + $0x3c] sm:$0xf]
        %v10272 = vld [vmem:[%s10255 + $0x40] sm:$0xf]
        %v10273 = vld [vmem:[%s10255 + $0x44] sm:$0xf]
        %v10274 = vld [vmem:[%s10255 + $0x48] sm:$0xf]
        %v10275 = vld [vmem:[%s10255 + $0x4c] sm:$0xf]
        %v10276 = vld [vmem:[%s10255 + $0x50] sm:$0xf]
        %v10277 = vld [vmem:[%s10255 + $0x54] sm:$0xf]
        %v10278 = vld [vmem:[%s10255 + $0x58] sm:$0xf]
        %v10279 = vld [vmem:[%s10255 + $0x5c] sm:$0xf]
        %v10280 = vld [vmem:[%s10255 + $0x60] sm:$0xf]
        %v10281 = vld [vmem:[%s10255 + $0x64] sm:$0xf]
        %v10282 = vld [vmem:[%s10255 + $0x68] sm:$0xf]
        %v10283 = vld [vmem:[%s10255 + $0x6c] sm:$0xf]
        %v10284 = vld [vmem:[%s10255 + $0x70] sm:$0xf]
        %v10285 = vld [vmem:[%s10255 + $0x74] sm:$0xf]
        %v10286 = vld [vmem:[%s10255 + $0x78] sm:$0xf]
        %v10287 = vld [vmem:[%s10255 + $0x7c] sm:$0xf]
        %v10288 = vld [vmem:[%s10255 + $0x80] sm:$0xf]
        %v10289 = vld [vmem:[%s10255 + $0x84] sm:$0xf]
        %v10290 = vld [vmem:[%s10255 + $0x88] sm:$0xf]
        %v10291 = vld [vmem:[%s10255 + $0x8c] sm:$0xf]
        %v10292 = vld [vmem:[%s10255 + $0x90] sm:$0xf]
        %v10293 = vld [vmem:[%s10255 + $0x94] sm:$0xf]
        %v10294 = vld [vmem:[%s10255 + $0x98] sm:$0xf]
        %v10295 = vld [vmem:[%s10255 + $0x9c] sm:$0xf]
        %v10296 = vld [vmem:[%s10255 + $0xa0] sm:$0xf]
        %v10297 = vld [vmem:[%s10255 + $0xa4] sm:$0xf]
        %v10298 = vld [vmem:[%s10255 + $0xa8] sm:$0xf]
        %v10299 = vld [vmem:[%s10255 + $0xac] sm:$0xf]
        %v10300 = vld [vmem:[%s10255 + $0xb0] sm:$0xf]
        %v10301 = vld [vmem:[%s10255 + $0xb4] sm:$0xf]
        %v10302 = vld [vmem:[%s10255 + $0xb8] sm:$0xf]
        %v10303 = vld [vmem:[%s10255 + $0xbc] sm:$0xf]
        %v10304 = vld [vmem:[%s10255 + $0xc0] sm:$0xf]
        %v10305 = vld [vmem:[%s10255 + $0xc4] sm:$0xf]
        %v10306 = vld [vmem:[%s10255 + $0xc8] sm:$0xf]
        %v10307 = vld [vmem:[%s10255 + $0xcc] sm:$0xf]
        %v10308 = vld [vmem:[%s10255 + $0xd0] sm:$0xf]
        %v10309 = vld [vmem:[%s10255 + $0xd4] sm:$0xf]
        %v10310 = vld [vmem:[%s10255 + $0xd8] sm:$0xf]
        %v10311 = vld [vmem:[%s10255 + $0xdc] sm:$0xf]
        %v10312 = vld [vmem:[%s10255 + $0xe0] sm:$0xf]
        %v10313 = vld [vmem:[%s10255 + $0xe4] sm:$0xf]
        %v10314 = vld [vmem:[%s10255 + $0xe8] sm:$0xf]
        %v10315 = vld [vmem:[%s10255 + $0xec] sm:$0xf]
        %v10316 = vld [vmem:[%s10255 + $0xf0] sm:$0xf]
        %v10317 = vld [vmem:[%s10255 + $0xf4] sm:$0xf]
        %v10318 = vld [vmem:[%s10255 + $0xf8] sm:$0xf]
        %v10319 = vld [vmem:[%s10255 + $0xfc] sm:$0xf]
        %v10384 = vunpack.c.l.b16 %v10256
        %v10385 = vunpack.c.l.b16 %v10257
        %v10386 = vunpack.c.l.b16 %v10258
        %v10387 = vunpack.c.l.b16 %v10259
        %v10388 = vunpack.c.l.b16 %v10260
        %v10389 = vunpack.c.l.b16 %v10261
        %v10390 = vunpack.c.l.b16 %v10262
        %v10391 = vunpack.c.l.b16 %v10263
        %v10392 = vunpack.c.l.b16 %v10264
        %v10393 = vunpack.c.l.b16 %v10265
        %v10394 = vunpack.c.l.b16 %v10266
        %v10395 = vunpack.c.l.b16 %v10267
        %v10396 = vunpack.c.l.b16 %v10268
        %v10397 = vunpack.c.l.b16 %v10269
        %v10398 = vunpack.c.l.b16 %v10270
        %v10399 = vunpack.c.l.b16 %v10271
        %v10400 = vunpack.c.l.b16 %v10272
        %v10401 = vunpack.c.l.b16 %v10273
        %v10402 = vunpack.c.l.b16 %v10274
        %v10403 = vunpack.c.l.b16 %v10275
        %v10404 = vunpack.c.l.b16 %v10276
        %v10405 = vunpack.c.l.b16 %v10277
        %v10406 = vunpack.c.l.b16 %v10278
        %v10407 = vunpack.c.l.b16 %v10279
        %v10408 = vunpack.c.l.b16 %v10280
        %v10409 = vunpack.c.l.b16 %v10281
        %v10410 = vunpack.c.l.b16 %v10282
        %v10411 = vunpack.c.l.b16 %v10283
        %v10412 = vunpack.c.l.b16 %v10284
        %v10413 = vunpack.c.l.b16 %v10285
        %v10414 = vunpack.c.l.b16 %v10286
        %v10415 = vunpack.c.l.b16 %v10287
        %v10416 = vunpack.c.l.b16 %v10288
        %v10417 = vunpack.c.l.b16 %v10289
        %v10418 = vunpack.c.l.b16 %v10290
        %v10419 = vunpack.c.l.b16 %v10291
        %v10420 = vunpack.c.l.b16 %v10292
        %v10421 = vunpack.c.l.b16 %v10293
        %v10422 = vunpack.c.l.b16 %v10294
        %v10423 = vunpack.c.l.b16 %v10295
        %v10424 = vunpack.c.l.b16 %v10296
        %v10425 = vunpack.c.l.b16 %v10297
        %v10426 = vunpack.c.l.b16 %v10298
        %v10427 = vunpack.c.l.b16 %v10299
        %v10428 = vunpack.c.l.b16 %v10300
        %v10429 = vunpack.c.l.b16 %v10301
        %v10430 = vunpack.c.l.b16 %v10302
        %v10431 = vunpack.c.l.b16 %v10303
        %v10432 = vunpack.c.l.b16 %v10304
        %v10433 = vunpack.c.l.b16 %v10305
        %v10434 = vunpack.c.l.b16 %v10306
        %v10435 = vunpack.c.l.b16 %v10307
        %v10436 = vunpack.c.l.b16 %v10308
        %v10437 = vunpack.c.l.b16 %v10309
        %v10438 = vunpack.c.l.b16 %v10310
        %v10439 = vunpack.c.l.b16 %v10311
        %v10440 = vunpack.c.l.b16 %v10312
        %v10441 = vunpack.c.l.b16 %v10313
        %v10442 = vunpack.c.l.b16 %v10314
        %v10443 = vunpack.c.l.b16 %v10315
        %v10444 = vunpack.c.l.b16 %v10316
        %v10445 = vunpack.c.l.b16 %v10317
        %v10446 = vunpack.c.l.b16 %v10318
        %v10447 = vunpack.c.l.b16 %v10319
        %v10448 = vpack.c.b16 %v10385, %v10384
        %v10449 = vpack.c.b16 %v10387, %v10386
        %v10450 = vpack.c.b16 %v10389, %v10388
        %v10451 = vpack.c.b16 %v10391, %v10390
        %v10452 = vpack.c.b16 %v10393, %v10392
        %v10453 = vpack.c.b16 %v10395, %v10394
        %v10454 = vpack.c.b16 %v10397, %v10396
        %v10455 = vpack.c.b16 %v10399, %v10398
        %v10456 = vpack.c.b16 %v10401, %v10400
        %v10457 = vpack.c.b16 %v10403, %v10402
        %v10458 = vpack.c.b16 %v10405, %v10404
        %v10459 = vpack.c.b16 %v10407, %v10406
        %v10460 = vpack.c.b16 %v10409, %v10408
        %v10461 = vpack.c.b16 %v10411, %v10410
        %v10462 = vpack.c.b16 %v10413, %v10412
        %v10463 = vpack.c.b16 %v10415, %v10414
        %v10464 = vpack.c.b16 %v10417, %v10416
        %v10465 = vpack.c.b16 %v10419, %v10418
        %v10466 = vpack.c.b16 %v10421, %v10420
        %v10467 = vpack.c.b16 %v10423, %v10422
        %v10468 = vpack.c.b16 %v10425, %v10424
        %v10469 = vpack.c.b16 %v10427, %v10426
        %v10470 = vpack.c.b16 %v10429, %v10428
        %v10471 = vpack.c.b16 %v10431, %v10430
        %v10472 = vpack.c.b16 %v10433, %v10432
        %v10473 = vpack.c.b16 %v10435, %v10434
        %v10474 = vpack.c.b16 %v10437, %v10436
        %v10475 = vpack.c.b16 %v10439, %v10438
        %v10476 = vpack.c.b16 %v10441, %v10440
        %v10477 = vpack.c.b16 %v10443, %v10442
        %v10478 = vpack.c.b16 %v10445, %v10444
        %v10479 = vpack.c.b16 %v10447, %v10446
        %10512 = vmatprep.subr.bf16.mxu0 0
        %10513 = vmatpush1.bf16.msra.mxu0 %v10448
        %10514 = vmatprep.subr.bf16.mxu0 0
        %10515 = vmatpush1.bf16.msra.mxu0 %v10449
        %10516 = vmatprep.subr.bf16.mxu0 0
        %10517 = vmatpush1.bf16.msra.mxu0 %v10450
        %10518 = vmatprep.subr.bf16.mxu0 0
        %10519 = vmatpush1.bf16.msra.mxu0 %v10451
        %10520 = vmatprep.subr.bf16.mxu0 0
        %10521 = vmatpush1.bf16.msra.mxu0 %v10452
        %10522 = vmatprep.subr.bf16.mxu0 0
        %10523 = vmatpush1.bf16.msra.mxu0 %v10453
        %10524 = vmatprep.subr.bf16.mxu0 0
        %10525 = vmatpush1.bf16.msra.mxu0 %v10454
        %10526 = vmatprep.subr.bf16.mxu0 0
        %10527 = vmatpush1.bf16.msra.mxu0 %v10455
        %10528 = vmatprep.subr.bf16.mxu0 0
        %10529 = vmatpush1.bf16.msra.mxu0 %v10456
        %10530 = vmatprep.subr.bf16.mxu0 0
        %10531 = vmatpush1.bf16.msra.mxu0 %v10457
        %10532 = vmatprep.subr.bf16.mxu0 0
        %10533 = vmatpush1.bf16.msra.mxu0 %v10458
        %10534 = vmatprep.subr.bf16.mxu0 0
        %10535 = vmatpush1.bf16.msra.mxu0 %v10459
        %10536 = vmatprep.subr.bf16.mxu0 0
        %10537 = vmatpush1.bf16.msra.mxu0 %v10460
        %10538 = vmatprep.subr.bf16.mxu0 0
        %10539 = vmatpush1.bf16.msra.mxu0 %v10461
        %10540 = vmatprep.subr.bf16.mxu0 0
        %10541 = vmatpush1.bf16.msra.mxu0 %v10462
        %10542 = vmatprep.subr.bf16.mxu0 0
        %10543 = vmatpush1.bf16.msra.mxu0 %v10463
        %10544 = vmatprep.mubr.bf16.mxu0 %v10180
        %10545 = vmatmul.mubr.bf16.gmra.mrb[0].mxu0 %v10179
        %v10546 = vpop.f32.mrb[0].mxu0
        %v10547 = vadd.f32 0.0, %v10546
        %v10548 = vpop.f32.mrb[0].mxu0
        %v10549 = vpop.f32.mrb[0].mxu0
        %v10550 = vpop.f32.mrb[0].mxu0
        %10551 = vdwg.mxu0
        %10552 = vmatprep.subr.bf16.mxu0 0
        %10553 = vmatpush1.bf16.msra.mxu0 %v10464
        %10554 = vmatprep.subr.bf16.mxu0 0
        %10555 = vmatpush1.bf16.msra.mxu0 %v10465
        %10556 = vmatprep.subr.bf16.mxu0 0
        %10557 = vmatpush1.bf16.msra.mxu0 %v10466
        %10558 = vmatprep.subr.bf16.mxu0 0
        %10559 = vmatpush1.bf16.msra.mxu0 %v10467
        %10560 = vmatprep.subr.bf16.mxu0 0
        %10561 = vmatpush1.bf16.msra.mxu0 %v10468
        %10562 = vmatprep.subr.bf16.mxu0 0
        %10563 = vmatpush1.bf16.msra.mxu0 %v10469
        %10564 = vmatprep.subr.bf16.mxu0 0
        %10565 = vmatpush1.bf16.msra.mxu0 %v10470
        %10566 = vmatprep.subr.bf16.mxu0 0
        %10567 = vmatpush1.bf16.msra.mxu0 %v10471
        %10568 = vmatprep.subr.bf16.mxu0 0
        %10569 = vmatpush1.bf16.msra.mxu0 %v10472
        %10570 = vmatprep.subr.bf16.mxu0 0
        %10571 = vmatpush1.bf16.msra.mxu0 %v10473
        %10572 = vmatprep.subr.bf16.mxu0 0
        %10573 = vmatpush1.bf16.msra.mxu0 %v10474
        %10574 = vmatprep.subr.bf16.mxu0 0
        %10575 = vmatpush1.bf16.msra.mxu0 %v10475
        %10576 = vmatprep.subr.bf16.mxu0 0
        %10577 = vmatpush1.bf16.msra.mxu0 %v10476
        %10578 = vmatprep.subr.bf16.mxu0 0
        %10579 = vmatpush1.bf16.msra.mxu0 %v10477
        %10580 = vmatprep.subr.bf16.mxu0 0
        %10581 = vmatpush1.bf16.msra.mxu0 %v10478
        %10582 = vmatprep.subr.bf16.mxu0 0
        %10583 = vmatpush1.bf16.msra.mxu0 %v10479
        %10584 = vmatprep.mubr.bf16.mxu0 %v10182
        %10585 = vmatmul.mubr.bf16.gmra.mrb[0].mxu0 %v10181
        %v10586 = vpop.f32.mrb[0].mxu0
        %v10587 = vadd.f32 %v10547, %v10586
        %v10588 = vpop.f32.mrb[0].mxu0
        %v10589 = vpop.f32.mrb[0].mxu0
        %v10590 = vpop.f32.mrb[0].mxu0
        %10591 = vdwg.mxu0
        %v10656 = vunpack.c.l.b16 %v10191
        %v10657 = vunpack.c.l.b16 %v10192
        %v10658 = vunpack.c.l.b16 %v10193
        %v10659 = vunpack.c.l.b16 %v10194
        %v10660 = vunpack.c.l.b16 %v10195
        %v10661 = vunpack.c.l.b16 %v10196
        %v10662 = vunpack.c.l.b16 %v10197
        %v10663 = vunpack.c.l.b16 %v10198
        %v10664 = vunpack.c.l.b16 %v10199
        %v10665 = vunpack.c.l.b16 %v10200
        %v10666 = vunpack.c.l.b16 %v10201
        %v10667 = vunpack.c.l.b16 %v10202
        %v10668 = vunpack.c.l.b16 %v10203
        %v10669 = vunpack.c.l.b16 %v10204
        %v10670 = vunpack.c.l.b16 %v10205
        %v10671 = vunpack.c.l.b16 %v10206
        %v10672 = vunpack.c.l.b16 %v10207
        %v10673 = vunpack.c.l.b16 %v10208
        %v10674 = vunpack.c.l.b16 %v10209
        %v10675 = vunpack.c.l.b16 %v10210
        %v10676 = vunpack.c.l.b16 %v10211
        %v10677 = vunpack.c.l.b16 %v10212
        %v10678 = vunpack.c.l.b16 %v10213
        %v10679 = vunpack.c.l.b16 %v10214
        %v10680 = vunpack.c.l.b16 %v10215
        %v10681 = vunpack.c.l.b16 %v10216
        %v10682 = vunpack.c.l.b16 %v10217
        %v10683 = vunpack.c.l.b16 %v10218
        %v10684 = vunpack.c.l.b16 %v10219
        %v10685 = vunpack.c.l.b16 %v10220
        %v10686 = vunpack.c.l.b16 %v10221
        %v10687 = vunpack.c.l.b16 %v10222
        %v10688 = vunpack.c.l.b16 %v10223
        %v10689 = vunpack.c.l.b16 %v10224
        %v10690 = vunpack.c.l.b16 %v10225
        %v10691 = vunpack.c.l.b16 %v10226
        %v10692 = vunpack.c.l.b16 %v10227
        %v10693 = vunpack.c.l.b16 %v10228
        %v10694 = vunpack.c.l.b16 %v10229
        %v10695 = vunpack.c.l.b16 %v10230
        %v10696 = vunpack.c.l.b16 %v10231
        %v10697 = vunpack.c.l.b16 %v10232
        %v10698 = vunpack.c.l.b16 %v10233
        %v10699 = vunpack.c.l.b16 %v10234
        %v10700 = vunpack.c.l.b16 %v10235
        %v10701 = vunpack.c.l.b16 %v10236
        %v10702 = vunpack.c.l.b16 %v10237
        %v10703 = vunpack.c.l.b16 %v10238
        %v10704 = vunpack.c.l.b16 %v10239
        %v10705 = vunpack.c.l.b16 %v10240
        %v10706 = vunpack.c.l.b16 %v10241
        %v10707 = vunpack.c.l.b16 %v10242
        %v10708 = vunpack.c.l.b16 %v10243
        %v10709 = vunpack.c.l.b16 %v10244
        %v10710 = vunpack.c.l.b16 %v10245
        %v10711 = vunpack.c.l.b16 %v10246
        %v10712 = vunpack.c.l.b16 %v10247
        %v10713 = vunpack.c.l.b16 %v10248
        %v10714 = vunpack.c.l.b16 %v10249
        %v10715 = vunpack.c.l.b16 %v10250
        %v10716 = vunpack.c.l.b16 %v10251
        %v10717 = vunpack.c.l.b16 %v10252
        %v10718 = vunpack.c.l.b16 %v10253
        %v10719 = vunpack.c.l.b16 %v10254
        %v10720 = vpack.c.b16 %v10657, %v10656
        %v10721 = vpack.c.b16 %v10659, %v10658
        %v10722 = vpack.c.b16 %v10661, %v10660
        %v10723 = vpack.c.b16 %v10663, %v10662
        %v10724 = vpack.c.b16 %v10665, %v10664
        %v10725 = vpack.c.b16 %v10667, %v10666
        %v10726 = vpack.c.b16 %v10669, %v10668
        %v10727 = vpack.c.b16 %v10671, %v10670
        %v10728 = vpack.c.b16 %v10673, %v10672
        %v10729 = vpack.c.b16 %v10675, %v10674
        %v10730 = vpack.c.b16 %v10677, %v10676
        %v10731 = vpack.c.b16 %v10679, %v10678
        %v10732 = vpack.c.b16 %v10681, %v10680
        %v10733 = vpack.c.b16 %v10683, %v10682
        %v10734 = vpack.c.b16 %v10685, %v10684
        %v10735 = vpack.c.b16 %v10687, %v10686
        %v10736 = vpack.c.b16 %v10689, %v10688
        %v10737 = vpack.c.b16 %v10691, %v10690
        %v10738 = vpack.c.b16 %v10693, %v10692
        %v10739 = vpack.c.b16 %v10695, %v10694
        %v10740 = vpack.c.b16 %v10697, %v10696
        %v10741 = vpack.c.b16 %v10699, %v10698
        %v10742 = vpack.c.b16 %v10701, %v10700
        %v10743 = vpack.c.b16 %v10703, %v10702
        %v10744 = vpack.c.b16 %v10705, %v10704
        %v10745 = vpack.c.b16 %v10707, %v10706
        %v10746 = vpack.c.b16 %v10709, %v10708
        %v10747 = vpack.c.b16 %v10711, %v10710
        %v10748 = vpack.c.b16 %v10713, %v10712
        %v10749 = vpack.c.b16 %v10715, %v10714
        %v10750 = vpack.c.b16 %v10717, %v10716
        %v10751 = vpack.c.b16 %v10719, %v10718
        %10784 = vmatprep.subr.bf16.mxu0 0
        %10785 = vmatpush1.bf16.msra.mxu0 %v10720
        %10786 = vmatprep.subr.bf16.mxu0 0
        %10787 = vmatpush1.bf16.msra.mxu0 %v10721
        %10788 = vmatprep.subr.bf16.mxu0 0
        %10789 = vmatpush1.bf16.msra.mxu0 %v10722
        %10790 = vmatprep.subr.bf16.mxu0 0
        %10791 = vmatpush1.bf16.msra.mxu0 %v10723
        %10792 = vmatprep.subr.bf16.mxu0 0
        %10793 = vmatpush1.bf16.msra.mxu0 %v10724
        %10794 = vmatprep.subr.bf16.mxu0 0
        %10795 = vmatpush1.bf16.msra.mxu0 %v10725
        %10796 = vmatprep.subr.bf16.mxu0 0
        %10797 = vmatpush1.bf16.msra.mxu0 %v10726
        %10798 = vmatprep.subr.bf16.mxu0 0
        %10799 = vmatpush1.bf16.msra.mxu0 %v10727
        %10800 = vmatprep.subr.bf16.mxu0 0
        %10801 = vmatpush1.bf16.msra.mxu0 %v10728
        %10802 = vmatprep.subr.bf16.mxu0 0
        %10803 = vmatpush1.bf16.msra.mxu0 %v10729
        %10804 = vmatprep.subr.bf16.mxu0 0
        %10805 = vmatpush1.bf16.msra.mxu0 %v10730
        %10806 = vmatprep.subr.bf16.mxu0 0
        %10807 = vmatpush1.bf16.msra.mxu0 %v10731
        %10808 = vmatprep.subr.bf16.mxu0 0
        %10809 = vmatpush1.bf16.msra.mxu0 %v10732
        %10810 = vmatprep.subr.bf16.mxu0 0
        %10811 = vmatpush1.bf16.msra.mxu0 %v10733
        %10812 = vmatprep.subr.bf16.mxu0 0
        %10813 = vmatpush1.bf16.msra.mxu0 %v10734
        %10814 = vmatprep.subr.bf16.mxu0 0
        %10815 = vmatpush1.bf16.msra.mxu0 %v10735
        %10816 = vmatprep.mubr.bf16.mxu0 %v10176
        %10817 = vmatmul.mubr.bf16.gmra.mrb[0].mxu0 %v10175
        %v10818 = vpop.f32.mrb[0].mxu0
        %v10819 = vadd.f32 %v10587, %v10818
        %v10820 = vpop.f32.mrb[0].mxu0
        %v10821 = vpop.f32.mrb[0].mxu0
        %v10822 = vpop.f32.mrb[0].mxu0
        %10823 = vdwg.mxu0
        %10824 = vmatprep.subr.bf16.mxu0 0
        %10825 = vmatpush1.bf16.msra.mxu0 %v10736
        %10826 = vmatprep.subr.bf16.mxu0 0
        %10827 = vmatpush1.bf16.msra.mxu0 %v10737
        %10828 = vmatprep.subr.bf16.mxu0 0
        %10829 = vmatpush1.bf16.msra.mxu0 %v10738
        %10830 = vmatprep.subr.bf16.mxu0 0
        %10831 = vmatpush1.bf16.msra.mxu0 %v10739
        %10832 = vmatprep.subr.bf16.mxu0 0
        %10833 = vmatpush1.bf16.msra.mxu0 %v10740
        %10834 = vmatprep.subr.bf16.mxu0 0
        %10835 = vmatpush1.bf16.msra.mxu0 %v10741
        %10836 = vmatprep.subr.bf16.mxu0 0
        %10837 = vmatpush1.bf16.msra.mxu0 %v10742
        %10838 = vmatprep.subr.bf16.mxu0 0
        %10839 = vmatpush1.bf16.msra.mxu0 %v10743
        %10840 = vmatprep.subr.bf16.mxu0 0
        %10841 = vmatpush1.bf16.msra.mxu0 %v10744
        %10842 = vmatprep.subr.bf16.mxu0 0
        %10843 = vmatpush1.bf16.msra.mxu0 %v10745
        %10844 = vmatprep.subr.bf16.mxu0 0
        %10845 = vmatpush1.bf16.msra.mxu0 %v10746
        %10846 = vmatprep.subr.bf16.mxu0 0
        %10847 = vmatpush1.bf16.msra.mxu0 %v10747
        %10848 = vmatprep.subr.bf16.mxu0 0
        %10849 = vmatpush1.bf16.msra.mxu0 %v10748
        %10850 = vmatprep.subr.bf16.mxu0 0
        %10851 = vmatpush1.bf16.msra.mxu0 %v10749
        %10852 = vmatprep.subr.bf16.mxu0 0
        %10853 = vmatpush1.bf16.msra.mxu0 %v10750
        %10854 = vmatprep.subr.bf16.mxu0 0
        %10855 = vmatpush1.bf16.msra.mxu0 %v10751
        %10856 = vmatprep.mubr.bf16.mxu0 %v10178
        %10857 = vmatmul.mubr.bf16.gmra.mrb[0].mxu0 %v10177
        %v10858 = vpop.f32.mrb[0].mxu0
        %v10859 = vadd.f32 %v10819, %v10858
        %v10860 = vpop.f32.mrb[0].mxu0
        %v10861 = vpop.f32.mrb[0].mxu0
        %v10862 = vpop.f32.mrb[0].mxu0
        %10863 = vdwg.mxu0
        %s10864 = scalar_lea.vmem %s7, 512
        %v10865 = vld [vmem:[%s10864] sm:$0xf]
        %v10866 = vld [vmem:[%s10864 + $0x4] sm:$0xf]
        %v10867 = vld [vmem:[%s10864 + $0x8] sm:$0xf]
        %v10868 = vld [vmem:[%s10864 + $0xc] sm:$0xf]
        %v10869 = vld [vmem:[%s10864 + $0x10] sm:$0xf]
        %v10870 = vld [vmem:[%s10864 + $0x14] sm:$0xf]
        %v10871 = vld [vmem:[%s10864 + $0x18] sm:$0xf]
        %v10872 = vld [vmem:[%s10864 + $0x1c] sm:$0xf]
        %v10873 = vld [vmem:[%s10864 + $0x20] sm:$0xf]
        %v10874 = vld [vmem:[%s10864 + $0x24] sm:$0xf]
        %v10875 = vld [vmem:[%s10864 + $0x28] sm:$0xf]
        %v10876 = vld [vmem:[%s10864 + $0x2c] sm:$0xf]
        %v10877 = vld [vmem:[%s10864 + $0x30] sm:$0xf]
        %v10878 = vld [vmem:[%s10864 + $0x34] sm:$0xf]
        %v10879 = vld [vmem:[%s10864 + $0x38] sm:$0xf]
        %v10880 = vld [vmem:[%s10864 + $0x3c] sm:$0xf]
        %v10881 = vld [vmem:[%s10864 + $0x40] sm:$0xf]
        %v10882 = vld [vmem:[%s10864 + $0x44] sm:$0xf]
        %v10883 = vld [vmem:[%s10864 + $0x48] sm:$0xf]
        %v10884 = vld [vmem:[%s10864 + $0x4c] sm:$0xf]
        %v10885 = vld [vmem:[%s10864 + $0x50] sm:$0xf]
        %v10886 = vld [vmem:[%s10864 + $0x54] sm:$0xf]
        %v10887 = vld [vmem:[%s10864 + $0x58] sm:$0xf]
        %v10888 = vld [vmem:[%s10864 + $0x5c] sm:$0xf]
        %v10889 = vld [vmem:[%s10864 + $0x60] sm:$0xf]
        %v10890 = vld [vmem:[%s10864 + $0x64] sm:$0xf]
        %v10891 = vld [vmem:[%s10864 + $0x68] sm:$0xf]
        %v10892 = vld [vmem:[%s10864 + $0x6c] sm:$0xf]
        %v10893 = vld [vmem:[%s10864 + $0x70] sm:$0xf]
        %v10894 = vld [vmem:[%s10864 + $0x74] sm:$0xf]
        %v10895 = vld [vmem:[%s10864 + $0x78] sm:$0xf]
        %v10896 = vld [vmem:[%s10864 + $0x7c] sm:$0xf]
        %v10897 = vld [vmem:[%s10864 + $0x80] sm:$0xf]
        %v10898 = vld [vmem:[%s10864 + $0x84] sm:$0xf]
        %v10899 = vld [vmem:[%s10864 + $0x88] sm:$0xf]
        %v10900 = vld [vmem:[%s10864 + $0x8c] sm:$0xf]
        %v10901 = vld [vmem:[%s10864 + $0x90] sm:$0xf]
        %v10902 = vld [vmem:[%s10864 + $0x94] sm:$0xf]
        %v10903 = vld [vmem:[%s10864 + $0x98] sm:$0xf]
        %v10904 = vld [vmem:[%s10864 + $0x9c] sm:$0xf]
        %v10905 = vld [vmem:[%s10864 + $0xa0] sm:$0xf]
        %v10906 = vld [vmem:[%s10864 + $0xa4] sm:$0xf]
        %v10907 = vld [vmem:[%s10864 + $0xa8] sm:$0xf]
        %v10908 = vld [vmem:[%s10864 + $0xac] sm:$0xf]
        %v10909 = vld [vmem:[%s10864 + $0xb0] sm:$0xf]
        %v10910 = vld [vmem:[%s10864 + $0xb4] sm:$0xf]
        %v10911 = vld [vmem:[%s10864 + $0xb8] sm:$0xf]
        %v10912 = vld [vmem:[%s10864 + $0xbc] sm:$0xf]
        %v10913 = vld [vmem:[%s10864 + $0xc0] sm:$0xf]
        %v10914 = vld [vmem:[%s10864 + $0xc4] sm:$0xf]
        %v10915 = vld [vmem:[%s10864 + $0xc8] sm:$0xf]
        %v10916 = vld [vmem:[%s10864 + $0xcc] sm:$0xf]
        %v10917 = vld [vmem:[%s10864 + $0xd0] sm:$0xf]
        %v10918 = vld [vmem:[%s10864 + $0xd4] sm:$0xf]
        %v10919 = vld [vmem:[%s10864 + $0xd8] sm:$0xf]
        %v10920 = vld [vmem:[%s10864 + $0xdc] sm:$0xf]
        %v10921 = vld [vmem:[%s10864 + $0xe0] sm:$0xf]
        %v10922 = vld [vmem:[%s10864 + $0xe4] sm:$0xf]
        %v10923 = vld [vmem:[%s10864 + $0xe8] sm:$0xf]
        %v10924 = vld [vmem:[%s10864 + $0xec] sm:$0xf]
        %v10925 = vld [vmem:[%s10864 + $0xf0] sm:$0xf]
        %v10926 = vld [vmem:[%s10864 + $0xf4] sm:$0xf]
        %v10927 = vld [vmem:[%s10864 + $0xf8] sm:$0xf]
        %v10928 = vld [vmem:[%s10864 + $0xfc] sm:$0xf]
        %v10993 = vunpack.c.l.b16 %v10865
        %v10994 = vunpack.c.l.b16 %v10866
        %v10995 = vunpack.c.l.b16 %v10867
        %v10996 = vunpack.c.l.b16 %v10868
        %v10997 = vunpack.c.l.b16 %v10869
        %v10998 = vunpack.c.l.b16 %v10870
        %v10999 = vunpack.c.l.b16 %v10871
        %v11000 = vunpack.c.l.b16 %v10872
        %v11001 = vunpack.c.l.b16 %v10873
        %v11002 = vunpack.c.l.b16 %v10874
        %v11003 = vunpack.c.l.b16 %v10875
        %v11004 = vunpack.c.l.b16 %v10876
        %v11005 = vunpack.c.l.b16 %v10877
        %v11006 = vunpack.c.l.b16 %v10878
        %v11007 = vunpack.c.l.b16 %v10879
        %v11008 = vunpack.c.l.b16 %v10880
        %v11009 = vunpack.c.l.b16 %v10881
        %v11010 = vunpack.c.l.b16 %v10882
        %v11011 = vunpack.c.l.b16 %v10883
        %v11012 = vunpack.c.l.b16 %v10884
        %v11013 = vunpack.c.l.b16 %v10885
        %v11014 = vunpack.c.l.b16 %v10886
        %v11015 = vunpack.c.l.b16 %v10887
        %v11016 = vunpack.c.l.b16 %v10888
        %v11017 = vunpack.c.l.b16 %v10889
        %v11018 = vunpack.c.l.b16 %v10890
        %v11019 = vunpack.c.l.b16 %v10891
        %v11020 = vunpack.c.l.b16 %v10892
        %v11021 = vunpack.c.l.b16 %v10893
        %v11022 = vunpack.c.l.b16 %v10894
        %v11023 = vunpack.c.l.b16 %v10895
        %v11024 = vunpack.c.l.b16 %v10896
        %v11025 = vunpack.c.l.b16 %v10897
        %v11026 = vunpack.c.l.b16 %v10898
        %v11027 = vunpack.c.l.b16 %v10899
        %v11028 = vunpack.c.l.b16 %v10900
        %v11029 = vunpack.c.l.b16 %v10901
        %v11030 = vunpack.c.l.b16 %v10902
        %v11031 = vunpack.c.l.b16 %v10903
        %v11032 = vunpack.c.l.b16 %v10904
        %v11033 = vunpack.c.l.b16 %v10905
        %v11034 = vunpack.c.l.b16 %v10906
        %v11035 = vunpack.c.l.b16 %v10907
        %v11036 = vunpack.c.l.b16 %v10908
        %v11037 = vunpack.c.l.b16 %v10909
        %v11038 = vunpack.c.l.b16 %v10910
        %v11039 = vunpack.c.l.b16 %v10911
        %v11040 = vunpack.c.l.b16 %v10912
        %v11041 = vunpack.c.l.b16 %v10913
        %v11042 = vunpack.c.l.b16 %v10914
        %v11043 = vunpack.c.l.b16 %v10915
        %v11044 = vunpack.c.l.b16 %v10916
        %v11045 = vunpack.c.l.b16 %v10917
        %v11046 = vunpack.c.l.b16 %v10918
        %v11047 = vunpack.c.l.b16 %v10919
        %v11048 = vunpack.c.l.b16 %v10920
        %v11049 = vunpack.c.l.b16 %v10921
        %v11050 = vunpack.c.l.b16 %v10922
        %v11051 = vunpack.c.l.b16 %v10923
        %v11052 = vunpack.c.l.b16 %v10924
        %v11053 = vunpack.c.l.b16 %v10925
        %v11054 = vunpack.c.l.b16 %v10926
        %v11055 = vunpack.c.l.b16 %v10927
        %v11056 = vunpack.c.l.b16 %v10928
        %v11057 = vpack.c.b16 %v10994, %v10993
        %v11058 = vpack.c.b16 %v10996, %v10995
        %v11059 = vpack.c.b16 %v10998, %v10997
        %v11060 = vpack.c.b16 %v11000, %v10999
        %v11061 = vpack.c.b16 %v11002, %v11001
        %v11062 = vpack.c.b16 %v11004, %v11003
        %v11063 = vpack.c.b16 %v11006, %v11005
        %v11064 = vpack.c.b16 %v11008, %v11007
        %v11065 = vpack.c.b16 %v11010, %v11009
        %v11066 = vpack.c.b16 %v11012, %v11011
        %v11067 = vpack.c.b16 %v11014, %v11013
        %v11068 = vpack.c.b16 %v11016, %v11015
        %v11069 = vpack.c.b16 %v11018, %v11017
        %v11070 = vpack.c.b16 %v11020, %v11019
        %v11071 = vpack.c.b16 %v11022, %v11021
        %v11072 = vpack.c.b16 %v11024, %v11023
        %v11073 = vpack.c.b16 %v11026, %v11025
        %v11074 = vpack.c.b16 %v11028, %v11027
        %v11075 = vpack.c.b16 %v11030, %v11029
        %v11076 = vpack.c.b16 %v11032, %v11031
        %v11077 = vpack.c.b16 %v11034, %v11033
        %v11078 = vpack.c.b16 %v11036, %v11035
        %v11079 = vpack.c.b16 %v11038, %v11037
        %v11080 = vpack.c.b16 %v11040, %v11039
        %v11081 = vpack.c.b16 %v11042, %v11041
        %v11082 = vpack.c.b16 %v11044, %v11043
        %v11083 = vpack.c.b16 %v11046, %v11045
        %v11084 = vpack.c.b16 %v11048, %v11047
        %v11085 = vpack.c.b16 %v11050, %v11049
        %v11086 = vpack.c.b16 %v11052, %v11051
        %v11087 = vpack.c.b16 %v11054, %v11053
        %v11088 = vpack.c.b16 %v11056, %v11055
        %11121 = vmatprep.subr.bf16.mxu0 0
        %11122 = vmatpush1.bf16.msra.mxu0 %v11057
        %11123 = vmatprep.subr.bf16.mxu0 0
        %11124 = vmatpush1.bf16.msra.mxu0 %v11058
        %11125 = vmatprep.subr.bf16.mxu0 0
        %11126 = vmatpush1.bf16.msra.mxu0 %v11059
        %11127 = vmatprep.subr.bf16.mxu0 0
        %11128 = vmatpush1.bf16.msra.mxu0 %v11060
        %11129 = vmatprep.subr.bf16.mxu0 0
        %11130 = vmatpush1.bf16.msra.mxu0 %v11061
        %11131 = vmatprep.subr.bf16.mxu0 0
        %11132 = vmatpush1.bf16.msra.mxu0 %v11062
        %11133 = vmatprep.subr.bf16.mxu0 0
        %11134 = vmatpush1.bf16.msra.mxu0 %v11063
        %11135 = vmatprep.subr.bf16.mxu0 0
        %11136 = vmatpush1.bf16.msra.mxu0 %v11064
        %11137 = vmatprep.subr.bf16.mxu0 0
        %11138 = vmatpush1.bf16.msra.mxu0 %v11065
        %11139 = vmatprep.subr.bf16.mxu0 0
        %11140 = vmatpush1.bf16.msra.mxu0 %v11066
        %11141 = vmatprep.subr.bf16.mxu0 0
        %11142 = vmatpush1.bf16.msra.mxu0 %v11067
        %11143 = vmatprep.subr.bf16.mxu0 0
        %11144 = vmatpush1.bf16.msra.mxu0 %v11068
        %11145 = vmatprep.subr.bf16.mxu0 0
        %11146 = vmatpush1.bf16.msra.mxu0 %v11069
        %11147 = vmatprep.subr.bf16.mxu0 0
        %11148 = vmatpush1.bf16.msra.mxu0 %v11070
        %11149 = vmatprep.subr.bf16.mxu0 0
        %11150 = vmatpush1.bf16.msra.mxu0 %v11071
        %11151 = vmatprep.subr.bf16.mxu0 0
        %11152 = vmatpush1.bf16.msra.mxu0 %v11072
        %11153 = vmatprep.mubr.bf16.mxu0 %v10184
        %11154 = vmatmul.mubr.bf16.gmra.mrb[0].mxu0 %v10183
        %v11155 = vpop.f32.mrb[0].mxu0
        %v11156 = vadd.f32 0.0, %v11155
        %v11157 = vpop.f32.mrb[0].mxu0
        %v11158 = vpop.f32.mrb[0].mxu0
        %v11159 = vpop.f32.mrb[0].mxu0
        %11160 = vdwg.mxu0
        %11161 = vmatprep.subr.bf16.mxu0 0
        %11162 = vmatpush1.bf16.msra.mxu0 %v11073
        %11163 = vmatprep.subr.bf16.mxu0 0
        %11164 = vmatpush1.bf16.msra.mxu0 %v11074
        %11165 = vmatprep.subr.bf16.mxu0 0
        %11166 = vmatpush1.bf16.msra.mxu0 %v11075
        %11167 = vmatprep.subr.bf16.mxu0 0
        %11168 = vmatpush1.bf16.msra.mxu0 %v11076
        %11169 = vmatprep.subr.bf16.mxu0 0
        %11170 = vmatpush1.bf16.msra.mxu0 %v11077
        %11171 = vmatprep.subr.bf16.mxu0 0
        %11172 = vmatpush1.bf16.msra.mxu0 %v11078
        %11173 = vmatprep.subr.bf16.mxu0 0
        %11174 = vmatpush1.bf16.msra.mxu0 %v11079
        %11175 = vmatprep.subr.bf16.mxu0 0
        %11176 = vmatpush1.bf16.msra.mxu0 %v11080
        %11177 = vmatprep.subr.bf16.mxu0 0
        %11178 = vmatpush1.bf16.msra.mxu0 %v11081
        %11179 = vmatprep.subr.bf16.mxu0 0
        %11180 = vmatpush1.bf16.msra.mxu0 %v11082
        %11181 = vmatprep.subr.bf16.mxu0 0
        %11182 = vmatpush1.bf16.msra.mxu0 %v11083
        %11183 = vmatprep.subr.bf16.mxu0 0
        %11184 = vmatpush1.bf16.msra.mxu0 %v11084
        %11185 = vmatprep.subr.bf16.mxu0 0
        %11186 = vmatpush1.bf16.msra.mxu0 %v11085
        %11187 = vmatprep.subr.bf16.mxu0 0
        %11188 = vmatpush1.bf16.msra.mxu0 %v11086
        %11189 = vmatprep.subr.bf16.mxu0 0
        %11190 = vmatpush1.bf16.msra.mxu0 %v11087
        %11191 = vmatprep.subr.bf16.mxu0 0
        %11192 = vmatpush1.bf16.msra.mxu0 %v11088
        %11193 = vmatprep.mubr.bf16.mxu0 %v10186
        %11194 = vmatmul.mubr.bf16.gmra.mrb[0].mxu0 %v10185
        %v11195 = vpop.f32.mrb[0].mxu0
        %v11196 = vadd.f32 %v11156, %v11195
        %v11197 = vpop.f32.mrb[0].mxu0
        %v11198 = vpop.f32.mrb[0].mxu0
        %v11199 = vpop.f32.mrb[0].mxu0
        %11200 = vdwg.mxu0
        %v11201 = vadd.f32 %v10859, %v11196
        %s11202 = scalar_lea.vmem %s7, 768
        %v11203 = vld [vmem:[%s11202] sm:$0xf]
        %v11204 = vld [vmem:[%s11202 + $0x4] sm:$0xf]
        %v11205 = vld [vmem:[%s11202 + $0x8] sm:$0xf]
        %v11206 = vld [vmem:[%s11202 + $0xc] sm:$0xf]
        %v11207 = vld [vmem:[%s11202 + $0x10] sm:$0xf]
        %v11208 = vld [vmem:[%s11202 + $0x14] sm:$0xf]
        %v11209 = vld [vmem:[%s11202 + $0x18] sm:$0xf]
        %v11210 = vld [vmem:[%s11202 + $0x1c] sm:$0xf]
        %v11211 = vld [vmem:[%s11202 + $0x20] sm:$0xf]
        %v11212 = vld [vmem:[%s11202 + $0x24] sm:$0xf]
        %v11213 = vld [vmem:[%s11202 + $0x28] sm:$0xf]
        %v11214 = vld [vmem:[%s11202 + $0x2c] sm:$0xf]
        %v11215 = vld [vmem:[%s11202 + $0x30] sm:$0xf]
        %v11216 = vld [vmem:[%s11202 + $0x34] sm:$0xf]
        %v11217 = vld [vmem:[%s11202 + $0x38] sm:$0xf]
        %v11218 = vld [vmem:[%s11202 + $0x3c] sm:$0xf]
        %v11219 = vld [vmem:[%s11202 + $0x40] sm:$0xf]
        %v11220 = vld [vmem:[%s11202 + $0x44] sm:$0xf]
        %v11221 = vld [vmem:[%s11202 + $0x48] sm:$0xf]
        %v11222 = vld [vmem:[%s11202 + $0x4c] sm:$0xf]
        %v11223 = vld [vmem:[%s11202 + $0x50] sm:$0xf]
        %v11224 = vld [vmem:[%s11202 + $0x54] sm:$0xf]
        %v11225 = vld [vmem:[%s11202 + $0x58] sm:$0xf]
        %v11226 = vld [vmem:[%s11202 + $0x5c] sm:$0xf]
        %v11227 = vld [vmem:[%s11202 + $0x60] sm:$0xf]
        %v11228 = vld [vmem:[%s11202 + $0x64] sm:$0xf]
        %v11229 = vld [vmem:[%s11202 + $0x68] sm:$0xf]
        %v11230 = vld [vmem:[%s11202 + $0x6c] sm:$0xf]
        %v11231 = vld [vmem:[%s11202 + $0x70] sm:$0xf]
        %v11232 = vld [vmem:[%s11202 + $0x74] sm:$0xf]
        %v11233 = vld [vmem:[%s11202 + $0x78] sm:$0xf]
        %v11234 = vld [vmem:[%s11202 + $0x7c] sm:$0xf]
        %v11235 = vld [vmem:[%s11202 + $0x80] sm:$0xf]
        %v11236 = vld [vmem:[%s11202 + $0x84] sm:$0xf]
        %v11237 = vld [vmem:[%s11202 + $0x88] sm:$0xf]
        %v11238 = vld [vmem:[%s11202 + $0x8c] sm:$0xf]
        %v11239 = vld [vmem:[%s11202 + $0x90] sm:$0xf]
        %v11240 = vld [vmem:[%s11202 + $0x94] sm:$0xf]
        %v11241 = vld [vmem:[%s11202 + $0x98] sm:$0xf]
        %v11242 = vld [vmem:[%s11202 + $0x9c] sm:$0xf]
        %v11243 = vld [vmem:[%s11202 + $0xa0] sm:$0xf]
        %v11244 = vld [vmem:[%s11202 + $0xa4] sm:$0xf]
        %v11245 = vld [vmem:[%s11202 + $0xa8] sm:$0xf]
        %v11246 = vld [vmem:[%s11202 + $0xac] sm:$0xf]
        %v11247 = vld [vmem:[%s11202 + $0xb0] sm:$0xf]
        %v11248 = vld [vmem:[%s11202 + $0xb4] sm:$0xf]
        %v11249 = vld [vmem:[%s11202 + $0xb8] sm:$0xf]
        %v11250 = vld [vmem:[%s11202 + $0xbc] sm:$0xf]
        %v11251 = vld [vmem:[%s11202 + $0xc0] sm:$0xf]
        %v11252 = vld [vmem:[%s11202 + $0xc4] sm:$0xf]
        %v11253 = vld [vmem:[%s11202 + $0xc8] sm:$0xf]
        %v11254 = vld [vmem:[%s11202 + $0xcc] sm:$0xf]
        %v11255 = vld [vmem:[%s11202 + $0xd0] sm:$0xf]
        %v11256 = vld [vmem:[%s11202 + $0xd4] sm:$0xf]
        %v11257 = vld [vmem:[%s11202 + $0xd8] sm:$0xf]
        %v11258 = vld [vmem:[%s11202 + $0xdc] sm:$0xf]
        %v11259 = vld [vmem:[%s11202 + $0xe0] sm:$0xf]
        %v11260 = vld [vmem:[%s11202 + $0xe4] sm:$0xf]
        %v11261 = vld [vmem:[%s11202 + $0xe8] sm:$0xf]
        %v11262 = vld [vmem:[%s11202 + $0xec] sm:$0xf]
        %v11263 = vld [vmem:[%s11202 + $0xf0] sm:$0xf]
        %v11264 = vld [vmem:[%s11202 + $0xf4] sm:$0xf]
        %v11265 = vld [vmem:[%s11202 + $0xf8] sm:$0xf]
        %v11266 = vld [vmem:[%s11202 + $0xfc] sm:$0xf]
        %v11331 = vunpack.c.l.b16 %v11203
        %v11332 = vunpack.c.l.b16 %v11204
        %v11333 = vunpack.c.l.b16 %v11205
        %v11334 = vunpack.c.l.b16 %v11206
        %v11335 = vunpack.c.l.b16 %v11207
        %v11336 = vunpack.c.l.b16 %v11208
        %v11337 = vunpack.c.l.b16 %v11209
        %v11338 = vunpack.c.l.b16 %v11210
        %v11339 = vunpack.c.l.b16 %v11211
        %v11340 = vunpack.c.l.b16 %v11212
        %v11341 = vunpack.c.l.b16 %v11213
        %v11342 = vunpack.c.l.b16 %v11214
        %v11343 = vunpack.c.l.b16 %v11215
        %v11344 = vunpack.c.l.b16 %v11216
        %v11345 = vunpack.c.l.b16 %v11217
        %v11346 = vunpack.c.l.b16 %v11218
        %v11347 = vunpack.c.l.b16 %v11219
        %v11348 = vunpack.c.l.b16 %v11220
        %v11349 = vunpack.c.l.b16 %v11221
        %v11350 = vunpack.c.l.b16 %v11222
        %v11351 = vunpack.c.l.b16 %v11223
        %v11352 = vunpack.c.l.b16 %v11224
        %v11353 = vunpack.c.l.b16 %v11225
        %v11354 = vunpack.c.l.b16 %v11226
        %v11355 = vunpack.c.l.b16 %v11227
        %v11356 = vunpack.c.l.b16 %v11228
        %v11357 = vunpack.c.l.b16 %v11229
        %v11358 = vunpack.c.l.b16 %v11230
        %v11359 = vunpack.c.l.b16 %v11231
        %v11360 = vunpack.c.l.b16 %v11232
        %v11361 = vunpack.c.l.b16 %v11233
        %v11362 = vunpack.c.l.b16 %v11234
        %v11363 = vunpack.c.l.b16 %v11235
        %v11364 = vunpack.c.l.b16 %v11236
        %v11365 = vunpack.c.l.b16 %v11237
        %v11366 = vunpack.c.l.b16 %v11238
        %v11367 = vunpack.c.l.b16 %v11239
        %v11368 = vunpack.c.l.b16 %v11240
        %v11369 = vunpack.c.l.b16 %v11241
        %v11370 = vunpack.c.l.b16 %v11242
        %v11371 = vunpack.c.l.b16 %v11243
        %v11372 = vunpack.c.l.b16 %v11244
        %v11373 = vunpack.c.l.b16 %v11245
        %v11374 = vunpack.c.l.b16 %v11246
        %v11375 = vunpack.c.l.b16 %v11247
        %v11376 = vunpack.c.l.b16 %v11248
        %v11377 = vunpack.c.l.b16 %v11249
        %v11378 = vunpack.c.l.b16 %v11250
        %v11379 = vunpack.c.l.b16 %v11251
        %v11380 = vunpack.c.l.b16 %v11252
        %v11381 = vunpack.c.l.b16 %v11253
        %v11382 = vunpack.c.l.b16 %v11254
        %v11383 = vunpack.c.l.b16 %v11255
        %v11384 = vunpack.c.l.b16 %v11256
        %v11385 = vunpack.c.l.b16 %v11257
        %v11386 = vunpack.c.l.b16 %v11258
        %v11387 = vunpack.c.l.b16 %v11259
        %v11388 = vunpack.c.l.b16 %v11260
        %v11389 = vunpack.c.l.b16 %v11261
        %v11390 = vunpack.c.l.b16 %v11262
        %v11391 = vunpack.c.l.b16 %v11263
        %v11392 = vunpack.c.l.b16 %v11264
        %v11393 = vunpack.c.l.b16 %v11265
        %v11394 = vunpack.c.l.b16 %v11266
        %v11395 = vpack.c.b16 %v11332, %v11331
        %v11396 = vpack.c.b16 %v11334, %v11333
        %v11397 = vpack.c.b16 %v11336, %v11335
        %v11398 = vpack.c.b16 %v11338, %v11337
        %v11399 = vpack.c.b16 %v11340, %v11339
        %v11400 = vpack.c.b16 %v11342, %v11341
        %v11401 = vpack.c.b16 %v11344, %v11343
        %v11402 = vpack.c.b16 %v11346, %v11345
        %v11403 = vpack.c.b16 %v11348, %v11347
        %v11404 = vpack.c.b16 %v11350, %v11349
        %v11405 = vpack.c.b16 %v11352, %v11351
        %v11406 = vpack.c.b16 %v11354, %v11353
        %v11407 = vpack.c.b16 %v11356, %v11355
        %v11408 = vpack.c.b16 %v11358, %v11357
        %v11409 = vpack.c.b16 %v11360, %v11359
        %v11410 = vpack.c.b16 %v11362, %v11361
        %v11411 = vpack.c.b16 %v11364, %v11363
        %v11412 = vpack.c.b16 %v11366, %v11365
        %v11413 = vpack.c.b16 %v11368, %v11367
        %v11414 = vpack.c.b16 %v11370, %v11369
        %v11415 = vpack.c.b16 %v11372, %v11371
        %v11416 = vpack.c.b16 %v11374, %v11373
        %v11417 = vpack.c.b16 %v11376, %v11375
        %v11418 = vpack.c.b16 %v11378, %v11377
        %v11419 = vpack.c.b16 %v11380, %v11379
        %v11420 = vpack.c.b16 %v11382, %v11381
        %v11421 = vpack.c.b16 %v11384, %v11383
        %v11422 = vpack.c.b16 %v11386, %v11385
        %v11423 = vpack.c.b16 %v11388, %v11387
        %v11424 = vpack.c.b16 %v11390, %v11389
        %v11425 = vpack.c.b16 %v11392, %v11391
        %v11426 = vpack.c.b16 %v11394, %v11393
        %11459 = vmatprep.subr.bf16.mxu0 0
        %11460 = vmatpush1.bf16.msra.mxu0 %v11395
        %11461 = vmatprep.subr.bf16.mxu0 0
        %11462 = vmatpush1.bf16.msra.mxu0 %v11396
        %11463 = vmatprep.subr.bf16.mxu0 0
        %11464 = vmatpush1.bf16.msra.mxu0 %v11397
        %11465 = vmatprep.subr.bf16.mxu0 0
        %11466 = vmatpush1.bf16.msra.mxu0 %v11398
        %11467 = vmatprep.subr.bf16.mxu0 0
        %11468 = vmatpush1.bf16.msra.mxu0 %v11399
        %11469 = vmatprep.subr.bf16.mxu0 0
        %11470 = vmatpush1.bf16.msra.mxu0 %v11400
        %11471 = vmatprep.subr.bf16.mxu0 0
        %11472 = vmatpush1.bf16.msra.mxu0 %v11401
        %11473 = vmatprep.subr.bf16.mxu0 0
        %11474 = vmatpush1.bf16.msra.mxu0 %v11402
        %11475 = vmatprep.subr.bf16.mxu0 0
        %11476 = vmatpush1.bf16.msra.mxu0 %v11403
        %11477 = vmatprep.subr.bf16.mxu0 0
        %11478 = vmatpush1.bf16.msra.mxu0 %v11404
        %11479 = vmatprep.subr.bf16.mxu0 0
        %11480 = vmatpush1.bf16.msra.mxu0 %v11405
        %11481 = vmatprep.subr.bf16.mxu0 0
        %11482 = vmatpush1.bf16.msra.mxu0 %v11406
        %11483 = vmatprep.subr.bf16.mxu0 0
        %11484 = vmatpush1.bf16.msra.mxu0 %v11407
        %11485 = vmatprep.subr.bf16.mxu0 0
        %11486 = vmatpush1.bf16.msra.mxu0 %v11408
        %11487 = vmatprep.subr.bf16.mxu0 0
        %11488 = vmatpush1.bf16.msra.mxu0 %v11409
        %11489 = vmatprep.subr.bf16.mxu0 0
        %11490 = vmatpush1.bf16.msra.mxu0 %v11410
        %11491 = vmatprep.mubr.bf16.mxu0 %v10188
        %11492 = vmatmul.mubr.bf16.gmra.mrb[0].mxu0 %v10187
        %v11493 = vpop.f32.mrb[0].mxu0
        %v11494 = vadd.f32 0.0, %v11493
        %v11495 = vpop.f32.mrb[0].mxu0
        %v11496 = vpop.f32.mrb[0].mxu0
        %v11497 = vpop.f32.mrb[0].mxu0
        %11498 = vdwg.mxu0
        %11499 = vmatprep.subr.bf16.mxu0 0
        %11500 = vmatpush1.bf16.msra.mxu0 %v11411
        %11501 = vmatprep.subr.bf16.mxu0 0
        %11502 = vmatpush1.bf16.msra.mxu0 %v11412
        %11503 = vmatprep.subr.bf16.mxu0 0
        %11504 = vmatpush1.bf16.msra.mxu0 %v11413
        %11505 = vmatprep.subr.bf16.mxu0 0
        %11506 = vmatpush1.bf16.msra.mxu0 %v11414
        %11507 = vmatprep.subr.bf16.mxu0 0
        %11508 = vmatpush1.bf16.msra.mxu0 %v11415
        %11509 = vmatprep.subr.bf16.mxu0 0
        %11510 = vmatpush1.bf16.msra.mxu0 %v11416
        %11511 = vmatprep.subr.bf16.mxu0 0
        %11512 = vmatpush1.bf16.msra.mxu0 %v11417
        %11513 = vmatprep.subr.bf16.mxu0 0
        %11514 = vmatpush1.bf16.msra.mxu0 %v11418
        %11515 = vmatprep.subr.bf16.mxu0 0
        %11516 = vmatpush1.bf16.msra.mxu0 %v11419
        %11517 = vmatprep.subr.bf16.mxu0 0
        %11518 = vmatpush1.bf16.msra.mxu0 %v11420
        %11519 = vmatprep.subr.bf16.mxu0 0
        %11520 = vmatpush1.bf16.msra.mxu0 %v11421
        %11521 = vmatprep.subr.bf16.mxu0 0
        %11522 = vmatpush1.bf16.msra.mxu0 %v11422
        %11523 = vmatprep.subr.bf16.mxu0 0
        %11524 = vmatpush1.bf16.msra.mxu0 %v11423
        %11525 = vmatprep.subr.bf16.mxu0 0
        %11526 = vmatpush1.bf16.msra.mxu0 %v11424
        %11527 = vmatprep.subr.bf16.mxu0 0
        %11528 = vmatpush1.bf16.msra.mxu0 %v11425
        %11529 = vmatprep.subr.bf16.mxu0 0
        %11530 = vmatpush1.bf16.msra.mxu0 %v11426
        %11531 = vmatprep.mubr.bf16.mxu0 %v10190
        %11532 = vmatmul.mubr.bf16.gmra.mrb[0].mxu0 %v10189
        %v11533 = vpop.f32.mrb[0].mxu0
        %v11534 = vadd.f32 %v11494, %v11533
        %v11535 = vpop.f32.mrb[0].mxu0
        %v11536 = vpop.f32.mrb[0].mxu0
        %v11537 = vpop.f32.mrb[0].mxu0
        %11538 = vdwg.mxu0
        %v11539 = vadd.f32 %v11201, %v11534
        %v11540 = vld [vmem:[%s8] sm:$0x1]
        %v11541 = vadd.f32 %v11539, %v11540
        %v11542 = vmax.f32 %v11541, 0.0
        %v11543 = vpack.c.bf16 %v11542, %v11542
        %v11544 = vld [vmem:[%s9] sm:$0xf]
        %v11545 = vld [vmem:[%s9 + $0x4] sm:$0xf]
        %v11546 = vld [vmem:[%s9 + $0x8] sm:$0xf]
        %v11547 = vld [vmem:[%s9 + $0xc] sm:$0xf]
        %v11548 = vld [vmem:[%s9 + $0x10] sm:$0xf]
        %v11549 = vld [vmem:[%s9 + $0x14] sm:$0xf]
        %v11550 = vld [vmem:[%s9 + $0x18] sm:$0xf]
        %v11551 = vld [vmem:[%s9 + $0x1c] sm:$0xf]
        %v11552 = vld [vmem:[%s9 + $0x20] sm:$0xf]
        %v11553 = vld [vmem:[%s9 + $0x24] sm:$0xf]
        %v11554 = vld [vmem:[%s9 + $0x28] sm:$0xf]
        %v11555 = vld [vmem:[%s9 + $0x2c] sm:$0xf]
        %v11556 = vld [vmem:[%s9 + $0x30] sm:$0xf]
        %v11557 = vld [vmem:[%s9 + $0x34] sm:$0xf]
        %v11558 = vld [vmem:[%s9 + $0x38] sm:$0xf]
        %v11559 = vld [vmem:[%s9 + $0x3c] sm:$0xf]
        %v11560 = vld [vmem:[%s10] sm:$0x1]
        %v11577 = vunpack.c.l.b16 %v11544
        %v11578 = vunpack.c.l.b16 %v11545
        %v11579 = vunpack.c.l.b16 %v11546
        %v11580 = vunpack.c.l.b16 %v11547
        %v11581 = vunpack.c.l.b16 %v11548
        %v11582 = vunpack.c.l.b16 %v11549
        %v11583 = vunpack.c.l.b16 %v11550
        %v11584 = vunpack.c.l.b16 %v11551
        %v11585 = vunpack.c.l.b16 %v11552
        %v11586 = vunpack.c.l.b16 %v11553
        %v11587 = vunpack.c.l.b16 %v11554
        %v11588 = vunpack.c.l.b16 %v11555
        %v11589 = vunpack.c.l.b16 %v11556
        %v11590 = vunpack.c.l.b16 %v11557
        %v11591 = vunpack.c.l.b16 %v11558
        %v11592 = vunpack.c.l.b16 %v11559
        %v11593 = vpack.c.b16 %v11578, %v11577
        %v11594 = vpack.c.b16 %v11580, %v11579
        %v11595 = vpack.c.b16 %v11582, %v11581
        %v11596 = vpack.c.b16 %v11584, %v11583
        %v11597 = vpack.c.b16 %v11586, %v11585
        %v11598 = vpack.c.b16 %v11588, %v11587
        %v11599 = vpack.c.b16 %v11590, %v11589
        %v11600 = vpack.c.b16 %v11592, %v11591
        %11609 = vmatprep.subr.bf16.mxu0 0
        %11610 = vmatpush1.bf16.msra.mxu0 %v11593
        %11611 = vmatprep.subr.bf16.mxu0 0
        %11612 = vmatpush1.bf16.msra.mxu0 %v11594
        %11613 = vmatprep.subr.bf16.mxu0 0
        %11614 = vmatpush1.bf16.msra.mxu0 %v11595
        %11615 = vmatprep.subr.bf16.mxu0 0
        %11616 = vmatpush1.bf16.msra.mxu0 %v11596
        %11617 = vmatprep.subr.bf16.mxu0 0
        %11618 = vmatpush1.bf16.msra.mxu0 %v11597
        %11619 = vmatprep.subr.bf16.mxu0 0
        %11620 = vmatpush1.bf16.msra.mxu0 %v11598
        %11621 = vmatprep.subr.bf16.mxu0 0
        %11622 = vmatpush1.bf16.msra.mxu0 %v11599
        %11623 = vmatprep.subr.bf16.mxu0 0
        %11624 = vmatpush1.bf16.msra.mxu0 %v11600
        %11625 = vmatprep.subr.bf16.mxu0 0
        %11626 = vmatpush1.bf16.msra.mxu0 0
        %11627 = vmatprep.subr.bf16.mxu0 0
        %11628 = vmatpush1.bf16.msra.mxu0 0
        %11629 = vmatprep.subr.bf16.mxu0 0
        %11630 = vmatpush1.bf16.msra.mxu0 0
        %11631 = vmatprep.subr.bf16.mxu0 0
        %11632 = vmatpush1.bf16.msra.mxu0 0
        %11633 = vmatprep.subr.bf16.mxu0 0
        %11634 = vmatpush1.bf16.msra.mxu0 0
        %11635 = vmatprep.subr.bf16.mxu0 0
        %11636 = vmatpush1.bf16.msra.mxu0 0
        %11637 = vmatprep.subr.bf16.mxu0 0
        %11638 = vmatpush1.bf16.msra.mxu0 0
        %11639 = vmatprep.subr.bf16.mxu0 0
        %11640 = vmatpush1.bf16.msra.mxu0 0
        %11641 = vmatprep.mubr.bf16.mxu0 0
        %11642 = vmatmul.mubr.bf16.gmra.mrb[0].mxu0 %v11543
        %v11643 = vpop.f32.mrb[0].mxu0
        %v11644 = vadd.f32 %v11560, %v11643
        %v11645 = vpop.f32.mrb[0].mxu0
        %v11646 = vpop.f32.mrb[0].mxu0
        %v11647 = vpop.f32.mrb[0].mxu0
        %11648 = vdwg.mxu0
        %v11649 = vmax.f32 %v11644, 0.0
        %v11650 = vpack.c.bf16 %v11649, %v11649
        %v11651 = vld [vmem:[%s11] sm:$0xf]
        %v11652 = vld [vmem:[%s11 + $0x4] sm:$0xf]
        %v11653 = vld [vmem:[%s11 + $0x8] sm:$0xf]
        %v11654 = vld [vmem:[%s11 + $0xc] sm:$0xf]
        %v11655 = vld [vmem:[%s11 + $0x10] sm:$0xf]
        %v11656 = vld [vmem:[%s11 + $0x14] sm:$0xf]
        %v11657 = vld [vmem:[%s11 + $0x18] sm:$0xf]
        %v11658 = vld [vmem:[%s11 + $0x1c] sm:$0xf]
        %v11659 = vld [vmem:[%s12] sm:$0x1]
        %v11668 = vunpack.c.l.b16 %v11651
        %v11669 = vunpack.c.l.b16 %v11652
        %v11670 = vunpack.c.l.b16 %v11653
        %v11671 = vunpack.c.l.b16 %v11654
        %v11672 = vunpack.c.l.b16 %v11655
        %v11673 = vunpack.c.l.b16 %v11656
        %v11674 = vunpack.c.l.b16 %v11657
        %v11675 = vunpack.c.l.b16 %v11658
        %v11676 = vpack.c.b16 %v11669, %v11668
        %v11677 = vpack.c.b16 %v11671, %v11670
        %v11678 = vpack.c.b16 %v11673, %v11672
        %v11679 = vpack.c.b16 %v11675, %v11674
        %vm11684 = vcmask 523264
        %v11686 = vsel %vm11684, %v11650, 0
        %11688 = vmatprep.subr.bf16.mxu0 0
        %11689 = vmatpush1.bf16.msra.mxu0 %v11676
        %11690 = vmatprep.subr.bf16.mxu0 0
        %11691 = vmatpush1.bf16.msra.mxu0 %v11677
        %11692 = vmatprep.subr.bf16.mxu0 0
        %11693 = vmatpush1.bf16.msra.mxu0 %v11678
        %11694 = vmatprep.subr.bf16.mxu0 0
        %11695 = vmatpush1.bf16.msra.mxu0 %v11679
        %11696 = vmatprep.subr.bf16.mxu0 0
        %11697 = vmatpush1.bf16.msra.mxu0 0
        %11698 = vmatprep.subr.bf16.mxu0 0
        %11699 = vmatpush1.bf16.msra.mxu0 0
        %11700 = vmatprep.subr.bf16.mxu0 0
        %11701 = vmatpush1.bf16.msra.mxu0 0
        %11702 = vmatprep.subr.bf16.mxu0 0
        %11703 = vmatpush1.bf16.msra.mxu0 0
        %11704 = vmatprep.subr.bf16.mxu0 0
        %11705 = vmatpush1.bf16.msra.mxu0 0
        %11706 = vmatprep.subr.bf16.mxu0 0
        %11707 = vmatpush1.bf16.msra.mxu0 0
        %11708 = vmatprep.subr.bf16.mxu0 0
        %11709 = vmatpush1.bf16.msra.mxu0 0
        %11710 = vmatprep.subr.bf16.mxu0 0
        %11711 = vmatpush1.bf16.msra.mxu0 0
        %11712 = vmatprep.subr.bf16.mxu0 0
        %11713 = vmatpush1.bf16.msra.mxu0 0
        %11714 = vmatprep.subr.bf16.mxu0 0
        %11715 = vmatpush1.bf16.msra.mxu0 0
        %11716 = vmatprep.subr.bf16.mxu0 0
        %11717 = vmatpush1.bf16.msra.mxu0 0
        %11718 = vmatprep.subr.bf16.mxu0 0
        %11719 = vmatpush1.bf16.msra.mxu0 0
        %11720 = vmatprep.mubr.bf16.mxu0 0
        %11721 = vmatmul.mubr.bf16.gmra.mrb[0].mxu0 %v11686
        %v11722 = vpop.f32.mrb[0].mxu0
        %v11723 = vadd.f32 %v11659, %v11722
        %v11724 = vpop.f32.mrb[0].mxu0
        %v11725 = vpop.f32.mrb[0].mxu0
        %v11726 = vpop.f32.mrb[0].mxu0
        %11727 = vdwg.mxu0
        %vm11728 = vcmask 73728
        %v11729 = vsel %vm11728, %v11723, -inf
        %11730 = vmax.xlane.f32.xlu0 %v11729
        %v11731 = vpop.xlane.xlu0 %11730
        %v11732 = vsub.f32 %v11723, %v11731
        %v11733 = vmul.f32 %v11732, 1.442695
        %v11734 = vpow.pop %v11733
        %v11735 = vsel %vm11728, %v11734, 0.0
        %11736 = vadd.xlane.f32.xlu0 %v11735
        %v11737 = vpop.xlane.xlu0 %11736
        %v11738 = vlog2.pop %v11737
        %v11739 = vmul.f32 %v11738, 0.6931472
        %v11740 = vsub.f32 %v11732, %v11739
        %11741 = vst.msk [vmem:[%s432] sm:$0x1] %vm11728, %v11740
        %s11742 = sand.u32 %s313, 1
        %s11743 = scalar_lea.sflag [#allocation3], %s11742
        %s11744 = sand.u32 %s313, 1
        %s11745 = scalar_lea.vmem [#allocation2], %s11744
        // Predicated region
        $region73: #{cnn_forward.1} parent=71 // pred_check
          %p11746 = pneg %p323
        $region74: #{cnn_forward.1} parent=71 // pred_check_branch
          %11748 = sbr.rel (%p11746) target = $region76
        $region75: #{cnn_forward.1} parent=71 // pred_region
          %s11750 = ssub.s32 16, 16
          %11751 = vsyncadd %s11743, %s11750
          %s11752 = smul.addr %s27, 16
          %s11753 = scalar_lea.hbm %s13, %s11752
          %s11755 = sshll.u32 %s11745, 4
          %s11756 = int_to_ptr.vmem [resolvable:$true] %s11755
          %11758 = dma.vmem_to_hbm [thread:$0]  %s11756, 16, %s11753, %s11743
        $region76: #{cnn_forward.1} parent=71 // pred_fallthru
          _
      $region72: #{cnn_forward.1} parent=5 // pred_fallthru
        _
      %p11759 = scmp.le.s32.totalorder 2, %s22
      // Predicated region
      $region77: #{cnn_forward.1} parent=5 // pred_check
        %p11760 = pneg %p11759
      $region78: #{cnn_forward.1} parent=5 // pred_check_branch
        %11762 = sbr.rel (%p11760) target = $region80
      $region79: #{cnn_forward.1} parent=5 // pred_region
        %s11763 = ssub.s32 %s22, 2
        // Predicated region
        $region81: #{cnn_forward.1} parent=79 // pred_check
          %p11764 = pneg %p329
        $region82: #{cnn_forward.1} parent=79 // pred_check_branch
          %11766 = sbr.rel (%p11764) target = $region84
        $region83: #{cnn_forward.1} parent=79 // pred_region
          %s11767 = sand.u32 %s314, 1
          %s11768 = scalar_lea.sflag [#allocation3], %s11767
          %s11769 = sand.u32 %s314, 1
          %s11770 = scalar_lea.vmem [#allocation2], %s11769
          %11771 = dma.done %s11768, 16
        $region84: #{cnn_forward.1} parent=79 // pred_fallthru
          _
      $region80: #{cnn_forward.1} parent=5 // pred_fallthru
        _
    $region6: #{cnn_forward.1} parent=1 // loop_footer
      %s26 = sadd.s32 1, %s22
    $region7: #{cnn_forward.1} parent=1 // loop_footer_branch
      %21 = sbr.rel target = $region3
    $region8: #{cnn_forward.1} parent=1 // loop_exit
      _
    %11772 = vsyncpa [#allocation3], 1
    %s11773 = scalar_lea.sflag [#allocation3], 1
    %11774 = vsyncpa %s11773, 1

</llo_original>
